<compile_context>
chip_gen: v7x
topology: tpu7x:2x2x1
jax: 0.10.0
libtpu: 0.0.40
codegen_flags: <defaults>
</compile_context>

<pallas_src>
import functools

import jax
import jax.numpy as jnp
import numpy as np
from jax import lax
from jax.experimental import pallas as pl
from jax.experimental.pallas import tpu as pltpu

KER = 7
PAD = KER // 2
EPS = 1e-5
_OW = 8        # sublane-aligned column where the un-padded image starts in scratch
_LANE = 128


def _block_kernel(x_ref, wc_ref, bc_ref, gamma_ref, beta_ref,
                  w1_ref, b1_ref, w2_ref, b2_ref, o_ref, xpad_s,
                  *, H, W, C, G, TH, transpose_out):
    HW = H * W
    CH = TH * W                 # rows of H*W handled per bottleneck chunk
    cs = C // G                 # channels per GroupNorm group

    # ---- build zero halo in VMEM (single HBM read of x per sample) ----------
    xpad_s[...] = jnp.zeros_like(xpad_s)
    xpad_s[PAD:PAD + H, _OW:_OW + W, :] = x_ref[0].astype(jnp.float32)

    # ---- per-sample depthwise 7x7 conv, 'same' zero padding ------------------
    acc = jnp.zeros((H, W, C), jnp.float32)
    for kh in range(KER):
        for kw in range(KER):
            c0 = _OW - PAD + kw
            tap = xpad_s[kh:kh + H, c0:c0 + W, :]
            acc = acc + tap * wc_ref[0, kh, kw, :].astype(jnp.float32)
    acc = acc + bc_ref[0, 0, :].astype(jnp.float32)

    # ---- GroupNorm, single pass: per-channel moments -> group stats ----------
    yf = acc.reshape(HW, C)                                   # lane dim kept
    s1 = jnp.sum(yf, axis=0, keepdims=True)                   # (1, C)
    s2 = jnp.sum(yf * yf, axis=0, keepdims=True)              # (1, C)
    npg = float(HW * cs)
    if G == 1:
        g1 = jnp.sum(s1, axis=1, keepdims=True) / npg          # (1, 1)
        g2 = jnp.sum(s2, axis=1, keepdims=True) / npg
        mean_c = g1
        inv_c = lax.rsqrt(g2 - g1 * g1 + EPS)
    else:
        # channel -> group combine via tiny one-hot matmuls (stays lane-major)
        cg_c = lax.broadcasted_iota(jnp.int32, (C, G), 0) // cs
        cg_g = lax.broadcasted_iota(jnp.int32, (C, G), 1)
        oh_cg = (cg_c == cg_g).astype(jnp.float32)              # (C, G)
        gc_g = lax.broadcasted_iota(jnp.int32, (G, C), 0)
        gc_c = lax.broadcasted_iota(jnp.int32, (G, C), 1) // cs
        oh_gc = (gc_c == gc_g).astype(jnp.float32)              # (G, C)
        g1 = jnp.dot(s1, oh_cg, preferred_element_type=jnp.float32) / npg
        g2 = jnp.dot(s2, oh_cg, preferred_element_type=jnp.float32) / npg
        inv_g = lax.rsqrt(g2 - g1 * g1 + EPS)                   # (1, G)
        mean_c = jnp.dot(g1, oh_gc, preferred_element_type=jnp.float32)
        inv_c = jnp.dot(inv_g, oh_gc, preferred_element_type=jnp.float32)
    scale = inv_c * gamma_ref[...]                              # (1, C)
    shift = beta_ref[...] - mean_c * scale                      # (1, C)

    # ---- bottleneck 1x1 -> SiLU -> 1x1 + residual, tiled over H*W rows -------
    w1 = w1_ref[...]          # bf16
    w2 = w2_ref[...]          # bf16
    b1 = b1_ref[...]          # f32
    b2 = b2_ref[...]          # f32
    for ci in range(H // TH):
        r0 = ci * CH
        yc = yf[r0:r0 + CH, :] * scale + shift                  # (CH, C)  f32
        h1 = jnp.dot(yc.astype(jnp.bfloat16), w1,
                     preferred_element_type=jnp.float32) + b1   # (CH, 4C) f32
        h1 = h1 * jax.nn.sigmoid(h1)                            # SiLU in f32
        yb = jnp.dot(h1.astype(jnp.bfloat16), w2,
                     preferred_element_type=jnp.float32) + b2   # (CH, C)  f32
        res = x_ref[0, ci * TH:(ci + 1) * TH].astype(jnp.float32).reshape(CH, C)
        out = res + yb
        if transpose_out:
            # C < 128: store lane-dense as (C, H*W) slab
            o_ref[0, :, r0:r0 + CH] = jnp.transpose(out).astype(o_ref.dtype)
        else:
            # C >= 128: channels already lane-dense
            o_ref[0, ci * TH:(ci + 1) * TH] = out.reshape(TH, W, C).astype(o_ref.dtype)


def _pick_row_tile(H, W, target_rows=512):
    th = max(1, min(H, target_rows // max(W, 1)))
    while H % th:
        th -= 1
    return th


def _padded_bytes(shape, itemsize=4):
    s = list(shape)
    s[-1] = -(-s[-1] // _LANE) * _LANE
    if len(s) >= 2:
        s[-2] = -(-s[-2] // 8) * 8
    n = 1
    for d in s:
        n *= d
    return n * itemsize


def hyper_convnext_block(x_nchw, weights, params):
    """x_nchw: (B, C, H, W) f32; weights: (B, 49*C + C) f32 (hypernet output)."""
    B, C, H, W = x_nchw.shape
    G = C // min(32, C)
    Hid = params['w1'].shape[1]
    TH = _pick_row_tile(H, W)
    transpose_out = C < _LANE

    # one input-side transpose (channels -> lanes for the conv / GroupNorm)
    x = jnp.transpose(x_nchw, (0, 2, 3, 1))                     # (B, H, W, C)

    off = KER * KER * C
    wconv = weights[:, :off].reshape(B, C, KER, KER)            # 'b (o h w)'
    wconv = jnp.transpose(wconv, (0, 2, 3, 1))                  # (B, 7, 7, C)  (tiny)
    bconv = weights[:, off:off + C].reshape(B, 1, C)

    gamma = params['gamma'].reshape(1, C).astype(jnp.float32)
    beta = params['beta'].reshape(1, C).astype(jnp.float32)
    w1 = params['w1'].astype(jnp.bfloat16)                      # (C, 4C)  MXU bf16
    b1 = params['b1'].reshape(1, Hid).astype(jnp.float32)
    w2 = params['w2'].astype(jnp.bfloat16)                      # (4C, C)
    b2 = params['b2'].reshape(1, C).astype(jnp.float32)

    HP = H + 2 * PAD
    WP = -(-(_OW + W + PAD) // 8) * 8                           # sublane-aligned width

    if transpose_out:
        out_shape = jax.ShapeDtypeStruct((B, C, H * W), x.dtype)
        out_spec = pl.BlockSpec((1, C, H * W), lambda b: (b, 0, 0))
    else:
        out_shape = jax.ShapeDtypeStruct((B, H, W, C), x.dtype)
        out_spec = pl.BlockSpec((1, H, W, C), lambda b: (b, 0, 0, 0))

    # explicit VMEM budget from the chosen tiles (double-buffered I/O + scratch
    # + bounded bottleneck chunk), with headroom; clamped v7x-safe.
    est = (2 * _padded_bytes((H, W, C)) +
           2 * _padded_bytes(out_shape.shape[1:]) +
           _padded_bytes((HP, WP, C)) +
           2 * _padded_bytes((H * W, C)) +
           3 * _padded_bytes((TH * W, Hid)) +
           2 * _padded_bytes((C, Hid)) + 2 * _padded_bytes((Hid, C)))
    vmem_limit = int(min(64 * 2 ** 20, max(16 * 2 ** 20, 2 * est)))

    kernel = functools.partial(_block_kernel, H=H, W=W, C=C, G=G, TH=TH,
                               transpose_out=transpose_out)

    out = pl.pallas_call(
        kernel,
        out_shape=out_shape,
        grid_spec=pltpu.PrefetchScalarGridSpec(
            num_scalar_prefetch=0,
            grid=(B,),
            in_specs=[
                pl.BlockSpec((1, H, W, C), lambda b: (b, 0, 0, 0)),      # x
                pl.BlockSpec((1, KER, KER, C), lambda b: (b, 0, 0, 0)),  # conv w
                pl.BlockSpec((1, 1, C), lambda b: (b, 0, 0)),            # conv b
                pl.BlockSpec((1, C), lambda b: (0, 0)),                  # gamma
                pl.BlockSpec((1, C), lambda b: (0, 0)),                  # beta
                pl.BlockSpec((C, Hid), lambda b: (0, 0)),                # w1
                pl.BlockSpec((1, Hid), lambda b: (0, 0)),                # b1
                pl.BlockSpec((Hid, C), lambda b: (0, 0)),                # w2
                pl.BlockSpec((1, C), lambda b: (0, 0)),                  # b2
            ],
            out_specs=out_spec,
            scratch_shapes=[pltpu.VMEM((HP, WP, C), jnp.float32)],
        ),
        compiler_params=pltpu.CompilerParams(
            dimension_semantics=("parallel",),
            vmem_limit_bytes=vmem_limit),
    )(x, wconv, bconv, gamma, beta, w1, b1, w2, b2)

    if transpose_out:
        return out.reshape(B, C, H, W)                          # free reshape
    return jnp.transpose(out, (0, 3, 1, 2))


def reference(x_nchw, weights, params):
    """Pure-JAX f32 reference of the same forward pass (NCHW throughout)."""
    B, C, H, W = x_nchw.shape
    G = C // min(32, C)
    off = KER * KER * C
    wconv = weights[:, :off].reshape(B, C, KER, KER)
    bconv = weights[:, off:off + C]

    xp = jnp.pad(x_nchw, ((0, 0), (0, 0), (PAD, PAD), (PAD, PAD)))
    y = jnp.zeros((B, C, H, W), jnp.float32)
    for kh in range(KER):
        for kw in range(KER):
            y = y + xp[:, :, kh:kh + H, kw:kw + W] * wconv[:, :, kh, kw][:, :, None, None]
    y = y + bconv[:, :, None, None]

    yg = y.reshape(B, G, C // G, H, W)
    mean = yg.mean(axis=(2, 3, 4), keepdims=True)
    var = ((yg - mean) ** 2).mean(axis=(2, 3, 4), keepdims=True)
    yn = ((yg - mean) / jnp.sqrt(var + EPS)).reshape(B, C, H, W)
    yn = yn * params['gamma'][None, :, None, None] + params['beta'][None, :, None, None]

    t = jnp.einsum('bchw,cd->bdhw', yn, params['w1']) + params['b1'][None, :, None, None]
    t = t * jax.nn.sigmoid(t)
    t = jnp.einsum('bdhw,dc->bchw', t, params['w2']) + params['b2'][None, :, None, None]
    return x_nchw + t


if __name__ == "__main__":
    B, C, H, W = 2, 4, 16, 16          # mlp_input = mlp_output = 4
    Hid = 4 * C

    ks = jax.random.split(jax.random.PRNGKey(0), 9)
    x = jax.random.normal(ks[0], (B, C, H, W), jnp.float32)

    # Hypernet-generated weights, initialized like HyperConv2dDepthWise.ini_weights_
    w_part = jax.random.normal(ks[1], (B, KER * KER * C), jnp.float32) * np.sqrt(6.0 / (KER ** 2 + C))
    b_part = jax.random.normal(ks[2], (B, C), jnp.float32) * np.sqrt(1.0 / C)
    weights = jnp.concatenate([w_part, b_part], axis=1)   # (B, 49*C + C)

    params = {
        'gamma': 1.0 + 0.1 * jax.random.normal(ks[3], (C,), jnp.float32),
        'beta': 0.1 * jax.random.normal(ks[4], (C,), jnp.float32),
        'w1': jax.random.normal(ks[5], (C, Hid), jnp.float32) / np.sqrt(C),
        'b1': 0.1 * jax.random.normal(ks[6], (Hid,), jnp.float32),
        'w2': jax.random.normal(ks[7], (Hid, C), jnp.float32) / np.sqrt(Hid),
        'b2': 0.1 * jax.random.normal(ks[8], (C,), jnp.float32),
    }

    out = jax.block_until_ready(hyper_convnext_block(x, weights, params))
    ref = jax.block_until_ready(reference(x, weights, params))
    # tolerance accounts for bf16 inputs at the MXU (f32 accumulation / reference)
    np.testing.assert_allclose(np.asarray(out), np.asarray(ref), rtol=3e-2, atol=3e-2)
    print("KERNEL_OK")
</pallas_src>

<mosaic_0001>
module attributes {stable_mosaic.version = 11 : i64} {
  func.func @_block_kernel(%arg0: i32, %arg1: memref<1x16x16x4xf32, #tpu.memory_space<vmem>>, %arg2: memref<1x7x7x4xf32, #tpu.memory_space<vmem>>, %arg3: memref<1x1x4xf32, #tpu.memory_space<vmem>>, %arg4: memref<1x4xf32, #tpu.memory_space<vmem>>, %arg5: memref<1x4xf32, #tpu.memory_space<vmem>>, %arg6: memref<4x16xbf16, #tpu.memory_space<vmem>>, %arg7: memref<1x16xf32, #tpu.memory_space<vmem>>, %arg8: memref<16x4xbf16, #tpu.memory_space<vmem>>, %arg9: memref<1x4xf32, #tpu.memory_space<vmem>>, %arg10: memref<1x4x256xf32, #tpu.memory_space<vmem>>, %arg11: memref<22x32x4xf32, #tpu.memory_space<vmem>>) attributes {dimension_semantics = [#tpu.dimension_semantics<parallel>], iteration_bounds = array<i64: 2>, scalar_prefetch = 0 : i64, scratch_operands = 1 : i64, tpu.core_type = #tpu.core_type<tc>, window_params = [{transform_indices = @transform_0, window_bounds = array<i64: 1, 16, 16, 4>}, {transform_indices = @transform_1, window_bounds = array<i64: 1, 7, 7, 4>}, {transform_indices = @transform_2, window_bounds = array<i64: 1, 1, 4>}, {pipeline_mode = #tpu.pipeline_mode<synchronous>, transform_indices = @transform_3, window_bounds = array<i64: 1, 4>}, {pipeline_mode = #tpu.pipeline_mode<synchronous>, transform_indices = @transform_4, window_bounds = array<i64: 1, 4>}, {pipeline_mode = #tpu.pipeline_mode<synchronous>, transform_indices = @transform_5, window_bounds = array<i64: 4, 16>}, {pipeline_mode = #tpu.pipeline_mode<synchronous>, transform_indices = @transform_6, window_bounds = array<i64: 1, 16>}, {pipeline_mode = #tpu.pipeline_mode<synchronous>, transform_indices = @transform_7, window_bounds = array<i64: 16, 4>}, {pipeline_mode = #tpu.pipeline_mode<synchronous>, transform_indices = @transform_8, window_bounds = array<i64: 1, 4>}, {transform_indices = @transform_9, window_bounds = array<i64: 1, 4, 256>}]} {
    %cst = arith.constant 0.000000e+00 : f32
    %0 = vector.broadcast %cst : f32 to vector<22x32x4xf32>
    %c0 = arith.constant 0 : index
    %c0_0 = arith.constant 0 : index
    %c0_1 = arith.constant 0 : index
    %1 = vector.load %arg11[%c0, %c0_0, %c0_1] : memref<22x32x4xf32, #tpu.memory_space<vmem>>, vector<22x32x4xf32>
    tpu.vector_store %arg11[%c0, %c0_0, %c0_1], %0 {strides = array<i32>} : memref<22x32x4xf32, #tpu.memory_space<vmem>>, vector<22x32x4xf32>,
    %c0_2 = arith.constant 0 : index
    %c0_3 = arith.constant 0 : index
    %c0_4 = arith.constant 0 : index
    %c0_5 = arith.constant 0 : index
    %2 = vector.load %arg1[%c0_2, %c0_3, %c0_4, %c0_5] : memref<1x16x16x4xf32, #tpu.memory_space<vmem>>, vector<1x16x16x4xf32>
    %3 = vector.shape_cast %2 : vector<1x16x16x4xf32> to vector<16x16x4xf32>
    %c3 = arith.constant 3 : index
    %c8 = arith.constant 8 : index
    %c0_6 = arith.constant 0 : index
    %4 = vector.load %arg11[%c3, %c8, %c0_6] : memref<22x32x4xf32, #tpu.memory_space<vmem>>, vector<16x16x4xf32>
    tpu.vector_store %arg11[%c3, %c8, %c0_6], %3 {strides = array<i32>} : memref<22x32x4xf32, #tpu.memory_space<vmem>>, vector<16x16x4xf32>,
    %cst_7 = arith.constant 0.000000e+00 : f32
    %5 = vector.broadcast %cst_7 : f32 to vector<16x16x4xf32>
    %c0_8 = arith.constant 0 : index
    %c5 = arith.constant 5 : index
    %c0_9 = arith.constant 0 : index
    %6 = vector.load %arg11[%c0_8, %c5, %c0_9] : memref<22x32x4xf32, #tpu.memory_space<vmem>>, vector<16x16x4xf32>
    %c0_10 = arith.constant 0 : index
    %c0_11 = arith.constant 0 : index
    %c0_12 = arith.constant 0 : index
    %c0_13 = arith.constant 0 : index
    %7 = vector.load %arg2[%c0_10, %c0_11, %c0_12, %c0_13] : memref<1x7x7x4xf32, #tpu.memory_space<vmem>>, vector<1x1x1x4xf32>
    %8 = vector.shape_cast %7 : vector<1x1x1x4xf32> to vector<4xf32>
    %9 = vector.shape_cast %8 : vector<4xf32> to vector<1x1x4xf32>
    %10 = vector.broadcast %9 : vector<1x1x4xf32> to vector<16x16x4xf32>
    %11 = arith.mulf %6, %10 : vector<16x16x4xf32>
    %12 = arith.addf %5, %11 : vector<16x16x4xf32>
    %c0_14 = arith.constant 0 : index
    %c6 = arith.constant 6 : index
    %c0_15 = arith.constant 0 : index
    %13 = vector.load %arg11[%c0_14, %c6, %c0_15] : memref<22x32x4xf32, #tpu.memory_space<vmem>>, vector<16x16x4xf32>
    %c0_16 = arith.constant 0 : index
    %c0_17 = arith.constant 0 : index
    %c1 = arith.constant 1 : index
    %c0_18 = arith.constant 0 : index
    %14 = vector.load %arg2[%c0_16, %c0_17, %c1, %c0_18] : memref<1x7x7x4xf32, #tpu.memory_space<vmem>>, vector<1x1x1x4xf32>
    %15 = vector.shape_cast %14 : vector<1x1x1x4xf32> to vector<4xf32>
    %16 = vector.shape_cast %15 : vector<4xf32> to vector<1x1x4xf32>
    %17 = vector.broadcast %16 : vector<1x1x4xf32> to vector<16x16x4xf32>
    %18 = arith.mulf %13, %17 : vector<16x16x4xf32>
    %19 = arith.addf %12, %18 : vector<16x16x4xf32>
    %c0_19 = arith.constant 0 : index
    %c7 = arith.constant 7 : index
    %c0_20 = arith.constant 0 : index
    %20 = vector.load %arg11[%c0_19, %c7, %c0_20] : memref<22x32x4xf32, #tpu.memory_space<vmem>>, vector<16x16x4xf32>
    %c0_21 = arith.constant 0 : index
    %c0_22 = arith.constant 0 : index
    %c2 = arith.constant 2 : index
    %c0_23 = arith.constant 0 : index
    %21 = vector.load %arg2[%c0_21, %c0_22, %c2, %c0_23] : memref<1x7x7x4xf32, #tpu.memory_space<vmem>>, vector<1x1x1x4xf32>
    %22 = vector.shape_cast %21 : vector<1x1x1x4xf32> to vector<4xf32>
    %23 = vector.shape_cast %22 : vector<4xf32> to vector<1x1x4xf32>
    %24 = vector.broadcast %23 : vector<1x1x4xf32> to vector<16x16x4xf32>
    %25 = arith.mulf %20, %24 : vector<16x16x4xf32>
    %26 = arith.addf %19, %25 : vector<16x16x4xf32>
    %c0_24 = arith.constant 0 : index
    %c8_25 = arith.constant 8 : index
    %c0_26 = arith.constant 0 : index
    %27 = vector.load %arg11[%c0_24, %c8_25, %c0_26] : memref<22x32x4xf32, #tpu.memory_space<vmem>>, vector<16x16x4xf32>
    %c0_27 = arith.constant 0 : index
    %c0_28 = arith.constant 0 : index
    %c3_29 = arith.constant 3 : index
    %c0_30 = arith.constant 0 : index
    %28 = vector.load %arg2[%c0_27, %c0_28, %c3_29, %c0_30] : memref<1x7x7x4xf32, #tpu.memory_space<vmem>>, vector<1x1x1x4xf32>
    %29 = vector.shape_cast %28 : vector<1x1x1x4xf32> to vector<4xf32>
    %30 = vector.shape_cast %29 : vector<4xf32> to vector<1x1x4xf32>
    %31 = vector.broadcast %30 : vector<1x1x4xf32> to vector<16x16x4xf32>
    %32 = arith.mulf %27, %31 : vector<16x16x4xf32>
    %33 = arith.addf %26, %32 : vector<16x16x4xf32>
    %c0_31 = arith.constant 0 : index
    %c9 = arith.constant 9 : index
    %c0_32 = arith.constant 0 : index
    %34 = vector.load %arg11[%c0_31, %c9, %c0_32] : memref<22x32x4xf32, #tpu.memory_space<vmem>>, vector<16x16x4xf32>
    %c0_33 = arith.constant 0 : index
    %c0_34 = arith.constant 0 : index
    %c4 = arith.constant 4 : index
    %c0_35 = arith.constant 0 : index
    %35 = vector.load %arg2[%c0_33, %c0_34, %c4, %c0_35] : memref<1x7x7x4xf32, #tpu.memory_space<vmem>>, vector<1x1x1x4xf32>
    %36 = vector.shape_cast %35 : vector<1x1x1x4xf32> to vector<4xf32>
    %37 = vector.shape_cast %36 : vector<4xf32> to vector<1x1x4xf32>
    %38 = vector.broadcast %37 : vector<1x1x4xf32> to vector<16x16x4xf32>
    %39 = arith.mulf %34, %38 : vector<16x16x4xf32>
    %40 = arith.addf %33, %39 : vector<16x16x4xf32>
    %c0_36 = arith.constant 0 : index
    %c10 = arith.constant 10 : index
    %c0_37 = arith.constant 0 : index
    %41 = vector.load %arg11[%c0_36, %c10, %c0_37] : memref<22x32x4xf32, #tpu.memory_space<vmem>>, vector<16x16x4xf32>
    %c0_38 = arith.constant 0 : index
    %c0_39 = arith.constant 0 : index
    %c5_40 = arith.constant 5 : index
    %c0_41 = arith.constant 0 : index
    %42 = vector.load %arg2[%c0_38, %c0_39, %c5_40, %c0_41] : memref<1x7x7x4xf32, #tpu.memory_space<vmem>>, vector<1x1x1x4xf32>
    %43 = vector.shape_cast %42 : vector<1x1x1x4xf32> to vector<4xf32>
    %44 = vector.shape_cast %43 : vector<4xf32> to vector<1x1x4xf32>
    %45 = vector.broadcast %44 : vector<1x1x4xf32> to vector<16x16x4xf32>
    %46 = arith.mulf %41, %45 : vector<16x16x4xf32>
    %47 = arith.addf %40, %46 : vector<16x16x4xf32>
    %c0_42 = arith.constant 0 : index
    %c11 = arith.constant 11 : index
    %c0_43 = arith.constant 0 : index
    %48 = vector.load %arg11[%c0_42, %c11, %c0_43] : memref<22x32x4xf32, #tpu.memory_space<vmem>>, vector<16x16x4xf32>
    %c0_44 = arith.constant 0 : index
    %c0_45 = arith.constant 0 : index
    %c6_46 = arith.constant 6 : index
    %c0_47 = arith.constant 0 : index
    %49 = vector.load %arg2[%c0_44, %c0_45, %c6_46, %c0_47] : memref<1x7x7x4xf32, #tpu.memory_space<vmem>>, vector<1x1x1x4xf32>
    %50 = vector.shape_cast %49 : vector<1x1x1x4xf32> to vector<4xf32>
    %51 = vector.shape_cast %50 : vector<4xf32> to vector<1x1x4xf32>
    %52 = vector.broadcast %51 : vector<1x1x4xf32> to vector<16x16x4xf32>
    %53 = arith.mulf %48, %52 : vector<16x16x4xf32>
    %54 = arith.addf %47, %53 : vector<16x16x4xf32>
    %c1_48 = arith.constant 1 : index
    %c5_49 = arith.constant 5 : index
    %c0_50 = arith.constant 0 : index
    %55 = vector.load %arg11[%c1_48, %c5_49, %c0_50] : memref<22x32x4xf32, #tpu.memory_space<vmem>>, vector<16x16x4xf32>
    %c0_51 = arith.constant 0 : index
    %c1_52 = arith.constant 1 : index
    %c0_53 = arith.constant 0 : index
    %c0_54 = arith.constant 0 : index
    %56 = vector.load %arg2[%c0_51, %c1_52, %c0_53, %c0_54] : memref<1x7x7x4xf32, #tpu.memory_space<vmem>>, vector<1x1x1x4xf32>
    %57 = vector.shape_cast %56 : vector<1x1x1x4xf32> to vector<4xf32>
    %58 = vector.shape_cast %57 : vector<4xf32> to vector<1x1x4xf32>
    %59 = vector.broadcast %58 : vector<1x1x4xf32> to vector<16x16x4xf32>
    %60 = arith.mulf %55, %59 : vector<16x16x4xf32>
    %61 = arith.addf %54, %60 : vector<16x16x4xf32>
    %c1_55 = arith.constant 1 : index
    %c6_56 = arith.constant 6 : index
    %c0_57 = arith.constant 0 : index
    %62 = vector.load %arg11[%c1_55, %c6_56, %c0_57] : memref<22x32x4xf32, #tpu.memory_space<vmem>>, vector<16x16x4xf32>
    %c0_58 = arith.constant 0 : index
    %c1_59 = arith.constant 1 : index
    %c1_60 = arith.constant 1 : index
    %c0_61 = arith.constant 0 : index
    %63 = vector.load %arg2[%c0_58, %c1_59, %c1_60, %c0_61] : memref<1x7x7x4xf32, #tpu.memory_space<vmem>>, vector<1x1x1x4xf32>
    %64 = vector.shape_cast %63 : vector<1x1x1x4xf32> to vector<4xf32>
    %65 = vector.shape_cast %64 : vector<4xf32> to vector<1x1x4xf32>
    %66 = vector.broadcast %65 : vector<1x1x4xf32> to vector<16x16x4xf32>
    %67 = arith.mulf %62, %66 : vector<16x16x4xf32>
    %68 = arith.addf %61, %67 : vector<16x16x4xf32>
    %c1_62 = arith.constant 1 : index
    %c7_63 = arith.constant 7 : index
    %c0_64 = arith.constant 0 : index
    %69 = vector.load %arg11[%c1_62, %c7_63, %c0_64] : memref<22x32x4xf32, #tpu.memory_space<vmem>>, vector<16x16x4xf32>
    %c0_65 = arith.constant 0 : index
    %c1_66 = arith.constant 1 : index
    %c2_67 = arith.constant 2 : index
    %c0_68 = arith.constant 0 : index
    %70 = vector.load %arg2[%c0_65, %c1_66, %c2_67, %c0_68] : memref<1x7x7x4xf32, #tpu.memory_space<vmem>>, vector<1x1x1x4xf32>
    %71 = vector.shape_cast %70 : vector<1x1x1x4xf32> to vector<4xf32>
    %72 = vector.shape_cast %71 : vector<4xf32> to vector<1x1x4xf32>
    %73 = vector.broadcast %72 : vector<1x1x4xf32> to vector<16x16x4xf32>
    %74 = arith.mulf %69, %73 : vector<16x16x4xf32>
    %75 = arith.addf %68, %74 : vector<16x16x4xf32>
    %c1_69 = arith.constant 1 : index
    %c8_70 = arith.constant 8 : index
    %c0_71 = arith.constant 0 : index
    %76 = vector.load %arg11[%c1_69, %c8_70, %c0_71] : memref<22x32x4xf32, #tpu.memory_space<vmem>>, vector<16x16x4xf32>
    %c0_72 = arith.constant 0 : index
    %c1_73 = arith.constant 1 : index
    %c3_74 = arith.constant 3 : index
    %c0_75 = arith.constant 0 : index
    %77 = vector.load %arg2[%c0_72, %c1_73, %c3_74, %c0_75] : memref<1x7x7x4xf32, #tpu.memory_space<vmem>>, vector<1x1x1x4xf32>
    %78 = vector.shape_cast %77 : vector<1x1x1x4xf32> to vector<4xf32>
    %79 = vector.shape_cast %78 : vector<4xf32> to vector<1x1x4xf32>
    %80 = vector.broadcast %79 : vector<1x1x4xf32> to vector<16x16x4xf32>
    %81 = arith.mulf %76, %80 : vector<16x16x4xf32>
    %82 = arith.addf %75, %81 : vector<16x16x4xf32>
    %c1_76 = arith.constant 1 : index
    %c9_77 = arith.constant 9 : index
    %c0_78 = arith.constant 0 : index
    %83 = vector.load %arg11[%c1_76, %c9_77, %c0_78] : memref<22x32x4xf32, #tpu.memory_space<vmem>>, vector<16x16x4xf32>
    %c0_79 = arith.constant 0 : index
    %c1_80 = arith.constant 1 : index
    %c4_81 = arith.constant 4 : index
    %c0_82 = arith.constant 0 : index
    %84 = vector.load %arg2[%c0_79, %c1_80, %c4_81, %c0_82] : memref<1x7x7x4xf32, #tpu.memory_space<vmem>>, vector<1x1x1x4xf32>
    %85 = vector.shape_cast %84 : vector<1x1x1x4xf32> to vector<4xf32>
    %86 = vector.shape_cast %85 : vector<4xf32> to vector<1x1x4xf32>
    %87 = vector.broadcast %86 : vector<1x1x4xf32> to vector<16x16x4xf32>
    %88 = arith.mulf %83, %87 : vector<16x16x4xf32>
    %89 = arith.addf %82, %88 : vector<16x16x4xf32>
    %c1_83 = arith.constant 1 : index
    %c10_84 = arith.constant 10 : index
    %c0_85 = arith.constant 0 : index
    %90 = vector.load %arg11[%c1_83, %c10_84, %c0_85] : memref<22x32x4xf32, #tpu.memory_space<vmem>>, vector<16x16x4xf32>
    %c0_86 = arith.constant 0 : index
    %c1_87 = arith.constant 1 : index
    %c5_88 = arith.constant 5 : index
    %c0_89 = arith.constant 0 : index
    %91 = vector.load %arg2[%c0_86, %c1_87, %c5_88, %c0_89] : memref<1x7x7x4xf32, #tpu.memory_space<vmem>>, vector<1x1x1x4xf32>
    %92 = vector.shape_cast %91 : vector<1x1x1x4xf32> to vector<4xf32>
    %93 = vector.shape_cast %92 : vector<4xf32> to vector<1x1x4xf32>
    %94 = vector.broadcast %93 : vector<1x1x4xf32> to vector<16x16x4xf32>
    %95 = arith.mulf %90, %94 : vector<16x16x4xf32>
    %96 = arith.addf %89, %95 : vector<16x16x4xf32>
    %c1_90 = arith.constant 1 : index
    %c11_91 = arith.constant 11 : index
    %c0_92 = arith.constant 0 : index
    %97 = vector.load %arg11[%c1_90, %c11_91, %c0_92] : memref<22x32x4xf32, #tpu.memory_space<vmem>>, vector<16x16x4xf32>
    %c0_93 = arith.constant 0 : index
    %c1_94 = arith.constant 1 : index
    %c6_95 = arith.constant 6 : index
    %c0_96 = arith.constant 0 : index
    %98 = vector.load %arg2[%c0_93, %c1_94, %c6_95, %c0_96] : memref<1x7x7x4xf32, #tpu.memory_space<vmem>>, vector<1x1x1x4xf32>
    %99 = vector.shape_cast %98 : vector<1x1x1x4xf32> to vector<4xf32>
    %100 = vector.shape_cast %99 : vector<4xf32> to vector<1x1x4xf32>
    %101 = vector.broadcast %100 : vector<1x1x4xf32> to vector<16x16x4xf32>
    %102 = arith.mulf %97, %101 : vector<16x16x4xf32>
    %103 = arith.addf %96, %102 : vector<16x16x4xf32>
    %c2_97 = arith.constant 2 : index
    %c5_98 = arith.constant 5 : index
    %c0_99 = arith.constant 0 : index
    %104 = vector.load %arg11[%c2_97, %c5_98, %c0_99] : memref<22x32x4xf32, #tpu.memory_space<vmem>>, vector<16x16x4xf32>
    %c0_100 = arith.constant 0 : index
    %c2_101 = arith.constant 2 : index
    %c0_102 = arith.constant 0 : index
    %c0_103 = arith.constant 0 : index
    %105 = vector.load %arg2[%c0_100, %c2_101, %c0_102, %c0_103] : memref<1x7x7x4xf32, #tpu.memory_space<vmem>>, vector<1x1x1x4xf32>
    %106 = vector.shape_cast %105 : vector<1x1x1x4xf32> to vector<4xf32>
    %107 = vector.shape_cast %106 : vector<4xf32> to vector<1x1x4xf32>
    %108 = vector.broadcast %107 : vector<1x1x4xf32> to vector<16x16x4xf32>
    %109 = arith.mulf %104, %108 : vector<16x16x4xf32>
    %110 = arith.addf %103, %109 : vector<16x16x4xf32>
    %c2_104 = arith.constant 2 : index
    %c6_105 = arith.constant 6 : index
    %c0_106 = arith.constant 0 : index
    %111 = vector.load %arg11[%c2_104, %c6_105, %c0_106] : memref<22x32x4xf32, #tpu.memory_space<vmem>>, vector<16x16x4xf32>
    %c0_107 = arith.constant 0 : index
    %c2_108 = arith.constant 2 : index
    %c1_109 = arith.constant 1 : index
    %c0_110 = arith.constant 0 : index
    %112 = vector.load %arg2[%c0_107, %c2_108, %c1_109, %c0_110] : memref<1x7x7x4xf32, #tpu.memory_space<vmem>>, vector<1x1x1x4xf32>
    %113 = vector.shape_cast %112 : vector<1x1x1x4xf32> to vector<4xf32>
    %114 = vector.shape_cast %113 : vector<4xf32> to vector<1x1x4xf32>
    %115 = vector.broadcast %114 : vector<1x1x4xf32> to vector<16x16x4xf32>
    %116 = arith.mulf %111, %115 : vector<16x16x4xf32>
    %117 = arith.addf %110, %116 : vector<16x16x4xf32>
    %c2_111 = arith.constant 2 : index
    %c7_112 = arith.constant 7 : index
    %c0_113 = arith.constant 0 : index
    %118 = vector.load %arg11[%c2_111, %c7_112, %c0_113] : memref<22x32x4xf32, #tpu.memory_space<vmem>>, vector<16x16x4xf32>
    %c0_114 = arith.constant 0 : index
    %c2_115 = arith.constant 2 : index
    %c2_116 = arith.constant 2 : index
    %c0_117 = arith.constant 0 : index
    %119 = vector.load %arg2[%c0_114, %c2_115, %c2_116, %c0_117] : memref<1x7x7x4xf32, #tpu.memory_space<vmem>>, vector<1x1x1x4xf32>
    %120 = vector.shape_cast %119 : vector<1x1x1x4xf32> to vector<4xf32>
    %121 = vector.shape_cast %120 : vector<4xf32> to vector<1x1x4xf32>
    %122 = vector.broadcast %121 : vector<1x1x4xf32> to vector<16x16x4xf32>
    %123 = arith.mulf %118, %122 : vector<16x16x4xf32>
    %124 = arith.addf %117, %123 : vector<16x16x4xf32>
    %c2_118 = arith.constant 2 : index
    %c8_119 = arith.constant 8 : index
    %c0_120 = arith.constant 0 : index
    %125 = vector.load %arg11[%c2_118, %c8_119, %c0_120] : memref<22x32x4xf32, #tpu.memory_space<vmem>>, vector<16x16x4xf32>
    %c0_121 = arith.constant 0 : index
    %c2_122 = arith.constant 2 : index
    %c3_123 = arith.constant 3 : index
    %c0_124 = arith.constant 0 : index
    %126 = vector.load %arg2[%c0_121, %c2_122, %c3_123, %c0_124] : memref<1x7x7x4xf32, #tpu.memory_space<vmem>>, vector<1x1x1x4xf32>
    %127 = vector.shape_cast %126 : vector<1x1x1x4xf32> to vector<4xf32>
    %128 = vector.shape_cast %127 : vector<4xf32> to vector<1x1x4xf32>
    %129 = vector.broadcast %128 : vector<1x1x4xf32> to vector<16x16x4xf32>
    %130 = arith.mulf %125, %129 : vector<16x16x4xf32>
    %131 = arith.addf %124, %130 : vector<16x16x4xf32>
    %c2_125 = arith.constant 2 : index
    %c9_126 = arith.constant 9 : index
    %c0_127 = arith.constant 0 : index
    %132 = vector.load %arg11[%c2_125, %c9_126, %c0_127] : memref<22x32x4xf32, #tpu.memory_space<vmem>>, vector<16x16x4xf32>
    %c0_128 = arith.constant 0 : index
    %c2_129 = arith.constant 2 : index
    %c4_130 = arith.constant 4 : index
    %c0_131 = arith.constant 0 : index
    %133 = vector.load %arg2[%c0_128, %c2_129, %c4_130, %c0_131] : memref<1x7x7x4xf32, #tpu.memory_space<vmem>>, vector<1x1x1x4xf32>
    %134 = vector.shape_cast %133 : vector<1x1x1x4xf32> to vector<4xf32>
    %135 = vector.shape_cast %134 : vector<4xf32> to vector<1x1x4xf32>
    %136 = vector.broadcast %135 : vector<1x1x4xf32> to vector<16x16x4xf32>
    %137 = arith.mulf %132, %136 : vector<16x16x4xf32>
    %138 = arith.addf %131, %137 : vector<16x16x4xf32>
    %c2_132 = arith.constant 2 : index
    %c10_133 = arith.constant 10 : index
    %c0_134 = arith.constant 0 : index
    %139 = vector.load %arg11[%c2_132, %c10_133, %c0_134] : memref<22x32x4xf32, #tpu.memory_space<vmem>>, vector<16x16x4xf32>
    %c0_135 = arith.constant 0 : index
    %c2_136 = arith.constant 2 : index
    %c5_137 = arith.constant 5 : index
    %c0_138 = arith.constant 0 : index
    %140 = vector.load %arg2[%c0_135, %c2_136, %c5_137, %c0_138] : memref<1x7x7x4xf32, #tpu.memory_space<vmem>>, vector<1x1x1x4xf32>
    %141 = vector.shape_cast %140 : vector<1x1x1x4xf32> to vector<4xf32>
    %142 = vector.shape_cast %141 : vector<4xf32> to vector<1x1x4xf32>
    %143 = vector.broadcast %142 : vector<1x1x4xf32> to vector<16x16x4xf32>
    %144 = arith.mulf %139, %143 : vector<16x16x4xf32>
    %145 = arith.addf %138, %144 : vector<16x16x4xf32>
    %c2_139 = arith.constant 2 : index
    %c11_140 = arith.constant 11 : index
    %c0_141 = arith.constant 0 : index
    %146 = vector.load %arg11[%c2_139, %c11_140, %c0_141] : memref<22x32x4xf32, #tpu.memory_space<vmem>>, vector<16x16x4xf32>
    %c0_142 = arith.constant 0 : index
    %c2_143 = arith.constant 2 : index
    %c6_144 = arith.constant 6 : index
    %c0_145 = arith.constant 0 : index
    %147 = vector.load %arg2[%c0_142, %c2_143, %c6_144, %c0_145] : memref<1x7x7x4xf32, #tpu.memory_space<vmem>>, vector<1x1x1x4xf32>
    %148 = vector.shape_cast %147 : vector<1x1x1x4xf32> to vector<4xf32>
    %149 = vector.shape_cast %148 : vector<4xf32> to vector<1x1x4xf32>
    %150 = vector.broadcast %149 : vector<1x1x4xf32> to vector<16x16x4xf32>
    %151 = arith.mulf %146, %150 : vector<16x16x4xf32>
    %152 = arith.addf %145, %151 : vector<16x16x4xf32>
    %c3_146 = arith.constant 3 : index
    %c5_147 = arith.constant 5 : index
    %c0_148 = arith.constant 0 : index
    %153 = vector.load %arg11[%c3_146, %c5_147, %c0_148] : memref<22x32x4xf32, #tpu.memory_space<vmem>>, vector<16x16x4xf32>
    %c0_149 = arith.constant 0 : index
    %c3_150 = arith.constant 3 : index
    %c0_151 = arith.constant 0 : index
    %c0_152 = arith.constant 0 : index
    %154 = vector.load %arg2[%c0_149, %c3_150, %c0_151, %c0_152] : memref<1x7x7x4xf32, #tpu.memory_space<vmem>>, vector<1x1x1x4xf32>
    %155 = vector.shape_cast %154 : vector<1x1x1x4xf32> to vector<4xf32>
    %156 = vector.shape_cast %155 : vector<4xf32> to vector<1x1x4xf32>
    %157 = vector.broadcast %156 : vector<1x1x4xf32> to vector<16x16x4xf32>
    %158 = arith.mulf %153, %157 : vector<16x16x4xf32>
    %159 = arith.addf %152, %158 : vector<16x16x4xf32>
    %c3_153 = arith.constant 3 : index
    %c6_154 = arith.constant 6 : index
    %c0_155 = arith.constant 0 : index
    %160 = vector.load %arg11[%c3_153, %c6_154, %c0_155] : memref<22x32x4xf32, #tpu.memory_space<vmem>>, vector<16x16x4xf32>
    %c0_156 = arith.constant 0 : index
    %c3_157 = arith.constant 3 : index
    %c1_158 = arith.constant 1 : index
    %c0_159 = arith.constant 0 : index
    %161 = vector.load %arg2[%c0_156, %c3_157, %c1_158, %c0_159] : memref<1x7x7x4xf32, #tpu.memory_space<vmem>>, vector<1x1x1x4xf32>
    %162 = vector.shape_cast %161 : vector<1x1x1x4xf32> to vector<4xf32>
    %163 = vector.shape_cast %162 : vector<4xf32> to vector<1x1x4xf32>
    %164 = vector.broadcast %163 : vector<1x1x4xf32> to vector<16x16x4xf32>
    %165 = arith.mulf %160, %164 : vector<16x16x4xf32>
    %166 = arith.addf %159, %165 : vector<16x16x4xf32>
    %c3_160 = arith.constant 3 : index
    %c7_161 = arith.constant 7 : index
    %c0_162 = arith.constant 0 : index
    %167 = vector.load %arg11[%c3_160, %c7_161, %c0_162] : memref<22x32x4xf32, #tpu.memory_space<vmem>>, vector<16x16x4xf32>
    %c0_163 = arith.constant 0 : index
    %c3_164 = arith.constant 3 : index
    %c2_165 = arith.constant 2 : index
    %c0_166 = arith.constant 0 : index
    %168 = vector.load %arg2[%c0_163, %c3_164, %c2_165, %c0_166] : memref<1x7x7x4xf32, #tpu.memory_space<vmem>>, vector<1x1x1x4xf32>
    %169 = vector.shape_cast %168 : vector<1x1x1x4xf32> to vector<4xf32>
    %170 = vector.shape_cast %169 : vector<4xf32> to vector<1x1x4xf32>
    %171 = vector.broadcast %170 : vector<1x1x4xf32> to vector<16x16x4xf32>
    %172 = arith.mulf %167, %171 : vector<16x16x4xf32>
    %173 = arith.addf %166, %172 : vector<16x16x4xf32>
    %c3_167 = arith.constant 3 : index
    %c8_168 = arith.constant 8 : index
    %c0_169 = arith.constant 0 : index
    %174 = vector.load %arg11[%c3_167, %c8_168, %c0_169] : memref<22x32x4xf32, #tpu.memory_space<vmem>>, vector<16x16x4xf32>
    %c0_170 = arith.constant 0 : index
    %c3_171 = arith.constant 3 : index
    %c3_172 = arith.constant 3 : index
    %c0_173 = arith.constant 0 : index
    %175 = vector.load %arg2[%c0_170, %c3_171, %c3_172, %c0_173] : memref<1x7x7x4xf32, #tpu.memory_space<vmem>>, vector<1x1x1x4xf32>
    %176 = vector.shape_cast %175 : vector<1x1x1x4xf32> to vector<4xf32>
    %177 = vector.shape_cast %176 : vector<4xf32> to vector<1x1x4xf32>
    %178 = vector.broadcast %177 : vector<1x1x4xf32> to vector<16x16x4xf32>
    %179 = arith.mulf %174, %178 : vector<16x16x4xf32>
    %180 = arith.addf %173, %179 : vector<16x16x4xf32>
    %c3_174 = arith.constant 3 : index
    %c9_175 = arith.constant 9 : index
    %c0_176 = arith.constant 0 : index
    %181 = vector.load %arg11[%c3_174, %c9_175, %c0_176] : memref<22x32x4xf32, #tpu.memory_space<vmem>>, vector<16x16x4xf32>
    %c0_177 = arith.constant 0 : index
    %c3_178 = arith.constant 3 : index
    %c4_179 = arith.constant 4 : index
    %c0_180 = arith.constant 0 : index
    %182 = vector.load %arg2[%c0_177, %c3_178, %c4_179, %c0_180] : memref<1x7x7x4xf32, #tpu.memory_space<vmem>>, vector<1x1x1x4xf32>
    %183 = vector.shape_cast %182 : vector<1x1x1x4xf32> to vector<4xf32>
    %184 = vector.shape_cast %183 : vector<4xf32> to vector<1x1x4xf32>
    %185 = vector.broadcast %184 : vector<1x1x4xf32> to vector<16x16x4xf32>
    %186 = arith.mulf %181, %185 : vector<16x16x4xf32>
    %187 = arith.addf %180, %186 : vector<16x16x4xf32>
    %c3_181 = arith.constant 3 : index
    %c10_182 = arith.constant 10 : index
    %c0_183 = arith.constant 0 : index
    %188 = vector.load %arg11[%c3_181, %c10_182, %c0_183] : memref<22x32x4xf32, #tpu.memory_space<vmem>>, vector<16x16x4xf32>
    %c0_184 = arith.constant 0 : index
    %c3_185 = arith.constant 3 : index
    %c5_186 = arith.constant 5 : index
    %c0_187 = arith.constant 0 : index
    %189 = vector.load %arg2[%c0_184, %c3_185, %c5_186, %c0_187] : memref<1x7x7x4xf32, #tpu.memory_space<vmem>>, vector<1x1x1x4xf32>
    %190 = vector.shape_cast %189 : vector<1x1x1x4xf32> to vector<4xf32>
    %191 = vector.shape_cast %190 : vector<4xf32> to vector<1x1x4xf32>
    %192 = vector.broadcast %191 : vector<1x1x4xf32> to vector<16x16x4xf32>
    %193 = arith.mulf %188, %192 : vector<16x16x4xf32>
    %194 = arith.addf %187, %193 : vector<16x16x4xf32>
    %c3_188 = arith.constant 3 : index
    %c11_189 = arith.constant 11 : index
    %c0_190 = arith.constant 0 : index
    %195 = vector.load %arg11[%c3_188, %c11_189, %c0_190] : memref<22x32x4xf32, #tpu.memory_space<vmem>>, vector<16x16x4xf32>
    %c0_191 = arith.constant 0 : index
    %c3_192 = arith.constant 3 : index
    %c6_193 = arith.constant 6 : index
    %c0_194 = arith.constant 0 : index
    %196 = vector.load %arg2[%c0_191, %c3_192, %c6_193, %c0_194] : memref<1x7x7x4xf32, #tpu.memory_space<vmem>>, vector<1x1x1x4xf32>
    %197 = vector.shape_cast %196 : vector<1x1x1x4xf32> to vector<4xf32>
    %198 = vector.shape_cast %197 : vector<4xf32> to vector<1x1x4xf32>
    %199 = vector.broadcast %198 : vector<1x1x4xf32> to vector<16x16x4xf32>
    %200 = arith.mulf %195, %199 : vector<16x16x4xf32>
    %201 = arith.addf %194, %200 : vector<16x16x4xf32>
    %c4_195 = arith.constant 4 : index
    %c5_196 = arith.constant 5 : index
    %c0_197 = arith.constant 0 : index
    %202 = vector.load %arg11[%c4_195, %c5_196, %c0_197] : memref<22x32x4xf32, #tpu.memory_space<vmem>>, vector<16x16x4xf32>
    %c0_198 = arith.constant 0 : index
    %c4_199 = arith.constant 4 : index
    %c0_200 = arith.constant 0 : index
    %c0_201 = arith.constant 0 : index
    %203 = vector.load %arg2[%c0_198, %c4_199, %c0_200, %c0_201] : memref<1x7x7x4xf32, #tpu.memory_space<vmem>>, vector<1x1x1x4xf32>
    %204 = vector.shape_cast %203 : vector<1x1x1x4xf32> to vector<4xf32>
    %205 = vector.shape_cast %204 : vector<4xf32> to vector<1x1x4xf32>
    %206 = vector.broadcast %205 : vector<1x1x4xf32> to vector<16x16x4xf32>
    %207 = arith.mulf %202, %206 : vector<16x16x4xf32>
    %208 = arith.addf %201, %207 : vector<16x16x4xf32>
    %c4_202 = arith.constant 4 : index
    %c6_203 = arith.constant 6 : index
    %c0_204 = arith.constant 0 : index
    %209 = vector.load %arg11[%c4_202, %c6_203, %c0_204] : memref<22x32x4xf32, #tpu.memory_space<vmem>>, vector<16x16x4xf32>
    %c0_205 = arith.constant 0 : index
    %c4_206 = arith.constant 4 : index
    %c1_207 = arith.constant 1 : index
    %c0_208 = arith.constant 0 : index
    %210 = vector.load %arg2[%c0_205, %c4_206, %c1_207, %c0_208] : memref<1x7x7x4xf32, #tpu.memory_space<vmem>>, vector<1x1x1x4xf32>
    %211 = vector.shape_cast %210 : vector<1x1x1x4xf32> to vector<4xf32>
    %212 = vector.shape_cast %211 : vector<4xf32> to vector<1x1x4xf32>
    %213 = vector.broadcast %212 : vector<1x1x4xf32> to vector<16x16x4xf32>
    %214 = arith.mulf %209, %213 : vector<16x16x4xf32>
    %215 = arith.addf %208, %214 : vector<16x16x4xf32>
    %c4_209 = arith.constant 4 : index
    %c7_210 = arith.constant 7 : index
    %c0_211 = arith.constant 0 : index
    %216 = vector.load %arg11[%c4_209, %c7_210, %c0_211] : memref<22x32x4xf32, #tpu.memory_space<vmem>>, vector<16x16x4xf32>
    %c0_212 = arith.constant 0 : index
    %c4_213 = arith.constant 4 : index
    %c2_214 = arith.constant 2 : index
    %c0_215 = arith.constant 0 : index
    %217 = vector.load %arg2[%c0_212, %c4_213, %c2_214, %c0_215] : memref<1x7x7x4xf32, #tpu.memory_space<vmem>>, vector<1x1x1x4xf32>
    %218 = vector.shape_cast %217 : vector<1x1x1x4xf32> to vector<4xf32>
    %219 = vector.shape_cast %218 : vector<4xf32> to vector<1x1x4xf32>
    %220 = vector.broadcast %219 : vector<1x1x4xf32> to vector<16x16x4xf32>
    %221 = arith.mulf %216, %220 : vector<16x16x4xf32>
    %222 = arith.addf %215, %221 : vector<16x16x4xf32>
    %c4_216 = arith.constant 4 : index
    %c8_217 = arith.constant 8 : index
    %c0_218 = arith.constant 0 : index
    %223 = vector.load %arg11[%c4_216, %c8_217, %c0_218] : memref<22x32x4xf32, #tpu.memory_space<vmem>>, vector<16x16x4xf32>
    %c0_219 = arith.constant 0 : index
    %c4_220 = arith.constant 4 : index
    %c3_221 = arith.constant 3 : index
    %c0_222 = arith.constant 0 : index
    %224 = vector.load %arg2[%c0_219, %c4_220, %c3_221, %c0_222] : memref<1x7x7x4xf32, #tpu.memory_space<vmem>>, vector<1x1x1x4xf32>
    %225 = vector.shape_cast %224 : vector<1x1x1x4xf32> to vector<4xf32>
    %226 = vector.shape_cast %225 : vector<4xf32> to vector<1x1x4xf32>
    %227 = vector.broadcast %226 : vector<1x1x4xf32> to vector<16x16x4xf32>
    %228 = arith.mulf %223, %227 : vector<16x16x4xf32>
    %229 = arith.addf %222, %228 : vector<16x16x4xf32>
    %c4_223 = arith.constant 4 : index
    %c9_224 = arith.constant 9 : index
    %c0_225 = arith.constant 0 : index
    %230 = vector.load %arg11[%c4_223, %c9_224, %c0_225] : memref<22x32x4xf32, #tpu.memory_space<vmem>>, vector<16x16x4xf32>
    %c0_226 = arith.constant 0 : index
    %c4_227 = arith.constant 4 : index
    %c4_228 = arith.constant 4 : index
    %c0_229 = arith.constant 0 : index
    %231 = vector.load %arg2[%c0_226, %c4_227, %c4_228, %c0_229] : memref<1x7x7x4xf32, #tpu.memory_space<vmem>>, vector<1x1x1x4xf32>
    %232 = vector.shape_cast %231 : vector<1x1x1x4xf32> to vector<4xf32>
    %233 = vector.shape_cast %232 : vector<4xf32> to vector<1x1x4xf32>
    %234 = vector.broadcast %233 : vector<1x1x4xf32> to vector<16x16x4xf32>
    %235 = arith.mulf %230, %234 : vector<16x16x4xf32>
    %236 = arith.addf %229, %235 : vector<16x16x4xf32>
    %c4_230 = arith.constant 4 : index
    %c10_231 = arith.constant 10 : index
    %c0_232 = arith.constant 0 : index
    %237 = vector.load %arg11[%c4_230, %c10_231, %c0_232] : memref<22x32x4xf32, #tpu.memory_space<vmem>>, vector<16x16x4xf32>
    %c0_233 = arith.constant 0 : index
    %c4_234 = arith.constant 4 : index
    %c5_235 = arith.constant 5 : index
    %c0_236 = arith.constant 0 : index
    %238 = vector.load %arg2[%c0_233, %c4_234, %c5_235, %c0_236] : memref<1x7x7x4xf32, #tpu.memory_space<vmem>>, vector<1x1x1x4xf32>
    %239 = vector.shape_cast %238 : vector<1x1x1x4xf32> to vector<4xf32>
    %240 = vector.shape_cast %239 : vector<4xf32> to vector<1x1x4xf32>
    %241 = vector.broadcast %240 : vector<1x1x4xf32> to vector<16x16x4xf32>
    %242 = arith.mulf %237, %241 : vector<16x16x4xf32>
    %243 = arith.addf %236, %242 : vector<16x16x4xf32>
    %c4_237 = arith.constant 4 : index
    %c11_238 = arith.constant 11 : index
    %c0_239 = arith.constant 0 : index
    %244 = vector.load %arg11[%c4_237, %c11_238, %c0_239] : memref<22x32x4xf32, #tpu.memory_space<vmem>>, vector<16x16x4xf32>
    %c0_240 = arith.constant 0 : index
    %c4_241 = arith.constant 4 : index
    %c6_242 = arith.constant 6 : index
    %c0_243 = arith.constant 0 : index
    %245 = vector.load %arg2[%c0_240, %c4_241, %c6_242, %c0_243] : memref<1x7x7x4xf32, #tpu.memory_space<vmem>>, vector<1x1x1x4xf32>
    %246 = vector.shape_cast %245 : vector<1x1x1x4xf32> to vector<4xf32>
    %247 = vector.shape_cast %246 : vector<4xf32> to vector<1x1x4xf32>
    %248 = vector.broadcast %247 : vector<1x1x4xf32> to vector<16x16x4xf32>
    %249 = arith.mulf %244, %248 : vector<16x16x4xf32>
    %250 = arith.addf %243, %249 : vector<16x16x4xf32>
    %c5_244 = arith.constant 5 : index
    %c5_245 = arith.constant 5 : index
    %c0_246 = arith.constant 0 : index
    %251 = vector.load %arg11[%c5_244, %c5_245, %c0_246] : memref<22x32x4xf32, #tpu.memory_space<vmem>>, vector<16x16x4xf32>
    %c0_247 = arith.constant 0 : index
    %c5_248 = arith.constant 5 : index
    %c0_249 = arith.constant 0 : index
    %c0_250 = arith.constant 0 : index
    %252 = vector.load %arg2[%c0_247, %c5_248, %c0_249, %c0_250] : memref<1x7x7x4xf32, #tpu.memory_space<vmem>>, vector<1x1x1x4xf32>
    %253 = vector.shape_cast %252 : vector<1x1x1x4xf32> to vector<4xf32>
    %254 = vector.shape_cast %253 : vector<4xf32> to vector<1x1x4xf32>
    %255 = vector.broadcast %254 : vector<1x1x4xf32> to vector<16x16x4xf32>
    %256 = arith.mulf %251, %255 : vector<16x16x4xf32>
    %257 = arith.addf %250, %256 : vector<16x16x4xf32>
    %c5_251 = arith.constant 5 : index
    %c6_252 = arith.constant 6 : index
    %c0_253 = arith.constant 0 : index
    %258 = vector.load %arg11[%c5_251, %c6_252, %c0_253] : memref<22x32x4xf32, #tpu.memory_space<vmem>>, vector<16x16x4xf32>
    %c0_254 = arith.constant 0 : index
    %c5_255 = arith.constant 5 : index
    %c1_256 = arith.constant 1 : index
    %c0_257 = arith.constant 0 : index
    %259 = vector.load %arg2[%c0_254, %c5_255, %c1_256, %c0_257] : memref<1x7x7x4xf32, #tpu.memory_space<vmem>>, vector<1x1x1x4xf32>
    %260 = vector.shape_cast %259 : vector<1x1x1x4xf32> to vector<4xf32>
    %261 = vector.shape_cast %260 : vector<4xf32> to vector<1x1x4xf32>
    %262 = vector.broadcast %261 : vector<1x1x4xf32> to vector<16x16x4xf32>
    %263 = arith.mulf %258, %262 : vector<16x16x4xf32>
    %264 = arith.addf %257, %263 : vector<16x16x4xf32>
    %c5_258 = arith.constant 5 : index
    %c7_259 = arith.constant 7 : index
    %c0_260 = arith.constant 0 : index
    %265 = vector.load %arg11[%c5_258, %c7_259, %c0_260] : memref<22x32x4xf32, #tpu.memory_space<vmem>>, vector<16x16x4xf32>
    %c0_261 = arith.constant 0 : index
    %c5_262 = arith.constant 5 : index
    %c2_263 = arith.constant 2 : index
    %c0_264 = arith.constant 0 : index
    %266 = vector.load %arg2[%c0_261, %c5_262, %c2_263, %c0_264] : memref<1x7x7x4xf32, #tpu.memory_space<vmem>>, vector<1x1x1x4xf32>
    %267 = vector.shape_cast %266 : vector<1x1x1x4xf32> to vector<4xf32>
    %268 = vector.shape_cast %267 : vector<4xf32> to vector<1x1x4xf32>
    %269 = vector.broadcast %268 : vector<1x1x4xf32> to vector<16x16x4xf32>
    %270 = arith.mulf %265, %269 : vector<16x16x4xf32>
    %271 = arith.addf %264, %270 : vector<16x16x4xf32>
    %c5_265 = arith.constant 5 : index
    %c8_266 = arith.constant 8 : index
    %c0_267 = arith.constant 0 : index
    %272 = vector.load %arg11[%c5_265, %c8_266, %c0_267] : memref<22x32x4xf32, #tpu.memory_space<vmem>>, vector<16x16x4xf32>
    %c0_268 = arith.constant 0 : index
    %c5_269 = arith.constant 5 : index
    %c3_270 = arith.constant 3 : index
    %c0_271 = arith.constant 0 : index
    %273 = vector.load %arg2[%c0_268, %c5_269, %c3_270, %c0_271] : memref<1x7x7x4xf32, #tpu.memory_space<vmem>>, vector<1x1x1x4xf32>
    %274 = vector.shape_cast %273 : vector<1x1x1x4xf32> to vector<4xf32>
    %275 = vector.shape_cast %274 : vector<4xf32> to vector<1x1x4xf32>
    %276 = vector.broadcast %275 : vector<1x1x4xf32> to vector<16x16x4xf32>
    %277 = arith.mulf %272, %276 : vector<16x16x4xf32>
    %278 = arith.addf %271, %277 : vector<16x16x4xf32>
    %c5_272 = arith.constant 5 : index
    %c9_273 = arith.constant 9 : index
    %c0_274 = arith.constant 0 : index
    %279 = vector.load %arg11[%c5_272, %c9_273, %c0_274] : memref<22x32x4xf32, #tpu.memory_space<vmem>>, vector<16x16x4xf32>
    %c0_275 = arith.constant 0 : index
    %c5_276 = arith.constant 5 : index
    %c4_277 = arith.constant 4 : index
    %c0_278 = arith.constant 0 : index
    %280 = vector.load %arg2[%c0_275, %c5_276, %c4_277, %c0_278] : memref<1x7x7x4xf32, #tpu.memory_space<vmem>>, vector<1x1x1x4xf32>
    %281 = vector.shape_cast %280 : vector<1x1x1x4xf32> to vector<4xf32>
    %282 = vector.shape_cast %281 : vector<4xf32> to vector<1x1x4xf32>
    %283 = vector.broadcast %282 : vector<1x1x4xf32> to vector<16x16x4xf32>
    %284 = arith.mulf %279, %283 : vector<16x16x4xf32>
    %285 = arith.addf %278, %284 : vector<16x16x4xf32>
    %c5_279 = arith.constant 5 : index
    %c10_280 = arith.constant 10 : index
    %c0_281 = arith.constant 0 : index
    %286 = vector.load %arg11[%c5_279, %c10_280, %c0_281] : memref<22x32x4xf32, #tpu.memory_space<vmem>>, vector<16x16x4xf32>
    %c0_282 = arith.constant 0 : index
    %c5_283 = arith.constant 5 : index
    %c5_284 = arith.constant 5 : index
    %c0_285 = arith.constant 0 : index
    %287 = vector.load %arg2[%c0_282, %c5_283, %c5_284, %c0_285] : memref<1x7x7x4xf32, #tpu.memory_space<vmem>>, vector<1x1x1x4xf32>
    %288 = vector.shape_cast %287 : vector<1x1x1x4xf32> to vector<4xf32>
    %289 = vector.shape_cast %288 : vector<4xf32> to vector<1x1x4xf32>
    %290 = vector.broadcast %289 : vector<1x1x4xf32> to vector<16x16x4xf32>
    %291 = arith.mulf %286, %290 : vector<16x16x4xf32>
    %292 = arith.addf %285, %291 : vector<16x16x4xf32>
    %c5_286 = arith.constant 5 : index
    %c11_287 = arith.constant 11 : index
    %c0_288 = arith.constant 0 : index
    %293 = vector.load %arg11[%c5_286, %c11_287, %c0_288] : memref<22x32x4xf32, #tpu.memory_space<vmem>>, vector<16x16x4xf32>
    %c0_289 = arith.constant 0 : index
    %c5_290 = arith.constant 5 : index
    %c6_291 = arith.constant 6 : index
    %c0_292 = arith.constant 0 : index
    %294 = vector.load %arg2[%c0_289, %c5_290, %c6_291, %c0_292] : memref<1x7x7x4xf32, #tpu.memory_space<vmem>>, vector<1x1x1x4xf32>
    %295 = vector.shape_cast %294 : vector<1x1x1x4xf32> to vector<4xf32>
    %296 = vector.shape_cast %295 : vector<4xf32> to vector<1x1x4xf32>
    %297 = vector.broadcast %296 : vector<1x1x4xf32> to vector<16x16x4xf32>
    %298 = arith.mulf %293, %297 : vector<16x16x4xf32>
    %299 = arith.addf %292, %298 : vector<16x16x4xf32>
    %c6_293 = arith.constant 6 : index
    %c5_294 = arith.constant 5 : index
    %c0_295 = arith.constant 0 : index
    %300 = vector.load %arg11[%c6_293, %c5_294, %c0_295] : memref<22x32x4xf32, #tpu.memory_space<vmem>>, vector<16x16x4xf32>
    %c0_296 = arith.constant 0 : index
    %c6_297 = arith.constant 6 : index
    %c0_298 = arith.constant 0 : index
    %c0_299 = arith.constant 0 : index
    %301 = vector.load %arg2[%c0_296, %c6_297, %c0_298, %c0_299] : memref<1x7x7x4xf32, #tpu.memory_space<vmem>>, vector<1x1x1x4xf32>
    %302 = vector.shape_cast %301 : vector<1x1x1x4xf32> to vector<4xf32>
    %303 = vector.shape_cast %302 : vector<4xf32> to vector<1x1x4xf32>
    %304 = vector.broadcast %303 : vector<1x1x4xf32> to vector<16x16x4xf32>
    %305 = arith.mulf %300, %304 : vector<16x16x4xf32>
    %306 = arith.addf %299, %305 : vector<16x16x4xf32>
    %c6_300 = arith.constant 6 : index
    %c6_301 = arith.constant 6 : index
    %c0_302 = arith.constant 0 : index
    %307 = vector.load %arg11[%c6_300, %c6_301, %c0_302] : memref<22x32x4xf32, #tpu.memory_space<vmem>>, vector<16x16x4xf32>
    %c0_303 = arith.constant 0 : index
    %c6_304 = arith.constant 6 : index
    %c1_305 = arith.constant 1 : index
    %c0_306 = arith.constant 0 : index
    %308 = vector.load %arg2[%c0_303, %c6_304, %c1_305, %c0_306] : memref<1x7x7x4xf32, #tpu.memory_space<vmem>>, vector<1x1x1x4xf32>
    %309 = vector.shape_cast %308 : vector<1x1x1x4xf32> to vector<4xf32>
    %310 = vector.shape_cast %309 : vector<4xf32> to vector<1x1x4xf32>
    %311 = vector.broadcast %310 : vector<1x1x4xf32> to vector<16x16x4xf32>
    %312 = arith.mulf %307, %311 : vector<16x16x4xf32>
    %313 = arith.addf %306, %312 : vector<16x16x4xf32>
    %c6_307 = arith.constant 6 : index
    %c7_308 = arith.constant 7 : index
    %c0_309 = arith.constant 0 : index
    %314 = vector.load %arg11[%c6_307, %c7_308, %c0_309] : memref<22x32x4xf32, #tpu.memory_space<vmem>>, vector<16x16x4xf32>
    %c0_310 = arith.constant 0 : index
    %c6_311 = arith.constant 6 : index
    %c2_312 = arith.constant 2 : index
    %c0_313 = arith.constant 0 : index
    %315 = vector.load %arg2[%c0_310, %c6_311, %c2_312, %c0_313] : memref<1x7x7x4xf32, #tpu.memory_space<vmem>>, vector<1x1x1x4xf32>
    %316 = vector.shape_cast %315 : vector<1x1x1x4xf32> to vector<4xf32>
    %317 = vector.shape_cast %316 : vector<4xf32> to vector<1x1x4xf32>
    %318 = vector.broadcast %317 : vector<1x1x4xf32> to vector<16x16x4xf32>
    %319 = arith.mulf %314, %318 : vector<16x16x4xf32>
    %320 = arith.addf %313, %319 : vector<16x16x4xf32>
    %c6_314 = arith.constant 6 : index
    %c8_315 = arith.constant 8 : index
    %c0_316 = arith.constant 0 : index
    %321 = vector.load %arg11[%c6_314, %c8_315, %c0_316] : memref<22x32x4xf32, #tpu.memory_space<vmem>>, vector<16x16x4xf32>
    %c0_317 = arith.constant 0 : index
    %c6_318 = arith.constant 6 : index
    %c3_319 = arith.constant 3 : index
    %c0_320 = arith.constant 0 : index
    %322 = vector.load %arg2[%c0_317, %c6_318, %c3_319, %c0_320] : memref<1x7x7x4xf32, #tpu.memory_space<vmem>>, vector<1x1x1x4xf32>
    %323 = vector.shape_cast %322 : vector<1x1x1x4xf32> to vector<4xf32>
    %324 = vector.shape_cast %323 : vector<4xf32> to vector<1x1x4xf32>
    %325 = vector.broadcast %324 : vector<1x1x4xf32> to vector<16x16x4xf32>
    %326 = arith.mulf %321, %325 : vector<16x16x4xf32>
    %327 = arith.addf %320, %326 : vector<16x16x4xf32>
    %c6_321 = arith.constant 6 : index
    %c9_322 = arith.constant 9 : index
    %c0_323 = arith.constant 0 : index
    %328 = vector.load %arg11[%c6_321, %c9_322, %c0_323] : memref<22x32x4xf32, #tpu.memory_space<vmem>>, vector<16x16x4xf32>
    %c0_324 = arith.constant 0 : index
    %c6_325 = arith.constant 6 : index
    %c4_326 = arith.constant 4 : index
    %c0_327 = arith.constant 0 : index
    %329 = vector.load %arg2[%c0_324, %c6_325, %c4_326, %c0_327] : memref<1x7x7x4xf32, #tpu.memory_space<vmem>>, vector<1x1x1x4xf32>
    %330 = vector.shape_cast %329 : vector<1x1x1x4xf32> to vector<4xf32>
    %331 = vector.shape_cast %330 : vector<4xf32> to vector<1x1x4xf32>
    %332 = vector.broadcast %331 : vector<1x1x4xf32> to vector<16x16x4xf32>
    %333 = arith.mulf %328, %332 : vector<16x16x4xf32>
    %334 = arith.addf %327, %333 : vector<16x16x4xf32>
    %c6_328 = arith.constant 6 : index
    %c10_329 = arith.constant 10 : index
    %c0_330 = arith.constant 0 : index
    %335 = vector.load %arg11[%c6_328, %c10_329, %c0_330] : memref<22x32x4xf32, #tpu.memory_space<vmem>>, vector<16x16x4xf32>
    %c0_331 = arith.constant 0 : index
    %c6_332 = arith.constant 6 : index
    %c5_333 = arith.constant 5 : index
    %c0_334 = arith.constant 0 : index
    %336 = vector.load %arg2[%c0_331, %c6_332, %c5_333, %c0_334] : memref<1x7x7x4xf32, #tpu.memory_space<vmem>>, vector<1x1x1x4xf32>
    %337 = vector.shape_cast %336 : vector<1x1x1x4xf32> to vector<4xf32>
    %338 = vector.shape_cast %337 : vector<4xf32> to vector<1x1x4xf32>
    %339 = vector.broadcast %338 : vector<1x1x4xf32> to vector<16x16x4xf32>
    %340 = arith.mulf %335, %339 : vector<16x16x4xf32>
    %341 = arith.addf %334, %340 : vector<16x16x4xf32>
    %c6_335 = arith.constant 6 : index
    %c11_336 = arith.constant 11 : index
    %c0_337 = arith.constant 0 : index
    %342 = vector.load %arg11[%c6_335, %c11_336, %c0_337] : memref<22x32x4xf32, #tpu.memory_space<vmem>>, vector<16x16x4xf32>
    %c0_338 = arith.constant 0 : index
    %c6_339 = arith.constant 6 : index
    %c6_340 = arith.constant 6 : index
    %c0_341 = arith.constant 0 : index
    %343 = vector.load %arg2[%c0_338, %c6_339, %c6_340, %c0_341] : memref<1x7x7x4xf32, #tpu.memory_space<vmem>>, vector<1x1x1x4xf32>
    %344 = vector.shape_cast %343 : vector<1x1x1x4xf32> to vector<4xf32>
    %345 = vector.shape_cast %344 : vector<4xf32> to vector<1x1x4xf32>
    %346 = vector.broadcast %345 : vector<1x1x4xf32> to vector<16x16x4xf32>
    %347 = arith.mulf %342, %346 : vector<16x16x4xf32>
    %348 = arith.addf %341, %347 : vector<16x16x4xf32>
    %c0_342 = arith.constant 0 : index
    %c0_343 = arith.constant 0 : index
    %c0_344 = arith.constant 0 : index
    %349 = vector.load %arg3[%c0_342, %c0_343, %c0_344] : memref<1x1x4xf32, #tpu.memory_space<vmem>>, vector<1x1x4xf32>
    %350 = vector.shape_cast %349 : vector<1x1x4xf32> to vector<4xf32>
    %351 = vector.shape_cast %350 : vector<4xf32> to vector<1x1x4xf32>
    %352 = vector.broadcast %351 : vector<1x1x4xf32> to vector<16x16x4xf32>
    %353 = arith.addf %348, %352 : vector<16x16x4xf32>
    %354 = vector.shape_cast %353 : vector<16x16x4xf32> to vector<256x4xf32>
    %cst_345 = arith.constant dense<0.000000e+00> : vector<4xf32>
    %355 = vector.multi_reduction <add>, %354, %cst_345 [0] : vector<256x4xf32> to vector<4xf32>
    %356 = vector.shape_cast %355 : vector<4xf32> to vector<1x4xf32>
    %357 = arith.mulf %354, %354 : vector<256x4xf32>
    %cst_346 = arith.constant dense<0.000000e+00> : vector<4xf32>
    %358 = vector.multi_reduction <add>, %357, %cst_346 [0] : vector<256x4xf32> to vector<4xf32>
    %359 = vector.shape_cast %358 : vector<4xf32> to vector<1x4xf32>
    %cst_347 = arith.constant dense<0.000000e+00> : vector<1xf32>
    %360 = vector.multi_reduction <add>, %356, %cst_347 [1] : vector<1x4xf32> to vector<1xf32>
    %361 = vector.shape_cast %360 : vector<1xf32> to vector<1x1xf32>
    %cst_348 = arith.constant 1.024000e+03 : f32
    %362 = vector.broadcast %cst_348 : f32 to vector<1x1xf32>
    %363 = arith.divf %361, %362 : vector<1x1xf32>
    %cst_349 = arith.constant dense<0.000000e+00> : vector<1xf32>
    %364 = vector.multi_reduction <add>, %359, %cst_349 [1] : vector<1x4xf32> to vector<1xf32>
    %365 = vector.shape_cast %364 : vector<1xf32> to vector<1x1xf32>
    %cst_350 = arith.constant 1.024000e+03 : f32
    %366 = vector.broadcast %cst_350 : f32 to vector<1x1xf32>
    %367 = arith.divf %365, %366 : vector<1x1xf32>
    %368 = arith.mulf %363, %363 : vector<1x1xf32>
    %369 = arith.subf %367, %368 : vector<1x1xf32>
    %cst_351 = arith.constant 9.99999974E-6 : f32
    %370 = vector.broadcast %cst_351 : f32 to vector<1x1xf32>
    %371 = arith.addf %369, %370 : vector<1x1xf32>
    %372 = math.rsqrt %371 : vector<1x1xf32>
    %c0_352 = arith.constant 0 : index
    %c0_353 = arith.constant 0 : index
    %373 = vector.load %arg4[%c0_352, %c0_353] : memref<1x4xf32, #tpu.memory_space<vmem>>, vector<1x4xf32>
    %374 = vector.broadcast %372 : vector<1x1xf32> to vector<1x4xf32>
    %375 = arith.mulf %374, %373 : vector<1x4xf32>
    %c0_354 = arith.constant 0 : index
    %c0_355 = arith.constant 0 : index
    %376 = vector.load %arg5[%c0_354, %c0_355] : memref<1x4xf32, #tpu.memory_space<vmem>>, vector<1x4xf32>
    %377 = vector.broadcast %363 : vector<1x1xf32> to vector<1x4xf32>
    %378 = arith.mulf %377, %375 : vector<1x4xf32>
    %379 = arith.subf %376, %378 : vector<1x4xf32>
    %c0_356 = arith.constant 0 : index
    %c0_357 = arith.constant 0 : index
    %380 = vector.load %arg6[%c0_356, %c0_357] : memref<4x16xbf16, #tpu.memory_space<vmem>>, vector<4x16xbf16>
    %c0_358 = arith.constant 0 : index
    %c0_359 = arith.constant 0 : index
    %381 = vector.load %arg8[%c0_358, %c0_359] : memref<16x4xbf16, #tpu.memory_space<vmem>>, vector<16x4xbf16>
    %c0_360 = arith.constant 0 : index
    %c0_361 = arith.constant 0 : index
    %382 = vector.load %arg7[%c0_360, %c0_361] : memref<1x16xf32, #tpu.memory_space<vmem>>, vector<1x16xf32>
    %c0_362 = arith.constant 0 : index
    %c0_363 = arith.constant 0 : index
    %383 = vector.load %arg9[%c0_362, %c0_363] : memref<1x4xf32, #tpu.memory_space<vmem>>, vector<1x4xf32>
    %384 = vector.broadcast %375 : vector<1x4xf32> to vector<256x4xf32>
    %385 = arith.mulf %354, %384 : vector<256x4xf32>
    %386 = vector.broadcast %379 : vector<1x4xf32> to vector<256x4xf32>
    %387 = arith.addf %385, %386 : vector<256x4xf32>
    %388 = arith.truncf %387 : vector<256x4xf32> to vector<256x4xbf16>
    %cst_364 = arith.constant dense<0.000000e+00> : vector<256x16xf32>
    %389 = tpu.matmul %388, %380, %cst_364 {dimension_numbers = #tpu.dot_dimension_numbers<[1], [0], [0], [1], [0, 0, 1, 1], [], []>} : vector<256x4xbf16>, vector<4x16xbf16>, vector<256x16xf32> -> vector<256x16xf32>
    %390 = vector.broadcast %382 : vector<1x16xf32> to vector<256x16xf32>
    %391 = arith.addf %389, %390 : vector<256x16xf32>
    %392 = arith.negf %391 : vector<256x16xf32>
    %393 = math.exp %392 : vector<256x16xf32>
    %cst_365 = arith.constant 1.000000e+00 : f32
    %394 = vector.broadcast %cst_365 : f32 to vector<256x16xf32>
    %395 = arith.addf %394, %393 : vector<256x16xf32>
    %396 = arith.divf %394, %395 : vector<256x16xf32>
    %397 = arith.mulf %391, %396 : vector<256x16xf32>
    %398 = arith.truncf %397 : vector<256x16xf32> to vector<256x16xbf16>
    %cst_366 = arith.constant dense<0.000000e+00> : vector<256x4xf32>
    %399 = tpu.matmul %398, %381, %cst_366 {dimension_numbers = #tpu.dot_dimension_numbers<[1], [0], [0], [1], [0, 0, 1, 1], [], []>} : vector<256x16xbf16>, vector<16x4xbf16>, vector<256x4xf32> -> vector<256x4xf32>
    %400 = vector.broadcast %383 : vector<1x4xf32> to vector<256x4xf32>
    %401 = arith.addf %399, %400 : vector<256x4xf32>
    %c0_367 = arith.constant 0 : index
    %c0_368 = arith.constant 0 : index
    %c0_369 = arith.constant 0 : index
    %c0_370 = arith.constant 0 : index
    %402 = vector.load %arg1[%c0_367, %c0_368, %c0_369, %c0_370] : memref<1x16x16x4xf32, #tpu.memory_space<vmem>>, vector<1x16x16x4xf32>
    %403 = vector.shape_cast %402 : vector<1x16x16x4xf32> to vector<16x16x4xf32>
    %404 = vector.shape_cast %403 : vector<16x16x4xf32> to vector<256x4xf32>
    %405 = arith.addf %404, %401 : vector<256x4xf32>
    %406 = tpu.transpose %405, [1, 0] : vector<256x4xf32> -> vector<4x256xf32>
    %c0_371 = arith.constant 0 : index
    %c0_372 = arith.constant 0 : index
    %c0_373 = arith.constant 0 : index
    %407 = vector.load %arg10[%c0_371, %c0_372, %c0_373] : memref<1x4x256xf32, #tpu.memory_space<vmem>>, vector<1x4x256xf32>
    %408 = vector.shape_cast %407 : vector<1x4x256xf32> to vector<4x256xf32>
    %409 = vector.shape_cast %406 : vector<4x256xf32> to vector<1x4x256xf32>
    tpu.vector_store %arg10[%c0_371, %c0_372, %c0_373], %409 {strides = array<i32>} : memref<1x4x256xf32, #tpu.memory_space<vmem>>, vector<1x4x256xf32>,
    return
  }
  func.func @transform_0(%arg0: i32) -> (i32, i32, i32, i32) {
    %c0_i32 = arith.constant 0 : i32
    %c0_i32_0 = arith.constant 0 : i32
    %c0_i32_1 = arith.constant 0 : i32
    %c0_i32_2 = arith.constant 0 : i32
    return %arg0, %c0_i32, %c0_i32_0, %c0_i32_1 : i32, i32, i32, i32
  }
  func.func @transform_1(%arg0: i32) -> (i32, i32, i32, i32) {
    %c0_i32 = arith.constant 0 : i32
    %c0_i32_0 = arith.constant 0 : i32
    %c0_i32_1 = arith.constant 0 : i32
    %c0_i32_2 = arith.constant 0 : i32
    return %arg0, %c0_i32, %c0_i32_0, %c0_i32_1 : i32, i32, i32, i32
  }
  func.func @transform_2(%arg0: i32) -> (i32, i32, i32) {
    %c0_i32 = arith.constant 0 : i32
    %c0_i32_0 = arith.constant 0 : i32
    %c0_i32_1 = arith.constant 0 : i32
    return %arg0, %c0_i32, %c0_i32_0 : i32, i32, i32
  }
  func.func @transform_3(%arg0: i32) -> (i32, i32) {
    %c0_i32 = arith.constant 0 : i32
    %c0_i32_0 = arith.constant 0 : i32
    %c0_i32_1 = arith.constant 0 : i32
    return %c0_i32, %c0_i32_0 : i32, i32
  }
  func.func @transform_4(%arg0: i32) -> (i32, i32) {
    %c0_i32 = arith.constant 0 : i32
    %c0_i32_0 = arith.constant 0 : i32
    %c0_i32_1 = arith.constant 0 : i32
    return %c0_i32, %c0_i32_0 : i32, i32
  }
  func.func @transform_5(%arg0: i32) -> (i32, i32) {
    %c0_i32 = arith.constant 0 : i32
    %c0_i32_0 = arith.constant 0 : i32
    %c0_i32_1 = arith.constant 0 : i32
    return %c0_i32, %c0_i32_0 : i32, i32
  }
  func.func @transform_6(%arg0: i32) -> (i32, i32) {
    %c0_i32 = arith.constant 0 : i32
    %c0_i32_0 = arith.constant 0 : i32
    %c0_i32_1 = arith.constant 0 : i32
    return %c0_i32, %c0_i32_0 : i32, i32
  }
  func.func @transform_7(%arg0: i32) -> (i32, i32) {
    %c0_i32 = arith.constant 0 : i32
    %c0_i32_0 = arith.constant 0 : i32
    %c0_i32_1 = arith.constant 0 : i32
    return %c0_i32, %c0_i32_0 : i32, i32
  }
  func.func @transform_8(%arg0: i32) -> (i32, i32) {
    %c0_i32 = arith.constant 0 : i32
    %c0_i32_0 = arith.constant 0 : i32
    %c0_i32_1 = arith.constant 0 : i32
    return %c0_i32, %c0_i32_0 : i32, i32
  }
  func.func @transform_9(%arg0: i32) -> (i32, i32, i32) {
    %c0_i32 = arith.constant 0 : i32
    %c0_i32_0 = arith.constant 0 : i32
    %c0_i32_1 = arith.constant 0 : i32
    return %arg0, %c0_i32, %c0_i32_0 : i32, i32, i32
  }
}

</mosaic_0001>

<llo_original>
// kernel: tpu_custom_call.1
$region0: #{tpu_custom_call.1}
  #allocation0 [shape = 'u32[]', space=smem, size = 0x4, offset = 0x4, fixed_abs, tag = 'smem constant byte address 0x4 - core index']
  #allocation1 [shape = 'u32[144,128]{1,0:T(1,128)}', space=vmem, size = 0x12000, scoped, tag = 'internal scratch']
  #allocation2 [shape = 'f32[22,32,4]{2,1,0:T(8,128)}', space=vmem, size = 0x58000, scoped, tag = 'scratch operand']
  %s0 = inlined_call_operand.vmem [shape: f32[2,16,16,4], index: 0, kind: input, shape index: {}]
  %s1 = inlined_call_operand.vmem [shape: f32[2,7,7,4], index: 1, kind: input, shape index: {}]
  %s2 = inlined_call_operand.vmem [shape: f32[2,1,4], index: 2, kind: input, shape index: {}]
  %s3 = inlined_call_operand.vmem [shape: f32[1,4], index: 3, kind: input, shape index: {}]
  %s4 = inlined_call_operand.vmem [shape: f32[1,4], index: 4, kind: input, shape index: {}]
  %s5 = inlined_call_operand.vmem [shape: bf16[4,16], index: 5, kind: input, shape index: {}]
  %s6 = inlined_call_operand.vmem [shape: f32[1,16], index: 6, kind: input, shape index: {}]
  %s7 = inlined_call_operand.vmem [shape: bf16[16,4], index: 7, kind: input, shape index: {}]
  %s8 = inlined_call_operand.vmem [shape: f32[1,4], index: 8, kind: input, shape index: {}]
  %s9 = inlined_call_operand.hbm [shape: f32[2,4,256], index: 9, kind: output, shape index: {}]
  %s10 = sld [smem:[#allocation0]]
  $region69: #{tpu_custom_call.1} parent=0
    _
  %s12 = ssub.s32 1, %s10
  %s13 = scalar_select 0, %s12, %s10
  $region1: #{tpu_custom_call.1} parent=0
    #allocation3 [shape = 'u8[8192]{0}', space=vmem, size = 0x2000, scoped, tag = 'output window, operand 0']
    #allocation4 [shape = 's32[2]{0}', space=sflag, size = 0x8, scoped, tag = 'scoped memory for tpu_custom_call.1']
    %14 = vsyncpa [#allocation4], 0
    %s15 = scalar_lea.sflag [#allocation4], 1
    %16 = vsyncpa %s15, 0
    loop: start=0, step=1, limit=4
    $region2: #{tpu_custom_call.1} parent=1 // loop_pre_header
      _
    $region3: #{tpu_custom_call.1} parent=1 // loop_header
      %s18 = sphi 0, %s22
      %p19 = scmp.ge.s32.totalorder %s18, 4
      %s28 = sphi 0, %s30
      %s31 = sphi 0, %s28
      %s32 = sphi 0, %s31
      %s48 = sphi 0, %s32
      %s54 = sphi 0, %s56
      %s57 = sphi 0, %s54
      %s58 = sphi 0, %s57
      %s74 = sphi 0, %s58
      %s80 = sphi 0, %s82
      %s83 = sphi 0, %s80
      %s84 = sphi 0, %s83
      %s100 = sphi 0, %s84
      %s104 = sphi 0, %s104
      %s106 = sphi 0, %s104
      %s107 = sphi 0, %s106
      %s121 = sphi 0, %s107
      %s125 = sphi 0, %s125
      %s127 = sphi 0, %s125
      %s128 = sphi 0, %s127
      %s142 = sphi 0, %s128
      %s146 = sphi 0, %s146
      %s148 = sphi 0, %s146
      %s149 = sphi 0, %s148
      %s163 = sphi 0, %s149
      %s167 = sphi 0, %s167
      %s169 = sphi 0, %s167
      %s170 = sphi 0, %s169
      %s184 = sphi 0, %s170
      %s188 = sphi 0, %s188
      %s190 = sphi 0, %s188
      %s191 = sphi 0, %s190
      %s205 = sphi 0, %s191
      %s209 = sphi 0, %s209
      %s211 = sphi 0, %s209
      %s212 = sphi 0, %s211
      %s226 = sphi 0, %s212
      %s232 = sphi 0, %s234
      %s235 = sphi 0, %s232
      %s236 = sphi 0, %s235
      %s252 = sphi 0, %s236
    $region4: #{tpu_custom_call.1} parent=1 // loop_header_branch
      %21 = sbr.rel (%p19) target = $region8
    $region5: #{tpu_custom_call.1} parent=1 // loop_body
      %s23 = ssub.s32 %s18, 1
      %s24 = ssub.s32 %s18, 2
      %s25 = sadd.s32 %s18, 1
      %s26 = ssub.s32 %s18, %s25
      %p27 = scmp.eq.s32.totalorder %s26, 0
      %s29 = sadd.s32 %s28, 1
      %s30 = scalar_select %p27, %s28, %s29
      %p33 = pneg %p27
      %p34 = scmp.eq.s32.totalorder %s18, 1
      %p35 = por %p33, %p34
      %p36 = scmp.ne.s32.totalorder %s28, %s31
      %p37 = scmp.eq.s32.totalorder %s18, 0
      %p38 = por %p36, %p37
      %p39 = scmp.ne.s32.totalorder %s28, %s31
      %p40 = scmp.eq.s32.totalorder %s23, 1
      %p41 = por %p39, %p40
      %p42 = scmp.ne.s32.totalorder %s31, %s32
      %p43 = scmp.eq.s32.totalorder %s23, 0
      %p44 = por %p42, %p43
      %p45 = scmp.ne.s32.totalorder %s31, %s32
      %p46 = scmp.eq.s32.totalorder %s24, 1
      %p47 = por %p45, %p46
      %p49 = scmp.ne.s32.totalorder %s32, %s48
      %p50 = scmp.eq.s32.totalorder %s24, 0
      %p51 = por %p49, %p50
      %s52 = ssub.s32 %s18, %s25
      %p53 = scmp.eq.s32.totalorder %s52, 0
      %s55 = sadd.s32 %s54, 1
      %s56 = scalar_select %p53, %s54, %s55
      %p59 = pneg %p53
      %p60 = scmp.eq.s32.totalorder %s18, 1
      %p61 = por %p59, %p60
      %p62 = scmp.ne.s32.totalorder %s54, %s57
      %p63 = scmp.eq.s32.totalorder %s18, 0
      %p64 = por %p62, %p63
      %p65 = scmp.ne.s32.totalorder %s54, %s57
      %p66 = scmp.eq.s32.totalorder %s23, 1
      %p67 = por %p65, %p66
      %p68 = scmp.ne.s32.totalorder %s57, %s58
      %p69 = scmp.eq.s32.totalorder %s23, 0
      %p70 = por %p68, %p69
      %p71 = scmp.ne.s32.totalorder %s57, %s58
      %p72 = scmp.eq.s32.totalorder %s24, 1
      %p73 = por %p71, %p72
      %p75 = scmp.ne.s32.totalorder %s58, %s74
      %p76 = scmp.eq.s32.totalorder %s24, 0
      %p77 = por %p75, %p76
      %s78 = ssub.s32 %s18, %s25
      %p79 = scmp.eq.s32.totalorder %s78, 0
      %s81 = sadd.s32 %s80, 1
      %s82 = scalar_select %p79, %s80, %s81
      %p85 = pneg %p79
      %p86 = scmp.eq.s32.totalorder %s18, 1
      %p87 = por %p85, %p86
      %p88 = scmp.ne.s32.totalorder %s80, %s83
      %p89 = scmp.eq.s32.totalorder %s18, 0
      %p90 = por %p88, %p89
      %p91 = scmp.ne.s32.totalorder %s80, %s83
      %p92 = scmp.eq.s32.totalorder %s23, 1
      %p93 = por %p91, %p92
      %p94 = scmp.ne.s32.totalorder %s83, %s84
      %p95 = scmp.eq.s32.totalorder %s23, 0
      %p96 = por %p94, %p95
      %p97 = scmp.ne.s32.totalorder %s83, %s84
      %p98 = scmp.eq.s32.totalorder %s24, 1
      %p99 = por %p97, %p98
      %p101 = scmp.ne.s32.totalorder %s84, %s100
      %p102 = scmp.eq.s32.totalorder %s24, 0
      %p103 = por %p101, %p102
      %s105 = sadd.s32 %s104, 1
      %p108 = scmp.eq.s32.totalorder %s18, 1
      %p109 = scmp.ne.s32.totalorder %s104, %s106
      %p110 = scmp.eq.s32.totalorder %s18, 0
      %p111 = por %p109, %p110
      %p112 = scmp.ne.s32.totalorder %s104, %s106
      %p113 = scmp.eq.s32.totalorder %s23, 1
      %p114 = por %p112, %p113
      %p115 = scmp.ne.s32.totalorder %s106, %s107
      %p116 = scmp.eq.s32.totalorder %s23, 0
      %p117 = por %p115, %p116
      %p118 = scmp.ne.s32.totalorder %s106, %s107
      %p119 = scmp.eq.s32.totalorder %s24, 1
      %p120 = por %p118, %p119
      %p122 = scmp.ne.s32.totalorder %s107, %s121
      %p123 = scmp.eq.s32.totalorder %s24, 0
      %p124 = por %p122, %p123
      %s126 = sadd.s32 %s125, 1
      %p129 = scmp.eq.s32.totalorder %s18, 1
      %p130 = scmp.ne.s32.totalorder %s125, %s127
      %p131 = scmp.eq.s32.totalorder %s18, 0
      %p132 = por %p130, %p131
      %p133 = scmp.ne.s32.totalorder %s125, %s127
      %p134 = scmp.eq.s32.totalorder %s23, 1
      %p135 = por %p133, %p134
      %p136 = scmp.ne.s32.totalorder %s127, %s128
      %p137 = scmp.eq.s32.totalorder %s23, 0
      %p138 = por %p136, %p137
      %p139 = scmp.ne.s32.totalorder %s127, %s128
      %p140 = scmp.eq.s32.totalorder %s24, 1
      %p141 = por %p139, %p140
      %p143 = scmp.ne.s32.totalorder %s128, %s142
      %p144 = scmp.eq.s32.totalorder %s24, 0
      %p145 = por %p143, %p144
      %s147 = sadd.s32 %s146, 1
      %p150 = scmp.eq.s32.totalorder %s18, 1
      %p151 = scmp.ne.s32.totalorder %s146, %s148
      %p152 = scmp.eq.s32.totalorder %s18, 0
      %p153 = por %p151, %p152
      %p154 = scmp.ne.s32.totalorder %s146, %s148
      %p155 = scmp.eq.s32.totalorder %s23, 1
      %p156 = por %p154, %p155
      %p157 = scmp.ne.s32.totalorder %s148, %s149
      %p158 = scmp.eq.s32.totalorder %s23, 0
      %p159 = por %p157, %p158
      %p160 = scmp.ne.s32.totalorder %s148, %s149
      %p161 = scmp.eq.s32.totalorder %s24, 1
      %p162 = por %p160, %p161
      %p164 = scmp.ne.s32.totalorder %s149, %s163
      %p165 = scmp.eq.s32.totalorder %s24, 0
      %p166 = por %p164, %p165
      %s168 = sadd.s32 %s167, 1
      %p171 = scmp.eq.s32.totalorder %s18, 1
      %p172 = scmp.ne.s32.totalorder %s167, %s169
      %p173 = scmp.eq.s32.totalorder %s18, 0
      %p174 = por %p172, %p173
      %p175 = scmp.ne.s32.totalorder %s167, %s169
      %p176 = scmp.eq.s32.totalorder %s23, 1
      %p177 = por %p175, %p176
      %p178 = scmp.ne.s32.totalorder %s169, %s170
      %p179 = scmp.eq.s32.totalorder %s23, 0
      %p180 = por %p178, %p179
      %p181 = scmp.ne.s32.totalorder %s169, %s170
      %p182 = scmp.eq.s32.totalorder %s24, 1
      %p183 = por %p181, %p182
      %p185 = scmp.ne.s32.totalorder %s170, %s184
      %p186 = scmp.eq.s32.totalorder %s24, 0
      %p187 = por %p185, %p186
      %s189 = sadd.s32 %s188, 1
      %p192 = scmp.eq.s32.totalorder %s18, 1
      %p193 = scmp.ne.s32.totalorder %s188, %s190
      %p194 = scmp.eq.s32.totalorder %s18, 0
      %p195 = por %p193, %p194
      %p196 = scmp.ne.s32.totalorder %s188, %s190
      %p197 = scmp.eq.s32.totalorder %s23, 1
      %p198 = por %p196, %p197
      %p199 = scmp.ne.s32.totalorder %s190, %s191
      %p200 = scmp.eq.s32.totalorder %s23, 0
      %p201 = por %p199, %p200
      %p202 = scmp.ne.s32.totalorder %s190, %s191
      %p203 = scmp.eq.s32.totalorder %s24, 1
      %p204 = por %p202, %p203
      %p206 = scmp.ne.s32.totalorder %s191, %s205
      %p207 = scmp.eq.s32.totalorder %s24, 0
      %p208 = por %p206, %p207
      %s210 = sadd.s32 %s209, 1
      %p213 = scmp.eq.s32.totalorder %s18, 1
      %p214 = scmp.ne.s32.totalorder %s209, %s211
      %p215 = scmp.eq.s32.totalorder %s18, 0
      %p216 = por %p214, %p215
      %p217 = scmp.ne.s32.totalorder %s209, %s211
      %p218 = scmp.eq.s32.totalorder %s23, 1
      %p219 = por %p217, %p218
      %p220 = scmp.ne.s32.totalorder %s211, %s212
      %p221 = scmp.eq.s32.totalorder %s23, 0
      %p222 = por %p220, %p221
      %p223 = scmp.ne.s32.totalorder %s211, %s212
      %p224 = scmp.eq.s32.totalorder %s24, 1
      %p225 = por %p223, %p224
      %p227 = scmp.ne.s32.totalorder %s212, %s226
      %p228 = scmp.eq.s32.totalorder %s24, 0
      %p229 = por %p227, %p228
      %s230 = ssub.s32 %s18, %s25
      %p231 = scmp.eq.s32.totalorder %s230, 0
      %s233 = sadd.s32 %s232, 1
      %s234 = scalar_select %p231, %s232, %s233
      %p237 = pneg %p231
      %p238 = scmp.eq.s32.totalorder %s18, 1
      %p239 = por %p237, %p238
      %p240 = scmp.ne.s32.totalorder %s232, %s235
      %p241 = scmp.eq.s32.totalorder %s18, 0
      %p242 = por %p240, %p241
      %p243 = scmp.ne.s32.totalorder %s232, %s235
      %p244 = scmp.eq.s32.totalorder %s23, 1
      %p245 = por %p243, %p244
      %p246 = scmp.ne.s32.totalorder %s235, %s236
      %p247 = scmp.eq.s32.totalorder %s23, 0
      %p248 = por %p246, %p247
      %p249 = scmp.ne.s32.totalorder %s235, %s236
      %p250 = scmp.eq.s32.totalorder %s24, 1
      %p251 = por %p249, %p250
      %p253 = scmp.ne.s32.totalorder %s236, %s252
      %p254 = scmp.eq.s32.totalorder %s24, 0
      %p255 = por %p253, %p254
      %p256 = scmp.le.s32.totalorder 1, %s18
      %p257 = scmp.lt.s32.totalorder %s18, 3
      %p258 = pnand %p256, %p257
      %p259 = pneg %p258
      // Predicated region
      $region9: #{tpu_custom_call.1} parent=5 // pred_check
        _
      $region10: #{tpu_custom_call.1} parent=5 // pred_check_branch
        %261 = sbr.rel (%p258) target = $region12
      $region11: #{tpu_custom_call.1} parent=5 // pred_region
        %s262 = ssub.s32 %s18, 1
        // Predicated region
        $region13: #{tpu_custom_call.1} parent=11 // pred_check
          %p263 = pneg %p117
        $region14: #{tpu_custom_call.1} parent=11 // pred_check_branch
          %265 = sbr.rel (%p263) target = $region16
        $region15: #{tpu_custom_call.1} parent=11 // pred_region
          _
        $region16: #{tpu_custom_call.1} parent=11 // pred_fallthru
          _
        // Predicated region
        $region17: #{tpu_custom_call.1} parent=11 // pred_check
          %p266 = pneg %p138
        $region18: #{tpu_custom_call.1} parent=11 // pred_check_branch
          %268 = sbr.rel (%p266) target = $region20
        $region19: #{tpu_custom_call.1} parent=11 // pred_region
          _
        $region20: #{tpu_custom_call.1} parent=11 // pred_fallthru
          _
        // Predicated region
        $region21: #{tpu_custom_call.1} parent=11 // pred_check
          %p269 = pneg %p159
        $region22: #{tpu_custom_call.1} parent=11 // pred_check_branch
          %271 = sbr.rel (%p269) target = $region24
        $region23: #{tpu_custom_call.1} parent=11 // pred_region
          _
        $region24: #{tpu_custom_call.1} parent=11 // pred_fallthru
          _
        // Predicated region
        $region25: #{tpu_custom_call.1} parent=11 // pred_check
          %p272 = pneg %p180
        $region26: #{tpu_custom_call.1} parent=11 // pred_check_branch
          %274 = sbr.rel (%p272) target = $region28
        $region27: #{tpu_custom_call.1} parent=11 // pred_region
          _
        $region28: #{tpu_custom_call.1} parent=11 // pred_fallthru
          _
        // Predicated region
        $region29: #{tpu_custom_call.1} parent=11 // pred_check
          %p275 = pneg %p201
        $region30: #{tpu_custom_call.1} parent=11 // pred_check_branch
          %277 = sbr.rel (%p275) target = $region32
        $region31: #{tpu_custom_call.1} parent=11 // pred_region
          _
        $region32: #{tpu_custom_call.1} parent=11 // pred_fallthru
          _
        // Predicated region
        $region33: #{tpu_custom_call.1} parent=11 // pred_check
          %p278 = pneg %p222
        $region34: #{tpu_custom_call.1} parent=11 // pred_check_branch
          %280 = sbr.rel (%p278) target = $region36
        $region35: #{tpu_custom_call.1} parent=11 // pred_region
          _
        $region36: #{tpu_custom_call.1} parent=11 // pred_fallthru
          _
      $region12: #{tpu_custom_call.1} parent=5 // pred_fallthru
        _
      %p281 = scmp.lt.s32.totalorder %s18, 2
      // Predicated region
      $region37: #{tpu_custom_call.1} parent=5 // pred_check
        %p282 = pneg %p281
      $region38: #{tpu_custom_call.1} parent=5 // pred_check_branch
        %284 = sbr.rel (%p282) target = $region40
      $region39: #{tpu_custom_call.1} parent=5 // pred_region
        // Predicated region
        $region41: #{tpu_custom_call.1} parent=39 // pred_check
          %p285 = pneg %p38
        $region42: #{tpu_custom_call.1} parent=39 // pred_check_branch
          %287 = sbr.rel (%p285) target = $region44
        $region43: #{tpu_custom_call.1} parent=39 // pred_region
          %p288 = scmp.lt.s32.totalorder %s18, 1
          %s289 = scalar_select %p288, %s18, 1
          %s290 = smul.addr %s289, 32
          %s291 = smul.addr %s290, 8
          %s292 = scalar_lea.vmem %s0, %s291
        $region44: #{tpu_custom_call.1} parent=39 // pred_fallthru
          _
        // Predicated region
        $region45: #{tpu_custom_call.1} parent=39 // pred_check
          %p293 = pneg %p64
        $region46: #{tpu_custom_call.1} parent=39 // pred_check_branch
          %295 = sbr.rel (%p293) target = $region48
        $region47: #{tpu_custom_call.1} parent=39 // pred_region
          %p296 = scmp.lt.s32.totalorder %s18, 1
          %s297 = scalar_select %p296, %s18, 1
          %s298 = smul.addr %s297, 7
          %s299 = smul.addr %s298, 8
          %s300 = scalar_lea.vmem %s1, %s299
        $region48: #{tpu_custom_call.1} parent=39 // pred_fallthru
          _
        // Predicated region
        $region49: #{tpu_custom_call.1} parent=39 // pred_check
          %p301 = pneg %p90
        $region50: #{tpu_custom_call.1} parent=39 // pred_check_branch
          %303 = sbr.rel (%p301) target = $region52
        $region51: #{tpu_custom_call.1} parent=39 // pred_region
          %p304 = scmp.lt.s32.totalorder %s18, 1
          %s305 = scalar_select %p304, %s18, 1
          %s306 = scalar_lea.vmem %s2, %s305
        $region52: #{tpu_custom_call.1} parent=39 // pred_fallthru
          _
      $region40: #{tpu_custom_call.1} parent=5 // pred_fallthru
        _
      %p307 = scmp.le.s32.totalorder 1, %s18
      %p308 = scmp.lt.s32.totalorder %s18, 3
      %p309 = pnand %p307, %p308
      %p310 = pneg %p309
      // Predicated region
      $region53: #{tpu_custom_call.1} parent=5 // pred_check
        _
      $region54: #{tpu_custom_call.1} parent=5 // pred_check_branch
        %312 = sbr.rel (%p309) target = $region56
      $region55: #{tpu_custom_call.1} parent=5 // pred_region
        %s313 = ssub.s32 %s18, 1
        %p314 = scmp.lt.s32.totalorder %s23, 1
        %s315 = scalar_select %p314, %s23, 1
        %s316 = smul.addr %s315, 32
        %s317 = smul.addr %s316, 8
        %s318 = scalar_lea.vmem %s0, %s317
        %p319 = pneg %p44
        %p320 = pneg %p41
        %p321 = scmp.lt.s32.totalorder %s23, 1
        %s322 = scalar_select %p321, %s23, 1
        %s323 = smul.addr %s322, 7
        %s324 = smul.addr %s323, 8
        %s325 = scalar_lea.vmem %s1, %s324
        %p326 = pneg %p70
        %p327 = pneg %p67
        %p328 = scmp.lt.s32.totalorder %s23, 1
        %s329 = scalar_select %p328, %s23, 1
        %s330 = scalar_lea.vmem %s2, %s329
        %p331 = pneg %p96
        %p332 = pneg %p93
        %p333 = pneg %p117
        %p334 = pneg %p114
        %p335 = pneg %p138
        %p336 = pneg %p135
        %p337 = pneg %p159
        %p338 = pneg %p156
        %p339 = pneg %p180
        %p340 = pneg %p177
        %p341 = pneg %p201
        %p342 = pneg %p198
        %p343 = pneg %p222
        %p344 = pneg %p219
        %p345 = pneg %p248
        %p346 = pneg %p245
        %s347 = sand.u32 %s235, 1
        %s348 = scalar_lea.sflag [#allocation4], %s347
        %s349 = sand.u32 %s235, 1
        %s350 = smul.addr %s349, 8
        %s351 = scalar_lea.vmem [#allocation3], %s350
        %p352 = scmp.lt.s32.totalorder %s23, 1
        %s353 = scalar_select %p352, %s23, 1
        %s354 = smul.addr %s353, 32
        %s355 = smul.addr %s354, 8
        %s356 = scalar_lea.vmem %s0, %s355
        %p357 = scmp.lt.s32.totalorder %s23, 1
        %s358 = scalar_select %p357, %s23, 1
        %s359 = smul.addr %s358, 7
        %s360 = smul.addr %s359, 8
        %s361 = scalar_lea.vmem %s1, %s360
        %p362 = scmp.lt.s32.totalorder %s23, 1
        %s363 = scalar_select %p362, %s23, 1
        %s364 = scalar_lea.vmem %s2, %s363
        %vm366 = vcmask 31744
        %367 = vst.msk [vmem:[#allocation2] sm:$0xff] %vm366, 0.0
        %368 = vst.msk [vmem:[#allocation2 + $0x8] sm:$0xff] %vm366, 0.0
        %369 = vst.msk [vmem:[#allocation2 + $0x10] sm:$0xff] %vm366, 0.0
        %370 = vst.msk [vmem:[#allocation2 + $0x18] sm:$0xff] %vm366, 0.0
        %371 = vst.msk [vmem:[#allocation2 + $0x20] sm:$0xff] %vm366, 0.0
        %372 = vst.msk [vmem:[#allocation2 + $0x28] sm:$0xff] %vm366, 0.0
        %373 = vst.msk [vmem:[#allocation2 + $0x30] sm:$0xff] %vm366, 0.0
        %374 = vst.msk [vmem:[#allocation2 + $0x38] sm:$0xff] %vm366, 0.0
        %375 = vst.msk [vmem:[#allocation2 + $0x40] sm:$0xff] %vm366, 0.0
        %376 = vst.msk [vmem:[#allocation2 + $0x48] sm:$0xff] %vm366, 0.0
        %377 = vst.msk [vmem:[#allocation2 + $0x50] sm:$0xff] %vm366, 0.0
        %378 = vst.msk [vmem:[#allocation2 + $0x58] sm:$0xff] %vm366, 0.0
        %379 = vst.msk [vmem:[#allocation2 + $0x60] sm:$0xff] %vm366, 0.0
        %380 = vst.msk [vmem:[#allocation2 + $0x68] sm:$0xff] %vm366, 0.0
        %381 = vst.msk [vmem:[#allocation2 + $0x70] sm:$0xff] %vm366, 0.0
        %382 = vst.msk [vmem:[#allocation2 + $0x78] sm:$0xff] %vm366, 0.0
        %383 = vst.msk [vmem:[#allocation2 + $0x80] sm:$0xff] %vm366, 0.0
        %384 = vst.msk [vmem:[#allocation2 + $0x88] sm:$0xff] %vm366, 0.0
        %385 = vst.msk [vmem:[#allocation2 + $0x90] sm:$0xff] %vm366, 0.0
        %386 = vst.msk [vmem:[#allocation2 + $0x98] sm:$0xff] %vm366, 0.0
        %387 = vst.msk [vmem:[#allocation2 + $0xa0] sm:$0xff] %vm366, 0.0
        %388 = vst.msk [vmem:[#allocation2 + $0xa8] sm:$0xff] %vm366, 0.0
        %389 = vst.msk [vmem:[#allocation2 + $0xb0] sm:$0xff] %vm366, 0.0
        %390 = vst.msk [vmem:[#allocation2 + $0xb8] sm:$0xff] %vm366, 0.0
        %391 = vst.msk [vmem:[#allocation2 + $0xc0] sm:$0xff] %vm366, 0.0
        %392 = vst.msk [vmem:[#allocation2 + $0xc8] sm:$0xff] %vm366, 0.0
        %393 = vst.msk [vmem:[#allocation2 + $0xd0] sm:$0xff] %vm366, 0.0
        %394 = vst.msk [vmem:[#allocation2 + $0xd8] sm:$0xff] %vm366, 0.0
        %395 = vst.msk [vmem:[#allocation2 + $0xe0] sm:$0xff] %vm366, 0.0
        %396 = vst.msk [vmem:[#allocation2 + $0xe8] sm:$0xff] %vm366, 0.0
        %397 = vst.msk [vmem:[#allocation2 + $0xf0] sm:$0xff] %vm366, 0.0
        %398 = vst.msk [vmem:[#allocation2 + $0xf8] sm:$0xff] %vm366, 0.0
        %399 = vst.msk [vmem:[#allocation2 + $0x100] sm:$0xff] %vm366, 0.0
        %400 = vst.msk [vmem:[#allocation2 + $0x108] sm:$0xff] %vm366, 0.0
        %401 = vst.msk [vmem:[#allocation2 + $0x110] sm:$0xff] %vm366, 0.0
        %402 = vst.msk [vmem:[#allocation2 + $0x118] sm:$0xff] %vm366, 0.0
        %403 = vst.msk [vmem:[#allocation2 + $0x120] sm:$0xff] %vm366, 0.0
        %404 = vst.msk [vmem:[#allocation2 + $0x128] sm:$0xff] %vm366, 0.0
        %405 = vst.msk [vmem:[#allocation2 + $0x130] sm:$0xff] %vm366, 0.0
        %406 = vst.msk [vmem:[#allocation2 + $0x138] sm:$0xff] %vm366, 0.0
        %407 = vst.msk [vmem:[#allocation2 + $0x140] sm:$0xff] %vm366, 0.0
        %408 = vst.msk [vmem:[#allocation2 + $0x148] sm:$0xff] %vm366, 0.0
        %409 = vst.msk [vmem:[#allocation2 + $0x150] sm:$0xff] %vm366, 0.0
        %410 = vst.msk [vmem:[#allocation2 + $0x158] sm:$0xff] %vm366, 0.0
        %411 = vst.msk [vmem:[#allocation2 + $0x160] sm:$0xff] %vm366, 0.0
        %412 = vst.msk [vmem:[#allocation2 + $0x168] sm:$0xff] %vm366, 0.0
        %413 = vst.msk [vmem:[#allocation2 + $0x170] sm:$0xff] %vm366, 0.0
        %414 = vst.msk [vmem:[#allocation2 + $0x178] sm:$0xff] %vm366, 0.0
        %415 = vst.msk [vmem:[#allocation2 + $0x180] sm:$0xff] %vm366, 0.0
        %416 = vst.msk [vmem:[#allocation2 + $0x188] sm:$0xff] %vm366, 0.0
        %417 = vst.msk [vmem:[#allocation2 + $0x190] sm:$0xff] %vm366, 0.0
        %418 = vst.msk [vmem:[#allocation2 + $0x198] sm:$0xff] %vm366, 0.0
        %419 = vst.msk [vmem:[#allocation2 + $0x1a0] sm:$0xff] %vm366, 0.0
        %420 = vst.msk [vmem:[#allocation2 + $0x1a8] sm:$0xff] %vm366, 0.0
        %421 = vst.msk [vmem:[#allocation2 + $0x1b0] sm:$0xff] %vm366, 0.0
        %422 = vst.msk [vmem:[#allocation2 + $0x1b8] sm:$0xff] %vm366, 0.0
        %423 = vst.msk [vmem:[#allocation2 + $0x1c0] sm:$0xff] %vm366, 0.0
        %424 = vst.msk [vmem:[#allocation2 + $0x1c8] sm:$0xff] %vm366, 0.0
        %425 = vst.msk [vmem:[#allocation2 + $0x1d0] sm:$0xff] %vm366, 0.0
        %426 = vst.msk [vmem:[#allocation2 + $0x1d8] sm:$0xff] %vm366, 0.0
        %427 = vst.msk [vmem:[#allocation2 + $0x1e0] sm:$0xff] %vm366, 0.0
        %428 = vst.msk [vmem:[#allocation2 + $0x1e8] sm:$0xff] %vm366, 0.0
        %429 = vst.msk [vmem:[#allocation2 + $0x1f0] sm:$0xff] %vm366, 0.0
        %430 = vst.msk [vmem:[#allocation2 + $0x1f8] sm:$0xff] %vm366, 0.0
        %431 = vst.msk [vmem:[#allocation2 + $0x200] sm:$0xff] %vm366, 0.0
        %432 = vst.msk [vmem:[#allocation2 + $0x208] sm:$0xff] %vm366, 0.0
        %433 = vst.msk [vmem:[#allocation2 + $0x210] sm:$0xff] %vm366, 0.0
        %434 = vst.msk [vmem:[#allocation2 + $0x218] sm:$0xff] %vm366, 0.0
        %435 = vst.msk [vmem:[#allocation2 + $0x220] sm:$0xff] %vm366, 0.0
        %436 = vst.msk [vmem:[#allocation2 + $0x228] sm:$0xff] %vm366, 0.0
        %437 = vst.msk [vmem:[#allocation2 + $0x230] sm:$0xff] %vm366, 0.0
        %438 = vst.msk [vmem:[#allocation2 + $0x238] sm:$0xff] %vm366, 0.0
        %439 = vst.msk [vmem:[#allocation2 + $0x240] sm:$0xff] %vm366, 0.0
        %440 = vst.msk [vmem:[#allocation2 + $0x248] sm:$0xff] %vm366, 0.0
        %441 = vst.msk [vmem:[#allocation2 + $0x250] sm:$0xff] %vm366, 0.0
        %442 = vst.msk [vmem:[#allocation2 + $0x258] sm:$0xff] %vm366, 0.0
        %443 = vst.msk [vmem:[#allocation2 + $0x260] sm:$0xff] %vm366, 0.0
        %444 = vst.msk [vmem:[#allocation2 + $0x268] sm:$0xff] %vm366, 0.0
        %445 = vst.msk [vmem:[#allocation2 + $0x270] sm:$0xff] %vm366, 0.0
        %446 = vst.msk [vmem:[#allocation2 + $0x278] sm:$0xff] %vm366, 0.0
        %447 = vst.msk [vmem:[#allocation2 + $0x280] sm:$0xff] %vm366, 0.0
        %448 = vst.msk [vmem:[#allocation2 + $0x288] sm:$0xff] %vm366, 0.0
        %449 = vst.msk [vmem:[#allocation2 + $0x290] sm:$0xff] %vm366, 0.0
        %450 = vst.msk [vmem:[#allocation2 + $0x298] sm:$0xff] %vm366, 0.0
        %451 = vst.msk [vmem:[#allocation2 + $0x2a0] sm:$0xff] %vm366, 0.0
        %452 = vst.msk [vmem:[#allocation2 + $0x2a8] sm:$0xff] %vm366, 0.0
        %453 = vst.msk [vmem:[#allocation2 + $0x2b0] sm:$0xff] %vm366, 0.0
        %454 = vst.msk [vmem:[#allocation2 + $0x2b8] sm:$0xff] %vm366, 0.0
        %v455 = vld [vmem:[%s356] sm:$0xff]
        %v456 = vld [vmem:[%s356 + $0x8] sm:$0xff]
        %v457 = vld [vmem:[%s356 + $0x10] sm:$0xff]
        %v458 = vld [vmem:[%s356 + $0x18] sm:$0xff]
        %v459 = vld [vmem:[%s356 + $0x20] sm:$0xff]
        %v460 = vld [vmem:[%s356 + $0x28] sm:$0xff]
        %v461 = vld [vmem:[%s356 + $0x30] sm:$0xff]
        %v462 = vld [vmem:[%s356 + $0x38] sm:$0xff]
        %v463 = vld [vmem:[%s356 + $0x40] sm:$0xff]
        %v464 = vld [vmem:[%s356 + $0x48] sm:$0xff]
        %v465 = vld [vmem:[%s356 + $0x50] sm:$0xff]
        %v466 = vld [vmem:[%s356 + $0x58] sm:$0xff]
        %v467 = vld [vmem:[%s356 + $0x60] sm:$0xff]
        %v468 = vld [vmem:[%s356 + $0x68] sm:$0xff]
        %v469 = vld [vmem:[%s356 + $0x70] sm:$0xff]
        %v470 = vld [vmem:[%s356 + $0x78] sm:$0xff]
        %v471 = vld [vmem:[%s356 + $0x80] sm:$0xff]
        %v472 = vld [vmem:[%s356 + $0x88] sm:$0xff]
        %v473 = vld [vmem:[%s356 + $0x90] sm:$0xff]
        %v474 = vld [vmem:[%s356 + $0x98] sm:$0xff]
        %v475 = vld [vmem:[%s356 + $0xa0] sm:$0xff]
        %v476 = vld [vmem:[%s356 + $0xa8] sm:$0xff]
        %v477 = vld [vmem:[%s356 + $0xb0] sm:$0xff]
        %v478 = vld [vmem:[%s356 + $0xb8] sm:$0xff]
        %v479 = vld [vmem:[%s356 + $0xc0] sm:$0xff]
        %v480 = vld [vmem:[%s356 + $0xc8] sm:$0xff]
        %v481 = vld [vmem:[%s356 + $0xd0] sm:$0xff]
        %v482 = vld [vmem:[%s356 + $0xd8] sm:$0xff]
        %v483 = vld [vmem:[%s356 + $0xe0] sm:$0xff]
        %v484 = vld [vmem:[%s356 + $0xe8] sm:$0xff]
        %v485 = vld [vmem:[%s356 + $0xf0] sm:$0xff]
        %v486 = vld [vmem:[%s356 + $0xf8] sm:$0xff]
        %s487 = scalar_lea.vmem [#allocation2], 96
        %488 = vst.msk [vmem:[%s487 + $0x8] sm:$0xff] %vm366, %v455
        %489 = vst.msk [vmem:[%s487 + $0x10] sm:$0xff] %vm366, %v456
        %490 = vst.msk [vmem:[%s487 + $0x28] sm:$0xff] %vm366, %v457
        %491 = vst.msk [vmem:[%s487 + $0x30] sm:$0xff] %vm366, %v458
        %492 = vst.msk [vmem:[%s487 + $0x48] sm:$0xff] %vm366, %v459
        %493 = vst.msk [vmem:[%s487 + $0x50] sm:$0xff] %vm366, %v460
        %494 = vst.msk [vmem:[%s487 + $0x68] sm:$0xff] %vm366, %v461
        %495 = vst.msk [vmem:[%s487 + $0x70] sm:$0xff] %vm366, %v462
        %496 = vst.msk [vmem:[%s487 + $0x88] sm:$0xff] %vm366, %v463
        %497 = vst.msk [vmem:[%s487 + $0x90] sm:$0xff] %vm366, %v464
        %498 = vst.msk [vmem:[%s487 + $0xa8] sm:$0xff] %vm366, %v465
        %499 = vst.msk [vmem:[%s487 + $0xb0] sm:$0xff] %vm366, %v466
        %500 = vst.msk [vmem:[%s487 + $0xc8] sm:$0xff] %vm366, %v467
        %501 = vst.msk [vmem:[%s487 + $0xd0] sm:$0xff] %vm366, %v468
        %502 = vst.msk [vmem:[%s487 + $0xe8] sm:$0xff] %vm366, %v469
        %503 = vst.msk [vmem:[%s487 + $0xf0] sm:$0xff] %vm366, %v470
        %504 = vst.msk [vmem:[%s487 + $0x108] sm:$0xff] %vm366, %v471
        %505 = vst.msk [vmem:[%s487 + $0x110] sm:$0xff] %vm366, %v472
        %506 = vst.msk [vmem:[%s487 + $0x128] sm:$0xff] %vm366, %v473
        %507 = vst.msk [vmem:[%s487 + $0x130] sm:$0xff] %vm366, %v474
        %508 = vst.msk [vmem:[%s487 + $0x148] sm:$0xff] %vm366, %v475
        %509 = vst.msk [vmem:[%s487 + $0x150] sm:$0xff] %vm366, %v476
        %510 = vst.msk [vmem:[%s487 + $0x168] sm:$0xff] %vm366, %v477
        %511 = vst.msk [vmem:[%s487 + $0x170] sm:$0xff] %vm366, %v478
        %512 = vst.msk [vmem:[%s487 + $0x188] sm:$0xff] %vm366, %v479
        %513 = vst.msk [vmem:[%s487 + $0x190] sm:$0xff] %vm366, %v480
        %514 = vst.msk [vmem:[%s487 + $0x1a8] sm:$0xff] %vm366, %v481
        %515 = vst.msk [vmem:[%s487 + $0x1b0] sm:$0xff] %vm366, %v482
        %516 = vst.msk [vmem:[%s487 + $0x1c8] sm:$0xff] %vm366, %v483
        %517 = vst.msk [vmem:[%s487 + $0x1d0] sm:$0xff] %vm366, %v484
        %518 = vst.msk [vmem:[%s487 + $0x1e8] sm:$0xff] %vm366, %v485
        %519 = vst.msk [vmem:[%s487 + $0x1f0] sm:$0xff] %vm366, %v486
        %v520 = vld [vmem:[#allocation2 + $0x5] sm:$0xff]
        %v521 = vld [vmem:[#allocation2 + $0xd] sm:$0xff]
        %v522 = vld [vmem:[#allocation2 + $0x25] sm:$0xff]
        %v523 = vld [vmem:[#allocation2 + $0x2d] sm:$0xff]
        %v524 = vld [vmem:[#allocation2 + $0x45] sm:$0xff]
        %v525 = vld [vmem:[#allocation2 + $0x4d] sm:$0xff]
        %v526 = vld [vmem:[#allocation2 + $0x65] sm:$0xff]
        %v527 = vld [vmem:[#allocation2 + $0x6d] sm:$0xff]
        %v528 = vld [vmem:[#allocation2 + $0x85] sm:$0xff]
        %v529 = vld [vmem:[#allocation2 + $0x8d] sm:$0xff]
        %v530 = vld [vmem:[#allocation2 + $0xa5] sm:$0xff]
        %v531 = vld [vmem:[#allocation2 + $0xad] sm:$0xff]
        %v532 = vld [vmem:[#allocation2 + $0xc5] sm:$0xff]
        %v533 = vld [vmem:[#allocation2 + $0xcd] sm:$0xff]
        %v534 = vld [vmem:[#allocation2 + $0xe5] sm:$0xff]
        %v535 = vld [vmem:[#allocation2 + $0xed] sm:$0xff]
        %v536 = vld [vmem:[#allocation2 + $0x105] sm:$0xff]
        %v537 = vld [vmem:[#allocation2 + $0x10d] sm:$0xff]
        %v538 = vld [vmem:[#allocation2 + $0x125] sm:$0xff]
        %v539 = vld [vmem:[#allocation2 + $0x12d] sm:$0xff]
        %v540 = vld [vmem:[#allocation2 + $0x145] sm:$0xff]
        %v541 = vld [vmem:[#allocation2 + $0x14d] sm:$0xff]
        %v542 = vld [vmem:[#allocation2 + $0x165] sm:$0xff]
        %v543 = vld [vmem:[#allocation2 + $0x16d] sm:$0xff]
        %v544 = vld [vmem:[#allocation2 + $0x185] sm:$0xff]
        %v545 = vld [vmem:[#allocation2 + $0x18d] sm:$0xff]
        %v546 = vld [vmem:[#allocation2 + $0x1a5] sm:$0xff]
        %v547 = vld [vmem:[#allocation2 + $0x1ad] sm:$0xff]
        %v548 = vld [vmem:[#allocation2 + $0x1c5] sm:$0xff]
        %v549 = vld [vmem:[#allocation2 + $0x1cd] sm:$0xff]
        %v550 = vld [vmem:[#allocation2 + $0x1e5] sm:$0xff]
        %v551 = vld [vmem:[#allocation2 + $0x1ed] sm:$0xff]
        %v552 = vld [vmem:[%s361] sm:$0x1]
        %v553 = vlaneseq
        %v554 = vshrl.u32 %v553, 7
        %v555 = vsub.s32 0, %v554
        %v556 = vrot.slane %v552, %v555
        %v557 = vmul.f32 %v520, %v556
        %v558 = vmul.f32 %v521, %v556
        %v559 = vmul.f32 %v522, %v556
        %v560 = vmul.f32 %v523, %v556
        %v561 = vmul.f32 %v524, %v556
        %v562 = vmul.f32 %v525, %v556
        %v563 = vmul.f32 %v526, %v556
        %v564 = vmul.f32 %v527, %v556
        %v565 = vmul.f32 %v528, %v556
        %v566 = vmul.f32 %v529, %v556
        %v567 = vmul.f32 %v530, %v556
        %v568 = vmul.f32 %v531, %v556
        %v569 = vmul.f32 %v532, %v556
        %v570 = vmul.f32 %v533, %v556
        %v571 = vmul.f32 %v534, %v556
        %v572 = vmul.f32 %v535, %v556
        %v573 = vmul.f32 %v536, %v556
        %v574 = vmul.f32 %v537, %v556
        %v575 = vmul.f32 %v538, %v556
        %v576 = vmul.f32 %v539, %v556
        %v577 = vmul.f32 %v540, %v556
        %v578 = vmul.f32 %v541, %v556
        %v579 = vmul.f32 %v542, %v556
        %v580 = vmul.f32 %v543, %v556
        %v581 = vmul.f32 %v544, %v556
        %v582 = vmul.f32 %v545, %v556
        %v583 = vmul.f32 %v546, %v556
        %v584 = vmul.f32 %v547, %v556
        %v585 = vmul.f32 %v548, %v556
        %v586 = vmul.f32 %v549, %v556
        %v587 = vmul.f32 %v550, %v556
        %v588 = vmul.f32 %v551, %v556
        %v589 = vadd.f32 %v557, 0.0
        %v590 = vadd.f32 %v558, 0.0
        %v591 = vadd.f32 %v559, 0.0
        %v592 = vadd.f32 %v560, 0.0
        %v593 = vadd.f32 %v561, 0.0
        %v594 = vadd.f32 %v562, 0.0
        %v595 = vadd.f32 %v563, 0.0
        %v596 = vadd.f32 %v564, 0.0
        %v597 = vadd.f32 %v565, 0.0
        %v598 = vadd.f32 %v566, 0.0
        %v599 = vadd.f32 %v567, 0.0
        %v600 = vadd.f32 %v568, 0.0
        %v601 = vadd.f32 %v569, 0.0
        %v602 = vadd.f32 %v570, 0.0
        %v603 = vadd.f32 %v571, 0.0
        %v604 = vadd.f32 %v572, 0.0
        %v605 = vadd.f32 %v573, 0.0
        %v606 = vadd.f32 %v574, 0.0
        %v607 = vadd.f32 %v575, 0.0
        %v608 = vadd.f32 %v576, 0.0
        %v609 = vadd.f32 %v577, 0.0
        %v610 = vadd.f32 %v578, 0.0
        %v611 = vadd.f32 %v579, 0.0
        %v612 = vadd.f32 %v580, 0.0
        %v613 = vadd.f32 %v581, 0.0
        %v614 = vadd.f32 %v582, 0.0
        %v615 = vadd.f32 %v583, 0.0
        %v616 = vadd.f32 %v584, 0.0
        %v617 = vadd.f32 %v585, 0.0
        %v618 = vadd.f32 %v586, 0.0
        %v619 = vadd.f32 %v587, 0.0
        %v620 = vadd.f32 %v588, 0.0
        %v621 = vld [vmem:[#allocation2 + $0x6] sm:$0xff]
        %v622 = vld [vmem:[#allocation2 + $0xe] sm:$0xff]
        %v623 = vld [vmem:[#allocation2 + $0x26] sm:$0xff]
        %v624 = vld [vmem:[#allocation2 + $0x2e] sm:$0xff]
        %v625 = vld [vmem:[#allocation2 + $0x46] sm:$0xff]
        %v626 = vld [vmem:[#allocation2 + $0x4e] sm:$0xff]
        %v627 = vld [vmem:[#allocation2 + $0x66] sm:$0xff]
        %v628 = vld [vmem:[#allocation2 + $0x6e] sm:$0xff]
        %v629 = vld [vmem:[#allocation2 + $0x86] sm:$0xff]
        %v630 = vld [vmem:[#allocation2 + $0x8e] sm:$0xff]
        %v631 = vld [vmem:[#allocation2 + $0xa6] sm:$0xff]
        %v632 = vld [vmem:[#allocation2 + $0xae] sm:$0xff]
        %v633 = vld [vmem:[#allocation2 + $0xc6] sm:$0xff]
        %v634 = vld [vmem:[#allocation2 + $0xce] sm:$0xff]
        %v635 = vld [vmem:[#allocation2 + $0xe6] sm:$0xff]
        %v636 = vld [vmem:[#allocation2 + $0xee] sm:$0xff]
        %v637 = vld [vmem:[#allocation2 + $0x106] sm:$0xff]
        %v638 = vld [vmem:[#allocation2 + $0x10e] sm:$0xff]
        %v639 = vld [vmem:[#allocation2 + $0x126] sm:$0xff]
        %v640 = vld [vmem:[#allocation2 + $0x12e] sm:$0xff]
        %v641 = vld [vmem:[#allocation2 + $0x146] sm:$0xff]
        %v642 = vld [vmem:[#allocation2 + $0x14e] sm:$0xff]
        %v643 = vld [vmem:[#allocation2 + $0x166] sm:$0xff]
        %v644 = vld [vmem:[#allocation2 + $0x16e] sm:$0xff]
        %v645 = vld [vmem:[#allocation2 + $0x186] sm:$0xff]
        %v646 = vld [vmem:[#allocation2 + $0x18e] sm:$0xff]
        %v647 = vld [vmem:[#allocation2 + $0x1a6] sm:$0xff]
        %v648 = vld [vmem:[#allocation2 + $0x1ae] sm:$0xff]
        %v649 = vld [vmem:[#allocation2 + $0x1c6] sm:$0xff]
        %v650 = vld [vmem:[#allocation2 + $0x1ce] sm:$0xff]
        %v651 = vld [vmem:[#allocation2 + $0x1e6] sm:$0xff]
        %v652 = vld [vmem:[#allocation2 + $0x1ee] sm:$0xff]
        %v653 = vld [vmem:[%s361 + $0x1] sm:$0x1]
        %v654 = vlaneseq
        %v655 = vshrl.u32 %v654, 7
        %v656 = vsub.s32 0, %v655
        %v657 = vrot.slane %v653, %v656
        %v658 = vmul.f32 %v621, %v657
        %v659 = vmul.f32 %v622, %v657
        %v660 = vmul.f32 %v623, %v657
        %v661 = vmul.f32 %v624, %v657
        %v662 = vmul.f32 %v625, %v657
        %v663 = vmul.f32 %v626, %v657
        %v664 = vmul.f32 %v627, %v657
        %v665 = vmul.f32 %v628, %v657
        %v666 = vmul.f32 %v629, %v657
        %v667 = vmul.f32 %v630, %v657
        %v668 = vmul.f32 %v631, %v657
        %v669 = vmul.f32 %v632, %v657
        %v670 = vmul.f32 %v633, %v657
        %v671 = vmul.f32 %v634, %v657
        %v672 = vmul.f32 %v635, %v657
        %v673 = vmul.f32 %v636, %v657
        %v674 = vmul.f32 %v637, %v657
        %v675 = vmul.f32 %v638, %v657
        %v676 = vmul.f32 %v639, %v657
        %v677 = vmul.f32 %v640, %v657
        %v678 = vmul.f32 %v641, %v657
        %v679 = vmul.f32 %v642, %v657
        %v680 = vmul.f32 %v643, %v657
        %v681 = vmul.f32 %v644, %v657
        %v682 = vmul.f32 %v645, %v657
        %v683 = vmul.f32 %v646, %v657
        %v684 = vmul.f32 %v647, %v657
        %v685 = vmul.f32 %v648, %v657
        %v686 = vmul.f32 %v649, %v657
        %v687 = vmul.f32 %v650, %v657
        %v688 = vmul.f32 %v651, %v657
        %v689 = vmul.f32 %v652, %v657
        %v690 = vadd.f32 %v589, %v658
        %v691 = vadd.f32 %v590, %v659
        %v692 = vadd.f32 %v591, %v660
        %v693 = vadd.f32 %v592, %v661
        %v694 = vadd.f32 %v593, %v662
        %v695 = vadd.f32 %v594, %v663
        %v696 = vadd.f32 %v595, %v664
        %v697 = vadd.f32 %v596, %v665
        %v698 = vadd.f32 %v597, %v666
        %v699 = vadd.f32 %v598, %v667
        %v700 = vadd.f32 %v599, %v668
        %v701 = vadd.f32 %v600, %v669
        %v702 = vadd.f32 %v601, %v670
        %v703 = vadd.f32 %v602, %v671
        %v704 = vadd.f32 %v603, %v672
        %v705 = vadd.f32 %v604, %v673
        %v706 = vadd.f32 %v605, %v674
        %v707 = vadd.f32 %v606, %v675
        %v708 = vadd.f32 %v607, %v676
        %v709 = vadd.f32 %v608, %v677
        %v710 = vadd.f32 %v609, %v678
        %v711 = vadd.f32 %v610, %v679
        %v712 = vadd.f32 %v611, %v680
        %v713 = vadd.f32 %v612, %v681
        %v714 = vadd.f32 %v613, %v682
        %v715 = vadd.f32 %v614, %v683
        %v716 = vadd.f32 %v615, %v684
        %v717 = vadd.f32 %v616, %v685
        %v718 = vadd.f32 %v617, %v686
        %v719 = vadd.f32 %v618, %v687
        %v720 = vadd.f32 %v619, %v688
        %v721 = vadd.f32 %v620, %v689
        %v722 = vld [vmem:[#allocation2 + $0x7] sm:$0xff]
        %v723 = vld [vmem:[#allocation2 + $0xf] sm:$0xff]
        %v724 = vld [vmem:[#allocation2 + $0x27] sm:$0xff]
        %v725 = vld [vmem:[#allocation2 + $0x2f] sm:$0xff]
        %v726 = vld [vmem:[#allocation2 + $0x47] sm:$0xff]
        %v727 = vld [vmem:[#allocation2 + $0x4f] sm:$0xff]
        %v728 = vld [vmem:[#allocation2 + $0x67] sm:$0xff]
        %v729 = vld [vmem:[#allocation2 + $0x6f] sm:$0xff]
        %v730 = vld [vmem:[#allocation2 + $0x87] sm:$0xff]
        %v731 = vld [vmem:[#allocation2 + $0x8f] sm:$0xff]
        %v732 = vld [vmem:[#allocation2 + $0xa7] sm:$0xff]
        %v733 = vld [vmem:[#allocation2 + $0xaf] sm:$0xff]
        %v734 = vld [vmem:[#allocation2 + $0xc7] sm:$0xff]
        %v735 = vld [vmem:[#allocation2 + $0xcf] sm:$0xff]
        %v736 = vld [vmem:[#allocation2 + $0xe7] sm:$0xff]
        %v737 = vld [vmem:[#allocation2 + $0xef] sm:$0xff]
        %v738 = vld [vmem:[#allocation2 + $0x107] sm:$0xff]
        %v739 = vld [vmem:[#allocation2 + $0x10f] sm:$0xff]
        %v740 = vld [vmem:[#allocation2 + $0x127] sm:$0xff]
        %v741 = vld [vmem:[#allocation2 + $0x12f] sm:$0xff]
        %v742 = vld [vmem:[#allocation2 + $0x147] sm:$0xff]
        %v743 = vld [vmem:[#allocation2 + $0x14f] sm:$0xff]
        %v744 = vld [vmem:[#allocation2 + $0x167] sm:$0xff]
        %v745 = vld [vmem:[#allocation2 + $0x16f] sm:$0xff]
        %v746 = vld [vmem:[#allocation2 + $0x187] sm:$0xff]
        %v747 = vld [vmem:[#allocation2 + $0x18f] sm:$0xff]
        %v748 = vld [vmem:[#allocation2 + $0x1a7] sm:$0xff]
        %v749 = vld [vmem:[#allocation2 + $0x1af] sm:$0xff]
        %v750 = vld [vmem:[#allocation2 + $0x1c7] sm:$0xff]
        %v751 = vld [vmem:[#allocation2 + $0x1cf] sm:$0xff]
        %v752 = vld [vmem:[#allocation2 + $0x1e7] sm:$0xff]
        %v753 = vld [vmem:[#allocation2 + $0x1ef] sm:$0xff]
        %v754 = vld [vmem:[%s361 + $0x2] sm:$0x1]
        %v755 = vlaneseq
        %v756 = vshrl.u32 %v755, 7
        %v757 = vsub.s32 0, %v756
        %v758 = vrot.slane %v754, %v757
        %v759 = vmul.f32 %v722, %v758
        %v760 = vmul.f32 %v723, %v758
        %v761 = vmul.f32 %v724, %v758
        %v762 = vmul.f32 %v725, %v758
        %v763 = vmul.f32 %v726, %v758
        %v764 = vmul.f32 %v727, %v758
        %v765 = vmul.f32 %v728, %v758
        %v766 = vmul.f32 %v729, %v758
        %v767 = vmul.f32 %v730, %v758
        %v768 = vmul.f32 %v731, %v758
        %v769 = vmul.f32 %v732, %v758
        %v770 = vmul.f32 %v733, %v758
        %v771 = vmul.f32 %v734, %v758
        %v772 = vmul.f32 %v735, %v758
        %v773 = vmul.f32 %v736, %v758
        %v774 = vmul.f32 %v737, %v758
        %v775 = vmul.f32 %v738, %v758
        %v776 = vmul.f32 %v739, %v758
        %v777 = vmul.f32 %v740, %v758
        %v778 = vmul.f32 %v741, %v758
        %v779 = vmul.f32 %v742, %v758
        %v780 = vmul.f32 %v743, %v758
        %v781 = vmul.f32 %v744, %v758
        %v782 = vmul.f32 %v745, %v758
        %v783 = vmul.f32 %v746, %v758
        %v784 = vmul.f32 %v747, %v758
        %v785 = vmul.f32 %v748, %v758
        %v786 = vmul.f32 %v749, %v758
        %v787 = vmul.f32 %v750, %v758
        %v788 = vmul.f32 %v751, %v758
        %v789 = vmul.f32 %v752, %v758
        %v790 = vmul.f32 %v753, %v758
        %v791 = vadd.f32 %v690, %v759
        %v792 = vadd.f32 %v691, %v760
        %v793 = vadd.f32 %v692, %v761
        %v794 = vadd.f32 %v693, %v762
        %v795 = vadd.f32 %v694, %v763
        %v796 = vadd.f32 %v695, %v764
        %v797 = vadd.f32 %v696, %v765
        %v798 = vadd.f32 %v697, %v766
        %v799 = vadd.f32 %v698, %v767
        %v800 = vadd.f32 %v699, %v768
        %v801 = vadd.f32 %v700, %v769
        %v802 = vadd.f32 %v701, %v770
        %v803 = vadd.f32 %v702, %v771
        %v804 = vadd.f32 %v703, %v772
        %v805 = vadd.f32 %v704, %v773
        %v806 = vadd.f32 %v705, %v774
        %v807 = vadd.f32 %v706, %v775
        %v808 = vadd.f32 %v707, %v776
        %v809 = vadd.f32 %v708, %v777
        %v810 = vadd.f32 %v709, %v778
        %v811 = vadd.f32 %v710, %v779
        %v812 = vadd.f32 %v711, %v780
        %v813 = vadd.f32 %v712, %v781
        %v814 = vadd.f32 %v713, %v782
        %v815 = vadd.f32 %v714, %v783
        %v816 = vadd.f32 %v715, %v784
        %v817 = vadd.f32 %v716, %v785
        %v818 = vadd.f32 %v717, %v786
        %v819 = vadd.f32 %v718, %v787
        %v820 = vadd.f32 %v719, %v788
        %v821 = vadd.f32 %v720, %v789
        %v822 = vadd.f32 %v721, %v790
        %v823 = vld [vmem:[#allocation2 + $0x8] sm:$0xff]
        %v824 = vld [vmem:[#allocation2 + $0x10] sm:$0xff]
        %v825 = vld [vmem:[#allocation2 + $0x28] sm:$0xff]
        %v826 = vld [vmem:[#allocation2 + $0x30] sm:$0xff]
        %v827 = vld [vmem:[#allocation2 + $0x48] sm:$0xff]
        %v828 = vld [vmem:[#allocation2 + $0x50] sm:$0xff]
        %v829 = vld [vmem:[#allocation2 + $0x68] sm:$0xff]
        %v830 = vld [vmem:[#allocation2 + $0x70] sm:$0xff]
        %v831 = vld [vmem:[#allocation2 + $0x88] sm:$0xff]
        %v832 = vld [vmem:[#allocation2 + $0x90] sm:$0xff]
        %v833 = vld [vmem:[#allocation2 + $0xa8] sm:$0xff]
        %v834 = vld [vmem:[#allocation2 + $0xb0] sm:$0xff]
        %v835 = vld [vmem:[#allocation2 + $0xc8] sm:$0xff]
        %v836 = vld [vmem:[#allocation2 + $0xd0] sm:$0xff]
        %v837 = vld [vmem:[#allocation2 + $0xe8] sm:$0xff]
        %v838 = vld [vmem:[#allocation2 + $0xf0] sm:$0xff]
        %v839 = vld [vmem:[#allocation2 + $0x108] sm:$0xff]
        %v840 = vld [vmem:[#allocation2 + $0x110] sm:$0xff]
        %v841 = vld [vmem:[#allocation2 + $0x128] sm:$0xff]
        %v842 = vld [vmem:[#allocation2 + $0x130] sm:$0xff]
        %v843 = vld [vmem:[#allocation2 + $0x148] sm:$0xff]
        %v844 = vld [vmem:[#allocation2 + $0x150] sm:$0xff]
        %v845 = vld [vmem:[#allocation2 + $0x168] sm:$0xff]
        %v846 = vld [vmem:[#allocation2 + $0x170] sm:$0xff]
        %v847 = vld [vmem:[#allocation2 + $0x188] sm:$0xff]
        %v848 = vld [vmem:[#allocation2 + $0x190] sm:$0xff]
        %v849 = vld [vmem:[#allocation2 + $0x1a8] sm:$0xff]
        %v850 = vld [vmem:[#allocation2 + $0x1b0] sm:$0xff]
        %v851 = vld [vmem:[#allocation2 + $0x1c8] sm:$0xff]
        %v852 = vld [vmem:[#allocation2 + $0x1d0] sm:$0xff]
        %v853 = vld [vmem:[#allocation2 + $0x1e8] sm:$0xff]
        %v854 = vld [vmem:[#allocation2 + $0x1f0] sm:$0xff]
        %v855 = vld [vmem:[%s361 + $0x3] sm:$0x1]
        %v856 = vlaneseq
        %v857 = vshrl.u32 %v856, 7
        %v858 = vsub.s32 0, %v857
        %v859 = vrot.slane %v855, %v858
        %v860 = vmul.f32 %v823, %v859
        %v861 = vmul.f32 %v824, %v859
        %v862 = vmul.f32 %v825, %v859
        %v863 = vmul.f32 %v826, %v859
        %v864 = vmul.f32 %v827, %v859
        %v865 = vmul.f32 %v828, %v859
        %v866 = vmul.f32 %v829, %v859
        %v867 = vmul.f32 %v830, %v859
        %v868 = vmul.f32 %v831, %v859
        %v869 = vmul.f32 %v832, %v859
        %v870 = vmul.f32 %v833, %v859
        %v871 = vmul.f32 %v834, %v859
        %v872 = vmul.f32 %v835, %v859
        %v873 = vmul.f32 %v836, %v859
        %v874 = vmul.f32 %v837, %v859
        %v875 = vmul.f32 %v838, %v859
        %v876 = vmul.f32 %v839, %v859
        %v877 = vmul.f32 %v840, %v859
        %v878 = vmul.f32 %v841, %v859
        %v879 = vmul.f32 %v842, %v859
        %v880 = vmul.f32 %v843, %v859
        %v881 = vmul.f32 %v844, %v859
        %v882 = vmul.f32 %v845, %v859
        %v883 = vmul.f32 %v846, %v859
        %v884 = vmul.f32 %v847, %v859
        %v885 = vmul.f32 %v848, %v859
        %v886 = vmul.f32 %v849, %v859
        %v887 = vmul.f32 %v850, %v859
        %v888 = vmul.f32 %v851, %v859
        %v889 = vmul.f32 %v852, %v859
        %v890 = vmul.f32 %v853, %v859
        %v891 = vmul.f32 %v854, %v859
        %v892 = vadd.f32 %v791, %v860
        %v893 = vadd.f32 %v792, %v861
        %v894 = vadd.f32 %v793, %v862
        %v895 = vadd.f32 %v794, %v863
        %v896 = vadd.f32 %v795, %v864
        %v897 = vadd.f32 %v796, %v865
        %v898 = vadd.f32 %v797, %v866
        %v899 = vadd.f32 %v798, %v867
        %v900 = vadd.f32 %v799, %v868
        %v901 = vadd.f32 %v800, %v869
        %v902 = vadd.f32 %v801, %v870
        %v903 = vadd.f32 %v802, %v871
        %v904 = vadd.f32 %v803, %v872
        %v905 = vadd.f32 %v804, %v873
        %v906 = vadd.f32 %v805, %v874
        %v907 = vadd.f32 %v806, %v875
        %v908 = vadd.f32 %v807, %v876
        %v909 = vadd.f32 %v808, %v877
        %v910 = vadd.f32 %v809, %v878
        %v911 = vadd.f32 %v810, %v879
        %v912 = vadd.f32 %v811, %v880
        %v913 = vadd.f32 %v812, %v881
        %v914 = vadd.f32 %v813, %v882
        %v915 = vadd.f32 %v814, %v883
        %v916 = vadd.f32 %v815, %v884
        %v917 = vadd.f32 %v816, %v885
        %v918 = vadd.f32 %v817, %v886
        %v919 = vadd.f32 %v818, %v887
        %v920 = vadd.f32 %v819, %v888
        %v921 = vadd.f32 %v820, %v889
        %v922 = vadd.f32 %v821, %v890
        %v923 = vadd.f32 %v822, %v891
        %v924 = vld [vmem:[#allocation2 + $0x9] sm:$0xff]
        %v925 = vld [vmem:[#allocation2 + $0x11] sm:$0xff]
        %v926 = vld [vmem:[#allocation2 + $0x29] sm:$0xff]
        %v927 = vld [vmem:[#allocation2 + $0x31] sm:$0xff]
        %v928 = vld [vmem:[#allocation2 + $0x49] sm:$0xff]
        %v929 = vld [vmem:[#allocation2 + $0x51] sm:$0xff]
        %v930 = vld [vmem:[#allocation2 + $0x69] sm:$0xff]
        %v931 = vld [vmem:[#allocation2 + $0x71] sm:$0xff]
        %v932 = vld [vmem:[#allocation2 + $0x89] sm:$0xff]
        %v933 = vld [vmem:[#allocation2 + $0x91] sm:$0xff]
        %v934 = vld [vmem:[#allocation2 + $0xa9] sm:$0xff]
        %v935 = vld [vmem:[#allocation2 + $0xb1] sm:$0xff]
        %v936 = vld [vmem:[#allocation2 + $0xc9] sm:$0xff]
        %v937 = vld [vmem:[#allocation2 + $0xd1] sm:$0xff]
        %v938 = vld [vmem:[#allocation2 + $0xe9] sm:$0xff]
        %v939 = vld [vmem:[#allocation2 + $0xf1] sm:$0xff]
        %v940 = vld [vmem:[#allocation2 + $0x109] sm:$0xff]
        %v941 = vld [vmem:[#allocation2 + $0x111] sm:$0xff]
        %v942 = vld [vmem:[#allocation2 + $0x129] sm:$0xff]
        %v943 = vld [vmem:[#allocation2 + $0x131] sm:$0xff]
        %v944 = vld [vmem:[#allocation2 + $0x149] sm:$0xff]
        %v945 = vld [vmem:[#allocation2 + $0x151] sm:$0xff]
        %v946 = vld [vmem:[#allocation2 + $0x169] sm:$0xff]
        %v947 = vld [vmem:[#allocation2 + $0x171] sm:$0xff]
        %v948 = vld [vmem:[#allocation2 + $0x189] sm:$0xff]
        %v949 = vld [vmem:[#allocation2 + $0x191] sm:$0xff]
        %v950 = vld [vmem:[#allocation2 + $0x1a9] sm:$0xff]
        %v951 = vld [vmem:[#allocation2 + $0x1b1] sm:$0xff]
        %v952 = vld [vmem:[#allocation2 + $0x1c9] sm:$0xff]
        %v953 = vld [vmem:[#allocation2 + $0x1d1] sm:$0xff]
        %v954 = vld [vmem:[#allocation2 + $0x1e9] sm:$0xff]
        %v955 = vld [vmem:[#allocation2 + $0x1f1] sm:$0xff]
        %v956 = vld [vmem:[%s361 + $0x4] sm:$0x1]
        %v957 = vlaneseq
        %v958 = vshrl.u32 %v957, 7
        %v959 = vsub.s32 0, %v958
        %v960 = vrot.slane %v956, %v959
        %v961 = vmul.f32 %v924, %v960
        %v962 = vmul.f32 %v925, %v960
        %v963 = vmul.f32 %v926, %v960
        %v964 = vmul.f32 %v927, %v960
        %v965 = vmul.f32 %v928, %v960
        %v966 = vmul.f32 %v929, %v960
        %v967 = vmul.f32 %v930, %v960
        %v968 = vmul.f32 %v931, %v960
        %v969 = vmul.f32 %v932, %v960
        %v970 = vmul.f32 %v933, %v960
        %v971 = vmul.f32 %v934, %v960
        %v972 = vmul.f32 %v935, %v960
        %v973 = vmul.f32 %v936, %v960
        %v974 = vmul.f32 %v937, %v960
        %v975 = vmul.f32 %v938, %v960
        %v976 = vmul.f32 %v939, %v960
        %v977 = vmul.f32 %v940, %v960
        %v978 = vmul.f32 %v941, %v960
        %v979 = vmul.f32 %v942, %v960
        %v980 = vmul.f32 %v943, %v960
        %v981 = vmul.f32 %v944, %v960
        %v982 = vmul.f32 %v945, %v960
        %v983 = vmul.f32 %v946, %v960
        %v984 = vmul.f32 %v947, %v960
        %v985 = vmul.f32 %v948, %v960
        %v986 = vmul.f32 %v949, %v960
        %v987 = vmul.f32 %v950, %v960
        %v988 = vmul.f32 %v951, %v960
        %v989 = vmul.f32 %v952, %v960
        %v990 = vmul.f32 %v953, %v960
        %v991 = vmul.f32 %v954, %v960
        %v992 = vmul.f32 %v955, %v960
        %v993 = vadd.f32 %v892, %v961
        %v994 = vadd.f32 %v893, %v962
        %v995 = vadd.f32 %v894, %v963
        %v996 = vadd.f32 %v895, %v964
        %v997 = vadd.f32 %v896, %v965
        %v998 = vadd.f32 %v897, %v966
        %v999 = vadd.f32 %v898, %v967
        %v1000 = vadd.f32 %v899, %v968
        %v1001 = vadd.f32 %v900, %v969
        %v1002 = vadd.f32 %v901, %v970
        %v1003 = vadd.f32 %v902, %v971
        %v1004 = vadd.f32 %v903, %v972
        %v1005 = vadd.f32 %v904, %v973
        %v1006 = vadd.f32 %v905, %v974
        %v1007 = vadd.f32 %v906, %v975
        %v1008 = vadd.f32 %v907, %v976
        %v1009 = vadd.f32 %v908, %v977
        %v1010 = vadd.f32 %v909, %v978
        %v1011 = vadd.f32 %v910, %v979
        %v1012 = vadd.f32 %v911, %v980
        %v1013 = vadd.f32 %v912, %v981
        %v1014 = vadd.f32 %v913, %v982
        %v1015 = vadd.f32 %v914, %v983
        %v1016 = vadd.f32 %v915, %v984
        %v1017 = vadd.f32 %v916, %v985
        %v1018 = vadd.f32 %v917, %v986
        %v1019 = vadd.f32 %v918, %v987
        %v1020 = vadd.f32 %v919, %v988
        %v1021 = vadd.f32 %v920, %v989
        %v1022 = vadd.f32 %v921, %v990
        %v1023 = vadd.f32 %v922, %v991
        %v1024 = vadd.f32 %v923, %v992
        %v1025 = vld [vmem:[#allocation2 + $0xa] sm:$0xff]
        %v1026 = vld [vmem:[#allocation2 + $0x12] sm:$0xff]
        %v1027 = vld [vmem:[#allocation2 + $0x2a] sm:$0xff]
        %v1028 = vld [vmem:[#allocation2 + $0x32] sm:$0xff]
        %v1029 = vld [vmem:[#allocation2 + $0x4a] sm:$0xff]
        %v1030 = vld [vmem:[#allocation2 + $0x52] sm:$0xff]
        %v1031 = vld [vmem:[#allocation2 + $0x6a] sm:$0xff]
        %v1032 = vld [vmem:[#allocation2 + $0x72] sm:$0xff]
        %v1033 = vld [vmem:[#allocation2 + $0x8a] sm:$0xff]
        %v1034 = vld [vmem:[#allocation2 + $0x92] sm:$0xff]
        %v1035 = vld [vmem:[#allocation2 + $0xaa] sm:$0xff]
        %v1036 = vld [vmem:[#allocation2 + $0xb2] sm:$0xff]
        %v1037 = vld [vmem:[#allocation2 + $0xca] sm:$0xff]
        %v1038 = vld [vmem:[#allocation2 + $0xd2] sm:$0xff]
        %v1039 = vld [vmem:[#allocation2 + $0xea] sm:$0xff]
        %v1040 = vld [vmem:[#allocation2 + $0xf2] sm:$0xff]
        %v1041 = vld [vmem:[#allocation2 + $0x10a] sm:$0xff]
        %v1042 = vld [vmem:[#allocation2 + $0x112] sm:$0xff]
        %v1043 = vld [vmem:[#allocation2 + $0x12a] sm:$0xff]
        %v1044 = vld [vmem:[#allocation2 + $0x132] sm:$0xff]
        %v1045 = vld [vmem:[#allocation2 + $0x14a] sm:$0xff]
        %v1046 = vld [vmem:[#allocation2 + $0x152] sm:$0xff]
        %v1047 = vld [vmem:[#allocation2 + $0x16a] sm:$0xff]
        %v1048 = vld [vmem:[#allocation2 + $0x172] sm:$0xff]
        %v1049 = vld [vmem:[#allocation2 + $0x18a] sm:$0xff]
        %v1050 = vld [vmem:[#allocation2 + $0x192] sm:$0xff]
        %v1051 = vld [vmem:[#allocation2 + $0x1aa] sm:$0xff]
        %v1052 = vld [vmem:[#allocation2 + $0x1b2] sm:$0xff]
        %v1053 = vld [vmem:[#allocation2 + $0x1ca] sm:$0xff]
        %v1054 = vld [vmem:[#allocation2 + $0x1d2] sm:$0xff]
        %v1055 = vld [vmem:[#allocation2 + $0x1ea] sm:$0xff]
        %v1056 = vld [vmem:[#allocation2 + $0x1f2] sm:$0xff]
        %v1057 = vld [vmem:[%s361 + $0x5] sm:$0x1]
        %v1058 = vlaneseq
        %v1059 = vshrl.u32 %v1058, 7
        %v1060 = vsub.s32 0, %v1059
        %v1061 = vrot.slane %v1057, %v1060
        %v1062 = vmul.f32 %v1025, %v1061
        %v1063 = vmul.f32 %v1026, %v1061
        %v1064 = vmul.f32 %v1027, %v1061
        %v1065 = vmul.f32 %v1028, %v1061
        %v1066 = vmul.f32 %v1029, %v1061
        %v1067 = vmul.f32 %v1030, %v1061
        %v1068 = vmul.f32 %v1031, %v1061
        %v1069 = vmul.f32 %v1032, %v1061
        %v1070 = vmul.f32 %v1033, %v1061
        %v1071 = vmul.f32 %v1034, %v1061
        %v1072 = vmul.f32 %v1035, %v1061
        %v1073 = vmul.f32 %v1036, %v1061
        %v1074 = vmul.f32 %v1037, %v1061
        %v1075 = vmul.f32 %v1038, %v1061
        %v1076 = vmul.f32 %v1039, %v1061
        %v1077 = vmul.f32 %v1040, %v1061
        %v1078 = vmul.f32 %v1041, %v1061
        %v1079 = vmul.f32 %v1042, %v1061
        %v1080 = vmul.f32 %v1043, %v1061
        %v1081 = vmul.f32 %v1044, %v1061
        %v1082 = vmul.f32 %v1045, %v1061
        %v1083 = vmul.f32 %v1046, %v1061
        %v1084 = vmul.f32 %v1047, %v1061
        %v1085 = vmul.f32 %v1048, %v1061
        %v1086 = vmul.f32 %v1049, %v1061
        %v1087 = vmul.f32 %v1050, %v1061
        %v1088 = vmul.f32 %v1051, %v1061
        %v1089 = vmul.f32 %v1052, %v1061
        %v1090 = vmul.f32 %v1053, %v1061
        %v1091 = vmul.f32 %v1054, %v1061
        %v1092 = vmul.f32 %v1055, %v1061
        %v1093 = vmul.f32 %v1056, %v1061
        %v1094 = vadd.f32 %v993, %v1062
        %v1095 = vadd.f32 %v994, %v1063
        %v1096 = vadd.f32 %v995, %v1064
        %v1097 = vadd.f32 %v996, %v1065
        %v1098 = vadd.f32 %v997, %v1066
        %v1099 = vadd.f32 %v998, %v1067
        %v1100 = vadd.f32 %v999, %v1068
        %v1101 = vadd.f32 %v1000, %v1069
        %v1102 = vadd.f32 %v1001, %v1070
        %v1103 = vadd.f32 %v1002, %v1071
        %v1104 = vadd.f32 %v1003, %v1072
        %v1105 = vadd.f32 %v1004, %v1073
        %v1106 = vadd.f32 %v1005, %v1074
        %v1107 = vadd.f32 %v1006, %v1075
        %v1108 = vadd.f32 %v1007, %v1076
        %v1109 = vadd.f32 %v1008, %v1077
        %v1110 = vadd.f32 %v1009, %v1078
        %v1111 = vadd.f32 %v1010, %v1079
        %v1112 = vadd.f32 %v1011, %v1080
        %v1113 = vadd.f32 %v1012, %v1081
        %v1114 = vadd.f32 %v1013, %v1082
        %v1115 = vadd.f32 %v1014, %v1083
        %v1116 = vadd.f32 %v1015, %v1084
        %v1117 = vadd.f32 %v1016, %v1085
        %v1118 = vadd.f32 %v1017, %v1086
        %v1119 = vadd.f32 %v1018, %v1087
        %v1120 = vadd.f32 %v1019, %v1088
        %v1121 = vadd.f32 %v1020, %v1089
        %v1122 = vadd.f32 %v1021, %v1090
        %v1123 = vadd.f32 %v1022, %v1091
        %v1124 = vadd.f32 %v1023, %v1092
        %v1125 = vadd.f32 %v1024, %v1093
        %v1126 = vld [vmem:[#allocation2 + $0xb] sm:$0xff]
        %v1127 = vld [vmem:[#allocation2 + $0x13] sm:$0xff]
        %v1128 = vld [vmem:[#allocation2 + $0x2b] sm:$0xff]
        %v1129 = vld [vmem:[#allocation2 + $0x33] sm:$0xff]
        %v1130 = vld [vmem:[#allocation2 + $0x4b] sm:$0xff]
        %v1131 = vld [vmem:[#allocation2 + $0x53] sm:$0xff]
        %v1132 = vld [vmem:[#allocation2 + $0x6b] sm:$0xff]
        %v1133 = vld [vmem:[#allocation2 + $0x73] sm:$0xff]
        %v1134 = vld [vmem:[#allocation2 + $0x8b] sm:$0xff]
        %v1135 = vld [vmem:[#allocation2 + $0x93] sm:$0xff]
        %v1136 = vld [vmem:[#allocation2 + $0xab] sm:$0xff]
        %v1137 = vld [vmem:[#allocation2 + $0xb3] sm:$0xff]
        %v1138 = vld [vmem:[#allocation2 + $0xcb] sm:$0xff]
        %v1139 = vld [vmem:[#allocation2 + $0xd3] sm:$0xff]
        %v1140 = vld [vmem:[#allocation2 + $0xeb] sm:$0xff]
        %v1141 = vld [vmem:[#allocation2 + $0xf3] sm:$0xff]
        %v1142 = vld [vmem:[#allocation2 + $0x10b] sm:$0xff]
        %v1143 = vld [vmem:[#allocation2 + $0x113] sm:$0xff]
        %v1144 = vld [vmem:[#allocation2 + $0x12b] sm:$0xff]
        %v1145 = vld [vmem:[#allocation2 + $0x133] sm:$0xff]
        %v1146 = vld [vmem:[#allocation2 + $0x14b] sm:$0xff]
        %v1147 = vld [vmem:[#allocation2 + $0x153] sm:$0xff]
        %v1148 = vld [vmem:[#allocation2 + $0x16b] sm:$0xff]
        %v1149 = vld [vmem:[#allocation2 + $0x173] sm:$0xff]
        %v1150 = vld [vmem:[#allocation2 + $0x18b] sm:$0xff]
        %v1151 = vld [vmem:[#allocation2 + $0x193] sm:$0xff]
        %v1152 = vld [vmem:[#allocation2 + $0x1ab] sm:$0xff]
        %v1153 = vld [vmem:[#allocation2 + $0x1b3] sm:$0xff]
        %v1154 = vld [vmem:[#allocation2 + $0x1cb] sm:$0xff]
        %v1155 = vld [vmem:[#allocation2 + $0x1d3] sm:$0xff]
        %v1156 = vld [vmem:[#allocation2 + $0x1eb] sm:$0xff]
        %v1157 = vld [vmem:[#allocation2 + $0x1f3] sm:$0xff]
        %v1158 = vld [vmem:[%s361 + $0x6] sm:$0x1]
        %v1159 = vlaneseq
        %v1160 = vshrl.u32 %v1159, 7
        %v1161 = vsub.s32 0, %v1160
        %v1162 = vrot.slane %v1158, %v1161
        %v1163 = vmul.f32 %v1126, %v1162
        %v1164 = vmul.f32 %v1127, %v1162
        %v1165 = vmul.f32 %v1128, %v1162
        %v1166 = vmul.f32 %v1129, %v1162
        %v1167 = vmul.f32 %v1130, %v1162
        %v1168 = vmul.f32 %v1131, %v1162
        %v1169 = vmul.f32 %v1132, %v1162
        %v1170 = vmul.f32 %v1133, %v1162
        %v1171 = vmul.f32 %v1134, %v1162
        %v1172 = vmul.f32 %v1135, %v1162
        %v1173 = vmul.f32 %v1136, %v1162
        %v1174 = vmul.f32 %v1137, %v1162
        %v1175 = vmul.f32 %v1138, %v1162
        %v1176 = vmul.f32 %v1139, %v1162
        %v1177 = vmul.f32 %v1140, %v1162
        %v1178 = vmul.f32 %v1141, %v1162
        %v1179 = vmul.f32 %v1142, %v1162
        %v1180 = vmul.f32 %v1143, %v1162
        %v1181 = vmul.f32 %v1144, %v1162
        %v1182 = vmul.f32 %v1145, %v1162
        %v1183 = vmul.f32 %v1146, %v1162
        %v1184 = vmul.f32 %v1147, %v1162
        %v1185 = vmul.f32 %v1148, %v1162
        %v1186 = vmul.f32 %v1149, %v1162
        %v1187 = vmul.f32 %v1150, %v1162
        %v1188 = vmul.f32 %v1151, %v1162
        %v1189 = vmul.f32 %v1152, %v1162
        %v1190 = vmul.f32 %v1153, %v1162
        %v1191 = vmul.f32 %v1154, %v1162
        %v1192 = vmul.f32 %v1155, %v1162
        %v1193 = vmul.f32 %v1156, %v1162
        %v1194 = vmul.f32 %v1157, %v1162
        %v1195 = vadd.f32 %v1094, %v1163
        %v1196 = vadd.f32 %v1095, %v1164
        %v1197 = vadd.f32 %v1096, %v1165
        %v1198 = vadd.f32 %v1097, %v1166
        %v1199 = vadd.f32 %v1098, %v1167
        %v1200 = vadd.f32 %v1099, %v1168
        %v1201 = vadd.f32 %v1100, %v1169
        %v1202 = vadd.f32 %v1101, %v1170
        %v1203 = vadd.f32 %v1102, %v1171
        %v1204 = vadd.f32 %v1103, %v1172
        %v1205 = vadd.f32 %v1104, %v1173
        %v1206 = vadd.f32 %v1105, %v1174
        %v1207 = vadd.f32 %v1106, %v1175
        %v1208 = vadd.f32 %v1107, %v1176
        %v1209 = vadd.f32 %v1108, %v1177
        %v1210 = vadd.f32 %v1109, %v1178
        %v1211 = vadd.f32 %v1110, %v1179
        %v1212 = vadd.f32 %v1111, %v1180
        %v1213 = vadd.f32 %v1112, %v1181
        %v1214 = vadd.f32 %v1113, %v1182
        %v1215 = vadd.f32 %v1114, %v1183
        %v1216 = vadd.f32 %v1115, %v1184
        %v1217 = vadd.f32 %v1116, %v1185
        %v1218 = vadd.f32 %v1117, %v1186
        %v1219 = vadd.f32 %v1118, %v1187
        %v1220 = vadd.f32 %v1119, %v1188
        %v1221 = vadd.f32 %v1120, %v1189
        %v1222 = vadd.f32 %v1121, %v1190
        %v1223 = vadd.f32 %v1122, %v1191
        %v1224 = vadd.f32 %v1123, %v1192
        %v1225 = vadd.f32 %v1124, %v1193
        %v1226 = vadd.f32 %v1125, %v1194
        %s1227 = scalar_lea.vmem [#allocation2], 32
        %v1228 = vld [vmem:[%s1227 + $0x5] sm:$0xff]
        %v1229 = vld [vmem:[%s1227 + $0xd] sm:$0xff]
        %v1230 = vld [vmem:[%s1227 + $0x25] sm:$0xff]
        %v1231 = vld [vmem:[%s1227 + $0x2d] sm:$0xff]
        %v1232 = vld [vmem:[%s1227 + $0x45] sm:$0xff]
        %v1233 = vld [vmem:[%s1227 + $0x4d] sm:$0xff]
        %v1234 = vld [vmem:[%s1227 + $0x65] sm:$0xff]
        %v1235 = vld [vmem:[%s1227 + $0x6d] sm:$0xff]
        %v1236 = vld [vmem:[%s1227 + $0x85] sm:$0xff]
        %v1237 = vld [vmem:[%s1227 + $0x8d] sm:$0xff]
        %v1238 = vld [vmem:[%s1227 + $0xa5] sm:$0xff]
        %v1239 = vld [vmem:[%s1227 + $0xad] sm:$0xff]
        %v1240 = vld [vmem:[%s1227 + $0xc5] sm:$0xff]
        %v1241 = vld [vmem:[%s1227 + $0xcd] sm:$0xff]
        %v1242 = vld [vmem:[%s1227 + $0xe5] sm:$0xff]
        %v1243 = vld [vmem:[%s1227 + $0xed] sm:$0xff]
        %v1244 = vld [vmem:[%s1227 + $0x105] sm:$0xff]
        %v1245 = vld [vmem:[%s1227 + $0x10d] sm:$0xff]
        %v1246 = vld [vmem:[%s1227 + $0x125] sm:$0xff]
        %v1247 = vld [vmem:[%s1227 + $0x12d] sm:$0xff]
        %v1248 = vld [vmem:[%s1227 + $0x145] sm:$0xff]
        %v1249 = vld [vmem:[%s1227 + $0x14d] sm:$0xff]
        %v1250 = vld [vmem:[%s1227 + $0x165] sm:$0xff]
        %v1251 = vld [vmem:[%s1227 + $0x16d] sm:$0xff]
        %v1252 = vld [vmem:[%s1227 + $0x185] sm:$0xff]
        %v1253 = vld [vmem:[%s1227 + $0x18d] sm:$0xff]
        %v1254 = vld [vmem:[%s1227 + $0x1a5] sm:$0xff]
        %v1255 = vld [vmem:[%s1227 + $0x1ad] sm:$0xff]
        %v1256 = vld [vmem:[%s1227 + $0x1c5] sm:$0xff]
        %v1257 = vld [vmem:[%s1227 + $0x1cd] sm:$0xff]
        %v1258 = vld [vmem:[%s1227 + $0x1e5] sm:$0xff]
        %v1259 = vld [vmem:[%s1227 + $0x1ed] sm:$0xff]
        %s1260 = scalar_lea.vmem %s361, 8
        %v1261 = vld [vmem:[%s1260] sm:$0x1]
        %v1262 = vlaneseq
        %v1263 = vshrl.u32 %v1262, 7
        %v1264 = vsub.s32 0, %v1263
        %v1265 = vrot.slane %v1261, %v1264
        %v1266 = vmul.f32 %v1228, %v1265
        %v1267 = vmul.f32 %v1229, %v1265
        %v1268 = vmul.f32 %v1230, %v1265
        %v1269 = vmul.f32 %v1231, %v1265
        %v1270 = vmul.f32 %v1232, %v1265
        %v1271 = vmul.f32 %v1233, %v1265
        %v1272 = vmul.f32 %v1234, %v1265
        %v1273 = vmul.f32 %v1235, %v1265
        %v1274 = vmul.f32 %v1236, %v1265
        %v1275 = vmul.f32 %v1237, %v1265
        %v1276 = vmul.f32 %v1238, %v1265
        %v1277 = vmul.f32 %v1239, %v1265
        %v1278 = vmul.f32 %v1240, %v1265
        %v1279 = vmul.f32 %v1241, %v1265
        %v1280 = vmul.f32 %v1242, %v1265
        %v1281 = vmul.f32 %v1243, %v1265
        %v1282 = vmul.f32 %v1244, %v1265
        %v1283 = vmul.f32 %v1245, %v1265
        %v1284 = vmul.f32 %v1246, %v1265
        %v1285 = vmul.f32 %v1247, %v1265
        %v1286 = vmul.f32 %v1248, %v1265
        %v1287 = vmul.f32 %v1249, %v1265
        %v1288 = vmul.f32 %v1250, %v1265
        %v1289 = vmul.f32 %v1251, %v1265
        %v1290 = vmul.f32 %v1252, %v1265
        %v1291 = vmul.f32 %v1253, %v1265
        %v1292 = vmul.f32 %v1254, %v1265
        %v1293 = vmul.f32 %v1255, %v1265
        %v1294 = vmul.f32 %v1256, %v1265
        %v1295 = vmul.f32 %v1257, %v1265
        %v1296 = vmul.f32 %v1258, %v1265
        %v1297 = vmul.f32 %v1259, %v1265
        %v1298 = vadd.f32 %v1195, %v1266
        %v1299 = vadd.f32 %v1196, %v1267
        %v1300 = vadd.f32 %v1197, %v1268
        %v1301 = vadd.f32 %v1198, %v1269
        %v1302 = vadd.f32 %v1199, %v1270
        %v1303 = vadd.f32 %v1200, %v1271
        %v1304 = vadd.f32 %v1201, %v1272
        %v1305 = vadd.f32 %v1202, %v1273
        %v1306 = vadd.f32 %v1203, %v1274
        %v1307 = vadd.f32 %v1204, %v1275
        %v1308 = vadd.f32 %v1205, %v1276
        %v1309 = vadd.f32 %v1206, %v1277
        %v1310 = vadd.f32 %v1207, %v1278
        %v1311 = vadd.f32 %v1208, %v1279
        %v1312 = vadd.f32 %v1209, %v1280
        %v1313 = vadd.f32 %v1210, %v1281
        %v1314 = vadd.f32 %v1211, %v1282
        %v1315 = vadd.f32 %v1212, %v1283
        %v1316 = vadd.f32 %v1213, %v1284
        %v1317 = vadd.f32 %v1214, %v1285
        %v1318 = vadd.f32 %v1215, %v1286
        %v1319 = vadd.f32 %v1216, %v1287
        %v1320 = vadd.f32 %v1217, %v1288
        %v1321 = vadd.f32 %v1218, %v1289
        %v1322 = vadd.f32 %v1219, %v1290
        %v1323 = vadd.f32 %v1220, %v1291
        %v1324 = vadd.f32 %v1221, %v1292
        %v1325 = vadd.f32 %v1222, %v1293
        %v1326 = vadd.f32 %v1223, %v1294
        %v1327 = vadd.f32 %v1224, %v1295
        %v1328 = vadd.f32 %v1225, %v1296
        %v1329 = vadd.f32 %v1226, %v1297
        %v1330 = vld [vmem:[%s1227 + $0x6] sm:$0xff]
        %v1331 = vld [vmem:[%s1227 + $0xe] sm:$0xff]
        %v1332 = vld [vmem:[%s1227 + $0x26] sm:$0xff]
        %v1333 = vld [vmem:[%s1227 + $0x2e] sm:$0xff]
        %v1334 = vld [vmem:[%s1227 + $0x46] sm:$0xff]
        %v1335 = vld [vmem:[%s1227 + $0x4e] sm:$0xff]
        %v1336 = vld [vmem:[%s1227 + $0x66] sm:$0xff]
        %v1337 = vld [vmem:[%s1227 + $0x6e] sm:$0xff]
        %v1338 = vld [vmem:[%s1227 + $0x86] sm:$0xff]
        %v1339 = vld [vmem:[%s1227 + $0x8e] sm:$0xff]
        %v1340 = vld [vmem:[%s1227 + $0xa6] sm:$0xff]
        %v1341 = vld [vmem:[%s1227 + $0xae] sm:$0xff]
        %v1342 = vld [vmem:[%s1227 + $0xc6] sm:$0xff]
        %v1343 = vld [vmem:[%s1227 + $0xce] sm:$0xff]
        %v1344 = vld [vmem:[%s1227 + $0xe6] sm:$0xff]
        %v1345 = vld [vmem:[%s1227 + $0xee] sm:$0xff]
        %v1346 = vld [vmem:[%s1227 + $0x106] sm:$0xff]
        %v1347 = vld [vmem:[%s1227 + $0x10e] sm:$0xff]
        %v1348 = vld [vmem:[%s1227 + $0x126] sm:$0xff]
        %v1349 = vld [vmem:[%s1227 + $0x12e] sm:$0xff]
        %v1350 = vld [vmem:[%s1227 + $0x146] sm:$0xff]
        %v1351 = vld [vmem:[%s1227 + $0x14e] sm:$0xff]
        %v1352 = vld [vmem:[%s1227 + $0x166] sm:$0xff]
        %v1353 = vld [vmem:[%s1227 + $0x16e] sm:$0xff]
        %v1354 = vld [vmem:[%s1227 + $0x186] sm:$0xff]
        %v1355 = vld [vmem:[%s1227 + $0x18e] sm:$0xff]
        %v1356 = vld [vmem:[%s1227 + $0x1a6] sm:$0xff]
        %v1357 = vld [vmem:[%s1227 + $0x1ae] sm:$0xff]
        %v1358 = vld [vmem:[%s1227 + $0x1c6] sm:$0xff]
        %v1359 = vld [vmem:[%s1227 + $0x1ce] sm:$0xff]
        %v1360 = vld [vmem:[%s1227 + $0x1e6] sm:$0xff]
        %v1361 = vld [vmem:[%s1227 + $0x1ee] sm:$0xff]
        %v1362 = vld [vmem:[%s1260 + $0x1] sm:$0x1]
        %v1363 = vlaneseq
        %v1364 = vshrl.u32 %v1363, 7
        %v1365 = vsub.s32 0, %v1364
        %v1366 = vrot.slane %v1362, %v1365
        %v1367 = vmul.f32 %v1330, %v1366
        %v1368 = vmul.f32 %v1331, %v1366
        %v1369 = vmul.f32 %v1332, %v1366
        %v1370 = vmul.f32 %v1333, %v1366
        %v1371 = vmul.f32 %v1334, %v1366
        %v1372 = vmul.f32 %v1335, %v1366
        %v1373 = vmul.f32 %v1336, %v1366
        %v1374 = vmul.f32 %v1337, %v1366
        %v1375 = vmul.f32 %v1338, %v1366
        %v1376 = vmul.f32 %v1339, %v1366
        %v1377 = vmul.f32 %v1340, %v1366
        %v1378 = vmul.f32 %v1341, %v1366
        %v1379 = vmul.f32 %v1342, %v1366
        %v1380 = vmul.f32 %v1343, %v1366
        %v1381 = vmul.f32 %v1344, %v1366
        %v1382 = vmul.f32 %v1345, %v1366
        %v1383 = vmul.f32 %v1346, %v1366
        %v1384 = vmul.f32 %v1347, %v1366
        %v1385 = vmul.f32 %v1348, %v1366
        %v1386 = vmul.f32 %v1349, %v1366
        %v1387 = vmul.f32 %v1350, %v1366
        %v1388 = vmul.f32 %v1351, %v1366
        %v1389 = vmul.f32 %v1352, %v1366
        %v1390 = vmul.f32 %v1353, %v1366
        %v1391 = vmul.f32 %v1354, %v1366
        %v1392 = vmul.f32 %v1355, %v1366
        %v1393 = vmul.f32 %v1356, %v1366
        %v1394 = vmul.f32 %v1357, %v1366
        %v1395 = vmul.f32 %v1358, %v1366
        %v1396 = vmul.f32 %v1359, %v1366
        %v1397 = vmul.f32 %v1360, %v1366
        %v1398 = vmul.f32 %v1361, %v1366
        %v1399 = vadd.f32 %v1298, %v1367
        %v1400 = vadd.f32 %v1299, %v1368
        %v1401 = vadd.f32 %v1300, %v1369
        %v1402 = vadd.f32 %v1301, %v1370
        %v1403 = vadd.f32 %v1302, %v1371
        %v1404 = vadd.f32 %v1303, %v1372
        %v1405 = vadd.f32 %v1304, %v1373
        %v1406 = vadd.f32 %v1305, %v1374
        %v1407 = vadd.f32 %v1306, %v1375
        %v1408 = vadd.f32 %v1307, %v1376
        %v1409 = vadd.f32 %v1308, %v1377
        %v1410 = vadd.f32 %v1309, %v1378
        %v1411 = vadd.f32 %v1310, %v1379
        %v1412 = vadd.f32 %v1311, %v1380
        %v1413 = vadd.f32 %v1312, %v1381
        %v1414 = vadd.f32 %v1313, %v1382
        %v1415 = vadd.f32 %v1314, %v1383
        %v1416 = vadd.f32 %v1315, %v1384
        %v1417 = vadd.f32 %v1316, %v1385
        %v1418 = vadd.f32 %v1317, %v1386
        %v1419 = vadd.f32 %v1318, %v1387
        %v1420 = vadd.f32 %v1319, %v1388
        %v1421 = vadd.f32 %v1320, %v1389
        %v1422 = vadd.f32 %v1321, %v1390
        %v1423 = vadd.f32 %v1322, %v1391
        %v1424 = vadd.f32 %v1323, %v1392
        %v1425 = vadd.f32 %v1324, %v1393
        %v1426 = vadd.f32 %v1325, %v1394
        %v1427 = vadd.f32 %v1326, %v1395
        %v1428 = vadd.f32 %v1327, %v1396
        %v1429 = vadd.f32 %v1328, %v1397
        %v1430 = vadd.f32 %v1329, %v1398
        %v1431 = vld [vmem:[%s1227 + $0x7] sm:$0xff]
        %v1432 = vld [vmem:[%s1227 + $0xf] sm:$0xff]
        %v1433 = vld [vmem:[%s1227 + $0x27] sm:$0xff]
        %v1434 = vld [vmem:[%s1227 + $0x2f] sm:$0xff]
        %v1435 = vld [vmem:[%s1227 + $0x47] sm:$0xff]
        %v1436 = vld [vmem:[%s1227 + $0x4f] sm:$0xff]
        %v1437 = vld [vmem:[%s1227 + $0x67] sm:$0xff]
        %v1438 = vld [vmem:[%s1227 + $0x6f] sm:$0xff]
        %v1439 = vld [vmem:[%s1227 + $0x87] sm:$0xff]
        %v1440 = vld [vmem:[%s1227 + $0x8f] sm:$0xff]
        %v1441 = vld [vmem:[%s1227 + $0xa7] sm:$0xff]
        %v1442 = vld [vmem:[%s1227 + $0xaf] sm:$0xff]
        %v1443 = vld [vmem:[%s1227 + $0xc7] sm:$0xff]
        %v1444 = vld [vmem:[%s1227 + $0xcf] sm:$0xff]
        %v1445 = vld [vmem:[%s1227 + $0xe7] sm:$0xff]
        %v1446 = vld [vmem:[%s1227 + $0xef] sm:$0xff]
        %v1447 = vld [vmem:[%s1227 + $0x107] sm:$0xff]
        %v1448 = vld [vmem:[%s1227 + $0x10f] sm:$0xff]
        %v1449 = vld [vmem:[%s1227 + $0x127] sm:$0xff]
        %v1450 = vld [vmem:[%s1227 + $0x12f] sm:$0xff]
        %v1451 = vld [vmem:[%s1227 + $0x147] sm:$0xff]
        %v1452 = vld [vmem:[%s1227 + $0x14f] sm:$0xff]
        %v1453 = vld [vmem:[%s1227 + $0x167] sm:$0xff]
        %v1454 = vld [vmem:[%s1227 + $0x16f] sm:$0xff]
        %v1455 = vld [vmem:[%s1227 + $0x187] sm:$0xff]
        %v1456 = vld [vmem:[%s1227 + $0x18f] sm:$0xff]
        %v1457 = vld [vmem:[%s1227 + $0x1a7] sm:$0xff]
        %v1458 = vld [vmem:[%s1227 + $0x1af] sm:$0xff]
        %v1459 = vld [vmem:[%s1227 + $0x1c7] sm:$0xff]
        %v1460 = vld [vmem:[%s1227 + $0x1cf] sm:$0xff]
        %v1461 = vld [vmem:[%s1227 + $0x1e7] sm:$0xff]
        %v1462 = vld [vmem:[%s1227 + $0x1ef] sm:$0xff]
        %v1463 = vld [vmem:[%s1260 + $0x2] sm:$0x1]
        %v1464 = vlaneseq
        %v1465 = vshrl.u32 %v1464, 7
        %v1466 = vsub.s32 0, %v1465
        %v1467 = vrot.slane %v1463, %v1466
        %v1468 = vmul.f32 %v1431, %v1467
        %v1469 = vmul.f32 %v1432, %v1467
        %v1470 = vmul.f32 %v1433, %v1467
        %v1471 = vmul.f32 %v1434, %v1467
        %v1472 = vmul.f32 %v1435, %v1467
        %v1473 = vmul.f32 %v1436, %v1467
        %v1474 = vmul.f32 %v1437, %v1467
        %v1475 = vmul.f32 %v1438, %v1467
        %v1476 = vmul.f32 %v1439, %v1467
        %v1477 = vmul.f32 %v1440, %v1467
        %v1478 = vmul.f32 %v1441, %v1467
        %v1479 = vmul.f32 %v1442, %v1467
        %v1480 = vmul.f32 %v1443, %v1467
        %v1481 = vmul.f32 %v1444, %v1467
        %v1482 = vmul.f32 %v1445, %v1467
        %v1483 = vmul.f32 %v1446, %v1467
        %v1484 = vmul.f32 %v1447, %v1467
        %v1485 = vmul.f32 %v1448, %v1467
        %v1486 = vmul.f32 %v1449, %v1467
        %v1487 = vmul.f32 %v1450, %v1467
        %v1488 = vmul.f32 %v1451, %v1467
        %v1489 = vmul.f32 %v1452, %v1467
        %v1490 = vmul.f32 %v1453, %v1467
        %v1491 = vmul.f32 %v1454, %v1467
        %v1492 = vmul.f32 %v1455, %v1467
        %v1493 = vmul.f32 %v1456, %v1467
        %v1494 = vmul.f32 %v1457, %v1467
        %v1495 = vmul.f32 %v1458, %v1467
        %v1496 = vmul.f32 %v1459, %v1467
        %v1497 = vmul.f32 %v1460, %v1467
        %v1498 = vmul.f32 %v1461, %v1467
        %v1499 = vmul.f32 %v1462, %v1467
        %v1500 = vadd.f32 %v1399, %v1468
        %v1501 = vadd.f32 %v1400, %v1469
        %v1502 = vadd.f32 %v1401, %v1470
        %v1503 = vadd.f32 %v1402, %v1471
        %v1504 = vadd.f32 %v1403, %v1472
        %v1505 = vadd.f32 %v1404, %v1473
        %v1506 = vadd.f32 %v1405, %v1474
        %v1507 = vadd.f32 %v1406, %v1475
        %v1508 = vadd.f32 %v1407, %v1476
        %v1509 = vadd.f32 %v1408, %v1477
        %v1510 = vadd.f32 %v1409, %v1478
        %v1511 = vadd.f32 %v1410, %v1479
        %v1512 = vadd.f32 %v1411, %v1480
        %v1513 = vadd.f32 %v1412, %v1481
        %v1514 = vadd.f32 %v1413, %v1482
        %v1515 = vadd.f32 %v1414, %v1483
        %v1516 = vadd.f32 %v1415, %v1484
        %v1517 = vadd.f32 %v1416, %v1485
        %v1518 = vadd.f32 %v1417, %v1486
        %v1519 = vadd.f32 %v1418, %v1487
        %v1520 = vadd.f32 %v1419, %v1488
        %v1521 = vadd.f32 %v1420, %v1489
        %v1522 = vadd.f32 %v1421, %v1490
        %v1523 = vadd.f32 %v1422, %v1491
        %v1524 = vadd.f32 %v1423, %v1492
        %v1525 = vadd.f32 %v1424, %v1493
        %v1526 = vadd.f32 %v1425, %v1494
        %v1527 = vadd.f32 %v1426, %v1495
        %v1528 = vadd.f32 %v1427, %v1496
        %v1529 = vadd.f32 %v1428, %v1497
        %v1530 = vadd.f32 %v1429, %v1498
        %v1531 = vadd.f32 %v1430, %v1499
        %v1532 = vld [vmem:[%s1227 + $0x8] sm:$0xff]
        %v1533 = vld [vmem:[%s1227 + $0x10] sm:$0xff]
        %v1534 = vld [vmem:[%s1227 + $0x28] sm:$0xff]
        %v1535 = vld [vmem:[%s1227 + $0x30] sm:$0xff]
        %v1536 = vld [vmem:[%s1227 + $0x48] sm:$0xff]
        %v1537 = vld [vmem:[%s1227 + $0x50] sm:$0xff]
        %v1538 = vld [vmem:[%s1227 + $0x68] sm:$0xff]
        %v1539 = vld [vmem:[%s1227 + $0x70] sm:$0xff]
        %v1540 = vld [vmem:[%s1227 + $0x88] sm:$0xff]
        %v1541 = vld [vmem:[%s1227 + $0x90] sm:$0xff]
        %v1542 = vld [vmem:[%s1227 + $0xa8] sm:$0xff]
        %v1543 = vld [vmem:[%s1227 + $0xb0] sm:$0xff]
        %v1544 = vld [vmem:[%s1227 + $0xc8] sm:$0xff]
        %v1545 = vld [vmem:[%s1227 + $0xd0] sm:$0xff]
        %v1546 = vld [vmem:[%s1227 + $0xe8] sm:$0xff]
        %v1547 = vld [vmem:[%s1227 + $0xf0] sm:$0xff]
        %v1548 = vld [vmem:[%s1227 + $0x108] sm:$0xff]
        %v1549 = vld [vmem:[%s1227 + $0x110] sm:$0xff]
        %v1550 = vld [vmem:[%s1227 + $0x128] sm:$0xff]
        %v1551 = vld [vmem:[%s1227 + $0x130] sm:$0xff]
        %v1552 = vld [vmem:[%s1227 + $0x148] sm:$0xff]
        %v1553 = vld [vmem:[%s1227 + $0x150] sm:$0xff]
        %v1554 = vld [vmem:[%s1227 + $0x168] sm:$0xff]
        %v1555 = vld [vmem:[%s1227 + $0x170] sm:$0xff]
        %v1556 = vld [vmem:[%s1227 + $0x188] sm:$0xff]
        %v1557 = vld [vmem:[%s1227 + $0x190] sm:$0xff]
        %v1558 = vld [vmem:[%s1227 + $0x1a8] sm:$0xff]
        %v1559 = vld [vmem:[%s1227 + $0x1b0] sm:$0xff]
        %v1560 = vld [vmem:[%s1227 + $0x1c8] sm:$0xff]
        %v1561 = vld [vmem:[%s1227 + $0x1d0] sm:$0xff]
        %v1562 = vld [vmem:[%s1227 + $0x1e8] sm:$0xff]
        %v1563 = vld [vmem:[%s1227 + $0x1f0] sm:$0xff]
        %v1564 = vld [vmem:[%s1260 + $0x3] sm:$0x1]
        %v1565 = vlaneseq
        %v1566 = vshrl.u32 %v1565, 7
        %v1567 = vsub.s32 0, %v1566
        %v1568 = vrot.slane %v1564, %v1567
        %v1569 = vmul.f32 %v1532, %v1568
        %v1570 = vmul.f32 %v1533, %v1568
        %v1571 = vmul.f32 %v1534, %v1568
        %v1572 = vmul.f32 %v1535, %v1568
        %v1573 = vmul.f32 %v1536, %v1568
        %v1574 = vmul.f32 %v1537, %v1568
        %v1575 = vmul.f32 %v1538, %v1568
        %v1576 = vmul.f32 %v1539, %v1568
        %v1577 = vmul.f32 %v1540, %v1568
        %v1578 = vmul.f32 %v1541, %v1568
        %v1579 = vmul.f32 %v1542, %v1568
        %v1580 = vmul.f32 %v1543, %v1568
        %v1581 = vmul.f32 %v1544, %v1568
        %v1582 = vmul.f32 %v1545, %v1568
        %v1583 = vmul.f32 %v1546, %v1568
        %v1584 = vmul.f32 %v1547, %v1568
        %v1585 = vmul.f32 %v1548, %v1568
        %v1586 = vmul.f32 %v1549, %v1568
        %v1587 = vmul.f32 %v1550, %v1568
        %v1588 = vmul.f32 %v1551, %v1568
        %v1589 = vmul.f32 %v1552, %v1568
        %v1590 = vmul.f32 %v1553, %v1568
        %v1591 = vmul.f32 %v1554, %v1568
        %v1592 = vmul.f32 %v1555, %v1568
        %v1593 = vmul.f32 %v1556, %v1568
        %v1594 = vmul.f32 %v1557, %v1568
        %v1595 = vmul.f32 %v1558, %v1568
        %v1596 = vmul.f32 %v1559, %v1568
        %v1597 = vmul.f32 %v1560, %v1568
        %v1598 = vmul.f32 %v1561, %v1568
        %v1599 = vmul.f32 %v1562, %v1568
        %v1600 = vmul.f32 %v1563, %v1568
        %v1601 = vadd.f32 %v1500, %v1569
        %v1602 = vadd.f32 %v1501, %v1570
        %v1603 = vadd.f32 %v1502, %v1571
        %v1604 = vadd.f32 %v1503, %v1572
        %v1605 = vadd.f32 %v1504, %v1573
        %v1606 = vadd.f32 %v1505, %v1574
        %v1607 = vadd.f32 %v1506, %v1575
        %v1608 = vadd.f32 %v1507, %v1576
        %v1609 = vadd.f32 %v1508, %v1577
        %v1610 = vadd.f32 %v1509, %v1578
        %v1611 = vadd.f32 %v1510, %v1579
        %v1612 = vadd.f32 %v1511, %v1580
        %v1613 = vadd.f32 %v1512, %v1581
        %v1614 = vadd.f32 %v1513, %v1582
        %v1615 = vadd.f32 %v1514, %v1583
        %v1616 = vadd.f32 %v1515, %v1584
        %v1617 = vadd.f32 %v1516, %v1585
        %v1618 = vadd.f32 %v1517, %v1586
        %v1619 = vadd.f32 %v1518, %v1587
        %v1620 = vadd.f32 %v1519, %v1588
        %v1621 = vadd.f32 %v1520, %v1589
        %v1622 = vadd.f32 %v1521, %v1590
        %v1623 = vadd.f32 %v1522, %v1591
        %v1624 = vadd.f32 %v1523, %v1592
        %v1625 = vadd.f32 %v1524, %v1593
        %v1626 = vadd.f32 %v1525, %v1594
        %v1627 = vadd.f32 %v1526, %v1595
        %v1628 = vadd.f32 %v1527, %v1596
        %v1629 = vadd.f32 %v1528, %v1597
        %v1630 = vadd.f32 %v1529, %v1598
        %v1631 = vadd.f32 %v1530, %v1599
        %v1632 = vadd.f32 %v1531, %v1600
        %v1633 = vld [vmem:[%s1227 + $0x9] sm:$0xff]
        %v1634 = vld [vmem:[%s1227 + $0x11] sm:$0xff]
        %v1635 = vld [vmem:[%s1227 + $0x29] sm:$0xff]
        %v1636 = vld [vmem:[%s1227 + $0x31] sm:$0xff]
        %v1637 = vld [vmem:[%s1227 + $0x49] sm:$0xff]
        %v1638 = vld [vmem:[%s1227 + $0x51] sm:$0xff]
        %v1639 = vld [vmem:[%s1227 + $0x69] sm:$0xff]
        %v1640 = vld [vmem:[%s1227 + $0x71] sm:$0xff]
        %v1641 = vld [vmem:[%s1227 + $0x89] sm:$0xff]
        %v1642 = vld [vmem:[%s1227 + $0x91] sm:$0xff]
        %v1643 = vld [vmem:[%s1227 + $0xa9] sm:$0xff]
        %v1644 = vld [vmem:[%s1227 + $0xb1] sm:$0xff]
        %v1645 = vld [vmem:[%s1227 + $0xc9] sm:$0xff]
        %v1646 = vld [vmem:[%s1227 + $0xd1] sm:$0xff]
        %v1647 = vld [vmem:[%s1227 + $0xe9] sm:$0xff]
        %v1648 = vld [vmem:[%s1227 + $0xf1] sm:$0xff]
        %v1649 = vld [vmem:[%s1227 + $0x109] sm:$0xff]
        %v1650 = vld [vmem:[%s1227 + $0x111] sm:$0xff]
        %v1651 = vld [vmem:[%s1227 + $0x129] sm:$0xff]
        %v1652 = vld [vmem:[%s1227 + $0x131] sm:$0xff]
        %v1653 = vld [vmem:[%s1227 + $0x149] sm:$0xff]
        %v1654 = vld [vmem:[%s1227 + $0x151] sm:$0xff]
        %v1655 = vld [vmem:[%s1227 + $0x169] sm:$0xff]
        %v1656 = vld [vmem:[%s1227 + $0x171] sm:$0xff]
        %v1657 = vld [vmem:[%s1227 + $0x189] sm:$0xff]
        %v1658 = vld [vmem:[%s1227 + $0x191] sm:$0xff]
        %v1659 = vld [vmem:[%s1227 + $0x1a9] sm:$0xff]
        %v1660 = vld [vmem:[%s1227 + $0x1b1] sm:$0xff]
        %v1661 = vld [vmem:[%s1227 + $0x1c9] sm:$0xff]
        %v1662 = vld [vmem:[%s1227 + $0x1d1] sm:$0xff]
        %v1663 = vld [vmem:[%s1227 + $0x1e9] sm:$0xff]
        %v1664 = vld [vmem:[%s1227 + $0x1f1] sm:$0xff]
        %v1665 = vld [vmem:[%s1260 + $0x4] sm:$0x1]
        %v1666 = vlaneseq
        %v1667 = vshrl.u32 %v1666, 7
        %v1668 = vsub.s32 0, %v1667
        %v1669 = vrot.slane %v1665, %v1668
        %v1670 = vmul.f32 %v1633, %v1669
        %v1671 = vmul.f32 %v1634, %v1669
        %v1672 = vmul.f32 %v1635, %v1669
        %v1673 = vmul.f32 %v1636, %v1669
        %v1674 = vmul.f32 %v1637, %v1669
        %v1675 = vmul.f32 %v1638, %v1669
        %v1676 = vmul.f32 %v1639, %v1669
        %v1677 = vmul.f32 %v1640, %v1669
        %v1678 = vmul.f32 %v1641, %v1669
        %v1679 = vmul.f32 %v1642, %v1669
        %v1680 = vmul.f32 %v1643, %v1669
        %v1681 = vmul.f32 %v1644, %v1669
        %v1682 = vmul.f32 %v1645, %v1669
        %v1683 = vmul.f32 %v1646, %v1669
        %v1684 = vmul.f32 %v1647, %v1669
        %v1685 = vmul.f32 %v1648, %v1669
        %v1686 = vmul.f32 %v1649, %v1669
        %v1687 = vmul.f32 %v1650, %v1669
        %v1688 = vmul.f32 %v1651, %v1669
        %v1689 = vmul.f32 %v1652, %v1669
        %v1690 = vmul.f32 %v1653, %v1669
        %v1691 = vmul.f32 %v1654, %v1669
        %v1692 = vmul.f32 %v1655, %v1669
        %v1693 = vmul.f32 %v1656, %v1669
        %v1694 = vmul.f32 %v1657, %v1669
        %v1695 = vmul.f32 %v1658, %v1669
        %v1696 = vmul.f32 %v1659, %v1669
        %v1697 = vmul.f32 %v1660, %v1669
        %v1698 = vmul.f32 %v1661, %v1669
        %v1699 = vmul.f32 %v1662, %v1669
        %v1700 = vmul.f32 %v1663, %v1669
        %v1701 = vmul.f32 %v1664, %v1669
        %v1702 = vadd.f32 %v1601, %v1670
        %v1703 = vadd.f32 %v1602, %v1671
        %v1704 = vadd.f32 %v1603, %v1672
        %v1705 = vadd.f32 %v1604, %v1673
        %v1706 = vadd.f32 %v1605, %v1674
        %v1707 = vadd.f32 %v1606, %v1675
        %v1708 = vadd.f32 %v1607, %v1676
        %v1709 = vadd.f32 %v1608, %v1677
        %v1710 = vadd.f32 %v1609, %v1678
        %v1711 = vadd.f32 %v1610, %v1679
        %v1712 = vadd.f32 %v1611, %v1680
        %v1713 = vadd.f32 %v1612, %v1681
        %v1714 = vadd.f32 %v1613, %v1682
        %v1715 = vadd.f32 %v1614, %v1683
        %v1716 = vadd.f32 %v1615, %v1684
        %v1717 = vadd.f32 %v1616, %v1685
        %v1718 = vadd.f32 %v1617, %v1686
        %v1719 = vadd.f32 %v1618, %v1687
        %v1720 = vadd.f32 %v1619, %v1688
        %v1721 = vadd.f32 %v1620, %v1689
        %v1722 = vadd.f32 %v1621, %v1690
        %v1723 = vadd.f32 %v1622, %v1691
        %v1724 = vadd.f32 %v1623, %v1692
        %v1725 = vadd.f32 %v1624, %v1693
        %v1726 = vadd.f32 %v1625, %v1694
        %v1727 = vadd.f32 %v1626, %v1695
        %v1728 = vadd.f32 %v1627, %v1696
        %v1729 = vadd.f32 %v1628, %v1697
        %v1730 = vadd.f32 %v1629, %v1698
        %v1731 = vadd.f32 %v1630, %v1699
        %v1732 = vadd.f32 %v1631, %v1700
        %v1733 = vadd.f32 %v1632, %v1701
        %v1734 = vld [vmem:[%s1227 + $0xa] sm:$0xff]
        %v1735 = vld [vmem:[%s1227 + $0x12] sm:$0xff]
        %v1736 = vld [vmem:[%s1227 + $0x2a] sm:$0xff]
        %v1737 = vld [vmem:[%s1227 + $0x32] sm:$0xff]
        %v1738 = vld [vmem:[%s1227 + $0x4a] sm:$0xff]
        %v1739 = vld [vmem:[%s1227 + $0x52] sm:$0xff]
        %v1740 = vld [vmem:[%s1227 + $0x6a] sm:$0xff]
        %v1741 = vld [vmem:[%s1227 + $0x72] sm:$0xff]
        %v1742 = vld [vmem:[%s1227 + $0x8a] sm:$0xff]
        %v1743 = vld [vmem:[%s1227 + $0x92] sm:$0xff]
        %v1744 = vld [vmem:[%s1227 + $0xaa] sm:$0xff]
        %v1745 = vld [vmem:[%s1227 + $0xb2] sm:$0xff]
        %v1746 = vld [vmem:[%s1227 + $0xca] sm:$0xff]
        %v1747 = vld [vmem:[%s1227 + $0xd2] sm:$0xff]
        %v1748 = vld [vmem:[%s1227 + $0xea] sm:$0xff]
        %v1749 = vld [vmem:[%s1227 + $0xf2] sm:$0xff]
        %v1750 = vld [vmem:[%s1227 + $0x10a] sm:$0xff]
        %v1751 = vld [vmem:[%s1227 + $0x112] sm:$0xff]
        %v1752 = vld [vmem:[%s1227 + $0x12a] sm:$0xff]
        %v1753 = vld [vmem:[%s1227 + $0x132] sm:$0xff]
        %v1754 = vld [vmem:[%s1227 + $0x14a] sm:$0xff]
        %v1755 = vld [vmem:[%s1227 + $0x152] sm:$0xff]
        %v1756 = vld [vmem:[%s1227 + $0x16a] sm:$0xff]
        %v1757 = vld [vmem:[%s1227 + $0x172] sm:$0xff]
        %v1758 = vld [vmem:[%s1227 + $0x18a] sm:$0xff]
        %v1759 = vld [vmem:[%s1227 + $0x192] sm:$0xff]
        %v1760 = vld [vmem:[%s1227 + $0x1aa] sm:$0xff]
        %v1761 = vld [vmem:[%s1227 + $0x1b2] sm:$0xff]
        %v1762 = vld [vmem:[%s1227 + $0x1ca] sm:$0xff]
        %v1763 = vld [vmem:[%s1227 + $0x1d2] sm:$0xff]
        %v1764 = vld [vmem:[%s1227 + $0x1ea] sm:$0xff]
        %v1765 = vld [vmem:[%s1227 + $0x1f2] sm:$0xff]
        %v1766 = vld [vmem:[%s1260 + $0x5] sm:$0x1]
        %v1767 = vlaneseq
        %v1768 = vshrl.u32 %v1767, 7
        %v1769 = vsub.s32 0, %v1768
        %v1770 = vrot.slane %v1766, %v1769
        %v1771 = vmul.f32 %v1734, %v1770
        %v1772 = vmul.f32 %v1735, %v1770
        %v1773 = vmul.f32 %v1736, %v1770
        %v1774 = vmul.f32 %v1737, %v1770
        %v1775 = vmul.f32 %v1738, %v1770
        %v1776 = vmul.f32 %v1739, %v1770
        %v1777 = vmul.f32 %v1740, %v1770
        %v1778 = vmul.f32 %v1741, %v1770
        %v1779 = vmul.f32 %v1742, %v1770
        %v1780 = vmul.f32 %v1743, %v1770
        %v1781 = vmul.f32 %v1744, %v1770
        %v1782 = vmul.f32 %v1745, %v1770
        %v1783 = vmul.f32 %v1746, %v1770
        %v1784 = vmul.f32 %v1747, %v1770
        %v1785 = vmul.f32 %v1748, %v1770
        %v1786 = vmul.f32 %v1749, %v1770
        %v1787 = vmul.f32 %v1750, %v1770
        %v1788 = vmul.f32 %v1751, %v1770
        %v1789 = vmul.f32 %v1752, %v1770
        %v1790 = vmul.f32 %v1753, %v1770
        %v1791 = vmul.f32 %v1754, %v1770
        %v1792 = vmul.f32 %v1755, %v1770
        %v1793 = vmul.f32 %v1756, %v1770
        %v1794 = vmul.f32 %v1757, %v1770
        %v1795 = vmul.f32 %v1758, %v1770
        %v1796 = vmul.f32 %v1759, %v1770
        %v1797 = vmul.f32 %v1760, %v1770
        %v1798 = vmul.f32 %v1761, %v1770
        %v1799 = vmul.f32 %v1762, %v1770
        %v1800 = vmul.f32 %v1763, %v1770
        %v1801 = vmul.f32 %v1764, %v1770
        %v1802 = vmul.f32 %v1765, %v1770
        %v1803 = vadd.f32 %v1702, %v1771
        %v1804 = vadd.f32 %v1703, %v1772
        %v1805 = vadd.f32 %v1704, %v1773
        %v1806 = vadd.f32 %v1705, %v1774
        %v1807 = vadd.f32 %v1706, %v1775
        %v1808 = vadd.f32 %v1707, %v1776
        %v1809 = vadd.f32 %v1708, %v1777
        %v1810 = vadd.f32 %v1709, %v1778
        %v1811 = vadd.f32 %v1710, %v1779
        %v1812 = vadd.f32 %v1711, %v1780
        %v1813 = vadd.f32 %v1712, %v1781
        %v1814 = vadd.f32 %v1713, %v1782
        %v1815 = vadd.f32 %v1714, %v1783
        %v1816 = vadd.f32 %v1715, %v1784
        %v1817 = vadd.f32 %v1716, %v1785
        %v1818 = vadd.f32 %v1717, %v1786
        %v1819 = vadd.f32 %v1718, %v1787
        %v1820 = vadd.f32 %v1719, %v1788
        %v1821 = vadd.f32 %v1720, %v1789
        %v1822 = vadd.f32 %v1721, %v1790
        %v1823 = vadd.f32 %v1722, %v1791
        %v1824 = vadd.f32 %v1723, %v1792
        %v1825 = vadd.f32 %v1724, %v1793
        %v1826 = vadd.f32 %v1725, %v1794
        %v1827 = vadd.f32 %v1726, %v1795
        %v1828 = vadd.f32 %v1727, %v1796
        %v1829 = vadd.f32 %v1728, %v1797
        %v1830 = vadd.f32 %v1729, %v1798
        %v1831 = vadd.f32 %v1730, %v1799
        %v1832 = vadd.f32 %v1731, %v1800
        %v1833 = vadd.f32 %v1732, %v1801
        %v1834 = vadd.f32 %v1733, %v1802
        %v1835 = vld [vmem:[%s1227 + $0xb] sm:$0xff]
        %v1836 = vld [vmem:[%s1227 + $0x13] sm:$0xff]
        %v1837 = vld [vmem:[%s1227 + $0x2b] sm:$0xff]
        %v1838 = vld [vmem:[%s1227 + $0x33] sm:$0xff]
        %v1839 = vld [vmem:[%s1227 + $0x4b] sm:$0xff]
        %v1840 = vld [vmem:[%s1227 + $0x53] sm:$0xff]
        %v1841 = vld [vmem:[%s1227 + $0x6b] sm:$0xff]
        %v1842 = vld [vmem:[%s1227 + $0x73] sm:$0xff]
        %v1843 = vld [vmem:[%s1227 + $0x8b] sm:$0xff]
        %v1844 = vld [vmem:[%s1227 + $0x93] sm:$0xff]
        %v1845 = vld [vmem:[%s1227 + $0xab] sm:$0xff]
        %v1846 = vld [vmem:[%s1227 + $0xb3] sm:$0xff]
        %v1847 = vld [vmem:[%s1227 + $0xcb] sm:$0xff]
        %v1848 = vld [vmem:[%s1227 + $0xd3] sm:$0xff]
        %v1849 = vld [vmem:[%s1227 + $0xeb] sm:$0xff]
        %v1850 = vld [vmem:[%s1227 + $0xf3] sm:$0xff]
        %v1851 = vld [vmem:[%s1227 + $0x10b] sm:$0xff]
        %v1852 = vld [vmem:[%s1227 + $0x113] sm:$0xff]
        %v1853 = vld [vmem:[%s1227 + $0x12b] sm:$0xff]
        %v1854 = vld [vmem:[%s1227 + $0x133] sm:$0xff]
        %v1855 = vld [vmem:[%s1227 + $0x14b] sm:$0xff]
        %v1856 = vld [vmem:[%s1227 + $0x153] sm:$0xff]
        %v1857 = vld [vmem:[%s1227 + $0x16b] sm:$0xff]
        %v1858 = vld [vmem:[%s1227 + $0x173] sm:$0xff]
        %v1859 = vld [vmem:[%s1227 + $0x18b] sm:$0xff]
        %v1860 = vld [vmem:[%s1227 + $0x193] sm:$0xff]
        %v1861 = vld [vmem:[%s1227 + $0x1ab] sm:$0xff]
        %v1862 = vld [vmem:[%s1227 + $0x1b3] sm:$0xff]
        %v1863 = vld [vmem:[%s1227 + $0x1cb] sm:$0xff]
        %v1864 = vld [vmem:[%s1227 + $0x1d3] sm:$0xff]
        %v1865 = vld [vmem:[%s1227 + $0x1eb] sm:$0xff]
        %v1866 = vld [vmem:[%s1227 + $0x1f3] sm:$0xff]
        %v1867 = vld [vmem:[%s1260 + $0x6] sm:$0x1]
        %v1868 = vlaneseq
        %v1869 = vshrl.u32 %v1868, 7
        %v1870 = vsub.s32 0, %v1869
        %v1871 = vrot.slane %v1867, %v1870
        %v1872 = vmul.f32 %v1835, %v1871
        %v1873 = vmul.f32 %v1836, %v1871
        %v1874 = vmul.f32 %v1837, %v1871
        %v1875 = vmul.f32 %v1838, %v1871
        %v1876 = vmul.f32 %v1839, %v1871
        %v1877 = vmul.f32 %v1840, %v1871
        %v1878 = vmul.f32 %v1841, %v1871
        %v1879 = vmul.f32 %v1842, %v1871
        %v1880 = vmul.f32 %v1843, %v1871
        %v1881 = vmul.f32 %v1844, %v1871
        %v1882 = vmul.f32 %v1845, %v1871
        %v1883 = vmul.f32 %v1846, %v1871
        %v1884 = vmul.f32 %v1847, %v1871
        %v1885 = vmul.f32 %v1848, %v1871
        %v1886 = vmul.f32 %v1849, %v1871
        %v1887 = vmul.f32 %v1850, %v1871
        %v1888 = vmul.f32 %v1851, %v1871
        %v1889 = vmul.f32 %v1852, %v1871
        %v1890 = vmul.f32 %v1853, %v1871
        %v1891 = vmul.f32 %v1854, %v1871
        %v1892 = vmul.f32 %v1855, %v1871
        %v1893 = vmul.f32 %v1856, %v1871
        %v1894 = vmul.f32 %v1857, %v1871
        %v1895 = vmul.f32 %v1858, %v1871
        %v1896 = vmul.f32 %v1859, %v1871
        %v1897 = vmul.f32 %v1860, %v1871
        %v1898 = vmul.f32 %v1861, %v1871
        %v1899 = vmul.f32 %v1862, %v1871
        %v1900 = vmul.f32 %v1863, %v1871
        %v1901 = vmul.f32 %v1864, %v1871
        %v1902 = vmul.f32 %v1865, %v1871
        %v1903 = vmul.f32 %v1866, %v1871
        %v1904 = vadd.f32 %v1803, %v1872
        %v1905 = vadd.f32 %v1804, %v1873
        %v1906 = vadd.f32 %v1805, %v1874
        %v1907 = vadd.f32 %v1806, %v1875
        %v1908 = vadd.f32 %v1807, %v1876
        %v1909 = vadd.f32 %v1808, %v1877
        %v1910 = vadd.f32 %v1809, %v1878
        %v1911 = vadd.f32 %v1810, %v1879
        %v1912 = vadd.f32 %v1811, %v1880
        %v1913 = vadd.f32 %v1812, %v1881
        %v1914 = vadd.f32 %v1813, %v1882
        %v1915 = vadd.f32 %v1814, %v1883
        %v1916 = vadd.f32 %v1815, %v1884
        %v1917 = vadd.f32 %v1816, %v1885
        %v1918 = vadd.f32 %v1817, %v1886
        %v1919 = vadd.f32 %v1818, %v1887
        %v1920 = vadd.f32 %v1819, %v1888
        %v1921 = vadd.f32 %v1820, %v1889
        %v1922 = vadd.f32 %v1821, %v1890
        %v1923 = vadd.f32 %v1822, %v1891
        %v1924 = vadd.f32 %v1823, %v1892
        %v1925 = vadd.f32 %v1824, %v1893
        %v1926 = vadd.f32 %v1825, %v1894
        %v1927 = vadd.f32 %v1826, %v1895
        %v1928 = vadd.f32 %v1827, %v1896
        %v1929 = vadd.f32 %v1828, %v1897
        %v1930 = vadd.f32 %v1829, %v1898
        %v1931 = vadd.f32 %v1830, %v1899
        %v1932 = vadd.f32 %v1831, %v1900
        %v1933 = vadd.f32 %v1832, %v1901
        %v1934 = vadd.f32 %v1833, %v1902
        %v1935 = vadd.f32 %v1834, %v1903
        %s1936 = scalar_lea.vmem [#allocation2], 64
        %v1937 = vld [vmem:[%s1936 + $0x5] sm:$0xff]
        %v1938 = vld [vmem:[%s1936 + $0xd] sm:$0xff]
        %v1939 = vld [vmem:[%s1936 + $0x25] sm:$0xff]
        %v1940 = vld [vmem:[%s1936 + $0x2d] sm:$0xff]
        %v1941 = vld [vmem:[%s1936 + $0x45] sm:$0xff]
        %v1942 = vld [vmem:[%s1936 + $0x4d] sm:$0xff]
        %v1943 = vld [vmem:[%s1936 + $0x65] sm:$0xff]
        %v1944 = vld [vmem:[%s1936 + $0x6d] sm:$0xff]
        %v1945 = vld [vmem:[%s1936 + $0x85] sm:$0xff]
        %v1946 = vld [vmem:[%s1936 + $0x8d] sm:$0xff]
        %v1947 = vld [vmem:[%s1936 + $0xa5] sm:$0xff]
        %v1948 = vld [vmem:[%s1936 + $0xad] sm:$0xff]
        %v1949 = vld [vmem:[%s1936 + $0xc5] sm:$0xff]
        %v1950 = vld [vmem:[%s1936 + $0xcd] sm:$0xff]
        %v1951 = vld [vmem:[%s1936 + $0xe5] sm:$0xff]
        %v1952 = vld [vmem:[%s1936 + $0xed] sm:$0xff]
        %v1953 = vld [vmem:[%s1936 + $0x105] sm:$0xff]
        %v1954 = vld [vmem:[%s1936 + $0x10d] sm:$0xff]
        %v1955 = vld [vmem:[%s1936 + $0x125] sm:$0xff]
        %v1956 = vld [vmem:[%s1936 + $0x12d] sm:$0xff]
        %v1957 = vld [vmem:[%s1936 + $0x145] sm:$0xff]
        %v1958 = vld [vmem:[%s1936 + $0x14d] sm:$0xff]
        %v1959 = vld [vmem:[%s1936 + $0x165] sm:$0xff]
        %v1960 = vld [vmem:[%s1936 + $0x16d] sm:$0xff]
        %v1961 = vld [vmem:[%s1936 + $0x185] sm:$0xff]
        %v1962 = vld [vmem:[%s1936 + $0x18d] sm:$0xff]
        %v1963 = vld [vmem:[%s1936 + $0x1a5] sm:$0xff]
        %v1964 = vld [vmem:[%s1936 + $0x1ad] sm:$0xff]
        %v1965 = vld [vmem:[%s1936 + $0x1c5] sm:$0xff]
        %v1966 = vld [vmem:[%s1936 + $0x1cd] sm:$0xff]
        %v1967 = vld [vmem:[%s1936 + $0x1e5] sm:$0xff]
        %v1968 = vld [vmem:[%s1936 + $0x1ed] sm:$0xff]
        %s1969 = scalar_lea.vmem %s361, 16
        %v1970 = vld [vmem:[%s1969] sm:$0x1]
        %v1971 = vlaneseq
        %v1972 = vshrl.u32 %v1971, 7
        %v1973 = vsub.s32 0, %v1972
        %v1974 = vrot.slane %v1970, %v1973
        %v1975 = vmul.f32 %v1937, %v1974
        %v1976 = vmul.f32 %v1938, %v1974
        %v1977 = vmul.f32 %v1939, %v1974
        %v1978 = vmul.f32 %v1940, %v1974
        %v1979 = vmul.f32 %v1941, %v1974
        %v1980 = vmul.f32 %v1942, %v1974
        %v1981 = vmul.f32 %v1943, %v1974
        %v1982 = vmul.f32 %v1944, %v1974
        %v1983 = vmul.f32 %v1945, %v1974
        %v1984 = vmul.f32 %v1946, %v1974
        %v1985 = vmul.f32 %v1947, %v1974
        %v1986 = vmul.f32 %v1948, %v1974
        %v1987 = vmul.f32 %v1949, %v1974
        %v1988 = vmul.f32 %v1950, %v1974
        %v1989 = vmul.f32 %v1951, %v1974
        %v1990 = vmul.f32 %v1952, %v1974
        %v1991 = vmul.f32 %v1953, %v1974
        %v1992 = vmul.f32 %v1954, %v1974
        %v1993 = vmul.f32 %v1955, %v1974
        %v1994 = vmul.f32 %v1956, %v1974
        %v1995 = vmul.f32 %v1957, %v1974
        %v1996 = vmul.f32 %v1958, %v1974
        %v1997 = vmul.f32 %v1959, %v1974
        %v1998 = vmul.f32 %v1960, %v1974
        %v1999 = vmul.f32 %v1961, %v1974
        %v2000 = vmul.f32 %v1962, %v1974
        %v2001 = vmul.f32 %v1963, %v1974
        %v2002 = vmul.f32 %v1964, %v1974
        %v2003 = vmul.f32 %v1965, %v1974
        %v2004 = vmul.f32 %v1966, %v1974
        %v2005 = vmul.f32 %v1967, %v1974
        %v2006 = vmul.f32 %v1968, %v1974
        %v2007 = vadd.f32 %v1904, %v1975
        %v2008 = vadd.f32 %v1905, %v1976
        %v2009 = vadd.f32 %v1906, %v1977
        %v2010 = vadd.f32 %v1907, %v1978
        %v2011 = vadd.f32 %v1908, %v1979
        %v2012 = vadd.f32 %v1909, %v1980
        %v2013 = vadd.f32 %v1910, %v1981
        %v2014 = vadd.f32 %v1911, %v1982
        %v2015 = vadd.f32 %v1912, %v1983
        %v2016 = vadd.f32 %v1913, %v1984
        %v2017 = vadd.f32 %v1914, %v1985
        %v2018 = vadd.f32 %v1915, %v1986
        %v2019 = vadd.f32 %v1916, %v1987
        %v2020 = vadd.f32 %v1917, %v1988
        %v2021 = vadd.f32 %v1918, %v1989
        %v2022 = vadd.f32 %v1919, %v1990
        %v2023 = vadd.f32 %v1920, %v1991
        %v2024 = vadd.f32 %v1921, %v1992
        %v2025 = vadd.f32 %v1922, %v1993
        %v2026 = vadd.f32 %v1923, %v1994
        %v2027 = vadd.f32 %v1924, %v1995
        %v2028 = vadd.f32 %v1925, %v1996
        %v2029 = vadd.f32 %v1926, %v1997
        %v2030 = vadd.f32 %v1927, %v1998
        %v2031 = vadd.f32 %v1928, %v1999
        %v2032 = vadd.f32 %v1929, %v2000
        %v2033 = vadd.f32 %v1930, %v2001
        %v2034 = vadd.f32 %v1931, %v2002
        %v2035 = vadd.f32 %v1932, %v2003
        %v2036 = vadd.f32 %v1933, %v2004
        %v2037 = vadd.f32 %v1934, %v2005
        %v2038 = vadd.f32 %v1935, %v2006
        %v2039 = vld [vmem:[%s1936 + $0x6] sm:$0xff]
        %v2040 = vld [vmem:[%s1936 + $0xe] sm:$0xff]
        %v2041 = vld [vmem:[%s1936 + $0x26] sm:$0xff]
        %v2042 = vld [vmem:[%s1936 + $0x2e] sm:$0xff]
        %v2043 = vld [vmem:[%s1936 + $0x46] sm:$0xff]
        %v2044 = vld [vmem:[%s1936 + $0x4e] sm:$0xff]
        %v2045 = vld [vmem:[%s1936 + $0x66] sm:$0xff]
        %v2046 = vld [vmem:[%s1936 + $0x6e] sm:$0xff]
        %v2047 = vld [vmem:[%s1936 + $0x86] sm:$0xff]
        %v2048 = vld [vmem:[%s1936 + $0x8e] sm:$0xff]
        %v2049 = vld [vmem:[%s1936 + $0xa6] sm:$0xff]
        %v2050 = vld [vmem:[%s1936 + $0xae] sm:$0xff]
        %v2051 = vld [vmem:[%s1936 + $0xc6] sm:$0xff]
        %v2052 = vld [vmem:[%s1936 + $0xce] sm:$0xff]
        %v2053 = vld [vmem:[%s1936 + $0xe6] sm:$0xff]
        %v2054 = vld [vmem:[%s1936 + $0xee] sm:$0xff]
        %v2055 = vld [vmem:[%s1936 + $0x106] sm:$0xff]
        %v2056 = vld [vmem:[%s1936 + $0x10e] sm:$0xff]
        %v2057 = vld [vmem:[%s1936 + $0x126] sm:$0xff]
        %v2058 = vld [vmem:[%s1936 + $0x12e] sm:$0xff]
        %v2059 = vld [vmem:[%s1936 + $0x146] sm:$0xff]
        %v2060 = vld [vmem:[%s1936 + $0x14e] sm:$0xff]
        %v2061 = vld [vmem:[%s1936 + $0x166] sm:$0xff]
        %v2062 = vld [vmem:[%s1936 + $0x16e] sm:$0xff]
        %v2063 = vld [vmem:[%s1936 + $0x186] sm:$0xff]
        %v2064 = vld [vmem:[%s1936 + $0x18e] sm:$0xff]
        %v2065 = vld [vmem:[%s1936 + $0x1a6] sm:$0xff]
        %v2066 = vld [vmem:[%s1936 + $0x1ae] sm:$0xff]
        %v2067 = vld [vmem:[%s1936 + $0x1c6] sm:$0xff]
        %v2068 = vld [vmem:[%s1936 + $0x1ce] sm:$0xff]
        %v2069 = vld [vmem:[%s1936 + $0x1e6] sm:$0xff]
        %v2070 = vld [vmem:[%s1936 + $0x1ee] sm:$0xff]
        %v2071 = vld [vmem:[%s1969 + $0x1] sm:$0x1]
        %v2072 = vlaneseq
        %v2073 = vshrl.u32 %v2072, 7
        %v2074 = vsub.s32 0, %v2073
        %v2075 = vrot.slane %v2071, %v2074
        %v2076 = vmul.f32 %v2039, %v2075
        %v2077 = vmul.f32 %v2040, %v2075
        %v2078 = vmul.f32 %v2041, %v2075
        %v2079 = vmul.f32 %v2042, %v2075
        %v2080 = vmul.f32 %v2043, %v2075
        %v2081 = vmul.f32 %v2044, %v2075
        %v2082 = vmul.f32 %v2045, %v2075
        %v2083 = vmul.f32 %v2046, %v2075
        %v2084 = vmul.f32 %v2047, %v2075
        %v2085 = vmul.f32 %v2048, %v2075
        %v2086 = vmul.f32 %v2049, %v2075
        %v2087 = vmul.f32 %v2050, %v2075
        %v2088 = vmul.f32 %v2051, %v2075
        %v2089 = vmul.f32 %v2052, %v2075
        %v2090 = vmul.f32 %v2053, %v2075
        %v2091 = vmul.f32 %v2054, %v2075
        %v2092 = vmul.f32 %v2055, %v2075
        %v2093 = vmul.f32 %v2056, %v2075
        %v2094 = vmul.f32 %v2057, %v2075
        %v2095 = vmul.f32 %v2058, %v2075
        %v2096 = vmul.f32 %v2059, %v2075
        %v2097 = vmul.f32 %v2060, %v2075
        %v2098 = vmul.f32 %v2061, %v2075
        %v2099 = vmul.f32 %v2062, %v2075
        %v2100 = vmul.f32 %v2063, %v2075
        %v2101 = vmul.f32 %v2064, %v2075
        %v2102 = vmul.f32 %v2065, %v2075
        %v2103 = vmul.f32 %v2066, %v2075
        %v2104 = vmul.f32 %v2067, %v2075
        %v2105 = vmul.f32 %v2068, %v2075
        %v2106 = vmul.f32 %v2069, %v2075
        %v2107 = vmul.f32 %v2070, %v2075
        %v2108 = vadd.f32 %v2007, %v2076
        %v2109 = vadd.f32 %v2008, %v2077
        %v2110 = vadd.f32 %v2009, %v2078
        %v2111 = vadd.f32 %v2010, %v2079
        %v2112 = vadd.f32 %v2011, %v2080
        %v2113 = vadd.f32 %v2012, %v2081
        %v2114 = vadd.f32 %v2013, %v2082
        %v2115 = vadd.f32 %v2014, %v2083
        %v2116 = vadd.f32 %v2015, %v2084
        %v2117 = vadd.f32 %v2016, %v2085
        %v2118 = vadd.f32 %v2017, %v2086
        %v2119 = vadd.f32 %v2018, %v2087
        %v2120 = vadd.f32 %v2019, %v2088
        %v2121 = vadd.f32 %v2020, %v2089
        %v2122 = vadd.f32 %v2021, %v2090
        %v2123 = vadd.f32 %v2022, %v2091
        %v2124 = vadd.f32 %v2023, %v2092
        %v2125 = vadd.f32 %v2024, %v2093
        %v2126 = vadd.f32 %v2025, %v2094
        %v2127 = vadd.f32 %v2026, %v2095
        %v2128 = vadd.f32 %v2027, %v2096
        %v2129 = vadd.f32 %v2028, %v2097
        %v2130 = vadd.f32 %v2029, %v2098
        %v2131 = vadd.f32 %v2030, %v2099
        %v2132 = vadd.f32 %v2031, %v2100
        %v2133 = vadd.f32 %v2032, %v2101
        %v2134 = vadd.f32 %v2033, %v2102
        %v2135 = vadd.f32 %v2034, %v2103
        %v2136 = vadd.f32 %v2035, %v2104
        %v2137 = vadd.f32 %v2036, %v2105
        %v2138 = vadd.f32 %v2037, %v2106
        %v2139 = vadd.f32 %v2038, %v2107
        %v2140 = vld [vmem:[%s1936 + $0x7] sm:$0xff]
        %v2141 = vld [vmem:[%s1936 + $0xf] sm:$0xff]
        %v2142 = vld [vmem:[%s1936 + $0x27] sm:$0xff]
        %v2143 = vld [vmem:[%s1936 + $0x2f] sm:$0xff]
        %v2144 = vld [vmem:[%s1936 + $0x47] sm:$0xff]
        %v2145 = vld [vmem:[%s1936 + $0x4f] sm:$0xff]
        %v2146 = vld [vmem:[%s1936 + $0x67] sm:$0xff]
        %v2147 = vld [vmem:[%s1936 + $0x6f] sm:$0xff]
        %v2148 = vld [vmem:[%s1936 + $0x87] sm:$0xff]
        %v2149 = vld [vmem:[%s1936 + $0x8f] sm:$0xff]
        %v2150 = vld [vmem:[%s1936 + $0xa7] sm:$0xff]
        %v2151 = vld [vmem:[%s1936 + $0xaf] sm:$0xff]
        %v2152 = vld [vmem:[%s1936 + $0xc7] sm:$0xff]
        %v2153 = vld [vmem:[%s1936 + $0xcf] sm:$0xff]
        %v2154 = vld [vmem:[%s1936 + $0xe7] sm:$0xff]
        %v2155 = vld [vmem:[%s1936 + $0xef] sm:$0xff]
        %v2156 = vld [vmem:[%s1936 + $0x107] sm:$0xff]
        %v2157 = vld [vmem:[%s1936 + $0x10f] sm:$0xff]
        %v2158 = vld [vmem:[%s1936 + $0x127] sm:$0xff]
        %v2159 = vld [vmem:[%s1936 + $0x12f] sm:$0xff]
        %v2160 = vld [vmem:[%s1936 + $0x147] sm:$0xff]
        %v2161 = vld [vmem:[%s1936 + $0x14f] sm:$0xff]
        %v2162 = vld [vmem:[%s1936 + $0x167] sm:$0xff]
        %v2163 = vld [vmem:[%s1936 + $0x16f] sm:$0xff]
        %v2164 = vld [vmem:[%s1936 + $0x187] sm:$0xff]
        %v2165 = vld [vmem:[%s1936 + $0x18f] sm:$0xff]
        %v2166 = vld [vmem:[%s1936 + $0x1a7] sm:$0xff]
        %v2167 = vld [vmem:[%s1936 + $0x1af] sm:$0xff]
        %v2168 = vld [vmem:[%s1936 + $0x1c7] sm:$0xff]
        %v2169 = vld [vmem:[%s1936 + $0x1cf] sm:$0xff]
        %v2170 = vld [vmem:[%s1936 + $0x1e7] sm:$0xff]
        %v2171 = vld [vmem:[%s1936 + $0x1ef] sm:$0xff]
        %v2172 = vld [vmem:[%s1969 + $0x2] sm:$0x1]
        %v2173 = vlaneseq
        %v2174 = vshrl.u32 %v2173, 7
        %v2175 = vsub.s32 0, %v2174
        %v2176 = vrot.slane %v2172, %v2175
        %v2177 = vmul.f32 %v2140, %v2176
        %v2178 = vmul.f32 %v2141, %v2176
        %v2179 = vmul.f32 %v2142, %v2176
        %v2180 = vmul.f32 %v2143, %v2176
        %v2181 = vmul.f32 %v2144, %v2176
        %v2182 = vmul.f32 %v2145, %v2176
        %v2183 = vmul.f32 %v2146, %v2176
        %v2184 = vmul.f32 %v2147, %v2176
        %v2185 = vmul.f32 %v2148, %v2176
        %v2186 = vmul.f32 %v2149, %v2176
        %v2187 = vmul.f32 %v2150, %v2176
        %v2188 = vmul.f32 %v2151, %v2176
        %v2189 = vmul.f32 %v2152, %v2176
        %v2190 = vmul.f32 %v2153, %v2176
        %v2191 = vmul.f32 %v2154, %v2176
        %v2192 = vmul.f32 %v2155, %v2176
        %v2193 = vmul.f32 %v2156, %v2176
        %v2194 = vmul.f32 %v2157, %v2176
        %v2195 = vmul.f32 %v2158, %v2176
        %v2196 = vmul.f32 %v2159, %v2176
        %v2197 = vmul.f32 %v2160, %v2176
        %v2198 = vmul.f32 %v2161, %v2176
        %v2199 = vmul.f32 %v2162, %v2176
        %v2200 = vmul.f32 %v2163, %v2176
        %v2201 = vmul.f32 %v2164, %v2176
        %v2202 = vmul.f32 %v2165, %v2176
        %v2203 = vmul.f32 %v2166, %v2176
        %v2204 = vmul.f32 %v2167, %v2176
        %v2205 = vmul.f32 %v2168, %v2176
        %v2206 = vmul.f32 %v2169, %v2176
        %v2207 = vmul.f32 %v2170, %v2176
        %v2208 = vmul.f32 %v2171, %v2176
        %v2209 = vadd.f32 %v2108, %v2177
        %v2210 = vadd.f32 %v2109, %v2178
        %v2211 = vadd.f32 %v2110, %v2179
        %v2212 = vadd.f32 %v2111, %v2180
        %v2213 = vadd.f32 %v2112, %v2181
        %v2214 = vadd.f32 %v2113, %v2182
        %v2215 = vadd.f32 %v2114, %v2183
        %v2216 = vadd.f32 %v2115, %v2184
        %v2217 = vadd.f32 %v2116, %v2185
        %v2218 = vadd.f32 %v2117, %v2186
        %v2219 = vadd.f32 %v2118, %v2187
        %v2220 = vadd.f32 %v2119, %v2188
        %v2221 = vadd.f32 %v2120, %v2189
        %v2222 = vadd.f32 %v2121, %v2190
        %v2223 = vadd.f32 %v2122, %v2191
        %v2224 = vadd.f32 %v2123, %v2192
        %v2225 = vadd.f32 %v2124, %v2193
        %v2226 = vadd.f32 %v2125, %v2194
        %v2227 = vadd.f32 %v2126, %v2195
        %v2228 = vadd.f32 %v2127, %v2196
        %v2229 = vadd.f32 %v2128, %v2197
        %v2230 = vadd.f32 %v2129, %v2198
        %v2231 = vadd.f32 %v2130, %v2199
        %v2232 = vadd.f32 %v2131, %v2200
        %v2233 = vadd.f32 %v2132, %v2201
        %v2234 = vadd.f32 %v2133, %v2202
        %v2235 = vadd.f32 %v2134, %v2203
        %v2236 = vadd.f32 %v2135, %v2204
        %v2237 = vadd.f32 %v2136, %v2205
        %v2238 = vadd.f32 %v2137, %v2206
        %v2239 = vadd.f32 %v2138, %v2207
        %v2240 = vadd.f32 %v2139, %v2208
        %v2241 = vld [vmem:[%s1936 + $0x8] sm:$0xff]
        %v2242 = vld [vmem:[%s1936 + $0x10] sm:$0xff]
        %v2243 = vld [vmem:[%s1936 + $0x28] sm:$0xff]
        %v2244 = vld [vmem:[%s1936 + $0x30] sm:$0xff]
        %v2245 = vld [vmem:[%s1936 + $0x48] sm:$0xff]
        %v2246 = vld [vmem:[%s1936 + $0x50] sm:$0xff]
        %v2247 = vld [vmem:[%s1936 + $0x68] sm:$0xff]
        %v2248 = vld [vmem:[%s1936 + $0x70] sm:$0xff]
        %v2249 = vld [vmem:[%s1936 + $0x88] sm:$0xff]
        %v2250 = vld [vmem:[%s1936 + $0x90] sm:$0xff]
        %v2251 = vld [vmem:[%s1936 + $0xa8] sm:$0xff]
        %v2252 = vld [vmem:[%s1936 + $0xb0] sm:$0xff]
        %v2253 = vld [vmem:[%s1936 + $0xc8] sm:$0xff]
        %v2254 = vld [vmem:[%s1936 + $0xd0] sm:$0xff]
        %v2255 = vld [vmem:[%s1936 + $0xe8] sm:$0xff]
        %v2256 = vld [vmem:[%s1936 + $0xf0] sm:$0xff]
        %v2257 = vld [vmem:[%s1936 + $0x108] sm:$0xff]
        %v2258 = vld [vmem:[%s1936 + $0x110] sm:$0xff]
        %v2259 = vld [vmem:[%s1936 + $0x128] sm:$0xff]
        %v2260 = vld [vmem:[%s1936 + $0x130] sm:$0xff]
        %v2261 = vld [vmem:[%s1936 + $0x148] sm:$0xff]
        %v2262 = vld [vmem:[%s1936 + $0x150] sm:$0xff]
        %v2263 = vld [vmem:[%s1936 + $0x168] sm:$0xff]
        %v2264 = vld [vmem:[%s1936 + $0x170] sm:$0xff]
        %v2265 = vld [vmem:[%s1936 + $0x188] sm:$0xff]
        %v2266 = vld [vmem:[%s1936 + $0x190] sm:$0xff]
        %v2267 = vld [vmem:[%s1936 + $0x1a8] sm:$0xff]
        %v2268 = vld [vmem:[%s1936 + $0x1b0] sm:$0xff]
        %v2269 = vld [vmem:[%s1936 + $0x1c8] sm:$0xff]
        %v2270 = vld [vmem:[%s1936 + $0x1d0] sm:$0xff]
        %v2271 = vld [vmem:[%s1936 + $0x1e8] sm:$0xff]
        %v2272 = vld [vmem:[%s1936 + $0x1f0] sm:$0xff]
        %v2273 = vld [vmem:[%s1969 + $0x3] sm:$0x1]
        %v2274 = vlaneseq
        %v2275 = vshrl.u32 %v2274, 7
        %v2276 = vsub.s32 0, %v2275
        %v2277 = vrot.slane %v2273, %v2276
        %v2278 = vmul.f32 %v2241, %v2277
        %v2279 = vmul.f32 %v2242, %v2277
        %v2280 = vmul.f32 %v2243, %v2277
        %v2281 = vmul.f32 %v2244, %v2277
        %v2282 = vmul.f32 %v2245, %v2277
        %v2283 = vmul.f32 %v2246, %v2277
        %v2284 = vmul.f32 %v2247, %v2277
        %v2285 = vmul.f32 %v2248, %v2277
        %v2286 = vmul.f32 %v2249, %v2277
        %v2287 = vmul.f32 %v2250, %v2277
        %v2288 = vmul.f32 %v2251, %v2277
        %v2289 = vmul.f32 %v2252, %v2277
        %v2290 = vmul.f32 %v2253, %v2277
        %v2291 = vmul.f32 %v2254, %v2277
        %v2292 = vmul.f32 %v2255, %v2277
        %v2293 = vmul.f32 %v2256, %v2277
        %v2294 = vmul.f32 %v2257, %v2277
        %v2295 = vmul.f32 %v2258, %v2277
        %v2296 = vmul.f32 %v2259, %v2277
        %v2297 = vmul.f32 %v2260, %v2277
        %v2298 = vmul.f32 %v2261, %v2277
        %v2299 = vmul.f32 %v2262, %v2277
        %v2300 = vmul.f32 %v2263, %v2277
        %v2301 = vmul.f32 %v2264, %v2277
        %v2302 = vmul.f32 %v2265, %v2277
        %v2303 = vmul.f32 %v2266, %v2277
        %v2304 = vmul.f32 %v2267, %v2277
        %v2305 = vmul.f32 %v2268, %v2277
        %v2306 = vmul.f32 %v2269, %v2277
        %v2307 = vmul.f32 %v2270, %v2277
        %v2308 = vmul.f32 %v2271, %v2277
        %v2309 = vmul.f32 %v2272, %v2277
        %v2310 = vadd.f32 %v2209, %v2278
        %v2311 = vadd.f32 %v2210, %v2279
        %v2312 = vadd.f32 %v2211, %v2280
        %v2313 = vadd.f32 %v2212, %v2281
        %v2314 = vadd.f32 %v2213, %v2282
        %v2315 = vadd.f32 %v2214, %v2283
        %v2316 = vadd.f32 %v2215, %v2284
        %v2317 = vadd.f32 %v2216, %v2285
        %v2318 = vadd.f32 %v2217, %v2286
        %v2319 = vadd.f32 %v2218, %v2287
        %v2320 = vadd.f32 %v2219, %v2288
        %v2321 = vadd.f32 %v2220, %v2289
        %v2322 = vadd.f32 %v2221, %v2290
        %v2323 = vadd.f32 %v2222, %v2291
        %v2324 = vadd.f32 %v2223, %v2292
        %v2325 = vadd.f32 %v2224, %v2293
        %v2326 = vadd.f32 %v2225, %v2294
        %v2327 = vadd.f32 %v2226, %v2295
        %v2328 = vadd.f32 %v2227, %v2296
        %v2329 = vadd.f32 %v2228, %v2297
        %v2330 = vadd.f32 %v2229, %v2298
        %v2331 = vadd.f32 %v2230, %v2299
        %v2332 = vadd.f32 %v2231, %v2300
        %v2333 = vadd.f32 %v2232, %v2301
        %v2334 = vadd.f32 %v2233, %v2302
        %v2335 = vadd.f32 %v2234, %v2303
        %v2336 = vadd.f32 %v2235, %v2304
        %v2337 = vadd.f32 %v2236, %v2305
        %v2338 = vadd.f32 %v2237, %v2306
        %v2339 = vadd.f32 %v2238, %v2307
        %v2340 = vadd.f32 %v2239, %v2308
        %v2341 = vadd.f32 %v2240, %v2309
        %v2342 = vld [vmem:[%s1936 + $0x9] sm:$0xff]
        %v2343 = vld [vmem:[%s1936 + $0x11] sm:$0xff]
        %v2344 = vld [vmem:[%s1936 + $0x29] sm:$0xff]
        %v2345 = vld [vmem:[%s1936 + $0x31] sm:$0xff]
        %v2346 = vld [vmem:[%s1936 + $0x49] sm:$0xff]
        %v2347 = vld [vmem:[%s1936 + $0x51] sm:$0xff]
        %v2348 = vld [vmem:[%s1936 + $0x69] sm:$0xff]
        %v2349 = vld [vmem:[%s1936 + $0x71] sm:$0xff]
        %v2350 = vld [vmem:[%s1936 + $0x89] sm:$0xff]
        %v2351 = vld [vmem:[%s1936 + $0x91] sm:$0xff]
        %v2352 = vld [vmem:[%s1936 + $0xa9] sm:$0xff]
        %v2353 = vld [vmem:[%s1936 + $0xb1] sm:$0xff]
        %v2354 = vld [vmem:[%s1936 + $0xc9] sm:$0xff]
        %v2355 = vld [vmem:[%s1936 + $0xd1] sm:$0xff]
        %v2356 = vld [vmem:[%s1936 + $0xe9] sm:$0xff]
        %v2357 = vld [vmem:[%s1936 + $0xf1] sm:$0xff]
        %v2358 = vld [vmem:[%s1936 + $0x109] sm:$0xff]
        %v2359 = vld [vmem:[%s1936 + $0x111] sm:$0xff]
        %v2360 = vld [vmem:[%s1936 + $0x129] sm:$0xff]
        %v2361 = vld [vmem:[%s1936 + $0x131] sm:$0xff]
        %v2362 = vld [vmem:[%s1936 + $0x149] sm:$0xff]
        %v2363 = vld [vmem:[%s1936 + $0x151] sm:$0xff]
        %v2364 = vld [vmem:[%s1936 + $0x169] sm:$0xff]
        %v2365 = vld [vmem:[%s1936 + $0x171] sm:$0xff]
        %v2366 = vld [vmem:[%s1936 + $0x189] sm:$0xff]
        %v2367 = vld [vmem:[%s1936 + $0x191] sm:$0xff]
        %v2368 = vld [vmem:[%s1936 + $0x1a9] sm:$0xff]
        %v2369 = vld [vmem:[%s1936 + $0x1b1] sm:$0xff]
        %v2370 = vld [vmem:[%s1936 + $0x1c9] sm:$0xff]
        %v2371 = vld [vmem:[%s1936 + $0x1d1] sm:$0xff]
        %v2372 = vld [vmem:[%s1936 + $0x1e9] sm:$0xff]
        %v2373 = vld [vmem:[%s1936 + $0x1f1] sm:$0xff]
        %v2374 = vld [vmem:[%s1969 + $0x4] sm:$0x1]
        %v2375 = vlaneseq
        %v2376 = vshrl.u32 %v2375, 7
        %v2377 = vsub.s32 0, %v2376
        %v2378 = vrot.slane %v2374, %v2377
        %v2379 = vmul.f32 %v2342, %v2378
        %v2380 = vmul.f32 %v2343, %v2378
        %v2381 = vmul.f32 %v2344, %v2378
        %v2382 = vmul.f32 %v2345, %v2378
        %v2383 = vmul.f32 %v2346, %v2378
        %v2384 = vmul.f32 %v2347, %v2378
        %v2385 = vmul.f32 %v2348, %v2378
        %v2386 = vmul.f32 %v2349, %v2378
        %v2387 = vmul.f32 %v2350, %v2378
        %v2388 = vmul.f32 %v2351, %v2378
        %v2389 = vmul.f32 %v2352, %v2378
        %v2390 = vmul.f32 %v2353, %v2378
        %v2391 = vmul.f32 %v2354, %v2378
        %v2392 = vmul.f32 %v2355, %v2378
        %v2393 = vmul.f32 %v2356, %v2378
        %v2394 = vmul.f32 %v2357, %v2378
        %v2395 = vmul.f32 %v2358, %v2378
        %v2396 = vmul.f32 %v2359, %v2378
        %v2397 = vmul.f32 %v2360, %v2378
        %v2398 = vmul.f32 %v2361, %v2378
        %v2399 = vmul.f32 %v2362, %v2378
        %v2400 = vmul.f32 %v2363, %v2378
        %v2401 = vmul.f32 %v2364, %v2378
        %v2402 = vmul.f32 %v2365, %v2378
        %v2403 = vmul.f32 %v2366, %v2378
        %v2404 = vmul.f32 %v2367, %v2378
        %v2405 = vmul.f32 %v2368, %v2378
        %v2406 = vmul.f32 %v2369, %v2378
        %v2407 = vmul.f32 %v2370, %v2378
        %v2408 = vmul.f32 %v2371, %v2378
        %v2409 = vmul.f32 %v2372, %v2378
        %v2410 = vmul.f32 %v2373, %v2378
        %v2411 = vadd.f32 %v2310, %v2379
        %v2412 = vadd.f32 %v2311, %v2380
        %v2413 = vadd.f32 %v2312, %v2381
        %v2414 = vadd.f32 %v2313, %v2382
        %v2415 = vadd.f32 %v2314, %v2383
        %v2416 = vadd.f32 %v2315, %v2384
        %v2417 = vadd.f32 %v2316, %v2385
        %v2418 = vadd.f32 %v2317, %v2386
        %v2419 = vadd.f32 %v2318, %v2387
        %v2420 = vadd.f32 %v2319, %v2388
        %v2421 = vadd.f32 %v2320, %v2389
        %v2422 = vadd.f32 %v2321, %v2390
        %v2423 = vadd.f32 %v2322, %v2391
        %v2424 = vadd.f32 %v2323, %v2392
        %v2425 = vadd.f32 %v2324, %v2393
        %v2426 = vadd.f32 %v2325, %v2394
        %v2427 = vadd.f32 %v2326, %v2395
        %v2428 = vadd.f32 %v2327, %v2396
        %v2429 = vadd.f32 %v2328, %v2397
        %v2430 = vadd.f32 %v2329, %v2398
        %v2431 = vadd.f32 %v2330, %v2399
        %v2432 = vadd.f32 %v2331, %v2400
        %v2433 = vadd.f32 %v2332, %v2401
        %v2434 = vadd.f32 %v2333, %v2402
        %v2435 = vadd.f32 %v2334, %v2403
        %v2436 = vadd.f32 %v2335, %v2404
        %v2437 = vadd.f32 %v2336, %v2405
        %v2438 = vadd.f32 %v2337, %v2406
        %v2439 = vadd.f32 %v2338, %v2407
        %v2440 = vadd.f32 %v2339, %v2408
        %v2441 = vadd.f32 %v2340, %v2409
        %v2442 = vadd.f32 %v2341, %v2410
        %v2443 = vld [vmem:[%s1936 + $0xa] sm:$0xff]
        %v2444 = vld [vmem:[%s1936 + $0x12] sm:$0xff]
        %v2445 = vld [vmem:[%s1936 + $0x2a] sm:$0xff]
        %v2446 = vld [vmem:[%s1936 + $0x32] sm:$0xff]
        %v2447 = vld [vmem:[%s1936 + $0x4a] sm:$0xff]
        %v2448 = vld [vmem:[%s1936 + $0x52] sm:$0xff]
        %v2449 = vld [vmem:[%s1936 + $0x6a] sm:$0xff]
        %v2450 = vld [vmem:[%s1936 + $0x72] sm:$0xff]
        %v2451 = vld [vmem:[%s1936 + $0x8a] sm:$0xff]
        %v2452 = vld [vmem:[%s1936 + $0x92] sm:$0xff]
        %v2453 = vld [vmem:[%s1936 + $0xaa] sm:$0xff]
        %v2454 = vld [vmem:[%s1936 + $0xb2] sm:$0xff]
        %v2455 = vld [vmem:[%s1936 + $0xca] sm:$0xff]
        %v2456 = vld [vmem:[%s1936 + $0xd2] sm:$0xff]
        %v2457 = vld [vmem:[%s1936 + $0xea] sm:$0xff]
        %v2458 = vld [vmem:[%s1936 + $0xf2] sm:$0xff]
        %v2459 = vld [vmem:[%s1936 + $0x10a] sm:$0xff]
        %v2460 = vld [vmem:[%s1936 + $0x112] sm:$0xff]
        %v2461 = vld [vmem:[%s1936 + $0x12a] sm:$0xff]
        %v2462 = vld [vmem:[%s1936 + $0x132] sm:$0xff]
        %v2463 = vld [vmem:[%s1936 + $0x14a] sm:$0xff]
        %v2464 = vld [vmem:[%s1936 + $0x152] sm:$0xff]
        %v2465 = vld [vmem:[%s1936 + $0x16a] sm:$0xff]
        %v2466 = vld [vmem:[%s1936 + $0x172] sm:$0xff]
        %v2467 = vld [vmem:[%s1936 + $0x18a] sm:$0xff]
        %v2468 = vld [vmem:[%s1936 + $0x192] sm:$0xff]
        %v2469 = vld [vmem:[%s1936 + $0x1aa] sm:$0xff]
        %v2470 = vld [vmem:[%s1936 + $0x1b2] sm:$0xff]
        %v2471 = vld [vmem:[%s1936 + $0x1ca] sm:$0xff]
        %v2472 = vld [vmem:[%s1936 + $0x1d2] sm:$0xff]
        %v2473 = vld [vmem:[%s1936 + $0x1ea] sm:$0xff]
        %v2474 = vld [vmem:[%s1936 + $0x1f2] sm:$0xff]
        %v2475 = vld [vmem:[%s1969 + $0x5] sm:$0x1]
        %v2476 = vlaneseq
        %v2477 = vshrl.u32 %v2476, 7
        %v2478 = vsub.s32 0, %v2477
        %v2479 = vrot.slane %v2475, %v2478
        %v2480 = vmul.f32 %v2443, %v2479
        %v2481 = vmul.f32 %v2444, %v2479
        %v2482 = vmul.f32 %v2445, %v2479
        %v2483 = vmul.f32 %v2446, %v2479
        %v2484 = vmul.f32 %v2447, %v2479
        %v2485 = vmul.f32 %v2448, %v2479
        %v2486 = vmul.f32 %v2449, %v2479
        %v2487 = vmul.f32 %v2450, %v2479
        %v2488 = vmul.f32 %v2451, %v2479
        %v2489 = vmul.f32 %v2452, %v2479
        %v2490 = vmul.f32 %v2453, %v2479
        %v2491 = vmul.f32 %v2454, %v2479
        %v2492 = vmul.f32 %v2455, %v2479
        %v2493 = vmul.f32 %v2456, %v2479
        %v2494 = vmul.f32 %v2457, %v2479
        %v2495 = vmul.f32 %v2458, %v2479
        %v2496 = vmul.f32 %v2459, %v2479
        %v2497 = vmul.f32 %v2460, %v2479
        %v2498 = vmul.f32 %v2461, %v2479
        %v2499 = vmul.f32 %v2462, %v2479
        %v2500 = vmul.f32 %v2463, %v2479
        %v2501 = vmul.f32 %v2464, %v2479
        %v2502 = vmul.f32 %v2465, %v2479
        %v2503 = vmul.f32 %v2466, %v2479
        %v2504 = vmul.f32 %v2467, %v2479
        %v2505 = vmul.f32 %v2468, %v2479
        %v2506 = vmul.f32 %v2469, %v2479
        %v2507 = vmul.f32 %v2470, %v2479
        %v2508 = vmul.f32 %v2471, %v2479
        %v2509 = vmul.f32 %v2472, %v2479
        %v2510 = vmul.f32 %v2473, %v2479
        %v2511 = vmul.f32 %v2474, %v2479
        %v2512 = vadd.f32 %v2411, %v2480
        %v2513 = vadd.f32 %v2412, %v2481
        %v2514 = vadd.f32 %v2413, %v2482
        %v2515 = vadd.f32 %v2414, %v2483
        %v2516 = vadd.f32 %v2415, %v2484
        %v2517 = vadd.f32 %v2416, %v2485
        %v2518 = vadd.f32 %v2417, %v2486
        %v2519 = vadd.f32 %v2418, %v2487
        %v2520 = vadd.f32 %v2419, %v2488
        %v2521 = vadd.f32 %v2420, %v2489
        %v2522 = vadd.f32 %v2421, %v2490
        %v2523 = vadd.f32 %v2422, %v2491
        %v2524 = vadd.f32 %v2423, %v2492
        %v2525 = vadd.f32 %v2424, %v2493
        %v2526 = vadd.f32 %v2425, %v2494
        %v2527 = vadd.f32 %v2426, %v2495
        %v2528 = vadd.f32 %v2427, %v2496
        %v2529 = vadd.f32 %v2428, %v2497
        %v2530 = vadd.f32 %v2429, %v2498
        %v2531 = vadd.f32 %v2430, %v2499
        %v2532 = vadd.f32 %v2431, %v2500
        %v2533 = vadd.f32 %v2432, %v2501
        %v2534 = vadd.f32 %v2433, %v2502
        %v2535 = vadd.f32 %v2434, %v2503
        %v2536 = vadd.f32 %v2435, %v2504
        %v2537 = vadd.f32 %v2436, %v2505
        %v2538 = vadd.f32 %v2437, %v2506
        %v2539 = vadd.f32 %v2438, %v2507
        %v2540 = vadd.f32 %v2439, %v2508
        %v2541 = vadd.f32 %v2440, %v2509
        %v2542 = vadd.f32 %v2441, %v2510
        %v2543 = vadd.f32 %v2442, %v2511
        %v2544 = vld [vmem:[%s1936 + $0xb] sm:$0xff]
        %v2545 = vld [vmem:[%s1936 + $0x13] sm:$0xff]
        %v2546 = vld [vmem:[%s1936 + $0x2b] sm:$0xff]
        %v2547 = vld [vmem:[%s1936 + $0x33] sm:$0xff]
        %v2548 = vld [vmem:[%s1936 + $0x4b] sm:$0xff]
        %v2549 = vld [vmem:[%s1936 + $0x53] sm:$0xff]
        %v2550 = vld [vmem:[%s1936 + $0x6b] sm:$0xff]
        %v2551 = vld [vmem:[%s1936 + $0x73] sm:$0xff]
        %v2552 = vld [vmem:[%s1936 + $0x8b] sm:$0xff]
        %v2553 = vld [vmem:[%s1936 + $0x93] sm:$0xff]
        %v2554 = vld [vmem:[%s1936 + $0xab] sm:$0xff]
        %v2555 = vld [vmem:[%s1936 + $0xb3] sm:$0xff]
        %v2556 = vld [vmem:[%s1936 + $0xcb] sm:$0xff]
        %v2557 = vld [vmem:[%s1936 + $0xd3] sm:$0xff]
        %v2558 = vld [vmem:[%s1936 + $0xeb] sm:$0xff]
        %v2559 = vld [vmem:[%s1936 + $0xf3] sm:$0xff]
        %v2560 = vld [vmem:[%s1936 + $0x10b] sm:$0xff]
        %v2561 = vld [vmem:[%s1936 + $0x113] sm:$0xff]
        %v2562 = vld [vmem:[%s1936 + $0x12b] sm:$0xff]
        %v2563 = vld [vmem:[%s1936 + $0x133] sm:$0xff]
        %v2564 = vld [vmem:[%s1936 + $0x14b] sm:$0xff]
        %v2565 = vld [vmem:[%s1936 + $0x153] sm:$0xff]
        %v2566 = vld [vmem:[%s1936 + $0x16b] sm:$0xff]
        %v2567 = vld [vmem:[%s1936 + $0x173] sm:$0xff]
        %v2568 = vld [vmem:[%s1936 + $0x18b] sm:$0xff]
        %v2569 = vld [vmem:[%s1936 + $0x193] sm:$0xff]
        %v2570 = vld [vmem:[%s1936 + $0x1ab] sm:$0xff]
        %v2571 = vld [vmem:[%s1936 + $0x1b3] sm:$0xff]
        %v2572 = vld [vmem:[%s1936 + $0x1cb] sm:$0xff]
        %v2573 = vld [vmem:[%s1936 + $0x1d3] sm:$0xff]
        %v2574 = vld [vmem:[%s1936 + $0x1eb] sm:$0xff]
        %v2575 = vld [vmem:[%s1936 + $0x1f3] sm:$0xff]
        %v2576 = vld [vmem:[%s1969 + $0x6] sm:$0x1]
        %v2577 = vlaneseq
        %v2578 = vshrl.u32 %v2577, 7
        %v2579 = vsub.s32 0, %v2578
        %v2580 = vrot.slane %v2576, %v2579
        %v2581 = vmul.f32 %v2544, %v2580
        %v2582 = vmul.f32 %v2545, %v2580
        %v2583 = vmul.f32 %v2546, %v2580
        %v2584 = vmul.f32 %v2547, %v2580
        %v2585 = vmul.f32 %v2548, %v2580
        %v2586 = vmul.f32 %v2549, %v2580
        %v2587 = vmul.f32 %v2550, %v2580
        %v2588 = vmul.f32 %v2551, %v2580
        %v2589 = vmul.f32 %v2552, %v2580
        %v2590 = vmul.f32 %v2553, %v2580
        %v2591 = vmul.f32 %v2554, %v2580
        %v2592 = vmul.f32 %v2555, %v2580
        %v2593 = vmul.f32 %v2556, %v2580
        %v2594 = vmul.f32 %v2557, %v2580
        %v2595 = vmul.f32 %v2558, %v2580
        %v2596 = vmul.f32 %v2559, %v2580
        %v2597 = vmul.f32 %v2560, %v2580
        %v2598 = vmul.f32 %v2561, %v2580
        %v2599 = vmul.f32 %v2562, %v2580
        %v2600 = vmul.f32 %v2563, %v2580
        %v2601 = vmul.f32 %v2564, %v2580
        %v2602 = vmul.f32 %v2565, %v2580
        %v2603 = vmul.f32 %v2566, %v2580
        %v2604 = vmul.f32 %v2567, %v2580
        %v2605 = vmul.f32 %v2568, %v2580
        %v2606 = vmul.f32 %v2569, %v2580
        %v2607 = vmul.f32 %v2570, %v2580
        %v2608 = vmul.f32 %v2571, %v2580
        %v2609 = vmul.f32 %v2572, %v2580
        %v2610 = vmul.f32 %v2573, %v2580
        %v2611 = vmul.f32 %v2574, %v2580
        %v2612 = vmul.f32 %v2575, %v2580
        %v2613 = vadd.f32 %v2512, %v2581
        %v2614 = vadd.f32 %v2513, %v2582
        %v2615 = vadd.f32 %v2514, %v2583
        %v2616 = vadd.f32 %v2515, %v2584
        %v2617 = vadd.f32 %v2516, %v2585
        %v2618 = vadd.f32 %v2517, %v2586
        %v2619 = vadd.f32 %v2518, %v2587
        %v2620 = vadd.f32 %v2519, %v2588
        %v2621 = vadd.f32 %v2520, %v2589
        %v2622 = vadd.f32 %v2521, %v2590
        %v2623 = vadd.f32 %v2522, %v2591
        %v2624 = vadd.f32 %v2523, %v2592
        %v2625 = vadd.f32 %v2524, %v2593
        %v2626 = vadd.f32 %v2525, %v2594
        %v2627 = vadd.f32 %v2526, %v2595
        %v2628 = vadd.f32 %v2527, %v2596
        %v2629 = vadd.f32 %v2528, %v2597
        %v2630 = vadd.f32 %v2529, %v2598
        %v2631 = vadd.f32 %v2530, %v2599
        %v2632 = vadd.f32 %v2531, %v2600
        %v2633 = vadd.f32 %v2532, %v2601
        %v2634 = vadd.f32 %v2533, %v2602
        %v2635 = vadd.f32 %v2534, %v2603
        %v2636 = vadd.f32 %v2535, %v2604
        %v2637 = vadd.f32 %v2536, %v2605
        %v2638 = vadd.f32 %v2537, %v2606
        %v2639 = vadd.f32 %v2538, %v2607
        %v2640 = vadd.f32 %v2539, %v2608
        %v2641 = vadd.f32 %v2540, %v2609
        %v2642 = vadd.f32 %v2541, %v2610
        %v2643 = vadd.f32 %v2542, %v2611
        %v2644 = vadd.f32 %v2543, %v2612
        %v2645 = vld [vmem:[%s487 + $0x5] sm:$0xff]
        %v2646 = vld [vmem:[%s487 + $0xd] sm:$0xff]
        %v2647 = vld [vmem:[%s487 + $0x25] sm:$0xff]
        %v2648 = vld [vmem:[%s487 + $0x2d] sm:$0xff]
        %v2649 = vld [vmem:[%s487 + $0x45] sm:$0xff]
        %v2650 = vld [vmem:[%s487 + $0x4d] sm:$0xff]
        %v2651 = vld [vmem:[%s487 + $0x65] sm:$0xff]
        %v2652 = vld [vmem:[%s487 + $0x6d] sm:$0xff]
        %v2653 = vld [vmem:[%s487 + $0x85] sm:$0xff]
        %v2654 = vld [vmem:[%s487 + $0x8d] sm:$0xff]
        %v2655 = vld [vmem:[%s487 + $0xa5] sm:$0xff]
        %v2656 = vld [vmem:[%s487 + $0xad] sm:$0xff]
        %v2657 = vld [vmem:[%s487 + $0xc5] sm:$0xff]
        %v2658 = vld [vmem:[%s487 + $0xcd] sm:$0xff]
        %v2659 = vld [vmem:[%s487 + $0xe5] sm:$0xff]
        %v2660 = vld [vmem:[%s487 + $0xed] sm:$0xff]
        %v2661 = vld [vmem:[%s487 + $0x105] sm:$0xff]
        %v2662 = vld [vmem:[%s487 + $0x10d] sm:$0xff]
        %v2663 = vld [vmem:[%s487 + $0x125] sm:$0xff]
        %v2664 = vld [vmem:[%s487 + $0x12d] sm:$0xff]
        %v2665 = vld [vmem:[%s487 + $0x145] sm:$0xff]
        %v2666 = vld [vmem:[%s487 + $0x14d] sm:$0xff]
        %v2667 = vld [vmem:[%s487 + $0x165] sm:$0xff]
        %v2668 = vld [vmem:[%s487 + $0x16d] sm:$0xff]
        %v2669 = vld [vmem:[%s487 + $0x185] sm:$0xff]
        %v2670 = vld [vmem:[%s487 + $0x18d] sm:$0xff]
        %v2671 = vld [vmem:[%s487 + $0x1a5] sm:$0xff]
        %v2672 = vld [vmem:[%s487 + $0x1ad] sm:$0xff]
        %v2673 = vld [vmem:[%s487 + $0x1c5] sm:$0xff]
        %v2674 = vld [vmem:[%s487 + $0x1cd] sm:$0xff]
        %v2675 = vld [vmem:[%s487 + $0x1e5] sm:$0xff]
        %v2676 = vld [vmem:[%s487 + $0x1ed] sm:$0xff]
        %s2677 = scalar_lea.vmem %s361, 24
        %v2678 = vld [vmem:[%s2677] sm:$0x1]
        %v2679 = vlaneseq
        %v2680 = vshrl.u32 %v2679, 7
        %v2681 = vsub.s32 0, %v2680
        %v2682 = vrot.slane %v2678, %v2681
        %v2683 = vmul.f32 %v2645, %v2682
        %v2684 = vmul.f32 %v2646, %v2682
        %v2685 = vmul.f32 %v2647, %v2682
        %v2686 = vmul.f32 %v2648, %v2682
        %v2687 = vmul.f32 %v2649, %v2682
        %v2688 = vmul.f32 %v2650, %v2682
        %v2689 = vmul.f32 %v2651, %v2682
        %v2690 = vmul.f32 %v2652, %v2682
        %v2691 = vmul.f32 %v2653, %v2682
        %v2692 = vmul.f32 %v2654, %v2682
        %v2693 = vmul.f32 %v2655, %v2682
        %v2694 = vmul.f32 %v2656, %v2682
        %v2695 = vmul.f32 %v2657, %v2682
        %v2696 = vmul.f32 %v2658, %v2682
        %v2697 = vmul.f32 %v2659, %v2682
        %v2698 = vmul.f32 %v2660, %v2682
        %v2699 = vmul.f32 %v2661, %v2682
        %v2700 = vmul.f32 %v2662, %v2682
        %v2701 = vmul.f32 %v2663, %v2682
        %v2702 = vmul.f32 %v2664, %v2682
        %v2703 = vmul.f32 %v2665, %v2682
        %v2704 = vmul.f32 %v2666, %v2682
        %v2705 = vmul.f32 %v2667, %v2682
        %v2706 = vmul.f32 %v2668, %v2682
        %v2707 = vmul.f32 %v2669, %v2682
        %v2708 = vmul.f32 %v2670, %v2682
        %v2709 = vmul.f32 %v2671, %v2682
        %v2710 = vmul.f32 %v2672, %v2682
        %v2711 = vmul.f32 %v2673, %v2682
        %v2712 = vmul.f32 %v2674, %v2682
        %v2713 = vmul.f32 %v2675, %v2682
        %v2714 = vmul.f32 %v2676, %v2682
        %v2715 = vadd.f32 %v2613, %v2683
        %v2716 = vadd.f32 %v2614, %v2684
        %v2717 = vadd.f32 %v2615, %v2685
        %v2718 = vadd.f32 %v2616, %v2686
        %v2719 = vadd.f32 %v2617, %v2687
        %v2720 = vadd.f32 %v2618, %v2688
        %v2721 = vadd.f32 %v2619, %v2689
        %v2722 = vadd.f32 %v2620, %v2690
        %v2723 = vadd.f32 %v2621, %v2691
        %v2724 = vadd.f32 %v2622, %v2692
        %v2725 = vadd.f32 %v2623, %v2693
        %v2726 = vadd.f32 %v2624, %v2694
        %v2727 = vadd.f32 %v2625, %v2695
        %v2728 = vadd.f32 %v2626, %v2696
        %v2729 = vadd.f32 %v2627, %v2697
        %v2730 = vadd.f32 %v2628, %v2698
        %v2731 = vadd.f32 %v2629, %v2699
        %v2732 = vadd.f32 %v2630, %v2700
        %v2733 = vadd.f32 %v2631, %v2701
        %v2734 = vadd.f32 %v2632, %v2702
        %v2735 = vadd.f32 %v2633, %v2703
        %v2736 = vadd.f32 %v2634, %v2704
        %v2737 = vadd.f32 %v2635, %v2705
        %v2738 = vadd.f32 %v2636, %v2706
        %v2739 = vadd.f32 %v2637, %v2707
        %v2740 = vadd.f32 %v2638, %v2708
        %v2741 = vadd.f32 %v2639, %v2709
        %v2742 = vadd.f32 %v2640, %v2710
        %v2743 = vadd.f32 %v2641, %v2711
        %v2744 = vadd.f32 %v2642, %v2712
        %v2745 = vadd.f32 %v2643, %v2713
        %v2746 = vadd.f32 %v2644, %v2714
        %v2747 = vld [vmem:[%s487 + $0x6] sm:$0xff]
        %v2748 = vld [vmem:[%s487 + $0xe] sm:$0xff]
        %v2749 = vld [vmem:[%s487 + $0x26] sm:$0xff]
        %v2750 = vld [vmem:[%s487 + $0x2e] sm:$0xff]
        %v2751 = vld [vmem:[%s487 + $0x46] sm:$0xff]
        %v2752 = vld [vmem:[%s487 + $0x4e] sm:$0xff]
        %v2753 = vld [vmem:[%s487 + $0x66] sm:$0xff]
        %v2754 = vld [vmem:[%s487 + $0x6e] sm:$0xff]
        %v2755 = vld [vmem:[%s487 + $0x86] sm:$0xff]
        %v2756 = vld [vmem:[%s487 + $0x8e] sm:$0xff]
        %v2757 = vld [vmem:[%s487 + $0xa6] sm:$0xff]
        %v2758 = vld [vmem:[%s487 + $0xae] sm:$0xff]
        %v2759 = vld [vmem:[%s487 + $0xc6] sm:$0xff]
        %v2760 = vld [vmem:[%s487 + $0xce] sm:$0xff]
        %v2761 = vld [vmem:[%s487 + $0xe6] sm:$0xff]
        %v2762 = vld [vmem:[%s487 + $0xee] sm:$0xff]
        %v2763 = vld [vmem:[%s487 + $0x106] sm:$0xff]
        %v2764 = vld [vmem:[%s487 + $0x10e] sm:$0xff]
        %v2765 = vld [vmem:[%s487 + $0x126] sm:$0xff]
        %v2766 = vld [vmem:[%s487 + $0x12e] sm:$0xff]
        %v2767 = vld [vmem:[%s487 + $0x146] sm:$0xff]
        %v2768 = vld [vmem:[%s487 + $0x14e] sm:$0xff]
        %v2769 = vld [vmem:[%s487 + $0x166] sm:$0xff]
        %v2770 = vld [vmem:[%s487 + $0x16e] sm:$0xff]
        %v2771 = vld [vmem:[%s487 + $0x186] sm:$0xff]
        %v2772 = vld [vmem:[%s487 + $0x18e] sm:$0xff]
        %v2773 = vld [vmem:[%s487 + $0x1a6] sm:$0xff]
        %v2774 = vld [vmem:[%s487 + $0x1ae] sm:$0xff]
        %v2775 = vld [vmem:[%s487 + $0x1c6] sm:$0xff]
        %v2776 = vld [vmem:[%s487 + $0x1ce] sm:$0xff]
        %v2777 = vld [vmem:[%s487 + $0x1e6] sm:$0xff]
        %v2778 = vld [vmem:[%s487 + $0x1ee] sm:$0xff]
        %v2779 = vld [vmem:[%s2677 + $0x1] sm:$0x1]
        %v2780 = vlaneseq
        %v2781 = vshrl.u32 %v2780, 7
        %v2782 = vsub.s32 0, %v2781
        %v2783 = vrot.slane %v2779, %v2782
        %v2784 = vmul.f32 %v2747, %v2783
        %v2785 = vmul.f32 %v2748, %v2783
        %v2786 = vmul.f32 %v2749, %v2783
        %v2787 = vmul.f32 %v2750, %v2783
        %v2788 = vmul.f32 %v2751, %v2783
        %v2789 = vmul.f32 %v2752, %v2783
        %v2790 = vmul.f32 %v2753, %v2783
        %v2791 = vmul.f32 %v2754, %v2783
        %v2792 = vmul.f32 %v2755, %v2783
        %v2793 = vmul.f32 %v2756, %v2783
        %v2794 = vmul.f32 %v2757, %v2783
        %v2795 = vmul.f32 %v2758, %v2783
        %v2796 = vmul.f32 %v2759, %v2783
        %v2797 = vmul.f32 %v2760, %v2783
        %v2798 = vmul.f32 %v2761, %v2783
        %v2799 = vmul.f32 %v2762, %v2783
        %v2800 = vmul.f32 %v2763, %v2783
        %v2801 = vmul.f32 %v2764, %v2783
        %v2802 = vmul.f32 %v2765, %v2783
        %v2803 = vmul.f32 %v2766, %v2783
        %v2804 = vmul.f32 %v2767, %v2783
        %v2805 = vmul.f32 %v2768, %v2783
        %v2806 = vmul.f32 %v2769, %v2783
        %v2807 = vmul.f32 %v2770, %v2783
        %v2808 = vmul.f32 %v2771, %v2783
        %v2809 = vmul.f32 %v2772, %v2783
        %v2810 = vmul.f32 %v2773, %v2783
        %v2811 = vmul.f32 %v2774, %v2783
        %v2812 = vmul.f32 %v2775, %v2783
        %v2813 = vmul.f32 %v2776, %v2783
        %v2814 = vmul.f32 %v2777, %v2783
        %v2815 = vmul.f32 %v2778, %v2783
        %v2816 = vadd.f32 %v2715, %v2784
        %v2817 = vadd.f32 %v2716, %v2785
        %v2818 = vadd.f32 %v2717, %v2786
        %v2819 = vadd.f32 %v2718, %v2787
        %v2820 = vadd.f32 %v2719, %v2788
        %v2821 = vadd.f32 %v2720, %v2789
        %v2822 = vadd.f32 %v2721, %v2790
        %v2823 = vadd.f32 %v2722, %v2791
        %v2824 = vadd.f32 %v2723, %v2792
        %v2825 = vadd.f32 %v2724, %v2793
        %v2826 = vadd.f32 %v2725, %v2794
        %v2827 = vadd.f32 %v2726, %v2795
        %v2828 = vadd.f32 %v2727, %v2796
        %v2829 = vadd.f32 %v2728, %v2797
        %v2830 = vadd.f32 %v2729, %v2798
        %v2831 = vadd.f32 %v2730, %v2799
        %v2832 = vadd.f32 %v2731, %v2800
        %v2833 = vadd.f32 %v2732, %v2801
        %v2834 = vadd.f32 %v2733, %v2802
        %v2835 = vadd.f32 %v2734, %v2803
        %v2836 = vadd.f32 %v2735, %v2804
        %v2837 = vadd.f32 %v2736, %v2805
        %v2838 = vadd.f32 %v2737, %v2806
        %v2839 = vadd.f32 %v2738, %v2807
        %v2840 = vadd.f32 %v2739, %v2808
        %v2841 = vadd.f32 %v2740, %v2809
        %v2842 = vadd.f32 %v2741, %v2810
        %v2843 = vadd.f32 %v2742, %v2811
        %v2844 = vadd.f32 %v2743, %v2812
        %v2845 = vadd.f32 %v2744, %v2813
        %v2846 = vadd.f32 %v2745, %v2814
        %v2847 = vadd.f32 %v2746, %v2815
        %v2848 = vld [vmem:[%s487 + $0x7] sm:$0xff]
        %v2849 = vld [vmem:[%s487 + $0xf] sm:$0xff]
        %v2850 = vld [vmem:[%s487 + $0x27] sm:$0xff]
        %v2851 = vld [vmem:[%s487 + $0x2f] sm:$0xff]
        %v2852 = vld [vmem:[%s487 + $0x47] sm:$0xff]
        %v2853 = vld [vmem:[%s487 + $0x4f] sm:$0xff]
        %v2854 = vld [vmem:[%s487 + $0x67] sm:$0xff]
        %v2855 = vld [vmem:[%s487 + $0x6f] sm:$0xff]
        %v2856 = vld [vmem:[%s487 + $0x87] sm:$0xff]
        %v2857 = vld [vmem:[%s487 + $0x8f] sm:$0xff]
        %v2858 = vld [vmem:[%s487 + $0xa7] sm:$0xff]
        %v2859 = vld [vmem:[%s487 + $0xaf] sm:$0xff]
        %v2860 = vld [vmem:[%s487 + $0xc7] sm:$0xff]
        %v2861 = vld [vmem:[%s487 + $0xcf] sm:$0xff]
        %v2862 = vld [vmem:[%s487 + $0xe7] sm:$0xff]
        %v2863 = vld [vmem:[%s487 + $0xef] sm:$0xff]
        %v2864 = vld [vmem:[%s487 + $0x107] sm:$0xff]
        %v2865 = vld [vmem:[%s487 + $0x10f] sm:$0xff]
        %v2866 = vld [vmem:[%s487 + $0x127] sm:$0xff]
        %v2867 = vld [vmem:[%s487 + $0x12f] sm:$0xff]
        %v2868 = vld [vmem:[%s487 + $0x147] sm:$0xff]
        %v2869 = vld [vmem:[%s487 + $0x14f] sm:$0xff]
        %v2870 = vld [vmem:[%s487 + $0x167] sm:$0xff]
        %v2871 = vld [vmem:[%s487 + $0x16f] sm:$0xff]
        %v2872 = vld [vmem:[%s487 + $0x187] sm:$0xff]
        %v2873 = vld [vmem:[%s487 + $0x18f] sm:$0xff]
        %v2874 = vld [vmem:[%s487 + $0x1a7] sm:$0xff]
        %v2875 = vld [vmem:[%s487 + $0x1af] sm:$0xff]
        %v2876 = vld [vmem:[%s487 + $0x1c7] sm:$0xff]
        %v2877 = vld [vmem:[%s487 + $0x1cf] sm:$0xff]
        %v2878 = vld [vmem:[%s487 + $0x1e7] sm:$0xff]
        %v2879 = vld [vmem:[%s487 + $0x1ef] sm:$0xff]
        %v2880 = vld [vmem:[%s2677 + $0x2] sm:$0x1]
        %v2881 = vlaneseq
        %v2882 = vshrl.u32 %v2881, 7
        %v2883 = vsub.s32 0, %v2882
        %v2884 = vrot.slane %v2880, %v2883
        %v2885 = vmul.f32 %v2848, %v2884
        %v2886 = vmul.f32 %v2849, %v2884
        %v2887 = vmul.f32 %v2850, %v2884
        %v2888 = vmul.f32 %v2851, %v2884
        %v2889 = vmul.f32 %v2852, %v2884
        %v2890 = vmul.f32 %v2853, %v2884
        %v2891 = vmul.f32 %v2854, %v2884
        %v2892 = vmul.f32 %v2855, %v2884
        %v2893 = vmul.f32 %v2856, %v2884
        %v2894 = vmul.f32 %v2857, %v2884
        %v2895 = vmul.f32 %v2858, %v2884
        %v2896 = vmul.f32 %v2859, %v2884
        %v2897 = vmul.f32 %v2860, %v2884
        %v2898 = vmul.f32 %v2861, %v2884
        %v2899 = vmul.f32 %v2862, %v2884
        %v2900 = vmul.f32 %v2863, %v2884
        %v2901 = vmul.f32 %v2864, %v2884
        %v2902 = vmul.f32 %v2865, %v2884
        %v2903 = vmul.f32 %v2866, %v2884
        %v2904 = vmul.f32 %v2867, %v2884
        %v2905 = vmul.f32 %v2868, %v2884
        %v2906 = vmul.f32 %v2869, %v2884
        %v2907 = vmul.f32 %v2870, %v2884
        %v2908 = vmul.f32 %v2871, %v2884
        %v2909 = vmul.f32 %v2872, %v2884
        %v2910 = vmul.f32 %v2873, %v2884
        %v2911 = vmul.f32 %v2874, %v2884
        %v2912 = vmul.f32 %v2875, %v2884
        %v2913 = vmul.f32 %v2876, %v2884
        %v2914 = vmul.f32 %v2877, %v2884
        %v2915 = vmul.f32 %v2878, %v2884
        %v2916 = vmul.f32 %v2879, %v2884
        %v2917 = vadd.f32 %v2816, %v2885
        %v2918 = vadd.f32 %v2817, %v2886
        %v2919 = vadd.f32 %v2818, %v2887
        %v2920 = vadd.f32 %v2819, %v2888
        %v2921 = vadd.f32 %v2820, %v2889
        %v2922 = vadd.f32 %v2821, %v2890
        %v2923 = vadd.f32 %v2822, %v2891
        %v2924 = vadd.f32 %v2823, %v2892
        %v2925 = vadd.f32 %v2824, %v2893
        %v2926 = vadd.f32 %v2825, %v2894
        %v2927 = vadd.f32 %v2826, %v2895
        %v2928 = vadd.f32 %v2827, %v2896
        %v2929 = vadd.f32 %v2828, %v2897
        %v2930 = vadd.f32 %v2829, %v2898
        %v2931 = vadd.f32 %v2830, %v2899
        %v2932 = vadd.f32 %v2831, %v2900
        %v2933 = vadd.f32 %v2832, %v2901
        %v2934 = vadd.f32 %v2833, %v2902
        %v2935 = vadd.f32 %v2834, %v2903
        %v2936 = vadd.f32 %v2835, %v2904
        %v2937 = vadd.f32 %v2836, %v2905
        %v2938 = vadd.f32 %v2837, %v2906
        %v2939 = vadd.f32 %v2838, %v2907
        %v2940 = vadd.f32 %v2839, %v2908
        %v2941 = vadd.f32 %v2840, %v2909
        %v2942 = vadd.f32 %v2841, %v2910
        %v2943 = vadd.f32 %v2842, %v2911
        %v2944 = vadd.f32 %v2843, %v2912
        %v2945 = vadd.f32 %v2844, %v2913
        %v2946 = vadd.f32 %v2845, %v2914
        %v2947 = vadd.f32 %v2846, %v2915
        %v2948 = vadd.f32 %v2847, %v2916
        %v2949 = vld [vmem:[%s487 + $0x8] sm:$0xff]
        %v2950 = vld [vmem:[%s487 + $0x10] sm:$0xff]
        %v2951 = vld [vmem:[%s487 + $0x28] sm:$0xff]
        %v2952 = vld [vmem:[%s487 + $0x30] sm:$0xff]
        %v2953 = vld [vmem:[%s487 + $0x48] sm:$0xff]
        %v2954 = vld [vmem:[%s487 + $0x50] sm:$0xff]
        %v2955 = vld [vmem:[%s487 + $0x68] sm:$0xff]
        %v2956 = vld [vmem:[%s487 + $0x70] sm:$0xff]
        %v2957 = vld [vmem:[%s487 + $0x88] sm:$0xff]
        %v2958 = vld [vmem:[%s487 + $0x90] sm:$0xff]
        %v2959 = vld [vmem:[%s487 + $0xa8] sm:$0xff]
        %v2960 = vld [vmem:[%s487 + $0xb0] sm:$0xff]
        %v2961 = vld [vmem:[%s487 + $0xc8] sm:$0xff]
        %v2962 = vld [vmem:[%s487 + $0xd0] sm:$0xff]
        %v2963 = vld [vmem:[%s487 + $0xe8] sm:$0xff]
        %v2964 = vld [vmem:[%s487 + $0xf0] sm:$0xff]
        %v2965 = vld [vmem:[%s487 + $0x108] sm:$0xff]
        %v2966 = vld [vmem:[%s487 + $0x110] sm:$0xff]
        %v2967 = vld [vmem:[%s487 + $0x128] sm:$0xff]
        %v2968 = vld [vmem:[%s487 + $0x130] sm:$0xff]
        %v2969 = vld [vmem:[%s487 + $0x148] sm:$0xff]
        %v2970 = vld [vmem:[%s487 + $0x150] sm:$0xff]
        %v2971 = vld [vmem:[%s487 + $0x168] sm:$0xff]
        %v2972 = vld [vmem:[%s487 + $0x170] sm:$0xff]
        %v2973 = vld [vmem:[%s487 + $0x188] sm:$0xff]
        %v2974 = vld [vmem:[%s487 + $0x190] sm:$0xff]
        %v2975 = vld [vmem:[%s487 + $0x1a8] sm:$0xff]
        %v2976 = vld [vmem:[%s487 + $0x1b0] sm:$0xff]
        %v2977 = vld [vmem:[%s487 + $0x1c8] sm:$0xff]
        %v2978 = vld [vmem:[%s487 + $0x1d0] sm:$0xff]
        %v2979 = vld [vmem:[%s487 + $0x1e8] sm:$0xff]
        %v2980 = vld [vmem:[%s487 + $0x1f0] sm:$0xff]
        %v2981 = vld [vmem:[%s2677 + $0x3] sm:$0x1]
        %v2982 = vlaneseq
        %v2983 = vshrl.u32 %v2982, 7
        %v2984 = vsub.s32 0, %v2983
        %v2985 = vrot.slane %v2981, %v2984
        %v2986 = vmul.f32 %v2949, %v2985
        %v2987 = vmul.f32 %v2950, %v2985
        %v2988 = vmul.f32 %v2951, %v2985
        %v2989 = vmul.f32 %v2952, %v2985
        %v2990 = vmul.f32 %v2953, %v2985
        %v2991 = vmul.f32 %v2954, %v2985
        %v2992 = vmul.f32 %v2955, %v2985
        %v2993 = vmul.f32 %v2956, %v2985
        %v2994 = vmul.f32 %v2957, %v2985
        %v2995 = vmul.f32 %v2958, %v2985
        %v2996 = vmul.f32 %v2959, %v2985
        %v2997 = vmul.f32 %v2960, %v2985
        %v2998 = vmul.f32 %v2961, %v2985
        %v2999 = vmul.f32 %v2962, %v2985
        %v3000 = vmul.f32 %v2963, %v2985
        %v3001 = vmul.f32 %v2964, %v2985
        %v3002 = vmul.f32 %v2965, %v2985
        %v3003 = vmul.f32 %v2966, %v2985
        %v3004 = vmul.f32 %v2967, %v2985
        %v3005 = vmul.f32 %v2968, %v2985
        %v3006 = vmul.f32 %v2969, %v2985
        %v3007 = vmul.f32 %v2970, %v2985
        %v3008 = vmul.f32 %v2971, %v2985
        %v3009 = vmul.f32 %v2972, %v2985
        %v3010 = vmul.f32 %v2973, %v2985
        %v3011 = vmul.f32 %v2974, %v2985
        %v3012 = vmul.f32 %v2975, %v2985
        %v3013 = vmul.f32 %v2976, %v2985
        %v3014 = vmul.f32 %v2977, %v2985
        %v3015 = vmul.f32 %v2978, %v2985
        %v3016 = vmul.f32 %v2979, %v2985
        %v3017 = vmul.f32 %v2980, %v2985
        %v3018 = vadd.f32 %v2917, %v2986
        %v3019 = vadd.f32 %v2918, %v2987
        %v3020 = vadd.f32 %v2919, %v2988
        %v3021 = vadd.f32 %v2920, %v2989
        %v3022 = vadd.f32 %v2921, %v2990
        %v3023 = vadd.f32 %v2922, %v2991
        %v3024 = vadd.f32 %v2923, %v2992
        %v3025 = vadd.f32 %v2924, %v2993
        %v3026 = vadd.f32 %v2925, %v2994
        %v3027 = vadd.f32 %v2926, %v2995
        %v3028 = vadd.f32 %v2927, %v2996
        %v3029 = vadd.f32 %v2928, %v2997
        %v3030 = vadd.f32 %v2929, %v2998
        %v3031 = vadd.f32 %v2930, %v2999
        %v3032 = vadd.f32 %v2931, %v3000
        %v3033 = vadd.f32 %v2932, %v3001
        %v3034 = vadd.f32 %v2933, %v3002
        %v3035 = vadd.f32 %v2934, %v3003
        %v3036 = vadd.f32 %v2935, %v3004
        %v3037 = vadd.f32 %v2936, %v3005
        %v3038 = vadd.f32 %v2937, %v3006
        %v3039 = vadd.f32 %v2938, %v3007
        %v3040 = vadd.f32 %v2939, %v3008
        %v3041 = vadd.f32 %v2940, %v3009
        %v3042 = vadd.f32 %v2941, %v3010
        %v3043 = vadd.f32 %v2942, %v3011
        %v3044 = vadd.f32 %v2943, %v3012
        %v3045 = vadd.f32 %v2944, %v3013
        %v3046 = vadd.f32 %v2945, %v3014
        %v3047 = vadd.f32 %v2946, %v3015
        %v3048 = vadd.f32 %v2947, %v3016
        %v3049 = vadd.f32 %v2948, %v3017
        %v3050 = vld [vmem:[%s487 + $0x9] sm:$0xff]
        %v3051 = vld [vmem:[%s487 + $0x11] sm:$0xff]
        %v3052 = vld [vmem:[%s487 + $0x29] sm:$0xff]
        %v3053 = vld [vmem:[%s487 + $0x31] sm:$0xff]
        %v3054 = vld [vmem:[%s487 + $0x49] sm:$0xff]
        %v3055 = vld [vmem:[%s487 + $0x51] sm:$0xff]
        %v3056 = vld [vmem:[%s487 + $0x69] sm:$0xff]
        %v3057 = vld [vmem:[%s487 + $0x71] sm:$0xff]
        %v3058 = vld [vmem:[%s487 + $0x89] sm:$0xff]
        %v3059 = vld [vmem:[%s487 + $0x91] sm:$0xff]
        %v3060 = vld [vmem:[%s487 + $0xa9] sm:$0xff]
        %v3061 = vld [vmem:[%s487 + $0xb1] sm:$0xff]
        %v3062 = vld [vmem:[%s487 + $0xc9] sm:$0xff]
        %v3063 = vld [vmem:[%s487 + $0xd1] sm:$0xff]
        %v3064 = vld [vmem:[%s487 + $0xe9] sm:$0xff]
        %v3065 = vld [vmem:[%s487 + $0xf1] sm:$0xff]
        %v3066 = vld [vmem:[%s487 + $0x109] sm:$0xff]
        %v3067 = vld [vmem:[%s487 + $0x111] sm:$0xff]
        %v3068 = vld [vmem:[%s487 + $0x129] sm:$0xff]
        %v3069 = vld [vmem:[%s487 + $0x131] sm:$0xff]
        %v3070 = vld [vmem:[%s487 + $0x149] sm:$0xff]
        %v3071 = vld [vmem:[%s487 + $0x151] sm:$0xff]
        %v3072 = vld [vmem:[%s487 + $0x169] sm:$0xff]
        %v3073 = vld [vmem:[%s487 + $0x171] sm:$0xff]
        %v3074 = vld [vmem:[%s487 + $0x189] sm:$0xff]
        %v3075 = vld [vmem:[%s487 + $0x191] sm:$0xff]
        %v3076 = vld [vmem:[%s487 + $0x1a9] sm:$0xff]
        %v3077 = vld [vmem:[%s487 + $0x1b1] sm:$0xff]
        %v3078 = vld [vmem:[%s487 + $0x1c9] sm:$0xff]
        %v3079 = vld [vmem:[%s487 + $0x1d1] sm:$0xff]
        %v3080 = vld [vmem:[%s487 + $0x1e9] sm:$0xff]
        %v3081 = vld [vmem:[%s487 + $0x1f1] sm:$0xff]
        %v3082 = vld [vmem:[%s2677 + $0x4] sm:$0x1]
        %v3083 = vlaneseq
        %v3084 = vshrl.u32 %v3083, 7
        %v3085 = vsub.s32 0, %v3084
        %v3086 = vrot.slane %v3082, %v3085
        %v3087 = vmul.f32 %v3050, %v3086
        %v3088 = vmul.f32 %v3051, %v3086
        %v3089 = vmul.f32 %v3052, %v3086
        %v3090 = vmul.f32 %v3053, %v3086
        %v3091 = vmul.f32 %v3054, %v3086
        %v3092 = vmul.f32 %v3055, %v3086
        %v3093 = vmul.f32 %v3056, %v3086
        %v3094 = vmul.f32 %v3057, %v3086
        %v3095 = vmul.f32 %v3058, %v3086
        %v3096 = vmul.f32 %v3059, %v3086
        %v3097 = vmul.f32 %v3060, %v3086
        %v3098 = vmul.f32 %v3061, %v3086
        %v3099 = vmul.f32 %v3062, %v3086
        %v3100 = vmul.f32 %v3063, %v3086
        %v3101 = vmul.f32 %v3064, %v3086
        %v3102 = vmul.f32 %v3065, %v3086
        %v3103 = vmul.f32 %v3066, %v3086
        %v3104 = vmul.f32 %v3067, %v3086
        %v3105 = vmul.f32 %v3068, %v3086
        %v3106 = vmul.f32 %v3069, %v3086
        %v3107 = vmul.f32 %v3070, %v3086
        %v3108 = vmul.f32 %v3071, %v3086
        %v3109 = vmul.f32 %v3072, %v3086
        %v3110 = vmul.f32 %v3073, %v3086
        %v3111 = vmul.f32 %v3074, %v3086
        %v3112 = vmul.f32 %v3075, %v3086
        %v3113 = vmul.f32 %v3076, %v3086
        %v3114 = vmul.f32 %v3077, %v3086
        %v3115 = vmul.f32 %v3078, %v3086
        %v3116 = vmul.f32 %v3079, %v3086
        %v3117 = vmul.f32 %v3080, %v3086
        %v3118 = vmul.f32 %v3081, %v3086
        %v3119 = vadd.f32 %v3018, %v3087
        %v3120 = vadd.f32 %v3019, %v3088
        %v3121 = vadd.f32 %v3020, %v3089
        %v3122 = vadd.f32 %v3021, %v3090
        %v3123 = vadd.f32 %v3022, %v3091
        %v3124 = vadd.f32 %v3023, %v3092
        %v3125 = vadd.f32 %v3024, %v3093
        %v3126 = vadd.f32 %v3025, %v3094
        %v3127 = vadd.f32 %v3026, %v3095
        %v3128 = vadd.f32 %v3027, %v3096
        %v3129 = vadd.f32 %v3028, %v3097
        %v3130 = vadd.f32 %v3029, %v3098
        %v3131 = vadd.f32 %v3030, %v3099
        %v3132 = vadd.f32 %v3031, %v3100
        %v3133 = vadd.f32 %v3032, %v3101
        %v3134 = vadd.f32 %v3033, %v3102
        %v3135 = vadd.f32 %v3034, %v3103
        %v3136 = vadd.f32 %v3035, %v3104
        %v3137 = vadd.f32 %v3036, %v3105
        %v3138 = vadd.f32 %v3037, %v3106
        %v3139 = vadd.f32 %v3038, %v3107
        %v3140 = vadd.f32 %v3039, %v3108
        %v3141 = vadd.f32 %v3040, %v3109
        %v3142 = vadd.f32 %v3041, %v3110
        %v3143 = vadd.f32 %v3042, %v3111
        %v3144 = vadd.f32 %v3043, %v3112
        %v3145 = vadd.f32 %v3044, %v3113
        %v3146 = vadd.f32 %v3045, %v3114
        %v3147 = vadd.f32 %v3046, %v3115
        %v3148 = vadd.f32 %v3047, %v3116
        %v3149 = vadd.f32 %v3048, %v3117
        %v3150 = vadd.f32 %v3049, %v3118
        %v3151 = vld [vmem:[%s487 + $0xa] sm:$0xff]
        %v3152 = vld [vmem:[%s487 + $0x12] sm:$0xff]
        %v3153 = vld [vmem:[%s487 + $0x2a] sm:$0xff]
        %v3154 = vld [vmem:[%s487 + $0x32] sm:$0xff]
        %v3155 = vld [vmem:[%s487 + $0x4a] sm:$0xff]
        %v3156 = vld [vmem:[%s487 + $0x52] sm:$0xff]
        %v3157 = vld [vmem:[%s487 + $0x6a] sm:$0xff]
        %v3158 = vld [vmem:[%s487 + $0x72] sm:$0xff]
        %v3159 = vld [vmem:[%s487 + $0x8a] sm:$0xff]
        %v3160 = vld [vmem:[%s487 + $0x92] sm:$0xff]
        %v3161 = vld [vmem:[%s487 + $0xaa] sm:$0xff]
        %v3162 = vld [vmem:[%s487 + $0xb2] sm:$0xff]
        %v3163 = vld [vmem:[%s487 + $0xca] sm:$0xff]
        %v3164 = vld [vmem:[%s487 + $0xd2] sm:$0xff]
        %v3165 = vld [vmem:[%s487 + $0xea] sm:$0xff]
        %v3166 = vld [vmem:[%s487 + $0xf2] sm:$0xff]
        %v3167 = vld [vmem:[%s487 + $0x10a] sm:$0xff]
        %v3168 = vld [vmem:[%s487 + $0x112] sm:$0xff]
        %v3169 = vld [vmem:[%s487 + $0x12a] sm:$0xff]
        %v3170 = vld [vmem:[%s487 + $0x132] sm:$0xff]
        %v3171 = vld [vmem:[%s487 + $0x14a] sm:$0xff]
        %v3172 = vld [vmem:[%s487 + $0x152] sm:$0xff]
        %v3173 = vld [vmem:[%s487 + $0x16a] sm:$0xff]
        %v3174 = vld [vmem:[%s487 + $0x172] sm:$0xff]
        %v3175 = vld [vmem:[%s487 + $0x18a] sm:$0xff]
        %v3176 = vld [vmem:[%s487 + $0x192] sm:$0xff]
        %v3177 = vld [vmem:[%s487 + $0x1aa] sm:$0xff]
        %v3178 = vld [vmem:[%s487 + $0x1b2] sm:$0xff]
        %v3179 = vld [vmem:[%s487 + $0x1ca] sm:$0xff]
        %v3180 = vld [vmem:[%s487 + $0x1d2] sm:$0xff]
        %v3181 = vld [vmem:[%s487 + $0x1ea] sm:$0xff]
        %v3182 = vld [vmem:[%s487 + $0x1f2] sm:$0xff]
        %v3183 = vld [vmem:[%s2677 + $0x5] sm:$0x1]
        %v3184 = vlaneseq
        %v3185 = vshrl.u32 %v3184, 7
        %v3186 = vsub.s32 0, %v3185
        %v3187 = vrot.slane %v3183, %v3186
        %v3188 = vmul.f32 %v3151, %v3187
        %v3189 = vmul.f32 %v3152, %v3187
        %v3190 = vmul.f32 %v3153, %v3187
        %v3191 = vmul.f32 %v3154, %v3187
        %v3192 = vmul.f32 %v3155, %v3187
        %v3193 = vmul.f32 %v3156, %v3187
        %v3194 = vmul.f32 %v3157, %v3187
        %v3195 = vmul.f32 %v3158, %v3187
        %v3196 = vmul.f32 %v3159, %v3187
        %v3197 = vmul.f32 %v3160, %v3187
        %v3198 = vmul.f32 %v3161, %v3187
        %v3199 = vmul.f32 %v3162, %v3187
        %v3200 = vmul.f32 %v3163, %v3187
        %v3201 = vmul.f32 %v3164, %v3187
        %v3202 = vmul.f32 %v3165, %v3187
        %v3203 = vmul.f32 %v3166, %v3187
        %v3204 = vmul.f32 %v3167, %v3187
        %v3205 = vmul.f32 %v3168, %v3187
        %v3206 = vmul.f32 %v3169, %v3187
        %v3207 = vmul.f32 %v3170, %v3187
        %v3208 = vmul.f32 %v3171, %v3187
        %v3209 = vmul.f32 %v3172, %v3187
        %v3210 = vmul.f32 %v3173, %v3187
        %v3211 = vmul.f32 %v3174, %v3187
        %v3212 = vmul.f32 %v3175, %v3187
        %v3213 = vmul.f32 %v3176, %v3187
        %v3214 = vmul.f32 %v3177, %v3187
        %v3215 = vmul.f32 %v3178, %v3187
        %v3216 = vmul.f32 %v3179, %v3187
        %v3217 = vmul.f32 %v3180, %v3187
        %v3218 = vmul.f32 %v3181, %v3187
        %v3219 = vmul.f32 %v3182, %v3187
        %v3220 = vadd.f32 %v3119, %v3188
        %v3221 = vadd.f32 %v3120, %v3189
        %v3222 = vadd.f32 %v3121, %v3190
        %v3223 = vadd.f32 %v3122, %v3191
        %v3224 = vadd.f32 %v3123, %v3192
        %v3225 = vadd.f32 %v3124, %v3193
        %v3226 = vadd.f32 %v3125, %v3194
        %v3227 = vadd.f32 %v3126, %v3195
        %v3228 = vadd.f32 %v3127, %v3196
        %v3229 = vadd.f32 %v3128, %v3197
        %v3230 = vadd.f32 %v3129, %v3198
        %v3231 = vadd.f32 %v3130, %v3199
        %v3232 = vadd.f32 %v3131, %v3200
        %v3233 = vadd.f32 %v3132, %v3201
        %v3234 = vadd.f32 %v3133, %v3202
        %v3235 = vadd.f32 %v3134, %v3203
        %v3236 = vadd.f32 %v3135, %v3204
        %v3237 = vadd.f32 %v3136, %v3205
        %v3238 = vadd.f32 %v3137, %v3206
        %v3239 = vadd.f32 %v3138, %v3207
        %v3240 = vadd.f32 %v3139, %v3208
        %v3241 = vadd.f32 %v3140, %v3209
        %v3242 = vadd.f32 %v3141, %v3210
        %v3243 = vadd.f32 %v3142, %v3211
        %v3244 = vadd.f32 %v3143, %v3212
        %v3245 = vadd.f32 %v3144, %v3213
        %v3246 = vadd.f32 %v3145, %v3214
        %v3247 = vadd.f32 %v3146, %v3215
        %v3248 = vadd.f32 %v3147, %v3216
        %v3249 = vadd.f32 %v3148, %v3217
        %v3250 = vadd.f32 %v3149, %v3218
        %v3251 = vadd.f32 %v3150, %v3219
        %v3252 = vld [vmem:[%s487 + $0xb] sm:$0xff]
        %v3253 = vld [vmem:[%s487 + $0x13] sm:$0xff]
        %v3254 = vld [vmem:[%s487 + $0x2b] sm:$0xff]
        %v3255 = vld [vmem:[%s487 + $0x33] sm:$0xff]
        %v3256 = vld [vmem:[%s487 + $0x4b] sm:$0xff]
        %v3257 = vld [vmem:[%s487 + $0x53] sm:$0xff]
        %v3258 = vld [vmem:[%s487 + $0x6b] sm:$0xff]
        %v3259 = vld [vmem:[%s487 + $0x73] sm:$0xff]
        %v3260 = vld [vmem:[%s487 + $0x8b] sm:$0xff]
        %v3261 = vld [vmem:[%s487 + $0x93] sm:$0xff]
        %v3262 = vld [vmem:[%s487 + $0xab] sm:$0xff]
        %v3263 = vld [vmem:[%s487 + $0xb3] sm:$0xff]
        %v3264 = vld [vmem:[%s487 + $0xcb] sm:$0xff]
        %v3265 = vld [vmem:[%s487 + $0xd3] sm:$0xff]
        %v3266 = vld [vmem:[%s487 + $0xeb] sm:$0xff]
        %v3267 = vld [vmem:[%s487 + $0xf3] sm:$0xff]
        %v3268 = vld [vmem:[%s487 + $0x10b] sm:$0xff]
        %v3269 = vld [vmem:[%s487 + $0x113] sm:$0xff]
        %v3270 = vld [vmem:[%s487 + $0x12b] sm:$0xff]
        %v3271 = vld [vmem:[%s487 + $0x133] sm:$0xff]
        %v3272 = vld [vmem:[%s487 + $0x14b] sm:$0xff]
        %v3273 = vld [vmem:[%s487 + $0x153] sm:$0xff]
        %v3274 = vld [vmem:[%s487 + $0x16b] sm:$0xff]
        %v3275 = vld [vmem:[%s487 + $0x173] sm:$0xff]
        %v3276 = vld [vmem:[%s487 + $0x18b] sm:$0xff]
        %v3277 = vld [vmem:[%s487 + $0x193] sm:$0xff]
        %v3278 = vld [vmem:[%s487 + $0x1ab] sm:$0xff]
        %v3279 = vld [vmem:[%s487 + $0x1b3] sm:$0xff]
        %v3280 = vld [vmem:[%s487 + $0x1cb] sm:$0xff]
        %v3281 = vld [vmem:[%s487 + $0x1d3] sm:$0xff]
        %v3282 = vld [vmem:[%s487 + $0x1eb] sm:$0xff]
        %v3283 = vld [vmem:[%s487 + $0x1f3] sm:$0xff]
        %v3284 = vld [vmem:[%s2677 + $0x6] sm:$0x1]
        %v3285 = vlaneseq
        %v3286 = vshrl.u32 %v3285, 7
        %v3287 = vsub.s32 0, %v3286
        %v3288 = vrot.slane %v3284, %v3287
        %v3289 = vmul.f32 %v3252, %v3288
        %v3290 = vmul.f32 %v3253, %v3288
        %v3291 = vmul.f32 %v3254, %v3288
        %v3292 = vmul.f32 %v3255, %v3288
        %v3293 = vmul.f32 %v3256, %v3288
        %v3294 = vmul.f32 %v3257, %v3288
        %v3295 = vmul.f32 %v3258, %v3288
        %v3296 = vmul.f32 %v3259, %v3288
        %v3297 = vmul.f32 %v3260, %v3288
        %v3298 = vmul.f32 %v3261, %v3288
        %v3299 = vmul.f32 %v3262, %v3288
        %v3300 = vmul.f32 %v3263, %v3288
        %v3301 = vmul.f32 %v3264, %v3288
        %v3302 = vmul.f32 %v3265, %v3288
        %v3303 = vmul.f32 %v3266, %v3288
        %v3304 = vmul.f32 %v3267, %v3288
        %v3305 = vmul.f32 %v3268, %v3288
        %v3306 = vmul.f32 %v3269, %v3288
        %v3307 = vmul.f32 %v3270, %v3288
        %v3308 = vmul.f32 %v3271, %v3288
        %v3309 = vmul.f32 %v3272, %v3288
        %v3310 = vmul.f32 %v3273, %v3288
        %v3311 = vmul.f32 %v3274, %v3288
        %v3312 = vmul.f32 %v3275, %v3288
        %v3313 = vmul.f32 %v3276, %v3288
        %v3314 = vmul.f32 %v3277, %v3288
        %v3315 = vmul.f32 %v3278, %v3288
        %v3316 = vmul.f32 %v3279, %v3288
        %v3317 = vmul.f32 %v3280, %v3288
        %v3318 = vmul.f32 %v3281, %v3288
        %v3319 = vmul.f32 %v3282, %v3288
        %v3320 = vmul.f32 %v3283, %v3288
        %v3321 = vadd.f32 %v3220, %v3289
        %v3322 = vadd.f32 %v3221, %v3290
        %v3323 = vadd.f32 %v3222, %v3291
        %v3324 = vadd.f32 %v3223, %v3292
        %v3325 = vadd.f32 %v3224, %v3293
        %v3326 = vadd.f32 %v3225, %v3294
        %v3327 = vadd.f32 %v3226, %v3295
        %v3328 = vadd.f32 %v3227, %v3296
        %v3329 = vadd.f32 %v3228, %v3297
        %v3330 = vadd.f32 %v3229, %v3298
        %v3331 = vadd.f32 %v3230, %v3299
        %v3332 = vadd.f32 %v3231, %v3300
        %v3333 = vadd.f32 %v3232, %v3301
        %v3334 = vadd.f32 %v3233, %v3302
        %v3335 = vadd.f32 %v3234, %v3303
        %v3336 = vadd.f32 %v3235, %v3304
        %v3337 = vadd.f32 %v3236, %v3305
        %v3338 = vadd.f32 %v3237, %v3306
        %v3339 = vadd.f32 %v3238, %v3307
        %v3340 = vadd.f32 %v3239, %v3308
        %v3341 = vadd.f32 %v3240, %v3309
        %v3342 = vadd.f32 %v3241, %v3310
        %v3343 = vadd.f32 %v3242, %v3311
        %v3344 = vadd.f32 %v3243, %v3312
        %v3345 = vadd.f32 %v3244, %v3313
        %v3346 = vadd.f32 %v3245, %v3314
        %v3347 = vadd.f32 %v3246, %v3315
        %v3348 = vadd.f32 %v3247, %v3316
        %v3349 = vadd.f32 %v3248, %v3317
        %v3350 = vadd.f32 %v3249, %v3318
        %v3351 = vadd.f32 %v3250, %v3319
        %v3352 = vadd.f32 %v3251, %v3320
        %s3353 = scalar_lea.vmem [#allocation2], 128
        %v3354 = vld [vmem:[%s3353 + $0x5] sm:$0xff]
        %v3355 = vld [vmem:[%s3353 + $0xd] sm:$0xff]
        %v3356 = vld [vmem:[%s3353 + $0x25] sm:$0xff]
        %v3357 = vld [vmem:[%s3353 + $0x2d] sm:$0xff]
        %v3358 = vld [vmem:[%s3353 + $0x45] sm:$0xff]
        %v3359 = vld [vmem:[%s3353 + $0x4d] sm:$0xff]
        %v3360 = vld [vmem:[%s3353 + $0x65] sm:$0xff]
        %v3361 = vld [vmem:[%s3353 + $0x6d] sm:$0xff]
        %v3362 = vld [vmem:[%s3353 + $0x85] sm:$0xff]
        %v3363 = vld [vmem:[%s3353 + $0x8d] sm:$0xff]
        %v3364 = vld [vmem:[%s3353 + $0xa5] sm:$0xff]
        %v3365 = vld [vmem:[%s3353 + $0xad] sm:$0xff]
        %v3366 = vld [vmem:[%s3353 + $0xc5] sm:$0xff]
        %v3367 = vld [vmem:[%s3353 + $0xcd] sm:$0xff]
        %v3368 = vld [vmem:[%s3353 + $0xe5] sm:$0xff]
        %v3369 = vld [vmem:[%s3353 + $0xed] sm:$0xff]
        %v3370 = vld [vmem:[%s3353 + $0x105] sm:$0xff]
        %v3371 = vld [vmem:[%s3353 + $0x10d] sm:$0xff]
        %v3372 = vld [vmem:[%s3353 + $0x125] sm:$0xff]
        %v3373 = vld [vmem:[%s3353 + $0x12d] sm:$0xff]
        %v3374 = vld [vmem:[%s3353 + $0x145] sm:$0xff]
        %v3375 = vld [vmem:[%s3353 + $0x14d] sm:$0xff]
        %v3376 = vld [vmem:[%s3353 + $0x165] sm:$0xff]
        %v3377 = vld [vmem:[%s3353 + $0x16d] sm:$0xff]
        %v3378 = vld [vmem:[%s3353 + $0x185] sm:$0xff]
        %v3379 = vld [vmem:[%s3353 + $0x18d] sm:$0xff]
        %v3380 = vld [vmem:[%s3353 + $0x1a5] sm:$0xff]
        %v3381 = vld [vmem:[%s3353 + $0x1ad] sm:$0xff]
        %v3382 = vld [vmem:[%s3353 + $0x1c5] sm:$0xff]
        %v3383 = vld [vmem:[%s3353 + $0x1cd] sm:$0xff]
        %v3384 = vld [vmem:[%s3353 + $0x1e5] sm:$0xff]
        %v3385 = vld [vmem:[%s3353 + $0x1ed] sm:$0xff]
        %s3386 = scalar_lea.vmem %s361, 32
        %v3387 = vld [vmem:[%s3386] sm:$0x1]
        %v3388 = vlaneseq
        %v3389 = vshrl.u32 %v3388, 7
        %v3390 = vsub.s32 0, %v3389
        %v3391 = vrot.slane %v3387, %v3390
        %v3392 = vmul.f32 %v3354, %v3391
        %v3393 = vmul.f32 %v3355, %v3391
        %v3394 = vmul.f32 %v3356, %v3391
        %v3395 = vmul.f32 %v3357, %v3391
        %v3396 = vmul.f32 %v3358, %v3391
        %v3397 = vmul.f32 %v3359, %v3391
        %v3398 = vmul.f32 %v3360, %v3391
        %v3399 = vmul.f32 %v3361, %v3391
        %v3400 = vmul.f32 %v3362, %v3391
        %v3401 = vmul.f32 %v3363, %v3391
        %v3402 = vmul.f32 %v3364, %v3391
        %v3403 = vmul.f32 %v3365, %v3391
        %v3404 = vmul.f32 %v3366, %v3391
        %v3405 = vmul.f32 %v3367, %v3391
        %v3406 = vmul.f32 %v3368, %v3391
        %v3407 = vmul.f32 %v3369, %v3391
        %v3408 = vmul.f32 %v3370, %v3391
        %v3409 = vmul.f32 %v3371, %v3391
        %v3410 = vmul.f32 %v3372, %v3391
        %v3411 = vmul.f32 %v3373, %v3391
        %v3412 = vmul.f32 %v3374, %v3391
        %v3413 = vmul.f32 %v3375, %v3391
        %v3414 = vmul.f32 %v3376, %v3391
        %v3415 = vmul.f32 %v3377, %v3391
        %v3416 = vmul.f32 %v3378, %v3391
        %v3417 = vmul.f32 %v3379, %v3391
        %v3418 = vmul.f32 %v3380, %v3391
        %v3419 = vmul.f32 %v3381, %v3391
        %v3420 = vmul.f32 %v3382, %v3391
        %v3421 = vmul.f32 %v3383, %v3391
        %v3422 = vmul.f32 %v3384, %v3391
        %v3423 = vmul.f32 %v3385, %v3391
        %v3424 = vadd.f32 %v3321, %v3392
        %v3425 = vadd.f32 %v3322, %v3393
        %v3426 = vadd.f32 %v3323, %v3394
        %v3427 = vadd.f32 %v3324, %v3395
        %v3428 = vadd.f32 %v3325, %v3396
        %v3429 = vadd.f32 %v3326, %v3397
        %v3430 = vadd.f32 %v3327, %v3398
        %v3431 = vadd.f32 %v3328, %v3399
        %v3432 = vadd.f32 %v3329, %v3400
        %v3433 = vadd.f32 %v3330, %v3401
        %v3434 = vadd.f32 %v3331, %v3402
        %v3435 = vadd.f32 %v3332, %v3403
        %v3436 = vadd.f32 %v3333, %v3404
        %v3437 = vadd.f32 %v3334, %v3405
        %v3438 = vadd.f32 %v3335, %v3406
        %v3439 = vadd.f32 %v3336, %v3407
        %v3440 = vadd.f32 %v3337, %v3408
        %v3441 = vadd.f32 %v3338, %v3409
        %v3442 = vadd.f32 %v3339, %v3410
        %v3443 = vadd.f32 %v3340, %v3411
        %v3444 = vadd.f32 %v3341, %v3412
        %v3445 = vadd.f32 %v3342, %v3413
        %v3446 = vadd.f32 %v3343, %v3414
        %v3447 = vadd.f32 %v3344, %v3415
        %v3448 = vadd.f32 %v3345, %v3416
        %v3449 = vadd.f32 %v3346, %v3417
        %v3450 = vadd.f32 %v3347, %v3418
        %v3451 = vadd.f32 %v3348, %v3419
        %v3452 = vadd.f32 %v3349, %v3420
        %v3453 = vadd.f32 %v3350, %v3421
        %v3454 = vadd.f32 %v3351, %v3422
        %v3455 = vadd.f32 %v3352, %v3423
        %v3456 = vld [vmem:[%s3353 + $0x6] sm:$0xff]
        %v3457 = vld [vmem:[%s3353 + $0xe] sm:$0xff]
        %v3458 = vld [vmem:[%s3353 + $0x26] sm:$0xff]
        %v3459 = vld [vmem:[%s3353 + $0x2e] sm:$0xff]
        %v3460 = vld [vmem:[%s3353 + $0x46] sm:$0xff]
        %v3461 = vld [vmem:[%s3353 + $0x4e] sm:$0xff]
        %v3462 = vld [vmem:[%s3353 + $0x66] sm:$0xff]
        %v3463 = vld [vmem:[%s3353 + $0x6e] sm:$0xff]
        %v3464 = vld [vmem:[%s3353 + $0x86] sm:$0xff]
        %v3465 = vld [vmem:[%s3353 + $0x8e] sm:$0xff]
        %v3466 = vld [vmem:[%s3353 + $0xa6] sm:$0xff]
        %v3467 = vld [vmem:[%s3353 + $0xae] sm:$0xff]
        %v3468 = vld [vmem:[%s3353 + $0xc6] sm:$0xff]
        %v3469 = vld [vmem:[%s3353 + $0xce] sm:$0xff]
        %v3470 = vld [vmem:[%s3353 + $0xe6] sm:$0xff]
        %v3471 = vld [vmem:[%s3353 + $0xee] sm:$0xff]
        %v3472 = vld [vmem:[%s3353 + $0x106] sm:$0xff]
        %v3473 = vld [vmem:[%s3353 + $0x10e] sm:$0xff]
        %v3474 = vld [vmem:[%s3353 + $0x126] sm:$0xff]
        %v3475 = vld [vmem:[%s3353 + $0x12e] sm:$0xff]
        %v3476 = vld [vmem:[%s3353 + $0x146] sm:$0xff]
        %v3477 = vld [vmem:[%s3353 + $0x14e] sm:$0xff]
        %v3478 = vld [vmem:[%s3353 + $0x166] sm:$0xff]
        %v3479 = vld [vmem:[%s3353 + $0x16e] sm:$0xff]
        %v3480 = vld [vmem:[%s3353 + $0x186] sm:$0xff]
        %v3481 = vld [vmem:[%s3353 + $0x18e] sm:$0xff]
        %v3482 = vld [vmem:[%s3353 + $0x1a6] sm:$0xff]
        %v3483 = vld [vmem:[%s3353 + $0x1ae] sm:$0xff]
        %v3484 = vld [vmem:[%s3353 + $0x1c6] sm:$0xff]
        %v3485 = vld [vmem:[%s3353 + $0x1ce] sm:$0xff]
        %v3486 = vld [vmem:[%s3353 + $0x1e6] sm:$0xff]
        %v3487 = vld [vmem:[%s3353 + $0x1ee] sm:$0xff]
        %v3488 = vld [vmem:[%s3386 + $0x1] sm:$0x1]
        %v3489 = vlaneseq
        %v3490 = vshrl.u32 %v3489, 7
        %v3491 = vsub.s32 0, %v3490
        %v3492 = vrot.slane %v3488, %v3491
        %v3493 = vmul.f32 %v3456, %v3492
        %v3494 = vmul.f32 %v3457, %v3492
        %v3495 = vmul.f32 %v3458, %v3492
        %v3496 = vmul.f32 %v3459, %v3492
        %v3497 = vmul.f32 %v3460, %v3492
        %v3498 = vmul.f32 %v3461, %v3492
        %v3499 = vmul.f32 %v3462, %v3492
        %v3500 = vmul.f32 %v3463, %v3492
        %v3501 = vmul.f32 %v3464, %v3492
        %v3502 = vmul.f32 %v3465, %v3492
        %v3503 = vmul.f32 %v3466, %v3492
        %v3504 = vmul.f32 %v3467, %v3492
        %v3505 = vmul.f32 %v3468, %v3492
        %v3506 = vmul.f32 %v3469, %v3492
        %v3507 = vmul.f32 %v3470, %v3492
        %v3508 = vmul.f32 %v3471, %v3492
        %v3509 = vmul.f32 %v3472, %v3492
        %v3510 = vmul.f32 %v3473, %v3492
        %v3511 = vmul.f32 %v3474, %v3492
        %v3512 = vmul.f32 %v3475, %v3492
        %v3513 = vmul.f32 %v3476, %v3492
        %v3514 = vmul.f32 %v3477, %v3492
        %v3515 = vmul.f32 %v3478, %v3492
        %v3516 = vmul.f32 %v3479, %v3492
        %v3517 = vmul.f32 %v3480, %v3492
        %v3518 = vmul.f32 %v3481, %v3492
        %v3519 = vmul.f32 %v3482, %v3492
        %v3520 = vmul.f32 %v3483, %v3492
        %v3521 = vmul.f32 %v3484, %v3492
        %v3522 = vmul.f32 %v3485, %v3492
        %v3523 = vmul.f32 %v3486, %v3492
        %v3524 = vmul.f32 %v3487, %v3492
        %v3525 = vadd.f32 %v3424, %v3493
        %v3526 = vadd.f32 %v3425, %v3494
        %v3527 = vadd.f32 %v3426, %v3495
        %v3528 = vadd.f32 %v3427, %v3496
        %v3529 = vadd.f32 %v3428, %v3497
        %v3530 = vadd.f32 %v3429, %v3498
        %v3531 = vadd.f32 %v3430, %v3499
        %v3532 = vadd.f32 %v3431, %v3500
        %v3533 = vadd.f32 %v3432, %v3501
        %v3534 = vadd.f32 %v3433, %v3502
        %v3535 = vadd.f32 %v3434, %v3503
        %v3536 = vadd.f32 %v3435, %v3504
        %v3537 = vadd.f32 %v3436, %v3505
        %v3538 = vadd.f32 %v3437, %v3506
        %v3539 = vadd.f32 %v3438, %v3507
        %v3540 = vadd.f32 %v3439, %v3508
        %v3541 = vadd.f32 %v3440, %v3509
        %v3542 = vadd.f32 %v3441, %v3510
        %v3543 = vadd.f32 %v3442, %v3511
        %v3544 = vadd.f32 %v3443, %v3512
        %v3545 = vadd.f32 %v3444, %v3513
        %v3546 = vadd.f32 %v3445, %v3514
        %v3547 = vadd.f32 %v3446, %v3515
        %v3548 = vadd.f32 %v3447, %v3516
        %v3549 = vadd.f32 %v3448, %v3517
        %v3550 = vadd.f32 %v3449, %v3518
        %v3551 = vadd.f32 %v3450, %v3519
        %v3552 = vadd.f32 %v3451, %v3520
        %v3553 = vadd.f32 %v3452, %v3521
        %v3554 = vadd.f32 %v3453, %v3522
        %v3555 = vadd.f32 %v3454, %v3523
        %v3556 = vadd.f32 %v3455, %v3524
        %v3557 = vld [vmem:[%s3353 + $0x7] sm:$0xff]
        %v3558 = vld [vmem:[%s3353 + $0xf] sm:$0xff]
        %v3559 = vld [vmem:[%s3353 + $0x27] sm:$0xff]
        %v3560 = vld [vmem:[%s3353 + $0x2f] sm:$0xff]
        %v3561 = vld [vmem:[%s3353 + $0x47] sm:$0xff]
        %v3562 = vld [vmem:[%s3353 + $0x4f] sm:$0xff]
        %v3563 = vld [vmem:[%s3353 + $0x67] sm:$0xff]
        %v3564 = vld [vmem:[%s3353 + $0x6f] sm:$0xff]
        %v3565 = vld [vmem:[%s3353 + $0x87] sm:$0xff]
        %v3566 = vld [vmem:[%s3353 + $0x8f] sm:$0xff]
        %v3567 = vld [vmem:[%s3353 + $0xa7] sm:$0xff]
        %v3568 = vld [vmem:[%s3353 + $0xaf] sm:$0xff]
        %v3569 = vld [vmem:[%s3353 + $0xc7] sm:$0xff]
        %v3570 = vld [vmem:[%s3353 + $0xcf] sm:$0xff]
        %v3571 = vld [vmem:[%s3353 + $0xe7] sm:$0xff]
        %v3572 = vld [vmem:[%s3353 + $0xef] sm:$0xff]
        %v3573 = vld [vmem:[%s3353 + $0x107] sm:$0xff]
        %v3574 = vld [vmem:[%s3353 + $0x10f] sm:$0xff]
        %v3575 = vld [vmem:[%s3353 + $0x127] sm:$0xff]
        %v3576 = vld [vmem:[%s3353 + $0x12f] sm:$0xff]
        %v3577 = vld [vmem:[%s3353 + $0x147] sm:$0xff]
        %v3578 = vld [vmem:[%s3353 + $0x14f] sm:$0xff]
        %v3579 = vld [vmem:[%s3353 + $0x167] sm:$0xff]
        %v3580 = vld [vmem:[%s3353 + $0x16f] sm:$0xff]
        %v3581 = vld [vmem:[%s3353 + $0x187] sm:$0xff]
        %v3582 = vld [vmem:[%s3353 + $0x18f] sm:$0xff]
        %v3583 = vld [vmem:[%s3353 + $0x1a7] sm:$0xff]
        %v3584 = vld [vmem:[%s3353 + $0x1af] sm:$0xff]
        %v3585 = vld [vmem:[%s3353 + $0x1c7] sm:$0xff]
        %v3586 = vld [vmem:[%s3353 + $0x1cf] sm:$0xff]
        %v3587 = vld [vmem:[%s3353 + $0x1e7] sm:$0xff]
        %v3588 = vld [vmem:[%s3353 + $0x1ef] sm:$0xff]
        %v3589 = vld [vmem:[%s3386 + $0x2] sm:$0x1]
        %v3590 = vlaneseq
        %v3591 = vshrl.u32 %v3590, 7
        %v3592 = vsub.s32 0, %v3591
        %v3593 = vrot.slane %v3589, %v3592
        %v3594 = vmul.f32 %v3557, %v3593
        %v3595 = vmul.f32 %v3558, %v3593
        %v3596 = vmul.f32 %v3559, %v3593
        %v3597 = vmul.f32 %v3560, %v3593
        %v3598 = vmul.f32 %v3561, %v3593
        %v3599 = vmul.f32 %v3562, %v3593
        %v3600 = vmul.f32 %v3563, %v3593
        %v3601 = vmul.f32 %v3564, %v3593
        %v3602 = vmul.f32 %v3565, %v3593
        %v3603 = vmul.f32 %v3566, %v3593
        %v3604 = vmul.f32 %v3567, %v3593
        %v3605 = vmul.f32 %v3568, %v3593
        %v3606 = vmul.f32 %v3569, %v3593
        %v3607 = vmul.f32 %v3570, %v3593
        %v3608 = vmul.f32 %v3571, %v3593
        %v3609 = vmul.f32 %v3572, %v3593
        %v3610 = vmul.f32 %v3573, %v3593
        %v3611 = vmul.f32 %v3574, %v3593
        %v3612 = vmul.f32 %v3575, %v3593
        %v3613 = vmul.f32 %v3576, %v3593
        %v3614 = vmul.f32 %v3577, %v3593
        %v3615 = vmul.f32 %v3578, %v3593
        %v3616 = vmul.f32 %v3579, %v3593
        %v3617 = vmul.f32 %v3580, %v3593
        %v3618 = vmul.f32 %v3581, %v3593
        %v3619 = vmul.f32 %v3582, %v3593
        %v3620 = vmul.f32 %v3583, %v3593
        %v3621 = vmul.f32 %v3584, %v3593
        %v3622 = vmul.f32 %v3585, %v3593
        %v3623 = vmul.f32 %v3586, %v3593
        %v3624 = vmul.f32 %v3587, %v3593
        %v3625 = vmul.f32 %v3588, %v3593
        %v3626 = vadd.f32 %v3525, %v3594
        %v3627 = vadd.f32 %v3526, %v3595
        %v3628 = vadd.f32 %v3527, %v3596
        %v3629 = vadd.f32 %v3528, %v3597
        %v3630 = vadd.f32 %v3529, %v3598
        %v3631 = vadd.f32 %v3530, %v3599
        %v3632 = vadd.f32 %v3531, %v3600
        %v3633 = vadd.f32 %v3532, %v3601
        %v3634 = vadd.f32 %v3533, %v3602
        %v3635 = vadd.f32 %v3534, %v3603
        %v3636 = vadd.f32 %v3535, %v3604
        %v3637 = vadd.f32 %v3536, %v3605
        %v3638 = vadd.f32 %v3537, %v3606
        %v3639 = vadd.f32 %v3538, %v3607
        %v3640 = vadd.f32 %v3539, %v3608
        %v3641 = vadd.f32 %v3540, %v3609
        %v3642 = vadd.f32 %v3541, %v3610
        %v3643 = vadd.f32 %v3542, %v3611
        %v3644 = vadd.f32 %v3543, %v3612
        %v3645 = vadd.f32 %v3544, %v3613
        %v3646 = vadd.f32 %v3545, %v3614
        %v3647 = vadd.f32 %v3546, %v3615
        %v3648 = vadd.f32 %v3547, %v3616
        %v3649 = vadd.f32 %v3548, %v3617
        %v3650 = vadd.f32 %v3549, %v3618
        %v3651 = vadd.f32 %v3550, %v3619
        %v3652 = vadd.f32 %v3551, %v3620
        %v3653 = vadd.f32 %v3552, %v3621
        %v3654 = vadd.f32 %v3553, %v3622
        %v3655 = vadd.f32 %v3554, %v3623
        %v3656 = vadd.f32 %v3555, %v3624
        %v3657 = vadd.f32 %v3556, %v3625
        %v3658 = vld [vmem:[%s3353 + $0x8] sm:$0xff]
        %v3659 = vld [vmem:[%s3353 + $0x10] sm:$0xff]
        %v3660 = vld [vmem:[%s3353 + $0x28] sm:$0xff]
        %v3661 = vld [vmem:[%s3353 + $0x30] sm:$0xff]
        %v3662 = vld [vmem:[%s3353 + $0x48] sm:$0xff]
        %v3663 = vld [vmem:[%s3353 + $0x50] sm:$0xff]
        %v3664 = vld [vmem:[%s3353 + $0x68] sm:$0xff]
        %v3665 = vld [vmem:[%s3353 + $0x70] sm:$0xff]
        %v3666 = vld [vmem:[%s3353 + $0x88] sm:$0xff]
        %v3667 = vld [vmem:[%s3353 + $0x90] sm:$0xff]
        %v3668 = vld [vmem:[%s3353 + $0xa8] sm:$0xff]
        %v3669 = vld [vmem:[%s3353 + $0xb0] sm:$0xff]
        %v3670 = vld [vmem:[%s3353 + $0xc8] sm:$0xff]
        %v3671 = vld [vmem:[%s3353 + $0xd0] sm:$0xff]
        %v3672 = vld [vmem:[%s3353 + $0xe8] sm:$0xff]
        %v3673 = vld [vmem:[%s3353 + $0xf0] sm:$0xff]
        %v3674 = vld [vmem:[%s3353 + $0x108] sm:$0xff]
        %v3675 = vld [vmem:[%s3353 + $0x110] sm:$0xff]
        %v3676 = vld [vmem:[%s3353 + $0x128] sm:$0xff]
        %v3677 = vld [vmem:[%s3353 + $0x130] sm:$0xff]
        %v3678 = vld [vmem:[%s3353 + $0x148] sm:$0xff]
        %v3679 = vld [vmem:[%s3353 + $0x150] sm:$0xff]
        %v3680 = vld [vmem:[%s3353 + $0x168] sm:$0xff]
        %v3681 = vld [vmem:[%s3353 + $0x170] sm:$0xff]
        %v3682 = vld [vmem:[%s3353 + $0x188] sm:$0xff]
        %v3683 = vld [vmem:[%s3353 + $0x190] sm:$0xff]
        %v3684 = vld [vmem:[%s3353 + $0x1a8] sm:$0xff]
        %v3685 = vld [vmem:[%s3353 + $0x1b0] sm:$0xff]
        %v3686 = vld [vmem:[%s3353 + $0x1c8] sm:$0xff]
        %v3687 = vld [vmem:[%s3353 + $0x1d0] sm:$0xff]
        %v3688 = vld [vmem:[%s3353 + $0x1e8] sm:$0xff]
        %v3689 = vld [vmem:[%s3353 + $0x1f0] sm:$0xff]
        %v3690 = vld [vmem:[%s3386 + $0x3] sm:$0x1]
        %v3691 = vlaneseq
        %v3692 = vshrl.u32 %v3691, 7
        %v3693 = vsub.s32 0, %v3692
        %v3694 = vrot.slane %v3690, %v3693
        %v3695 = vmul.f32 %v3658, %v3694
        %v3696 = vmul.f32 %v3659, %v3694
        %v3697 = vmul.f32 %v3660, %v3694
        %v3698 = vmul.f32 %v3661, %v3694
        %v3699 = vmul.f32 %v3662, %v3694
        %v3700 = vmul.f32 %v3663, %v3694
        %v3701 = vmul.f32 %v3664, %v3694
        %v3702 = vmul.f32 %v3665, %v3694
        %v3703 = vmul.f32 %v3666, %v3694
        %v3704 = vmul.f32 %v3667, %v3694
        %v3705 = vmul.f32 %v3668, %v3694
        %v3706 = vmul.f32 %v3669, %v3694
        %v3707 = vmul.f32 %v3670, %v3694
        %v3708 = vmul.f32 %v3671, %v3694
        %v3709 = vmul.f32 %v3672, %v3694
        %v3710 = vmul.f32 %v3673, %v3694
        %v3711 = vmul.f32 %v3674, %v3694
        %v3712 = vmul.f32 %v3675, %v3694
        %v3713 = vmul.f32 %v3676, %v3694
        %v3714 = vmul.f32 %v3677, %v3694
        %v3715 = vmul.f32 %v3678, %v3694
        %v3716 = vmul.f32 %v3679, %v3694
        %v3717 = vmul.f32 %v3680, %v3694
        %v3718 = vmul.f32 %v3681, %v3694
        %v3719 = vmul.f32 %v3682, %v3694
        %v3720 = vmul.f32 %v3683, %v3694
        %v3721 = vmul.f32 %v3684, %v3694
        %v3722 = vmul.f32 %v3685, %v3694
        %v3723 = vmul.f32 %v3686, %v3694
        %v3724 = vmul.f32 %v3687, %v3694
        %v3725 = vmul.f32 %v3688, %v3694
        %v3726 = vmul.f32 %v3689, %v3694
        %v3727 = vadd.f32 %v3626, %v3695
        %v3728 = vadd.f32 %v3627, %v3696
        %v3729 = vadd.f32 %v3628, %v3697
        %v3730 = vadd.f32 %v3629, %v3698
        %v3731 = vadd.f32 %v3630, %v3699
        %v3732 = vadd.f32 %v3631, %v3700
        %v3733 = vadd.f32 %v3632, %v3701
        %v3734 = vadd.f32 %v3633, %v3702
        %v3735 = vadd.f32 %v3634, %v3703
        %v3736 = vadd.f32 %v3635, %v3704
        %v3737 = vadd.f32 %v3636, %v3705
        %v3738 = vadd.f32 %v3637, %v3706
        %v3739 = vadd.f32 %v3638, %v3707
        %v3740 = vadd.f32 %v3639, %v3708
        %v3741 = vadd.f32 %v3640, %v3709
        %v3742 = vadd.f32 %v3641, %v3710
        %v3743 = vadd.f32 %v3642, %v3711
        %v3744 = vadd.f32 %v3643, %v3712
        %v3745 = vadd.f32 %v3644, %v3713
        %v3746 = vadd.f32 %v3645, %v3714
        %v3747 = vadd.f32 %v3646, %v3715
        %v3748 = vadd.f32 %v3647, %v3716
        %v3749 = vadd.f32 %v3648, %v3717
        %v3750 = vadd.f32 %v3649, %v3718
        %v3751 = vadd.f32 %v3650, %v3719
        %v3752 = vadd.f32 %v3651, %v3720
        %v3753 = vadd.f32 %v3652, %v3721
        %v3754 = vadd.f32 %v3653, %v3722
        %v3755 = vadd.f32 %v3654, %v3723
        %v3756 = vadd.f32 %v3655, %v3724
        %v3757 = vadd.f32 %v3656, %v3725
        %v3758 = vadd.f32 %v3657, %v3726
        %v3759 = vld [vmem:[%s3353 + $0x9] sm:$0xff]
        %v3760 = vld [vmem:[%s3353 + $0x11] sm:$0xff]
        %v3761 = vld [vmem:[%s3353 + $0x29] sm:$0xff]
        %v3762 = vld [vmem:[%s3353 + $0x31] sm:$0xff]
        %v3763 = vld [vmem:[%s3353 + $0x49] sm:$0xff]
        %v3764 = vld [vmem:[%s3353 + $0x51] sm:$0xff]
        %v3765 = vld [vmem:[%s3353 + $0x69] sm:$0xff]
        %v3766 = vld [vmem:[%s3353 + $0x71] sm:$0xff]
        %v3767 = vld [vmem:[%s3353 + $0x89] sm:$0xff]
        %v3768 = vld [vmem:[%s3353 + $0x91] sm:$0xff]
        %v3769 = vld [vmem:[%s3353 + $0xa9] sm:$0xff]
        %v3770 = vld [vmem:[%s3353 + $0xb1] sm:$0xff]
        %v3771 = vld [vmem:[%s3353 + $0xc9] sm:$0xff]
        %v3772 = vld [vmem:[%s3353 + $0xd1] sm:$0xff]
        %v3773 = vld [vmem:[%s3353 + $0xe9] sm:$0xff]
        %v3774 = vld [vmem:[%s3353 + $0xf1] sm:$0xff]
        %v3775 = vld [vmem:[%s3353 + $0x109] sm:$0xff]
        %v3776 = vld [vmem:[%s3353 + $0x111] sm:$0xff]
        %v3777 = vld [vmem:[%s3353 + $0x129] sm:$0xff]
        %v3778 = vld [vmem:[%s3353 + $0x131] sm:$0xff]
        %v3779 = vld [vmem:[%s3353 + $0x149] sm:$0xff]
        %v3780 = vld [vmem:[%s3353 + $0x151] sm:$0xff]
        %v3781 = vld [vmem:[%s3353 + $0x169] sm:$0xff]
        %v3782 = vld [vmem:[%s3353 + $0x171] sm:$0xff]
        %v3783 = vld [vmem:[%s3353 + $0x189] sm:$0xff]
        %v3784 = vld [vmem:[%s3353 + $0x191] sm:$0xff]
        %v3785 = vld [vmem:[%s3353 + $0x1a9] sm:$0xff]
        %v3786 = vld [vmem:[%s3353 + $0x1b1] sm:$0xff]
        %v3787 = vld [vmem:[%s3353 + $0x1c9] sm:$0xff]
        %v3788 = vld [vmem:[%s3353 + $0x1d1] sm:$0xff]
        %v3789 = vld [vmem:[%s3353 + $0x1e9] sm:$0xff]
        %v3790 = vld [vmem:[%s3353 + $0x1f1] sm:$0xff]
        %v3791 = vld [vmem:[%s3386 + $0x4] sm:$0x1]
        %v3792 = vlaneseq
        %v3793 = vshrl.u32 %v3792, 7
        %v3794 = vsub.s32 0, %v3793
        %v3795 = vrot.slane %v3791, %v3794
        %v3796 = vmul.f32 %v3759, %v3795
        %v3797 = vmul.f32 %v3760, %v3795
        %v3798 = vmul.f32 %v3761, %v3795
        %v3799 = vmul.f32 %v3762, %v3795
        %v3800 = vmul.f32 %v3763, %v3795
        %v3801 = vmul.f32 %v3764, %v3795
        %v3802 = vmul.f32 %v3765, %v3795
        %v3803 = vmul.f32 %v3766, %v3795
        %v3804 = vmul.f32 %v3767, %v3795
        %v3805 = vmul.f32 %v3768, %v3795
        %v3806 = vmul.f32 %v3769, %v3795
        %v3807 = vmul.f32 %v3770, %v3795
        %v3808 = vmul.f32 %v3771, %v3795
        %v3809 = vmul.f32 %v3772, %v3795
        %v3810 = vmul.f32 %v3773, %v3795
        %v3811 = vmul.f32 %v3774, %v3795
        %v3812 = vmul.f32 %v3775, %v3795
        %v3813 = vmul.f32 %v3776, %v3795
        %v3814 = vmul.f32 %v3777, %v3795
        %v3815 = vmul.f32 %v3778, %v3795
        %v3816 = vmul.f32 %v3779, %v3795
        %v3817 = vmul.f32 %v3780, %v3795
        %v3818 = vmul.f32 %v3781, %v3795
        %v3819 = vmul.f32 %v3782, %v3795
        %v3820 = vmul.f32 %v3783, %v3795
        %v3821 = vmul.f32 %v3784, %v3795
        %v3822 = vmul.f32 %v3785, %v3795
        %v3823 = vmul.f32 %v3786, %v3795
        %v3824 = vmul.f32 %v3787, %v3795
        %v3825 = vmul.f32 %v3788, %v3795
        %v3826 = vmul.f32 %v3789, %v3795
        %v3827 = vmul.f32 %v3790, %v3795
        %v3828 = vadd.f32 %v3727, %v3796
        %v3829 = vadd.f32 %v3728, %v3797
        %v3830 = vadd.f32 %v3729, %v3798
        %v3831 = vadd.f32 %v3730, %v3799
        %v3832 = vadd.f32 %v3731, %v3800
        %v3833 = vadd.f32 %v3732, %v3801
        %v3834 = vadd.f32 %v3733, %v3802
        %v3835 = vadd.f32 %v3734, %v3803
        %v3836 = vadd.f32 %v3735, %v3804
        %v3837 = vadd.f32 %v3736, %v3805
        %v3838 = vadd.f32 %v3737, %v3806
        %v3839 = vadd.f32 %v3738, %v3807
        %v3840 = vadd.f32 %v3739, %v3808
        %v3841 = vadd.f32 %v3740, %v3809
        %v3842 = vadd.f32 %v3741, %v3810
        %v3843 = vadd.f32 %v3742, %v3811
        %v3844 = vadd.f32 %v3743, %v3812
        %v3845 = vadd.f32 %v3744, %v3813
        %v3846 = vadd.f32 %v3745, %v3814
        %v3847 = vadd.f32 %v3746, %v3815
        %v3848 = vadd.f32 %v3747, %v3816
        %v3849 = vadd.f32 %v3748, %v3817
        %v3850 = vadd.f32 %v3749, %v3818
        %v3851 = vadd.f32 %v3750, %v3819
        %v3852 = vadd.f32 %v3751, %v3820
        %v3853 = vadd.f32 %v3752, %v3821
        %v3854 = vadd.f32 %v3753, %v3822
        %v3855 = vadd.f32 %v3754, %v3823
        %v3856 = vadd.f32 %v3755, %v3824
        %v3857 = vadd.f32 %v3756, %v3825
        %v3858 = vadd.f32 %v3757, %v3826
        %v3859 = vadd.f32 %v3758, %v3827
        %v3860 = vld [vmem:[%s3353 + $0xa] sm:$0xff]
        %v3861 = vld [vmem:[%s3353 + $0x12] sm:$0xff]
        %v3862 = vld [vmem:[%s3353 + $0x2a] sm:$0xff]
        %v3863 = vld [vmem:[%s3353 + $0x32] sm:$0xff]
        %v3864 = vld [vmem:[%s3353 + $0x4a] sm:$0xff]
        %v3865 = vld [vmem:[%s3353 + $0x52] sm:$0xff]
        %v3866 = vld [vmem:[%s3353 + $0x6a] sm:$0xff]
        %v3867 = vld [vmem:[%s3353 + $0x72] sm:$0xff]
        %v3868 = vld [vmem:[%s3353 + $0x8a] sm:$0xff]
        %v3869 = vld [vmem:[%s3353 + $0x92] sm:$0xff]
        %v3870 = vld [vmem:[%s3353 + $0xaa] sm:$0xff]
        %v3871 = vld [vmem:[%s3353 + $0xb2] sm:$0xff]
        %v3872 = vld [vmem:[%s3353 + $0xca] sm:$0xff]
        %v3873 = vld [vmem:[%s3353 + $0xd2] sm:$0xff]
        %v3874 = vld [vmem:[%s3353 + $0xea] sm:$0xff]
        %v3875 = vld [vmem:[%s3353 + $0xf2] sm:$0xff]
        %v3876 = vld [vmem:[%s3353 + $0x10a] sm:$0xff]
        %v3877 = vld [vmem:[%s3353 + $0x112] sm:$0xff]
        %v3878 = vld [vmem:[%s3353 + $0x12a] sm:$0xff]
        %v3879 = vld [vmem:[%s3353 + $0x132] sm:$0xff]
        %v3880 = vld [vmem:[%s3353 + $0x14a] sm:$0xff]
        %v3881 = vld [vmem:[%s3353 + $0x152] sm:$0xff]
        %v3882 = vld [vmem:[%s3353 + $0x16a] sm:$0xff]
        %v3883 = vld [vmem:[%s3353 + $0x172] sm:$0xff]
        %v3884 = vld [vmem:[%s3353 + $0x18a] sm:$0xff]
        %v3885 = vld [vmem:[%s3353 + $0x192] sm:$0xff]
        %v3886 = vld [vmem:[%s3353 + $0x1aa] sm:$0xff]
        %v3887 = vld [vmem:[%s3353 + $0x1b2] sm:$0xff]
        %v3888 = vld [vmem:[%s3353 + $0x1ca] sm:$0xff]
        %v3889 = vld [vmem:[%s3353 + $0x1d2] sm:$0xff]
        %v3890 = vld [vmem:[%s3353 + $0x1ea] sm:$0xff]
        %v3891 = vld [vmem:[%s3353 + $0x1f2] sm:$0xff]
        %v3892 = vld [vmem:[%s3386 + $0x5] sm:$0x1]
        %v3893 = vlaneseq
        %v3894 = vshrl.u32 %v3893, 7
        %v3895 = vsub.s32 0, %v3894
        %v3896 = vrot.slane %v3892, %v3895
        %v3897 = vmul.f32 %v3860, %v3896
        %v3898 = vmul.f32 %v3861, %v3896
        %v3899 = vmul.f32 %v3862, %v3896
        %v3900 = vmul.f32 %v3863, %v3896
        %v3901 = vmul.f32 %v3864, %v3896
        %v3902 = vmul.f32 %v3865, %v3896
        %v3903 = vmul.f32 %v3866, %v3896
        %v3904 = vmul.f32 %v3867, %v3896
        %v3905 = vmul.f32 %v3868, %v3896
        %v3906 = vmul.f32 %v3869, %v3896
        %v3907 = vmul.f32 %v3870, %v3896
        %v3908 = vmul.f32 %v3871, %v3896
        %v3909 = vmul.f32 %v3872, %v3896
        %v3910 = vmul.f32 %v3873, %v3896
        %v3911 = vmul.f32 %v3874, %v3896
        %v3912 = vmul.f32 %v3875, %v3896
        %v3913 = vmul.f32 %v3876, %v3896
        %v3914 = vmul.f32 %v3877, %v3896
        %v3915 = vmul.f32 %v3878, %v3896
        %v3916 = vmul.f32 %v3879, %v3896
        %v3917 = vmul.f32 %v3880, %v3896
        %v3918 = vmul.f32 %v3881, %v3896
        %v3919 = vmul.f32 %v3882, %v3896
        %v3920 = vmul.f32 %v3883, %v3896
        %v3921 = vmul.f32 %v3884, %v3896
        %v3922 = vmul.f32 %v3885, %v3896
        %v3923 = vmul.f32 %v3886, %v3896
        %v3924 = vmul.f32 %v3887, %v3896
        %v3925 = vmul.f32 %v3888, %v3896
        %v3926 = vmul.f32 %v3889, %v3896
        %v3927 = vmul.f32 %v3890, %v3896
        %v3928 = vmul.f32 %v3891, %v3896
        %v3929 = vadd.f32 %v3828, %v3897
        %v3930 = vadd.f32 %v3829, %v3898
        %v3931 = vadd.f32 %v3830, %v3899
        %v3932 = vadd.f32 %v3831, %v3900
        %v3933 = vadd.f32 %v3832, %v3901
        %v3934 = vadd.f32 %v3833, %v3902
        %v3935 = vadd.f32 %v3834, %v3903
        %v3936 = vadd.f32 %v3835, %v3904
        %v3937 = vadd.f32 %v3836, %v3905
        %v3938 = vadd.f32 %v3837, %v3906
        %v3939 = vadd.f32 %v3838, %v3907
        %v3940 = vadd.f32 %v3839, %v3908
        %v3941 = vadd.f32 %v3840, %v3909
        %v3942 = vadd.f32 %v3841, %v3910
        %v3943 = vadd.f32 %v3842, %v3911
        %v3944 = vadd.f32 %v3843, %v3912
        %v3945 = vadd.f32 %v3844, %v3913
        %v3946 = vadd.f32 %v3845, %v3914
        %v3947 = vadd.f32 %v3846, %v3915
        %v3948 = vadd.f32 %v3847, %v3916
        %v3949 = vadd.f32 %v3848, %v3917
        %v3950 = vadd.f32 %v3849, %v3918
        %v3951 = vadd.f32 %v3850, %v3919
        %v3952 = vadd.f32 %v3851, %v3920
        %v3953 = vadd.f32 %v3852, %v3921
        %v3954 = vadd.f32 %v3853, %v3922
        %v3955 = vadd.f32 %v3854, %v3923
        %v3956 = vadd.f32 %v3855, %v3924
        %v3957 = vadd.f32 %v3856, %v3925
        %v3958 = vadd.f32 %v3857, %v3926
        %v3959 = vadd.f32 %v3858, %v3927
        %v3960 = vadd.f32 %v3859, %v3928
        %v3961 = vld [vmem:[%s3353 + $0xb] sm:$0xff]
        %v3962 = vld [vmem:[%s3353 + $0x13] sm:$0xff]
        %v3963 = vld [vmem:[%s3353 + $0x2b] sm:$0xff]
        %v3964 = vld [vmem:[%s3353 + $0x33] sm:$0xff]
        %v3965 = vld [vmem:[%s3353 + $0x4b] sm:$0xff]
        %v3966 = vld [vmem:[%s3353 + $0x53] sm:$0xff]
        %v3967 = vld [vmem:[%s3353 + $0x6b] sm:$0xff]
        %v3968 = vld [vmem:[%s3353 + $0x73] sm:$0xff]
        %v3969 = vld [vmem:[%s3353 + $0x8b] sm:$0xff]
        %v3970 = vld [vmem:[%s3353 + $0x93] sm:$0xff]
        %v3971 = vld [vmem:[%s3353 + $0xab] sm:$0xff]
        %v3972 = vld [vmem:[%s3353 + $0xb3] sm:$0xff]
        %v3973 = vld [vmem:[%s3353 + $0xcb] sm:$0xff]
        %v3974 = vld [vmem:[%s3353 + $0xd3] sm:$0xff]
        %v3975 = vld [vmem:[%s3353 + $0xeb] sm:$0xff]
        %v3976 = vld [vmem:[%s3353 + $0xf3] sm:$0xff]
        %v3977 = vld [vmem:[%s3353 + $0x10b] sm:$0xff]
        %v3978 = vld [vmem:[%s3353 + $0x113] sm:$0xff]
        %v3979 = vld [vmem:[%s3353 + $0x12b] sm:$0xff]
        %v3980 = vld [vmem:[%s3353 + $0x133] sm:$0xff]
        %v3981 = vld [vmem:[%s3353 + $0x14b] sm:$0xff]
        %v3982 = vld [vmem:[%s3353 + $0x153] sm:$0xff]
        %v3983 = vld [vmem:[%s3353 + $0x16b] sm:$0xff]
        %v3984 = vld [vmem:[%s3353 + $0x173] sm:$0xff]
        %v3985 = vld [vmem:[%s3353 + $0x18b] sm:$0xff]
        %v3986 = vld [vmem:[%s3353 + $0x193] sm:$0xff]
        %v3987 = vld [vmem:[%s3353 + $0x1ab] sm:$0xff]
        %v3988 = vld [vmem:[%s3353 + $0x1b3] sm:$0xff]
        %v3989 = vld [vmem:[%s3353 + $0x1cb] sm:$0xff]
        %v3990 = vld [vmem:[%s3353 + $0x1d3] sm:$0xff]
        %v3991 = vld [vmem:[%s3353 + $0x1eb] sm:$0xff]
        %v3992 = vld [vmem:[%s3353 + $0x1f3] sm:$0xff]
        %v3993 = vld [vmem:[%s3386 + $0x6] sm:$0x1]
        %v3994 = vlaneseq
        %v3995 = vshrl.u32 %v3994, 7
        %v3996 = vsub.s32 0, %v3995
        %v3997 = vrot.slane %v3993, %v3996
        %v3998 = vmul.f32 %v3961, %v3997
        %v3999 = vmul.f32 %v3962, %v3997
        %v4000 = vmul.f32 %v3963, %v3997
        %v4001 = vmul.f32 %v3964, %v3997
        %v4002 = vmul.f32 %v3965, %v3997
        %v4003 = vmul.f32 %v3966, %v3997
        %v4004 = vmul.f32 %v3967, %v3997
        %v4005 = vmul.f32 %v3968, %v3997
        %v4006 = vmul.f32 %v3969, %v3997
        %v4007 = vmul.f32 %v3970, %v3997
        %v4008 = vmul.f32 %v3971, %v3997
        %v4009 = vmul.f32 %v3972, %v3997
        %v4010 = vmul.f32 %v3973, %v3997
        %v4011 = vmul.f32 %v3974, %v3997
        %v4012 = vmul.f32 %v3975, %v3997
        %v4013 = vmul.f32 %v3976, %v3997
        %v4014 = vmul.f32 %v3977, %v3997
        %v4015 = vmul.f32 %v3978, %v3997
        %v4016 = vmul.f32 %v3979, %v3997
        %v4017 = vmul.f32 %v3980, %v3997
        %v4018 = vmul.f32 %v3981, %v3997
        %v4019 = vmul.f32 %v3982, %v3997
        %v4020 = vmul.f32 %v3983, %v3997
        %v4021 = vmul.f32 %v3984, %v3997
        %v4022 = vmul.f32 %v3985, %v3997
        %v4023 = vmul.f32 %v3986, %v3997
        %v4024 = vmul.f32 %v3987, %v3997
        %v4025 = vmul.f32 %v3988, %v3997
        %v4026 = vmul.f32 %v3989, %v3997
        %v4027 = vmul.f32 %v3990, %v3997
        %v4028 = vmul.f32 %v3991, %v3997
        %v4029 = vmul.f32 %v3992, %v3997
        %v4030 = vadd.f32 %v3929, %v3998
        %v4031 = vadd.f32 %v3930, %v3999
        %v4032 = vadd.f32 %v3931, %v4000
        %v4033 = vadd.f32 %v3932, %v4001
        %v4034 = vadd.f32 %v3933, %v4002
        %v4035 = vadd.f32 %v3934, %v4003
        %v4036 = vadd.f32 %v3935, %v4004
        %v4037 = vadd.f32 %v3936, %v4005
        %v4038 = vadd.f32 %v3937, %v4006
        %v4039 = vadd.f32 %v3938, %v4007
        %v4040 = vadd.f32 %v3939, %v4008
        %v4041 = vadd.f32 %v3940, %v4009
        %v4042 = vadd.f32 %v3941, %v4010
        %v4043 = vadd.f32 %v3942, %v4011
        %v4044 = vadd.f32 %v3943, %v4012
        %v4045 = vadd.f32 %v3944, %v4013
        %v4046 = vadd.f32 %v3945, %v4014
        %v4047 = vadd.f32 %v3946, %v4015
        %v4048 = vadd.f32 %v3947, %v4016
        %v4049 = vadd.f32 %v3948, %v4017
        %v4050 = vadd.f32 %v3949, %v4018
        %v4051 = vadd.f32 %v3950, %v4019
        %v4052 = vadd.f32 %v3951, %v4020
        %v4053 = vadd.f32 %v3952, %v4021
        %v4054 = vadd.f32 %v3953, %v4022
        %v4055 = vadd.f32 %v3954, %v4023
        %v4056 = vadd.f32 %v3955, %v4024
        %v4057 = vadd.f32 %v3956, %v4025
        %v4058 = vadd.f32 %v3957, %v4026
        %v4059 = vadd.f32 %v3958, %v4027
        %v4060 = vadd.f32 %v3959, %v4028
        %v4061 = vadd.f32 %v3960, %v4029
        %s4062 = scalar_lea.vmem [#allocation2], 160
        %v4063 = vld [vmem:[%s4062 + $0x5] sm:$0xff]
        %v4064 = vld [vmem:[%s4062 + $0xd] sm:$0xff]
        %v4065 = vld [vmem:[%s4062 + $0x25] sm:$0xff]
        %v4066 = vld [vmem:[%s4062 + $0x2d] sm:$0xff]
        %v4067 = vld [vmem:[%s4062 + $0x45] sm:$0xff]
        %v4068 = vld [vmem:[%s4062 + $0x4d] sm:$0xff]
        %v4069 = vld [vmem:[%s4062 + $0x65] sm:$0xff]
        %v4070 = vld [vmem:[%s4062 + $0x6d] sm:$0xff]
        %v4071 = vld [vmem:[%s4062 + $0x85] sm:$0xff]
        %v4072 = vld [vmem:[%s4062 + $0x8d] sm:$0xff]
        %v4073 = vld [vmem:[%s4062 + $0xa5] sm:$0xff]
        %v4074 = vld [vmem:[%s4062 + $0xad] sm:$0xff]
        %v4075 = vld [vmem:[%s4062 + $0xc5] sm:$0xff]
        %v4076 = vld [vmem:[%s4062 + $0xcd] sm:$0xff]
        %v4077 = vld [vmem:[%s4062 + $0xe5] sm:$0xff]
        %v4078 = vld [vmem:[%s4062 + $0xed] sm:$0xff]
        %v4079 = vld [vmem:[%s4062 + $0x105] sm:$0xff]
        %v4080 = vld [vmem:[%s4062 + $0x10d] sm:$0xff]
        %v4081 = vld [vmem:[%s4062 + $0x125] sm:$0xff]
        %v4082 = vld [vmem:[%s4062 + $0x12d] sm:$0xff]
        %v4083 = vld [vmem:[%s4062 + $0x145] sm:$0xff]
        %v4084 = vld [vmem:[%s4062 + $0x14d] sm:$0xff]
        %v4085 = vld [vmem:[%s4062 + $0x165] sm:$0xff]
        %v4086 = vld [vmem:[%s4062 + $0x16d] sm:$0xff]
        %v4087 = vld [vmem:[%s4062 + $0x185] sm:$0xff]
        %v4088 = vld [vmem:[%s4062 + $0x18d] sm:$0xff]
        %v4089 = vld [vmem:[%s4062 + $0x1a5] sm:$0xff]
        %v4090 = vld [vmem:[%s4062 + $0x1ad] sm:$0xff]
        %v4091 = vld [vmem:[%s4062 + $0x1c5] sm:$0xff]
        %v4092 = vld [vmem:[%s4062 + $0x1cd] sm:$0xff]
        %v4093 = vld [vmem:[%s4062 + $0x1e5] sm:$0xff]
        %v4094 = vld [vmem:[%s4062 + $0x1ed] sm:$0xff]
        %s4095 = scalar_lea.vmem %s361, 40
        %v4096 = vld [vmem:[%s4095] sm:$0x1]
        %v4097 = vlaneseq
        %v4098 = vshrl.u32 %v4097, 7
        %v4099 = vsub.s32 0, %v4098
        %v4100 = vrot.slane %v4096, %v4099
        %v4101 = vmul.f32 %v4063, %v4100
        %v4102 = vmul.f32 %v4064, %v4100
        %v4103 = vmul.f32 %v4065, %v4100
        %v4104 = vmul.f32 %v4066, %v4100
        %v4105 = vmul.f32 %v4067, %v4100
        %v4106 = vmul.f32 %v4068, %v4100
        %v4107 = vmul.f32 %v4069, %v4100
        %v4108 = vmul.f32 %v4070, %v4100
        %v4109 = vmul.f32 %v4071, %v4100
        %v4110 = vmul.f32 %v4072, %v4100
        %v4111 = vmul.f32 %v4073, %v4100
        %v4112 = vmul.f32 %v4074, %v4100
        %v4113 = vmul.f32 %v4075, %v4100
        %v4114 = vmul.f32 %v4076, %v4100
        %v4115 = vmul.f32 %v4077, %v4100
        %v4116 = vmul.f32 %v4078, %v4100
        %v4117 = vmul.f32 %v4079, %v4100
        %v4118 = vmul.f32 %v4080, %v4100
        %v4119 = vmul.f32 %v4081, %v4100
        %v4120 = vmul.f32 %v4082, %v4100
        %v4121 = vmul.f32 %v4083, %v4100
        %v4122 = vmul.f32 %v4084, %v4100
        %v4123 = vmul.f32 %v4085, %v4100
        %v4124 = vmul.f32 %v4086, %v4100
        %v4125 = vmul.f32 %v4087, %v4100
        %v4126 = vmul.f32 %v4088, %v4100
        %v4127 = vmul.f32 %v4089, %v4100
        %v4128 = vmul.f32 %v4090, %v4100
        %v4129 = vmul.f32 %v4091, %v4100
        %v4130 = vmul.f32 %v4092, %v4100
        %v4131 = vmul.f32 %v4093, %v4100
        %v4132 = vmul.f32 %v4094, %v4100
        %v4133 = vadd.f32 %v4030, %v4101
        %v4134 = vadd.f32 %v4031, %v4102
        %v4135 = vadd.f32 %v4032, %v4103
        %v4136 = vadd.f32 %v4033, %v4104
        %v4137 = vadd.f32 %v4034, %v4105
        %v4138 = vadd.f32 %v4035, %v4106
        %v4139 = vadd.f32 %v4036, %v4107
        %v4140 = vadd.f32 %v4037, %v4108
        %v4141 = vadd.f32 %v4038, %v4109
        %v4142 = vadd.f32 %v4039, %v4110
        %v4143 = vadd.f32 %v4040, %v4111
        %v4144 = vadd.f32 %v4041, %v4112
        %v4145 = vadd.f32 %v4042, %v4113
        %v4146 = vadd.f32 %v4043, %v4114
        %v4147 = vadd.f32 %v4044, %v4115
        %v4148 = vadd.f32 %v4045, %v4116
        %v4149 = vadd.f32 %v4046, %v4117
        %v4150 = vadd.f32 %v4047, %v4118
        %v4151 = vadd.f32 %v4048, %v4119
        %v4152 = vadd.f32 %v4049, %v4120
        %v4153 = vadd.f32 %v4050, %v4121
        %v4154 = vadd.f32 %v4051, %v4122
        %v4155 = vadd.f32 %v4052, %v4123
        %v4156 = vadd.f32 %v4053, %v4124
        %v4157 = vadd.f32 %v4054, %v4125
        %v4158 = vadd.f32 %v4055, %v4126
        %v4159 = vadd.f32 %v4056, %v4127
        %v4160 = vadd.f32 %v4057, %v4128
        %v4161 = vadd.f32 %v4058, %v4129
        %v4162 = vadd.f32 %v4059, %v4130
        %v4163 = vadd.f32 %v4060, %v4131
        %v4164 = vadd.f32 %v4061, %v4132
        %v4165 = vld [vmem:[%s4062 + $0x6] sm:$0xff]
        %v4166 = vld [vmem:[%s4062 + $0xe] sm:$0xff]
        %v4167 = vld [vmem:[%s4062 + $0x26] sm:$0xff]
        %v4168 = vld [vmem:[%s4062 + $0x2e] sm:$0xff]
        %v4169 = vld [vmem:[%s4062 + $0x46] sm:$0xff]
        %v4170 = vld [vmem:[%s4062 + $0x4e] sm:$0xff]
        %v4171 = vld [vmem:[%s4062 + $0x66] sm:$0xff]
        %v4172 = vld [vmem:[%s4062 + $0x6e] sm:$0xff]
        %v4173 = vld [vmem:[%s4062 + $0x86] sm:$0xff]
        %v4174 = vld [vmem:[%s4062 + $0x8e] sm:$0xff]
        %v4175 = vld [vmem:[%s4062 + $0xa6] sm:$0xff]
        %v4176 = vld [vmem:[%s4062 + $0xae] sm:$0xff]
        %v4177 = vld [vmem:[%s4062 + $0xc6] sm:$0xff]
        %v4178 = vld [vmem:[%s4062 + $0xce] sm:$0xff]
        %v4179 = vld [vmem:[%s4062 + $0xe6] sm:$0xff]
        %v4180 = vld [vmem:[%s4062 + $0xee] sm:$0xff]
        %v4181 = vld [vmem:[%s4062 + $0x106] sm:$0xff]
        %v4182 = vld [vmem:[%s4062 + $0x10e] sm:$0xff]
        %v4183 = vld [vmem:[%s4062 + $0x126] sm:$0xff]
        %v4184 = vld [vmem:[%s4062 + $0x12e] sm:$0xff]
        %v4185 = vld [vmem:[%s4062 + $0x146] sm:$0xff]
        %v4186 = vld [vmem:[%s4062 + $0x14e] sm:$0xff]
        %v4187 = vld [vmem:[%s4062 + $0x166] sm:$0xff]
        %v4188 = vld [vmem:[%s4062 + $0x16e] sm:$0xff]
        %v4189 = vld [vmem:[%s4062 + $0x186] sm:$0xff]
        %v4190 = vld [vmem:[%s4062 + $0x18e] sm:$0xff]
        %v4191 = vld [vmem:[%s4062 + $0x1a6] sm:$0xff]
        %v4192 = vld [vmem:[%s4062 + $0x1ae] sm:$0xff]
        %v4193 = vld [vmem:[%s4062 + $0x1c6] sm:$0xff]
        %v4194 = vld [vmem:[%s4062 + $0x1ce] sm:$0xff]
        %v4195 = vld [vmem:[%s4062 + $0x1e6] sm:$0xff]
        %v4196 = vld [vmem:[%s4062 + $0x1ee] sm:$0xff]
        %v4197 = vld [vmem:[%s4095 + $0x1] sm:$0x1]
        %v4198 = vlaneseq
        %v4199 = vshrl.u32 %v4198, 7
        %v4200 = vsub.s32 0, %v4199
        %v4201 = vrot.slane %v4197, %v4200
        %v4202 = vmul.f32 %v4165, %v4201
        %v4203 = vmul.f32 %v4166, %v4201
        %v4204 = vmul.f32 %v4167, %v4201
        %v4205 = vmul.f32 %v4168, %v4201
        %v4206 = vmul.f32 %v4169, %v4201
        %v4207 = vmul.f32 %v4170, %v4201
        %v4208 = vmul.f32 %v4171, %v4201
        %v4209 = vmul.f32 %v4172, %v4201
        %v4210 = vmul.f32 %v4173, %v4201
        %v4211 = vmul.f32 %v4174, %v4201
        %v4212 = vmul.f32 %v4175, %v4201
        %v4213 = vmul.f32 %v4176, %v4201
        %v4214 = vmul.f32 %v4177, %v4201
        %v4215 = vmul.f32 %v4178, %v4201
        %v4216 = vmul.f32 %v4179, %v4201
        %v4217 = vmul.f32 %v4180, %v4201
        %v4218 = vmul.f32 %v4181, %v4201
        %v4219 = vmul.f32 %v4182, %v4201
        %v4220 = vmul.f32 %v4183, %v4201
        %v4221 = vmul.f32 %v4184, %v4201
        %v4222 = vmul.f32 %v4185, %v4201
        %v4223 = vmul.f32 %v4186, %v4201
        %v4224 = vmul.f32 %v4187, %v4201
        %v4225 = vmul.f32 %v4188, %v4201
        %v4226 = vmul.f32 %v4189, %v4201
        %v4227 = vmul.f32 %v4190, %v4201
        %v4228 = vmul.f32 %v4191, %v4201
        %v4229 = vmul.f32 %v4192, %v4201
        %v4230 = vmul.f32 %v4193, %v4201
        %v4231 = vmul.f32 %v4194, %v4201
        %v4232 = vmul.f32 %v4195, %v4201
        %v4233 = vmul.f32 %v4196, %v4201
        %v4234 = vadd.f32 %v4133, %v4202
        %v4235 = vadd.f32 %v4134, %v4203
        %v4236 = vadd.f32 %v4135, %v4204
        %v4237 = vadd.f32 %v4136, %v4205
        %v4238 = vadd.f32 %v4137, %v4206
        %v4239 = vadd.f32 %v4138, %v4207
        %v4240 = vadd.f32 %v4139, %v4208
        %v4241 = vadd.f32 %v4140, %v4209
        %v4242 = vadd.f32 %v4141, %v4210
        %v4243 = vadd.f32 %v4142, %v4211
        %v4244 = vadd.f32 %v4143, %v4212
        %v4245 = vadd.f32 %v4144, %v4213
        %v4246 = vadd.f32 %v4145, %v4214
        %v4247 = vadd.f32 %v4146, %v4215
        %v4248 = vadd.f32 %v4147, %v4216
        %v4249 = vadd.f32 %v4148, %v4217
        %v4250 = vadd.f32 %v4149, %v4218
        %v4251 = vadd.f32 %v4150, %v4219
        %v4252 = vadd.f32 %v4151, %v4220
        %v4253 = vadd.f32 %v4152, %v4221
        %v4254 = vadd.f32 %v4153, %v4222
        %v4255 = vadd.f32 %v4154, %v4223
        %v4256 = vadd.f32 %v4155, %v4224
        %v4257 = vadd.f32 %v4156, %v4225
        %v4258 = vadd.f32 %v4157, %v4226
        %v4259 = vadd.f32 %v4158, %v4227
        %v4260 = vadd.f32 %v4159, %v4228
        %v4261 = vadd.f32 %v4160, %v4229
        %v4262 = vadd.f32 %v4161, %v4230
        %v4263 = vadd.f32 %v4162, %v4231
        %v4264 = vadd.f32 %v4163, %v4232
        %v4265 = vadd.f32 %v4164, %v4233
        %v4266 = vld [vmem:[%s4062 + $0x7] sm:$0xff]
        %v4267 = vld [vmem:[%s4062 + $0xf] sm:$0xff]
        %v4268 = vld [vmem:[%s4062 + $0x27] sm:$0xff]
        %v4269 = vld [vmem:[%s4062 + $0x2f] sm:$0xff]
        %v4270 = vld [vmem:[%s4062 + $0x47] sm:$0xff]
        %v4271 = vld [vmem:[%s4062 + $0x4f] sm:$0xff]
        %v4272 = vld [vmem:[%s4062 + $0x67] sm:$0xff]
        %v4273 = vld [vmem:[%s4062 + $0x6f] sm:$0xff]
        %v4274 = vld [vmem:[%s4062 + $0x87] sm:$0xff]
        %v4275 = vld [vmem:[%s4062 + $0x8f] sm:$0xff]
        %v4276 = vld [vmem:[%s4062 + $0xa7] sm:$0xff]
        %v4277 = vld [vmem:[%s4062 + $0xaf] sm:$0xff]
        %v4278 = vld [vmem:[%s4062 + $0xc7] sm:$0xff]
        %v4279 = vld [vmem:[%s4062 + $0xcf] sm:$0xff]
        %v4280 = vld [vmem:[%s4062 + $0xe7] sm:$0xff]
        %v4281 = vld [vmem:[%s4062 + $0xef] sm:$0xff]
        %v4282 = vld [vmem:[%s4062 + $0x107] sm:$0xff]
        %v4283 = vld [vmem:[%s4062 + $0x10f] sm:$0xff]
        %v4284 = vld [vmem:[%s4062 + $0x127] sm:$0xff]
        %v4285 = vld [vmem:[%s4062 + $0x12f] sm:$0xff]
        %v4286 = vld [vmem:[%s4062 + $0x147] sm:$0xff]
        %v4287 = vld [vmem:[%s4062 + $0x14f] sm:$0xff]
        %v4288 = vld [vmem:[%s4062 + $0x167] sm:$0xff]
        %v4289 = vld [vmem:[%s4062 + $0x16f] sm:$0xff]
        %v4290 = vld [vmem:[%s4062 + $0x187] sm:$0xff]
        %v4291 = vld [vmem:[%s4062 + $0x18f] sm:$0xff]
        %v4292 = vld [vmem:[%s4062 + $0x1a7] sm:$0xff]
        %v4293 = vld [vmem:[%s4062 + $0x1af] sm:$0xff]
        %v4294 = vld [vmem:[%s4062 + $0x1c7] sm:$0xff]
        %v4295 = vld [vmem:[%s4062 + $0x1cf] sm:$0xff]
        %v4296 = vld [vmem:[%s4062 + $0x1e7] sm:$0xff]
        %v4297 = vld [vmem:[%s4062 + $0x1ef] sm:$0xff]
        %v4298 = vld [vmem:[%s4095 + $0x2] sm:$0x1]
        %v4299 = vlaneseq
        %v4300 = vshrl.u32 %v4299, 7
        %v4301 = vsub.s32 0, %v4300
        %v4302 = vrot.slane %v4298, %v4301
        %v4303 = vmul.f32 %v4266, %v4302
        %v4304 = vmul.f32 %v4267, %v4302
        %v4305 = vmul.f32 %v4268, %v4302
        %v4306 = vmul.f32 %v4269, %v4302
        %v4307 = vmul.f32 %v4270, %v4302
        %v4308 = vmul.f32 %v4271, %v4302
        %v4309 = vmul.f32 %v4272, %v4302
        %v4310 = vmul.f32 %v4273, %v4302
        %v4311 = vmul.f32 %v4274, %v4302
        %v4312 = vmul.f32 %v4275, %v4302
        %v4313 = vmul.f32 %v4276, %v4302
        %v4314 = vmul.f32 %v4277, %v4302
        %v4315 = vmul.f32 %v4278, %v4302
        %v4316 = vmul.f32 %v4279, %v4302
        %v4317 = vmul.f32 %v4280, %v4302
        %v4318 = vmul.f32 %v4281, %v4302
        %v4319 = vmul.f32 %v4282, %v4302
        %v4320 = vmul.f32 %v4283, %v4302
        %v4321 = vmul.f32 %v4284, %v4302
        %v4322 = vmul.f32 %v4285, %v4302
        %v4323 = vmul.f32 %v4286, %v4302
        %v4324 = vmul.f32 %v4287, %v4302
        %v4325 = vmul.f32 %v4288, %v4302
        %v4326 = vmul.f32 %v4289, %v4302
        %v4327 = vmul.f32 %v4290, %v4302
        %v4328 = vmul.f32 %v4291, %v4302
        %v4329 = vmul.f32 %v4292, %v4302
        %v4330 = vmul.f32 %v4293, %v4302
        %v4331 = vmul.f32 %v4294, %v4302
        %v4332 = vmul.f32 %v4295, %v4302
        %v4333 = vmul.f32 %v4296, %v4302
        %v4334 = vmul.f32 %v4297, %v4302
        %v4335 = vadd.f32 %v4234, %v4303
        %v4336 = vadd.f32 %v4235, %v4304
        %v4337 = vadd.f32 %v4236, %v4305
        %v4338 = vadd.f32 %v4237, %v4306
        %v4339 = vadd.f32 %v4238, %v4307
        %v4340 = vadd.f32 %v4239, %v4308
        %v4341 = vadd.f32 %v4240, %v4309
        %v4342 = vadd.f32 %v4241, %v4310
        %v4343 = vadd.f32 %v4242, %v4311
        %v4344 = vadd.f32 %v4243, %v4312
        %v4345 = vadd.f32 %v4244, %v4313
        %v4346 = vadd.f32 %v4245, %v4314
        %v4347 = vadd.f32 %v4246, %v4315
        %v4348 = vadd.f32 %v4247, %v4316
        %v4349 = vadd.f32 %v4248, %v4317
        %v4350 = vadd.f32 %v4249, %v4318
        %v4351 = vadd.f32 %v4250, %v4319
        %v4352 = vadd.f32 %v4251, %v4320
        %v4353 = vadd.f32 %v4252, %v4321
        %v4354 = vadd.f32 %v4253, %v4322
        %v4355 = vadd.f32 %v4254, %v4323
        %v4356 = vadd.f32 %v4255, %v4324
        %v4357 = vadd.f32 %v4256, %v4325
        %v4358 = vadd.f32 %v4257, %v4326
        %v4359 = vadd.f32 %v4258, %v4327
        %v4360 = vadd.f32 %v4259, %v4328
        %v4361 = vadd.f32 %v4260, %v4329
        %v4362 = vadd.f32 %v4261, %v4330
        %v4363 = vadd.f32 %v4262, %v4331
        %v4364 = vadd.f32 %v4263, %v4332
        %v4365 = vadd.f32 %v4264, %v4333
        %v4366 = vadd.f32 %v4265, %v4334
        %v4367 = vld [vmem:[%s4062 + $0x8] sm:$0xff]
        %v4368 = vld [vmem:[%s4062 + $0x10] sm:$0xff]
        %v4369 = vld [vmem:[%s4062 + $0x28] sm:$0xff]
        %v4370 = vld [vmem:[%s4062 + $0x30] sm:$0xff]
        %v4371 = vld [vmem:[%s4062 + $0x48] sm:$0xff]
        %v4372 = vld [vmem:[%s4062 + $0x50] sm:$0xff]
        %v4373 = vld [vmem:[%s4062 + $0x68] sm:$0xff]
        %v4374 = vld [vmem:[%s4062 + $0x70] sm:$0xff]
        %v4375 = vld [vmem:[%s4062 + $0x88] sm:$0xff]
        %v4376 = vld [vmem:[%s4062 + $0x90] sm:$0xff]
        %v4377 = vld [vmem:[%s4062 + $0xa8] sm:$0xff]
        %v4378 = vld [vmem:[%s4062 + $0xb0] sm:$0xff]
        %v4379 = vld [vmem:[%s4062 + $0xc8] sm:$0xff]
        %v4380 = vld [vmem:[%s4062 + $0xd0] sm:$0xff]
        %v4381 = vld [vmem:[%s4062 + $0xe8] sm:$0xff]
        %v4382 = vld [vmem:[%s4062 + $0xf0] sm:$0xff]
        %v4383 = vld [vmem:[%s4062 + $0x108] sm:$0xff]
        %v4384 = vld [vmem:[%s4062 + $0x110] sm:$0xff]
        %v4385 = vld [vmem:[%s4062 + $0x128] sm:$0xff]
        %v4386 = vld [vmem:[%s4062 + $0x130] sm:$0xff]
        %v4387 = vld [vmem:[%s4062 + $0x148] sm:$0xff]
        %v4388 = vld [vmem:[%s4062 + $0x150] sm:$0xff]
        %v4389 = vld [vmem:[%s4062 + $0x168] sm:$0xff]
        %v4390 = vld [vmem:[%s4062 + $0x170] sm:$0xff]
        %v4391 = vld [vmem:[%s4062 + $0x188] sm:$0xff]
        %v4392 = vld [vmem:[%s4062 + $0x190] sm:$0xff]
        %v4393 = vld [vmem:[%s4062 + $0x1a8] sm:$0xff]
        %v4394 = vld [vmem:[%s4062 + $0x1b0] sm:$0xff]
        %v4395 = vld [vmem:[%s4062 + $0x1c8] sm:$0xff]
        %v4396 = vld [vmem:[%s4062 + $0x1d0] sm:$0xff]
        %v4397 = vld [vmem:[%s4062 + $0x1e8] sm:$0xff]
        %v4398 = vld [vmem:[%s4062 + $0x1f0] sm:$0xff]
        %v4399 = vld [vmem:[%s4095 + $0x3] sm:$0x1]
        %v4400 = vlaneseq
        %v4401 = vshrl.u32 %v4400, 7
        %v4402 = vsub.s32 0, %v4401
        %v4403 = vrot.slane %v4399, %v4402
        %v4404 = vmul.f32 %v4367, %v4403
        %v4405 = vmul.f32 %v4368, %v4403
        %v4406 = vmul.f32 %v4369, %v4403
        %v4407 = vmul.f32 %v4370, %v4403
        %v4408 = vmul.f32 %v4371, %v4403
        %v4409 = vmul.f32 %v4372, %v4403
        %v4410 = vmul.f32 %v4373, %v4403
        %v4411 = vmul.f32 %v4374, %v4403
        %v4412 = vmul.f32 %v4375, %v4403
        %v4413 = vmul.f32 %v4376, %v4403
        %v4414 = vmul.f32 %v4377, %v4403
        %v4415 = vmul.f32 %v4378, %v4403
        %v4416 = vmul.f32 %v4379, %v4403
        %v4417 = vmul.f32 %v4380, %v4403
        %v4418 = vmul.f32 %v4381, %v4403
        %v4419 = vmul.f32 %v4382, %v4403
        %v4420 = vmul.f32 %v4383, %v4403
        %v4421 = vmul.f32 %v4384, %v4403
        %v4422 = vmul.f32 %v4385, %v4403
        %v4423 = vmul.f32 %v4386, %v4403
        %v4424 = vmul.f32 %v4387, %v4403
        %v4425 = vmul.f32 %v4388, %v4403
        %v4426 = vmul.f32 %v4389, %v4403
        %v4427 = vmul.f32 %v4390, %v4403
        %v4428 = vmul.f32 %v4391, %v4403
        %v4429 = vmul.f32 %v4392, %v4403
        %v4430 = vmul.f32 %v4393, %v4403
        %v4431 = vmul.f32 %v4394, %v4403
        %v4432 = vmul.f32 %v4395, %v4403
        %v4433 = vmul.f32 %v4396, %v4403
        %v4434 = vmul.f32 %v4397, %v4403
        %v4435 = vmul.f32 %v4398, %v4403
        %v4436 = vadd.f32 %v4335, %v4404
        %v4437 = vadd.f32 %v4336, %v4405
        %v4438 = vadd.f32 %v4337, %v4406
        %v4439 = vadd.f32 %v4338, %v4407
        %v4440 = vadd.f32 %v4339, %v4408
        %v4441 = vadd.f32 %v4340, %v4409
        %v4442 = vadd.f32 %v4341, %v4410
        %v4443 = vadd.f32 %v4342, %v4411
        %v4444 = vadd.f32 %v4343, %v4412
        %v4445 = vadd.f32 %v4344, %v4413
        %v4446 = vadd.f32 %v4345, %v4414
        %v4447 = vadd.f32 %v4346, %v4415
        %v4448 = vadd.f32 %v4347, %v4416
        %v4449 = vadd.f32 %v4348, %v4417
        %v4450 = vadd.f32 %v4349, %v4418
        %v4451 = vadd.f32 %v4350, %v4419
        %v4452 = vadd.f32 %v4351, %v4420
        %v4453 = vadd.f32 %v4352, %v4421
        %v4454 = vadd.f32 %v4353, %v4422
        %v4455 = vadd.f32 %v4354, %v4423
        %v4456 = vadd.f32 %v4355, %v4424
        %v4457 = vadd.f32 %v4356, %v4425
        %v4458 = vadd.f32 %v4357, %v4426
        %v4459 = vadd.f32 %v4358, %v4427
        %v4460 = vadd.f32 %v4359, %v4428
        %v4461 = vadd.f32 %v4360, %v4429
        %v4462 = vadd.f32 %v4361, %v4430
        %v4463 = vadd.f32 %v4362, %v4431
        %v4464 = vadd.f32 %v4363, %v4432
        %v4465 = vadd.f32 %v4364, %v4433
        %v4466 = vadd.f32 %v4365, %v4434
        %v4467 = vadd.f32 %v4366, %v4435
        %v4468 = vld [vmem:[%s4062 + $0x9] sm:$0xff]
        %v4469 = vld [vmem:[%s4062 + $0x11] sm:$0xff]
        %v4470 = vld [vmem:[%s4062 + $0x29] sm:$0xff]
        %v4471 = vld [vmem:[%s4062 + $0x31] sm:$0xff]
        %v4472 = vld [vmem:[%s4062 + $0x49] sm:$0xff]
        %v4473 = vld [vmem:[%s4062 + $0x51] sm:$0xff]
        %v4474 = vld [vmem:[%s4062 + $0x69] sm:$0xff]
        %v4475 = vld [vmem:[%s4062 + $0x71] sm:$0xff]
        %v4476 = vld [vmem:[%s4062 + $0x89] sm:$0xff]
        %v4477 = vld [vmem:[%s4062 + $0x91] sm:$0xff]
        %v4478 = vld [vmem:[%s4062 + $0xa9] sm:$0xff]
        %v4479 = vld [vmem:[%s4062 + $0xb1] sm:$0xff]
        %v4480 = vld [vmem:[%s4062 + $0xc9] sm:$0xff]
        %v4481 = vld [vmem:[%s4062 + $0xd1] sm:$0xff]
        %v4482 = vld [vmem:[%s4062 + $0xe9] sm:$0xff]
        %v4483 = vld [vmem:[%s4062 + $0xf1] sm:$0xff]
        %v4484 = vld [vmem:[%s4062 + $0x109] sm:$0xff]
        %v4485 = vld [vmem:[%s4062 + $0x111] sm:$0xff]
        %v4486 = vld [vmem:[%s4062 + $0x129] sm:$0xff]
        %v4487 = vld [vmem:[%s4062 + $0x131] sm:$0xff]
        %v4488 = vld [vmem:[%s4062 + $0x149] sm:$0xff]
        %v4489 = vld [vmem:[%s4062 + $0x151] sm:$0xff]
        %v4490 = vld [vmem:[%s4062 + $0x169] sm:$0xff]
        %v4491 = vld [vmem:[%s4062 + $0x171] sm:$0xff]
        %v4492 = vld [vmem:[%s4062 + $0x189] sm:$0xff]
        %v4493 = vld [vmem:[%s4062 + $0x191] sm:$0xff]
        %v4494 = vld [vmem:[%s4062 + $0x1a9] sm:$0xff]
        %v4495 = vld [vmem:[%s4062 + $0x1b1] sm:$0xff]
        %v4496 = vld [vmem:[%s4062 + $0x1c9] sm:$0xff]
        %v4497 = vld [vmem:[%s4062 + $0x1d1] sm:$0xff]
        %v4498 = vld [vmem:[%s4062 + $0x1e9] sm:$0xff]
        %v4499 = vld [vmem:[%s4062 + $0x1f1] sm:$0xff]
        %v4500 = vld [vmem:[%s4095 + $0x4] sm:$0x1]
        %v4501 = vlaneseq
        %v4502 = vshrl.u32 %v4501, 7
        %v4503 = vsub.s32 0, %v4502
        %v4504 = vrot.slane %v4500, %v4503
        %v4505 = vmul.f32 %v4468, %v4504
        %v4506 = vmul.f32 %v4469, %v4504
        %v4507 = vmul.f32 %v4470, %v4504
        %v4508 = vmul.f32 %v4471, %v4504
        %v4509 = vmul.f32 %v4472, %v4504
        %v4510 = vmul.f32 %v4473, %v4504
        %v4511 = vmul.f32 %v4474, %v4504
        %v4512 = vmul.f32 %v4475, %v4504
        %v4513 = vmul.f32 %v4476, %v4504
        %v4514 = vmul.f32 %v4477, %v4504
        %v4515 = vmul.f32 %v4478, %v4504
        %v4516 = vmul.f32 %v4479, %v4504
        %v4517 = vmul.f32 %v4480, %v4504
        %v4518 = vmul.f32 %v4481, %v4504
        %v4519 = vmul.f32 %v4482, %v4504
        %v4520 = vmul.f32 %v4483, %v4504
        %v4521 = vmul.f32 %v4484, %v4504
        %v4522 = vmul.f32 %v4485, %v4504
        %v4523 = vmul.f32 %v4486, %v4504
        %v4524 = vmul.f32 %v4487, %v4504
        %v4525 = vmul.f32 %v4488, %v4504
        %v4526 = vmul.f32 %v4489, %v4504
        %v4527 = vmul.f32 %v4490, %v4504
        %v4528 = vmul.f32 %v4491, %v4504
        %v4529 = vmul.f32 %v4492, %v4504
        %v4530 = vmul.f32 %v4493, %v4504
        %v4531 = vmul.f32 %v4494, %v4504
        %v4532 = vmul.f32 %v4495, %v4504
        %v4533 = vmul.f32 %v4496, %v4504
        %v4534 = vmul.f32 %v4497, %v4504
        %v4535 = vmul.f32 %v4498, %v4504
        %v4536 = vmul.f32 %v4499, %v4504
        %v4537 = vadd.f32 %v4436, %v4505
        %v4538 = vadd.f32 %v4437, %v4506
        %v4539 = vadd.f32 %v4438, %v4507
        %v4540 = vadd.f32 %v4439, %v4508
        %v4541 = vadd.f32 %v4440, %v4509
        %v4542 = vadd.f32 %v4441, %v4510
        %v4543 = vadd.f32 %v4442, %v4511
        %v4544 = vadd.f32 %v4443, %v4512
        %v4545 = vadd.f32 %v4444, %v4513
        %v4546 = vadd.f32 %v4445, %v4514
        %v4547 = vadd.f32 %v4446, %v4515
        %v4548 = vadd.f32 %v4447, %v4516
        %v4549 = vadd.f32 %v4448, %v4517
        %v4550 = vadd.f32 %v4449, %v4518
        %v4551 = vadd.f32 %v4450, %v4519
        %v4552 = vadd.f32 %v4451, %v4520
        %v4553 = vadd.f32 %v4452, %v4521
        %v4554 = vadd.f32 %v4453, %v4522
        %v4555 = vadd.f32 %v4454, %v4523
        %v4556 = vadd.f32 %v4455, %v4524
        %v4557 = vadd.f32 %v4456, %v4525
        %v4558 = vadd.f32 %v4457, %v4526
        %v4559 = vadd.f32 %v4458, %v4527
        %v4560 = vadd.f32 %v4459, %v4528
        %v4561 = vadd.f32 %v4460, %v4529
        %v4562 = vadd.f32 %v4461, %v4530
        %v4563 = vadd.f32 %v4462, %v4531
        %v4564 = vadd.f32 %v4463, %v4532
        %v4565 = vadd.f32 %v4464, %v4533
        %v4566 = vadd.f32 %v4465, %v4534
        %v4567 = vadd.f32 %v4466, %v4535
        %v4568 = vadd.f32 %v4467, %v4536
        %v4569 = vld [vmem:[%s4062 + $0xa] sm:$0xff]
        %v4570 = vld [vmem:[%s4062 + $0x12] sm:$0xff]
        %v4571 = vld [vmem:[%s4062 + $0x2a] sm:$0xff]
        %v4572 = vld [vmem:[%s4062 + $0x32] sm:$0xff]
        %v4573 = vld [vmem:[%s4062 + $0x4a] sm:$0xff]
        %v4574 = vld [vmem:[%s4062 + $0x52] sm:$0xff]
        %v4575 = vld [vmem:[%s4062 + $0x6a] sm:$0xff]
        %v4576 = vld [vmem:[%s4062 + $0x72] sm:$0xff]
        %v4577 = vld [vmem:[%s4062 + $0x8a] sm:$0xff]
        %v4578 = vld [vmem:[%s4062 + $0x92] sm:$0xff]
        %v4579 = vld [vmem:[%s4062 + $0xaa] sm:$0xff]
        %v4580 = vld [vmem:[%s4062 + $0xb2] sm:$0xff]
        %v4581 = vld [vmem:[%s4062 + $0xca] sm:$0xff]
        %v4582 = vld [vmem:[%s4062 + $0xd2] sm:$0xff]
        %v4583 = vld [vmem:[%s4062 + $0xea] sm:$0xff]
        %v4584 = vld [vmem:[%s4062 + $0xf2] sm:$0xff]
        %v4585 = vld [vmem:[%s4062 + $0x10a] sm:$0xff]
        %v4586 = vld [vmem:[%s4062 + $0x112] sm:$0xff]
        %v4587 = vld [vmem:[%s4062 + $0x12a] sm:$0xff]
        %v4588 = vld [vmem:[%s4062 + $0x132] sm:$0xff]
        %v4589 = vld [vmem:[%s4062 + $0x14a] sm:$0xff]
        %v4590 = vld [vmem:[%s4062 + $0x152] sm:$0xff]
        %v4591 = vld [vmem:[%s4062 + $0x16a] sm:$0xff]
        %v4592 = vld [vmem:[%s4062 + $0x172] sm:$0xff]
        %v4593 = vld [vmem:[%s4062 + $0x18a] sm:$0xff]
        %v4594 = vld [vmem:[%s4062 + $0x192] sm:$0xff]
        %v4595 = vld [vmem:[%s4062 + $0x1aa] sm:$0xff]
        %v4596 = vld [vmem:[%s4062 + $0x1b2] sm:$0xff]
        %v4597 = vld [vmem:[%s4062 + $0x1ca] sm:$0xff]
        %v4598 = vld [vmem:[%s4062 + $0x1d2] sm:$0xff]
        %v4599 = vld [vmem:[%s4062 + $0x1ea] sm:$0xff]
        %v4600 = vld [vmem:[%s4062 + $0x1f2] sm:$0xff]
        %v4601 = vld [vmem:[%s4095 + $0x5] sm:$0x1]
        %v4602 = vlaneseq
        %v4603 = vshrl.u32 %v4602, 7
        %v4604 = vsub.s32 0, %v4603
        %v4605 = vrot.slane %v4601, %v4604
        %v4606 = vmul.f32 %v4569, %v4605
        %v4607 = vmul.f32 %v4570, %v4605
        %v4608 = vmul.f32 %v4571, %v4605
        %v4609 = vmul.f32 %v4572, %v4605
        %v4610 = vmul.f32 %v4573, %v4605
        %v4611 = vmul.f32 %v4574, %v4605
        %v4612 = vmul.f32 %v4575, %v4605
        %v4613 = vmul.f32 %v4576, %v4605
        %v4614 = vmul.f32 %v4577, %v4605
        %v4615 = vmul.f32 %v4578, %v4605
        %v4616 = vmul.f32 %v4579, %v4605
        %v4617 = vmul.f32 %v4580, %v4605
        %v4618 = vmul.f32 %v4581, %v4605
        %v4619 = vmul.f32 %v4582, %v4605
        %v4620 = vmul.f32 %v4583, %v4605
        %v4621 = vmul.f32 %v4584, %v4605
        %v4622 = vmul.f32 %v4585, %v4605
        %v4623 = vmul.f32 %v4586, %v4605
        %v4624 = vmul.f32 %v4587, %v4605
        %v4625 = vmul.f32 %v4588, %v4605
        %v4626 = vmul.f32 %v4589, %v4605
        %v4627 = vmul.f32 %v4590, %v4605
        %v4628 = vmul.f32 %v4591, %v4605
        %v4629 = vmul.f32 %v4592, %v4605
        %v4630 = vmul.f32 %v4593, %v4605
        %v4631 = vmul.f32 %v4594, %v4605
        %v4632 = vmul.f32 %v4595, %v4605
        %v4633 = vmul.f32 %v4596, %v4605
        %v4634 = vmul.f32 %v4597, %v4605
        %v4635 = vmul.f32 %v4598, %v4605
        %v4636 = vmul.f32 %v4599, %v4605
        %v4637 = vmul.f32 %v4600, %v4605
        %v4638 = vadd.f32 %v4537, %v4606
        %v4639 = vadd.f32 %v4538, %v4607
        %v4640 = vadd.f32 %v4539, %v4608
        %v4641 = vadd.f32 %v4540, %v4609
        %v4642 = vadd.f32 %v4541, %v4610
        %v4643 = vadd.f32 %v4542, %v4611
        %v4644 = vadd.f32 %v4543, %v4612
        %v4645 = vadd.f32 %v4544, %v4613
        %v4646 = vadd.f32 %v4545, %v4614
        %v4647 = vadd.f32 %v4546, %v4615
        %v4648 = vadd.f32 %v4547, %v4616
        %v4649 = vadd.f32 %v4548, %v4617
        %v4650 = vadd.f32 %v4549, %v4618
        %v4651 = vadd.f32 %v4550, %v4619
        %v4652 = vadd.f32 %v4551, %v4620
        %v4653 = vadd.f32 %v4552, %v4621
        %v4654 = vadd.f32 %v4553, %v4622
        %v4655 = vadd.f32 %v4554, %v4623
        %v4656 = vadd.f32 %v4555, %v4624
        %v4657 = vadd.f32 %v4556, %v4625
        %v4658 = vadd.f32 %v4557, %v4626
        %v4659 = vadd.f32 %v4558, %v4627
        %v4660 = vadd.f32 %v4559, %v4628
        %v4661 = vadd.f32 %v4560, %v4629
        %v4662 = vadd.f32 %v4561, %v4630
        %v4663 = vadd.f32 %v4562, %v4631
        %v4664 = vadd.f32 %v4563, %v4632
        %v4665 = vadd.f32 %v4564, %v4633
        %v4666 = vadd.f32 %v4565, %v4634
        %v4667 = vadd.f32 %v4566, %v4635
        %v4668 = vadd.f32 %v4567, %v4636
        %v4669 = vadd.f32 %v4568, %v4637
        %v4670 = vld [vmem:[%s4062 + $0xb] sm:$0xff]
        %v4671 = vld [vmem:[%s4062 + $0x13] sm:$0xff]
        %v4672 = vld [vmem:[%s4062 + $0x2b] sm:$0xff]
        %v4673 = vld [vmem:[%s4062 + $0x33] sm:$0xff]
        %v4674 = vld [vmem:[%s4062 + $0x4b] sm:$0xff]
        %v4675 = vld [vmem:[%s4062 + $0x53] sm:$0xff]
        %v4676 = vld [vmem:[%s4062 + $0x6b] sm:$0xff]
        %v4677 = vld [vmem:[%s4062 + $0x73] sm:$0xff]
        %v4678 = vld [vmem:[%s4062 + $0x8b] sm:$0xff]
        %v4679 = vld [vmem:[%s4062 + $0x93] sm:$0xff]
        %v4680 = vld [vmem:[%s4062 + $0xab] sm:$0xff]
        %v4681 = vld [vmem:[%s4062 + $0xb3] sm:$0xff]
        %v4682 = vld [vmem:[%s4062 + $0xcb] sm:$0xff]
        %v4683 = vld [vmem:[%s4062 + $0xd3] sm:$0xff]
        %v4684 = vld [vmem:[%s4062 + $0xeb] sm:$0xff]
        %v4685 = vld [vmem:[%s4062 + $0xf3] sm:$0xff]
        %v4686 = vld [vmem:[%s4062 + $0x10b] sm:$0xff]
        %v4687 = vld [vmem:[%s4062 + $0x113] sm:$0xff]
        %v4688 = vld [vmem:[%s4062 + $0x12b] sm:$0xff]
        %v4689 = vld [vmem:[%s4062 + $0x133] sm:$0xff]
        %v4690 = vld [vmem:[%s4062 + $0x14b] sm:$0xff]
        %v4691 = vld [vmem:[%s4062 + $0x153] sm:$0xff]
        %v4692 = vld [vmem:[%s4062 + $0x16b] sm:$0xff]
        %v4693 = vld [vmem:[%s4062 + $0x173] sm:$0xff]
        %v4694 = vld [vmem:[%s4062 + $0x18b] sm:$0xff]
        %v4695 = vld [vmem:[%s4062 + $0x193] sm:$0xff]
        %v4696 = vld [vmem:[%s4062 + $0x1ab] sm:$0xff]
        %v4697 = vld [vmem:[%s4062 + $0x1b3] sm:$0xff]
        %v4698 = vld [vmem:[%s4062 + $0x1cb] sm:$0xff]
        %v4699 = vld [vmem:[%s4062 + $0x1d3] sm:$0xff]
        %v4700 = vld [vmem:[%s4062 + $0x1eb] sm:$0xff]
        %v4701 = vld [vmem:[%s4062 + $0x1f3] sm:$0xff]
        %v4702 = vld [vmem:[%s4095 + $0x6] sm:$0x1]
        %v4703 = vlaneseq
        %v4704 = vshrl.u32 %v4703, 7
        %v4705 = vsub.s32 0, %v4704
        %v4706 = vrot.slane %v4702, %v4705
        %v4707 = vmul.f32 %v4670, %v4706
        %v4708 = vmul.f32 %v4671, %v4706
        %v4709 = vmul.f32 %v4672, %v4706
        %v4710 = vmul.f32 %v4673, %v4706
        %v4711 = vmul.f32 %v4674, %v4706
        %v4712 = vmul.f32 %v4675, %v4706
        %v4713 = vmul.f32 %v4676, %v4706
        %v4714 = vmul.f32 %v4677, %v4706
        %v4715 = vmul.f32 %v4678, %v4706
        %v4716 = vmul.f32 %v4679, %v4706
        %v4717 = vmul.f32 %v4680, %v4706
        %v4718 = vmul.f32 %v4681, %v4706
        %v4719 = vmul.f32 %v4682, %v4706
        %v4720 = vmul.f32 %v4683, %v4706
        %v4721 = vmul.f32 %v4684, %v4706
        %v4722 = vmul.f32 %v4685, %v4706
        %v4723 = vmul.f32 %v4686, %v4706
        %v4724 = vmul.f32 %v4687, %v4706
        %v4725 = vmul.f32 %v4688, %v4706
        %v4726 = vmul.f32 %v4689, %v4706
        %v4727 = vmul.f32 %v4690, %v4706
        %v4728 = vmul.f32 %v4691, %v4706
        %v4729 = vmul.f32 %v4692, %v4706
        %v4730 = vmul.f32 %v4693, %v4706
        %v4731 = vmul.f32 %v4694, %v4706
        %v4732 = vmul.f32 %v4695, %v4706
        %v4733 = vmul.f32 %v4696, %v4706
        %v4734 = vmul.f32 %v4697, %v4706
        %v4735 = vmul.f32 %v4698, %v4706
        %v4736 = vmul.f32 %v4699, %v4706
        %v4737 = vmul.f32 %v4700, %v4706
        %v4738 = vmul.f32 %v4701, %v4706
        %v4739 = vadd.f32 %v4638, %v4707
        %v4740 = vadd.f32 %v4639, %v4708
        %v4741 = vadd.f32 %v4640, %v4709
        %v4742 = vadd.f32 %v4641, %v4710
        %v4743 = vadd.f32 %v4642, %v4711
        %v4744 = vadd.f32 %v4643, %v4712
        %v4745 = vadd.f32 %v4644, %v4713
        %v4746 = vadd.f32 %v4645, %v4714
        %v4747 = vadd.f32 %v4646, %v4715
        %v4748 = vadd.f32 %v4647, %v4716
        %v4749 = vadd.f32 %v4648, %v4717
        %v4750 = vadd.f32 %v4649, %v4718
        %v4751 = vadd.f32 %v4650, %v4719
        %v4752 = vadd.f32 %v4651, %v4720
        %v4753 = vadd.f32 %v4652, %v4721
        %v4754 = vadd.f32 %v4653, %v4722
        %v4755 = vadd.f32 %v4654, %v4723
        %v4756 = vadd.f32 %v4655, %v4724
        %v4757 = vadd.f32 %v4656, %v4725
        %v4758 = vadd.f32 %v4657, %v4726
        %v4759 = vadd.f32 %v4658, %v4727
        %v4760 = vadd.f32 %v4659, %v4728
        %v4761 = vadd.f32 %v4660, %v4729
        %v4762 = vadd.f32 %v4661, %v4730
        %v4763 = vadd.f32 %v4662, %v4731
        %v4764 = vadd.f32 %v4663, %v4732
        %v4765 = vadd.f32 %v4664, %v4733
        %v4766 = vadd.f32 %v4665, %v4734
        %v4767 = vadd.f32 %v4666, %v4735
        %v4768 = vadd.f32 %v4667, %v4736
        %v4769 = vadd.f32 %v4668, %v4737
        %v4770 = vadd.f32 %v4669, %v4738
        %s4771 = scalar_lea.vmem [#allocation2], 192
        %v4772 = vld [vmem:[%s4771 + $0x5] sm:$0xff]
        %v4773 = vld [vmem:[%s4771 + $0xd] sm:$0xff]
        %v4774 = vld [vmem:[%s4771 + $0x25] sm:$0xff]
        %v4775 = vld [vmem:[%s4771 + $0x2d] sm:$0xff]
        %v4776 = vld [vmem:[%s4771 + $0x45] sm:$0xff]
        %v4777 = vld [vmem:[%s4771 + $0x4d] sm:$0xff]
        %v4778 = vld [vmem:[%s4771 + $0x65] sm:$0xff]
        %v4779 = vld [vmem:[%s4771 + $0x6d] sm:$0xff]
        %v4780 = vld [vmem:[%s4771 + $0x85] sm:$0xff]
        %v4781 = vld [vmem:[%s4771 + $0x8d] sm:$0xff]
        %v4782 = vld [vmem:[%s4771 + $0xa5] sm:$0xff]
        %v4783 = vld [vmem:[%s4771 + $0xad] sm:$0xff]
        %v4784 = vld [vmem:[%s4771 + $0xc5] sm:$0xff]
        %v4785 = vld [vmem:[%s4771 + $0xcd] sm:$0xff]
        %v4786 = vld [vmem:[%s4771 + $0xe5] sm:$0xff]
        %v4787 = vld [vmem:[%s4771 + $0xed] sm:$0xff]
        %v4788 = vld [vmem:[%s4771 + $0x105] sm:$0xff]
        %v4789 = vld [vmem:[%s4771 + $0x10d] sm:$0xff]
        %v4790 = vld [vmem:[%s4771 + $0x125] sm:$0xff]
        %v4791 = vld [vmem:[%s4771 + $0x12d] sm:$0xff]
        %v4792 = vld [vmem:[%s4771 + $0x145] sm:$0xff]
        %v4793 = vld [vmem:[%s4771 + $0x14d] sm:$0xff]
        %v4794 = vld [vmem:[%s4771 + $0x165] sm:$0xff]
        %v4795 = vld [vmem:[%s4771 + $0x16d] sm:$0xff]
        %v4796 = vld [vmem:[%s4771 + $0x185] sm:$0xff]
        %v4797 = vld [vmem:[%s4771 + $0x18d] sm:$0xff]
        %v4798 = vld [vmem:[%s4771 + $0x1a5] sm:$0xff]
        %v4799 = vld [vmem:[%s4771 + $0x1ad] sm:$0xff]
        %v4800 = vld [vmem:[%s4771 + $0x1c5] sm:$0xff]
        %v4801 = vld [vmem:[%s4771 + $0x1cd] sm:$0xff]
        %v4802 = vld [vmem:[%s4771 + $0x1e5] sm:$0xff]
        %v4803 = vld [vmem:[%s4771 + $0x1ed] sm:$0xff]
        %s4804 = scalar_lea.vmem %s361, 48
        %v4805 = vld [vmem:[%s4804] sm:$0x1]
        %v4806 = vlaneseq
        %v4807 = vshrl.u32 %v4806, 7
        %v4808 = vsub.s32 0, %v4807
        %v4809 = vrot.slane %v4805, %v4808
        %v4810 = vmul.f32 %v4772, %v4809
        %v4811 = vmul.f32 %v4773, %v4809
        %v4812 = vmul.f32 %v4774, %v4809
        %v4813 = vmul.f32 %v4775, %v4809
        %v4814 = vmul.f32 %v4776, %v4809
        %v4815 = vmul.f32 %v4777, %v4809
        %v4816 = vmul.f32 %v4778, %v4809
        %v4817 = vmul.f32 %v4779, %v4809
        %v4818 = vmul.f32 %v4780, %v4809
        %v4819 = vmul.f32 %v4781, %v4809
        %v4820 = vmul.f32 %v4782, %v4809
        %v4821 = vmul.f32 %v4783, %v4809
        %v4822 = vmul.f32 %v4784, %v4809
        %v4823 = vmul.f32 %v4785, %v4809
        %v4824 = vmul.f32 %v4786, %v4809
        %v4825 = vmul.f32 %v4787, %v4809
        %v4826 = vmul.f32 %v4788, %v4809
        %v4827 = vmul.f32 %v4789, %v4809
        %v4828 = vmul.f32 %v4790, %v4809
        %v4829 = vmul.f32 %v4791, %v4809
        %v4830 = vmul.f32 %v4792, %v4809
        %v4831 = vmul.f32 %v4793, %v4809
        %v4832 = vmul.f32 %v4794, %v4809
        %v4833 = vmul.f32 %v4795, %v4809
        %v4834 = vmul.f32 %v4796, %v4809
        %v4835 = vmul.f32 %v4797, %v4809
        %v4836 = vmul.f32 %v4798, %v4809
        %v4837 = vmul.f32 %v4799, %v4809
        %v4838 = vmul.f32 %v4800, %v4809
        %v4839 = vmul.f32 %v4801, %v4809
        %v4840 = vmul.f32 %v4802, %v4809
        %v4841 = vmul.f32 %v4803, %v4809
        %v4842 = vadd.f32 %v4739, %v4810
        %v4843 = vadd.f32 %v4740, %v4811
        %v4844 = vadd.f32 %v4741, %v4812
        %v4845 = vadd.f32 %v4742, %v4813
        %v4846 = vadd.f32 %v4743, %v4814
        %v4847 = vadd.f32 %v4744, %v4815
        %v4848 = vadd.f32 %v4745, %v4816
        %v4849 = vadd.f32 %v4746, %v4817
        %v4850 = vadd.f32 %v4747, %v4818
        %v4851 = vadd.f32 %v4748, %v4819
        %v4852 = vadd.f32 %v4749, %v4820
        %v4853 = vadd.f32 %v4750, %v4821
        %v4854 = vadd.f32 %v4751, %v4822
        %v4855 = vadd.f32 %v4752, %v4823
        %v4856 = vadd.f32 %v4753, %v4824
        %v4857 = vadd.f32 %v4754, %v4825
        %v4858 = vadd.f32 %v4755, %v4826
        %v4859 = vadd.f32 %v4756, %v4827
        %v4860 = vadd.f32 %v4757, %v4828
        %v4861 = vadd.f32 %v4758, %v4829
        %v4862 = vadd.f32 %v4759, %v4830
        %v4863 = vadd.f32 %v4760, %v4831
        %v4864 = vadd.f32 %v4761, %v4832
        %v4865 = vadd.f32 %v4762, %v4833
        %v4866 = vadd.f32 %v4763, %v4834
        %v4867 = vadd.f32 %v4764, %v4835
        %v4868 = vadd.f32 %v4765, %v4836
        %v4869 = vadd.f32 %v4766, %v4837
        %v4870 = vadd.f32 %v4767, %v4838
        %v4871 = vadd.f32 %v4768, %v4839
        %v4872 = vadd.f32 %v4769, %v4840
        %v4873 = vadd.f32 %v4770, %v4841
        %v4874 = vld [vmem:[%s4771 + $0x6] sm:$0xff]
        %v4875 = vld [vmem:[%s4771 + $0xe] sm:$0xff]
        %v4876 = vld [vmem:[%s4771 + $0x26] sm:$0xff]
        %v4877 = vld [vmem:[%s4771 + $0x2e] sm:$0xff]
        %v4878 = vld [vmem:[%s4771 + $0x46] sm:$0xff]
        %v4879 = vld [vmem:[%s4771 + $0x4e] sm:$0xff]
        %v4880 = vld [vmem:[%s4771 + $0x66] sm:$0xff]
        %v4881 = vld [vmem:[%s4771 + $0x6e] sm:$0xff]
        %v4882 = vld [vmem:[%s4771 + $0x86] sm:$0xff]
        %v4883 = vld [vmem:[%s4771 + $0x8e] sm:$0xff]
        %v4884 = vld [vmem:[%s4771 + $0xa6] sm:$0xff]
        %v4885 = vld [vmem:[%s4771 + $0xae] sm:$0xff]
        %v4886 = vld [vmem:[%s4771 + $0xc6] sm:$0xff]
        %v4887 = vld [vmem:[%s4771 + $0xce] sm:$0xff]
        %v4888 = vld [vmem:[%s4771 + $0xe6] sm:$0xff]
        %v4889 = vld [vmem:[%s4771 + $0xee] sm:$0xff]
        %v4890 = vld [vmem:[%s4771 + $0x106] sm:$0xff]
        %v4891 = vld [vmem:[%s4771 + $0x10e] sm:$0xff]
        %v4892 = vld [vmem:[%s4771 + $0x126] sm:$0xff]
        %v4893 = vld [vmem:[%s4771 + $0x12e] sm:$0xff]
        %v4894 = vld [vmem:[%s4771 + $0x146] sm:$0xff]
        %v4895 = vld [vmem:[%s4771 + $0x14e] sm:$0xff]
        %v4896 = vld [vmem:[%s4771 + $0x166] sm:$0xff]
        %v4897 = vld [vmem:[%s4771 + $0x16e] sm:$0xff]
        %v4898 = vld [vmem:[%s4771 + $0x186] sm:$0xff]
        %v4899 = vld [vmem:[%s4771 + $0x18e] sm:$0xff]
        %v4900 = vld [vmem:[%s4771 + $0x1a6] sm:$0xff]
        %v4901 = vld [vmem:[%s4771 + $0x1ae] sm:$0xff]
        %v4902 = vld [vmem:[%s4771 + $0x1c6] sm:$0xff]
        %v4903 = vld [vmem:[%s4771 + $0x1ce] sm:$0xff]
        %v4904 = vld [vmem:[%s4771 + $0x1e6] sm:$0xff]
        %v4905 = vld [vmem:[%s4771 + $0x1ee] sm:$0xff]
        %v4906 = vld [vmem:[%s4804 + $0x1] sm:$0x1]
        %v4907 = vlaneseq
        %v4908 = vshrl.u32 %v4907, 7
        %v4909 = vsub.s32 0, %v4908
        %v4910 = vrot.slane %v4906, %v4909
        %v4911 = vmul.f32 %v4874, %v4910
        %v4912 = vmul.f32 %v4875, %v4910
        %v4913 = vmul.f32 %v4876, %v4910
        %v4914 = vmul.f32 %v4877, %v4910
        %v4915 = vmul.f32 %v4878, %v4910
        %v4916 = vmul.f32 %v4879, %v4910
        %v4917 = vmul.f32 %v4880, %v4910
        %v4918 = vmul.f32 %v4881, %v4910
        %v4919 = vmul.f32 %v4882, %v4910
        %v4920 = vmul.f32 %v4883, %v4910
        %v4921 = vmul.f32 %v4884, %v4910
        %v4922 = vmul.f32 %v4885, %v4910
        %v4923 = vmul.f32 %v4886, %v4910
        %v4924 = vmul.f32 %v4887, %v4910
        %v4925 = vmul.f32 %v4888, %v4910
        %v4926 = vmul.f32 %v4889, %v4910
        %v4927 = vmul.f32 %v4890, %v4910
        %v4928 = vmul.f32 %v4891, %v4910
        %v4929 = vmul.f32 %v4892, %v4910
        %v4930 = vmul.f32 %v4893, %v4910
        %v4931 = vmul.f32 %v4894, %v4910
        %v4932 = vmul.f32 %v4895, %v4910
        %v4933 = vmul.f32 %v4896, %v4910
        %v4934 = vmul.f32 %v4897, %v4910
        %v4935 = vmul.f32 %v4898, %v4910
        %v4936 = vmul.f32 %v4899, %v4910
        %v4937 = vmul.f32 %v4900, %v4910
        %v4938 = vmul.f32 %v4901, %v4910
        %v4939 = vmul.f32 %v4902, %v4910
        %v4940 = vmul.f32 %v4903, %v4910
        %v4941 = vmul.f32 %v4904, %v4910
        %v4942 = vmul.f32 %v4905, %v4910
        %v4943 = vadd.f32 %v4842, %v4911
        %v4944 = vadd.f32 %v4843, %v4912
        %v4945 = vadd.f32 %v4844, %v4913
        %v4946 = vadd.f32 %v4845, %v4914
        %v4947 = vadd.f32 %v4846, %v4915
        %v4948 = vadd.f32 %v4847, %v4916
        %v4949 = vadd.f32 %v4848, %v4917
        %v4950 = vadd.f32 %v4849, %v4918
        %v4951 = vadd.f32 %v4850, %v4919
        %v4952 = vadd.f32 %v4851, %v4920
        %v4953 = vadd.f32 %v4852, %v4921
        %v4954 = vadd.f32 %v4853, %v4922
        %v4955 = vadd.f32 %v4854, %v4923
        %v4956 = vadd.f32 %v4855, %v4924
        %v4957 = vadd.f32 %v4856, %v4925
        %v4958 = vadd.f32 %v4857, %v4926
        %v4959 = vadd.f32 %v4858, %v4927
        %v4960 = vadd.f32 %v4859, %v4928
        %v4961 = vadd.f32 %v4860, %v4929
        %v4962 = vadd.f32 %v4861, %v4930
        %v4963 = vadd.f32 %v4862, %v4931
        %v4964 = vadd.f32 %v4863, %v4932
        %v4965 = vadd.f32 %v4864, %v4933
        %v4966 = vadd.f32 %v4865, %v4934
        %v4967 = vadd.f32 %v4866, %v4935
        %v4968 = vadd.f32 %v4867, %v4936
        %v4969 = vadd.f32 %v4868, %v4937
        %v4970 = vadd.f32 %v4869, %v4938
        %v4971 = vadd.f32 %v4870, %v4939
        %v4972 = vadd.f32 %v4871, %v4940
        %v4973 = vadd.f32 %v4872, %v4941
        %v4974 = vadd.f32 %v4873, %v4942
        %v4975 = vld [vmem:[%s4771 + $0x7] sm:$0xff]
        %v4976 = vld [vmem:[%s4771 + $0xf] sm:$0xff]
        %v4977 = vld [vmem:[%s4771 + $0x27] sm:$0xff]
        %v4978 = vld [vmem:[%s4771 + $0x2f] sm:$0xff]
        %v4979 = vld [vmem:[%s4771 + $0x47] sm:$0xff]
        %v4980 = vld [vmem:[%s4771 + $0x4f] sm:$0xff]
        %v4981 = vld [vmem:[%s4771 + $0x67] sm:$0xff]
        %v4982 = vld [vmem:[%s4771 + $0x6f] sm:$0xff]
        %v4983 = vld [vmem:[%s4771 + $0x87] sm:$0xff]
        %v4984 = vld [vmem:[%s4771 + $0x8f] sm:$0xff]
        %v4985 = vld [vmem:[%s4771 + $0xa7] sm:$0xff]
        %v4986 = vld [vmem:[%s4771 + $0xaf] sm:$0xff]
        %v4987 = vld [vmem:[%s4771 + $0xc7] sm:$0xff]
        %v4988 = vld [vmem:[%s4771 + $0xcf] sm:$0xff]
        %v4989 = vld [vmem:[%s4771 + $0xe7] sm:$0xff]
        %v4990 = vld [vmem:[%s4771 + $0xef] sm:$0xff]
        %v4991 = vld [vmem:[%s4771 + $0x107] sm:$0xff]
        %v4992 = vld [vmem:[%s4771 + $0x10f] sm:$0xff]
        %v4993 = vld [vmem:[%s4771 + $0x127] sm:$0xff]
        %v4994 = vld [vmem:[%s4771 + $0x12f] sm:$0xff]
        %v4995 = vld [vmem:[%s4771 + $0x147] sm:$0xff]
        %v4996 = vld [vmem:[%s4771 + $0x14f] sm:$0xff]
        %v4997 = vld [vmem:[%s4771 + $0x167] sm:$0xff]
        %v4998 = vld [vmem:[%s4771 + $0x16f] sm:$0xff]
        %v4999 = vld [vmem:[%s4771 + $0x187] sm:$0xff]
        %v5000 = vld [vmem:[%s4771 + $0x18f] sm:$0xff]
        %v5001 = vld [vmem:[%s4771 + $0x1a7] sm:$0xff]
        %v5002 = vld [vmem:[%s4771 + $0x1af] sm:$0xff]
        %v5003 = vld [vmem:[%s4771 + $0x1c7] sm:$0xff]
        %v5004 = vld [vmem:[%s4771 + $0x1cf] sm:$0xff]
        %v5005 = vld [vmem:[%s4771 + $0x1e7] sm:$0xff]
        %v5006 = vld [vmem:[%s4771 + $0x1ef] sm:$0xff]
        %v5007 = vld [vmem:[%s4804 + $0x2] sm:$0x1]
        %v5008 = vlaneseq
        %v5009 = vshrl.u32 %v5008, 7
        %v5010 = vsub.s32 0, %v5009
        %v5011 = vrot.slane %v5007, %v5010
        %v5012 = vmul.f32 %v4975, %v5011
        %v5013 = vmul.f32 %v4976, %v5011
        %v5014 = vmul.f32 %v4977, %v5011
        %v5015 = vmul.f32 %v4978, %v5011
        %v5016 = vmul.f32 %v4979, %v5011
        %v5017 = vmul.f32 %v4980, %v5011
        %v5018 = vmul.f32 %v4981, %v5011
        %v5019 = vmul.f32 %v4982, %v5011
        %v5020 = vmul.f32 %v4983, %v5011
        %v5021 = vmul.f32 %v4984, %v5011
        %v5022 = vmul.f32 %v4985, %v5011
        %v5023 = vmul.f32 %v4986, %v5011
        %v5024 = vmul.f32 %v4987, %v5011
        %v5025 = vmul.f32 %v4988, %v5011
        %v5026 = vmul.f32 %v4989, %v5011
        %v5027 = vmul.f32 %v4990, %v5011
        %v5028 = vmul.f32 %v4991, %v5011
        %v5029 = vmul.f32 %v4992, %v5011
        %v5030 = vmul.f32 %v4993, %v5011
        %v5031 = vmul.f32 %v4994, %v5011
        %v5032 = vmul.f32 %v4995, %v5011
        %v5033 = vmul.f32 %v4996, %v5011
        %v5034 = vmul.f32 %v4997, %v5011
        %v5035 = vmul.f32 %v4998, %v5011
        %v5036 = vmul.f32 %v4999, %v5011
        %v5037 = vmul.f32 %v5000, %v5011
        %v5038 = vmul.f32 %v5001, %v5011
        %v5039 = vmul.f32 %v5002, %v5011
        %v5040 = vmul.f32 %v5003, %v5011
        %v5041 = vmul.f32 %v5004, %v5011
        %v5042 = vmul.f32 %v5005, %v5011
        %v5043 = vmul.f32 %v5006, %v5011
        %v5044 = vadd.f32 %v4943, %v5012
        %v5045 = vadd.f32 %v4944, %v5013
        %v5046 = vadd.f32 %v4945, %v5014
        %v5047 = vadd.f32 %v4946, %v5015
        %v5048 = vadd.f32 %v4947, %v5016
        %v5049 = vadd.f32 %v4948, %v5017
        %v5050 = vadd.f32 %v4949, %v5018
        %v5051 = vadd.f32 %v4950, %v5019
        %v5052 = vadd.f32 %v4951, %v5020
        %v5053 = vadd.f32 %v4952, %v5021
        %v5054 = vadd.f32 %v4953, %v5022
        %v5055 = vadd.f32 %v4954, %v5023
        %v5056 = vadd.f32 %v4955, %v5024
        %v5057 = vadd.f32 %v4956, %v5025
        %v5058 = vadd.f32 %v4957, %v5026
        %v5059 = vadd.f32 %v4958, %v5027
        %v5060 = vadd.f32 %v4959, %v5028
        %v5061 = vadd.f32 %v4960, %v5029
        %v5062 = vadd.f32 %v4961, %v5030
        %v5063 = vadd.f32 %v4962, %v5031
        %v5064 = vadd.f32 %v4963, %v5032
        %v5065 = vadd.f32 %v4964, %v5033
        %v5066 = vadd.f32 %v4965, %v5034
        %v5067 = vadd.f32 %v4966, %v5035
        %v5068 = vadd.f32 %v4967, %v5036
        %v5069 = vadd.f32 %v4968, %v5037
        %v5070 = vadd.f32 %v4969, %v5038
        %v5071 = vadd.f32 %v4970, %v5039
        %v5072 = vadd.f32 %v4971, %v5040
        %v5073 = vadd.f32 %v4972, %v5041
        %v5074 = vadd.f32 %v4973, %v5042
        %v5075 = vadd.f32 %v4974, %v5043
        %v5076 = vld [vmem:[%s4771 + $0x8] sm:$0xff]
        %v5077 = vld [vmem:[%s4771 + $0x10] sm:$0xff]
        %v5078 = vld [vmem:[%s4771 + $0x28] sm:$0xff]
        %v5079 = vld [vmem:[%s4771 + $0x30] sm:$0xff]
        %v5080 = vld [vmem:[%s4771 + $0x48] sm:$0xff]
        %v5081 = vld [vmem:[%s4771 + $0x50] sm:$0xff]
        %v5082 = vld [vmem:[%s4771 + $0x68] sm:$0xff]
        %v5083 = vld [vmem:[%s4771 + $0x70] sm:$0xff]
        %v5084 = vld [vmem:[%s4771 + $0x88] sm:$0xff]
        %v5085 = vld [vmem:[%s4771 + $0x90] sm:$0xff]
        %v5086 = vld [vmem:[%s4771 + $0xa8] sm:$0xff]
        %v5087 = vld [vmem:[%s4771 + $0xb0] sm:$0xff]
        %v5088 = vld [vmem:[%s4771 + $0xc8] sm:$0xff]
        %v5089 = vld [vmem:[%s4771 + $0xd0] sm:$0xff]
        %v5090 = vld [vmem:[%s4771 + $0xe8] sm:$0xff]
        %v5091 = vld [vmem:[%s4771 + $0xf0] sm:$0xff]
        %v5092 = vld [vmem:[%s4771 + $0x108] sm:$0xff]
        %v5093 = vld [vmem:[%s4771 + $0x110] sm:$0xff]
        %v5094 = vld [vmem:[%s4771 + $0x128] sm:$0xff]
        %v5095 = vld [vmem:[%s4771 + $0x130] sm:$0xff]
        %v5096 = vld [vmem:[%s4771 + $0x148] sm:$0xff]
        %v5097 = vld [vmem:[%s4771 + $0x150] sm:$0xff]
        %v5098 = vld [vmem:[%s4771 + $0x168] sm:$0xff]
        %v5099 = vld [vmem:[%s4771 + $0x170] sm:$0xff]
        %v5100 = vld [vmem:[%s4771 + $0x188] sm:$0xff]
        %v5101 = vld [vmem:[%s4771 + $0x190] sm:$0xff]
        %v5102 = vld [vmem:[%s4771 + $0x1a8] sm:$0xff]
        %v5103 = vld [vmem:[%s4771 + $0x1b0] sm:$0xff]
        %v5104 = vld [vmem:[%s4771 + $0x1c8] sm:$0xff]
        %v5105 = vld [vmem:[%s4771 + $0x1d0] sm:$0xff]
        %v5106 = vld [vmem:[%s4771 + $0x1e8] sm:$0xff]
        %v5107 = vld [vmem:[%s4771 + $0x1f0] sm:$0xff]
        %v5108 = vld [vmem:[%s4804 + $0x3] sm:$0x1]
        %v5109 = vlaneseq
        %v5110 = vshrl.u32 %v5109, 7
        %v5111 = vsub.s32 0, %v5110
        %v5112 = vrot.slane %v5108, %v5111
        %v5113 = vmul.f32 %v5076, %v5112
        %v5114 = vmul.f32 %v5077, %v5112
        %v5115 = vmul.f32 %v5078, %v5112
        %v5116 = vmul.f32 %v5079, %v5112
        %v5117 = vmul.f32 %v5080, %v5112
        %v5118 = vmul.f32 %v5081, %v5112
        %v5119 = vmul.f32 %v5082, %v5112
        %v5120 = vmul.f32 %v5083, %v5112
        %v5121 = vmul.f32 %v5084, %v5112
        %v5122 = vmul.f32 %v5085, %v5112
        %v5123 = vmul.f32 %v5086, %v5112
        %v5124 = vmul.f32 %v5087, %v5112
        %v5125 = vmul.f32 %v5088, %v5112
        %v5126 = vmul.f32 %v5089, %v5112
        %v5127 = vmul.f32 %v5090, %v5112
        %v5128 = vmul.f32 %v5091, %v5112
        %v5129 = vmul.f32 %v5092, %v5112
        %v5130 = vmul.f32 %v5093, %v5112
        %v5131 = vmul.f32 %v5094, %v5112
        %v5132 = vmul.f32 %v5095, %v5112
        %v5133 = vmul.f32 %v5096, %v5112
        %v5134 = vmul.f32 %v5097, %v5112
        %v5135 = vmul.f32 %v5098, %v5112
        %v5136 = vmul.f32 %v5099, %v5112
        %v5137 = vmul.f32 %v5100, %v5112
        %v5138 = vmul.f32 %v5101, %v5112
        %v5139 = vmul.f32 %v5102, %v5112
        %v5140 = vmul.f32 %v5103, %v5112
        %v5141 = vmul.f32 %v5104, %v5112
        %v5142 = vmul.f32 %v5105, %v5112
        %v5143 = vmul.f32 %v5106, %v5112
        %v5144 = vmul.f32 %v5107, %v5112
        %v5145 = vadd.f32 %v5044, %v5113
        %v5146 = vadd.f32 %v5045, %v5114
        %v5147 = vadd.f32 %v5046, %v5115
        %v5148 = vadd.f32 %v5047, %v5116
        %v5149 = vadd.f32 %v5048, %v5117
        %v5150 = vadd.f32 %v5049, %v5118
        %v5151 = vadd.f32 %v5050, %v5119
        %v5152 = vadd.f32 %v5051, %v5120
        %v5153 = vadd.f32 %v5052, %v5121
        %v5154 = vadd.f32 %v5053, %v5122
        %v5155 = vadd.f32 %v5054, %v5123
        %v5156 = vadd.f32 %v5055, %v5124
        %v5157 = vadd.f32 %v5056, %v5125
        %v5158 = vadd.f32 %v5057, %v5126
        %v5159 = vadd.f32 %v5058, %v5127
        %v5160 = vadd.f32 %v5059, %v5128
        %v5161 = vadd.f32 %v5060, %v5129
        %v5162 = vadd.f32 %v5061, %v5130
        %v5163 = vadd.f32 %v5062, %v5131
        %v5164 = vadd.f32 %v5063, %v5132
        %v5165 = vadd.f32 %v5064, %v5133
        %v5166 = vadd.f32 %v5065, %v5134
        %v5167 = vadd.f32 %v5066, %v5135
        %v5168 = vadd.f32 %v5067, %v5136
        %v5169 = vadd.f32 %v5068, %v5137
        %v5170 = vadd.f32 %v5069, %v5138
        %v5171 = vadd.f32 %v5070, %v5139
        %v5172 = vadd.f32 %v5071, %v5140
        %v5173 = vadd.f32 %v5072, %v5141
        %v5174 = vadd.f32 %v5073, %v5142
        %v5175 = vadd.f32 %v5074, %v5143
        %v5176 = vadd.f32 %v5075, %v5144
        %v5177 = vld [vmem:[%s4771 + $0x9] sm:$0xff]
        %v5178 = vld [vmem:[%s4771 + $0x11] sm:$0xff]
        %v5179 = vld [vmem:[%s4771 + $0x29] sm:$0xff]
        %v5180 = vld [vmem:[%s4771 + $0x31] sm:$0xff]
        %v5181 = vld [vmem:[%s4771 + $0x49] sm:$0xff]
        %v5182 = vld [vmem:[%s4771 + $0x51] sm:$0xff]
        %v5183 = vld [vmem:[%s4771 + $0x69] sm:$0xff]
        %v5184 = vld [vmem:[%s4771 + $0x71] sm:$0xff]
        %v5185 = vld [vmem:[%s4771 + $0x89] sm:$0xff]
        %v5186 = vld [vmem:[%s4771 + $0x91] sm:$0xff]
        %v5187 = vld [vmem:[%s4771 + $0xa9] sm:$0xff]
        %v5188 = vld [vmem:[%s4771 + $0xb1] sm:$0xff]
        %v5189 = vld [vmem:[%s4771 + $0xc9] sm:$0xff]
        %v5190 = vld [vmem:[%s4771 + $0xd1] sm:$0xff]
        %v5191 = vld [vmem:[%s4771 + $0xe9] sm:$0xff]
        %v5192 = vld [vmem:[%s4771 + $0xf1] sm:$0xff]
        %v5193 = vld [vmem:[%s4771 + $0x109] sm:$0xff]
        %v5194 = vld [vmem:[%s4771 + $0x111] sm:$0xff]
        %v5195 = vld [vmem:[%s4771 + $0x129] sm:$0xff]
        %v5196 = vld [vmem:[%s4771 + $0x131] sm:$0xff]
        %v5197 = vld [vmem:[%s4771 + $0x149] sm:$0xff]
        %v5198 = vld [vmem:[%s4771 + $0x151] sm:$0xff]
        %v5199 = vld [vmem:[%s4771 + $0x169] sm:$0xff]
        %v5200 = vld [vmem:[%s4771 + $0x171] sm:$0xff]
        %v5201 = vld [vmem:[%s4771 + $0x189] sm:$0xff]
        %v5202 = vld [vmem:[%s4771 + $0x191] sm:$0xff]
        %v5203 = vld [vmem:[%s4771 + $0x1a9] sm:$0xff]
        %v5204 = vld [vmem:[%s4771 + $0x1b1] sm:$0xff]
        %v5205 = vld [vmem:[%s4771 + $0x1c9] sm:$0xff]
        %v5206 = vld [vmem:[%s4771 + $0x1d1] sm:$0xff]
        %v5207 = vld [vmem:[%s4771 + $0x1e9] sm:$0xff]
        %v5208 = vld [vmem:[%s4771 + $0x1f1] sm:$0xff]
        %v5209 = vld [vmem:[%s4804 + $0x4] sm:$0x1]
        %v5210 = vlaneseq
        %v5211 = vshrl.u32 %v5210, 7
        %v5212 = vsub.s32 0, %v5211
        %v5213 = vrot.slane %v5209, %v5212
        %v5214 = vmul.f32 %v5177, %v5213
        %v5215 = vmul.f32 %v5178, %v5213
        %v5216 = vmul.f32 %v5179, %v5213
        %v5217 = vmul.f32 %v5180, %v5213
        %v5218 = vmul.f32 %v5181, %v5213
        %v5219 = vmul.f32 %v5182, %v5213
        %v5220 = vmul.f32 %v5183, %v5213
        %v5221 = vmul.f32 %v5184, %v5213
        %v5222 = vmul.f32 %v5185, %v5213
        %v5223 = vmul.f32 %v5186, %v5213
        %v5224 = vmul.f32 %v5187, %v5213
        %v5225 = vmul.f32 %v5188, %v5213
        %v5226 = vmul.f32 %v5189, %v5213
        %v5227 = vmul.f32 %v5190, %v5213
        %v5228 = vmul.f32 %v5191, %v5213
        %v5229 = vmul.f32 %v5192, %v5213
        %v5230 = vmul.f32 %v5193, %v5213
        %v5231 = vmul.f32 %v5194, %v5213
        %v5232 = vmul.f32 %v5195, %v5213
        %v5233 = vmul.f32 %v5196, %v5213
        %v5234 = vmul.f32 %v5197, %v5213
        %v5235 = vmul.f32 %v5198, %v5213
        %v5236 = vmul.f32 %v5199, %v5213
        %v5237 = vmul.f32 %v5200, %v5213
        %v5238 = vmul.f32 %v5201, %v5213
        %v5239 = vmul.f32 %v5202, %v5213
        %v5240 = vmul.f32 %v5203, %v5213
        %v5241 = vmul.f32 %v5204, %v5213
        %v5242 = vmul.f32 %v5205, %v5213
        %v5243 = vmul.f32 %v5206, %v5213
        %v5244 = vmul.f32 %v5207, %v5213
        %v5245 = vmul.f32 %v5208, %v5213
        %v5246 = vadd.f32 %v5145, %v5214
        %v5247 = vadd.f32 %v5146, %v5215
        %v5248 = vadd.f32 %v5147, %v5216
        %v5249 = vadd.f32 %v5148, %v5217
        %v5250 = vadd.f32 %v5149, %v5218
        %v5251 = vadd.f32 %v5150, %v5219
        %v5252 = vadd.f32 %v5151, %v5220
        %v5253 = vadd.f32 %v5152, %v5221
        %v5254 = vadd.f32 %v5153, %v5222
        %v5255 = vadd.f32 %v5154, %v5223
        %v5256 = vadd.f32 %v5155, %v5224
        %v5257 = vadd.f32 %v5156, %v5225
        %v5258 = vadd.f32 %v5157, %v5226
        %v5259 = vadd.f32 %v5158, %v5227
        %v5260 = vadd.f32 %v5159, %v5228
        %v5261 = vadd.f32 %v5160, %v5229
        %v5262 = vadd.f32 %v5161, %v5230
        %v5263 = vadd.f32 %v5162, %v5231
        %v5264 = vadd.f32 %v5163, %v5232
        %v5265 = vadd.f32 %v5164, %v5233
        %v5266 = vadd.f32 %v5165, %v5234
        %v5267 = vadd.f32 %v5166, %v5235
        %v5268 = vadd.f32 %v5167, %v5236
        %v5269 = vadd.f32 %v5168, %v5237
        %v5270 = vadd.f32 %v5169, %v5238
        %v5271 = vadd.f32 %v5170, %v5239
        %v5272 = vadd.f32 %v5171, %v5240
        %v5273 = vadd.f32 %v5172, %v5241
        %v5274 = vadd.f32 %v5173, %v5242
        %v5275 = vadd.f32 %v5174, %v5243
        %v5276 = vadd.f32 %v5175, %v5244
        %v5277 = vadd.f32 %v5176, %v5245
        %v5278 = vld [vmem:[%s4771 + $0xa] sm:$0xff]
        %v5279 = vld [vmem:[%s4771 + $0x12] sm:$0xff]
        %v5280 = vld [vmem:[%s4771 + $0x2a] sm:$0xff]
        %v5281 = vld [vmem:[%s4771 + $0x32] sm:$0xff]
        %v5282 = vld [vmem:[%s4771 + $0x4a] sm:$0xff]
        %v5283 = vld [vmem:[%s4771 + $0x52] sm:$0xff]
        %v5284 = vld [vmem:[%s4771 + $0x6a] sm:$0xff]
        %v5285 = vld [vmem:[%s4771 + $0x72] sm:$0xff]
        %v5286 = vld [vmem:[%s4771 + $0x8a] sm:$0xff]
        %v5287 = vld [vmem:[%s4771 + $0x92] sm:$0xff]
        %v5288 = vld [vmem:[%s4771 + $0xaa] sm:$0xff]
        %v5289 = vld [vmem:[%s4771 + $0xb2] sm:$0xff]
        %v5290 = vld [vmem:[%s4771 + $0xca] sm:$0xff]
        %v5291 = vld [vmem:[%s4771 + $0xd2] sm:$0xff]
        %v5292 = vld [vmem:[%s4771 + $0xea] sm:$0xff]
        %v5293 = vld [vmem:[%s4771 + $0xf2] sm:$0xff]
        %v5294 = vld [vmem:[%s4771 + $0x10a] sm:$0xff]
        %v5295 = vld [vmem:[%s4771 + $0x112] sm:$0xff]
        %v5296 = vld [vmem:[%s4771 + $0x12a] sm:$0xff]
        %v5297 = vld [vmem:[%s4771 + $0x132] sm:$0xff]
        %v5298 = vld [vmem:[%s4771 + $0x14a] sm:$0xff]
        %v5299 = vld [vmem:[%s4771 + $0x152] sm:$0xff]
        %v5300 = vld [vmem:[%s4771 + $0x16a] sm:$0xff]
        %v5301 = vld [vmem:[%s4771 + $0x172] sm:$0xff]
        %v5302 = vld [vmem:[%s4771 + $0x18a] sm:$0xff]
        %v5303 = vld [vmem:[%s4771 + $0x192] sm:$0xff]
        %v5304 = vld [vmem:[%s4771 + $0x1aa] sm:$0xff]
        %v5305 = vld [vmem:[%s4771 + $0x1b2] sm:$0xff]
        %v5306 = vld [vmem:[%s4771 + $0x1ca] sm:$0xff]
        %v5307 = vld [vmem:[%s4771 + $0x1d2] sm:$0xff]
        %v5308 = vld [vmem:[%s4771 + $0x1ea] sm:$0xff]
        %v5309 = vld [vmem:[%s4771 + $0x1f2] sm:$0xff]
        %v5310 = vld [vmem:[%s4804 + $0x5] sm:$0x1]
        %v5311 = vlaneseq
        %v5312 = vshrl.u32 %v5311, 7
        %v5313 = vsub.s32 0, %v5312
        %v5314 = vrot.slane %v5310, %v5313
        %v5315 = vmul.f32 %v5278, %v5314
        %v5316 = vmul.f32 %v5279, %v5314
        %v5317 = vmul.f32 %v5280, %v5314
        %v5318 = vmul.f32 %v5281, %v5314
        %v5319 = vmul.f32 %v5282, %v5314
        %v5320 = vmul.f32 %v5283, %v5314
        %v5321 = vmul.f32 %v5284, %v5314
        %v5322 = vmul.f32 %v5285, %v5314
        %v5323 = vmul.f32 %v5286, %v5314
        %v5324 = vmul.f32 %v5287, %v5314
        %v5325 = vmul.f32 %v5288, %v5314
        %v5326 = vmul.f32 %v5289, %v5314
        %v5327 = vmul.f32 %v5290, %v5314
        %v5328 = vmul.f32 %v5291, %v5314
        %v5329 = vmul.f32 %v5292, %v5314
        %v5330 = vmul.f32 %v5293, %v5314
        %v5331 = vmul.f32 %v5294, %v5314
        %v5332 = vmul.f32 %v5295, %v5314
        %v5333 = vmul.f32 %v5296, %v5314
        %v5334 = vmul.f32 %v5297, %v5314
        %v5335 = vmul.f32 %v5298, %v5314
        %v5336 = vmul.f32 %v5299, %v5314
        %v5337 = vmul.f32 %v5300, %v5314
        %v5338 = vmul.f32 %v5301, %v5314
        %v5339 = vmul.f32 %v5302, %v5314
        %v5340 = vmul.f32 %v5303, %v5314
        %v5341 = vmul.f32 %v5304, %v5314
        %v5342 = vmul.f32 %v5305, %v5314
        %v5343 = vmul.f32 %v5306, %v5314
        %v5344 = vmul.f32 %v5307, %v5314
        %v5345 = vmul.f32 %v5308, %v5314
        %v5346 = vmul.f32 %v5309, %v5314
        %v5347 = vadd.f32 %v5246, %v5315
        %v5348 = vadd.f32 %v5247, %v5316
        %v5349 = vadd.f32 %v5248, %v5317
        %v5350 = vadd.f32 %v5249, %v5318
        %v5351 = vadd.f32 %v5250, %v5319
        %v5352 = vadd.f32 %v5251, %v5320
        %v5353 = vadd.f32 %v5252, %v5321
        %v5354 = vadd.f32 %v5253, %v5322
        %v5355 = vadd.f32 %v5254, %v5323
        %v5356 = vadd.f32 %v5255, %v5324
        %v5357 = vadd.f32 %v5256, %v5325
        %v5358 = vadd.f32 %v5257, %v5326
        %v5359 = vadd.f32 %v5258, %v5327
        %v5360 = vadd.f32 %v5259, %v5328
        %v5361 = vadd.f32 %v5260, %v5329
        %v5362 = vadd.f32 %v5261, %v5330
        %v5363 = vadd.f32 %v5262, %v5331
        %v5364 = vadd.f32 %v5263, %v5332
        %v5365 = vadd.f32 %v5264, %v5333
        %v5366 = vadd.f32 %v5265, %v5334
        %v5367 = vadd.f32 %v5266, %v5335
        %v5368 = vadd.f32 %v5267, %v5336
        %v5369 = vadd.f32 %v5268, %v5337
        %v5370 = vadd.f32 %v5269, %v5338
        %v5371 = vadd.f32 %v5270, %v5339
        %v5372 = vadd.f32 %v5271, %v5340
        %v5373 = vadd.f32 %v5272, %v5341
        %v5374 = vadd.f32 %v5273, %v5342
        %v5375 = vadd.f32 %v5274, %v5343
        %v5376 = vadd.f32 %v5275, %v5344
        %v5377 = vadd.f32 %v5276, %v5345
        %v5378 = vadd.f32 %v5277, %v5346
        %v5379 = vld [vmem:[%s4771 + $0xb] sm:$0xff]
        %v5380 = vld [vmem:[%s4771 + $0x13] sm:$0xff]
        %v5381 = vld [vmem:[%s4771 + $0x2b] sm:$0xff]
        %v5382 = vld [vmem:[%s4771 + $0x33] sm:$0xff]
        %v5383 = vld [vmem:[%s4771 + $0x4b] sm:$0xff]
        %v5384 = vld [vmem:[%s4771 + $0x53] sm:$0xff]
        %v5385 = vld [vmem:[%s4771 + $0x6b] sm:$0xff]
        %v5386 = vld [vmem:[%s4771 + $0x73] sm:$0xff]
        %v5387 = vld [vmem:[%s4771 + $0x8b] sm:$0xff]
        %v5388 = vld [vmem:[%s4771 + $0x93] sm:$0xff]
        %v5389 = vld [vmem:[%s4771 + $0xab] sm:$0xff]
        %v5390 = vld [vmem:[%s4771 + $0xb3] sm:$0xff]
        %v5391 = vld [vmem:[%s4771 + $0xcb] sm:$0xff]
        %v5392 = vld [vmem:[%s4771 + $0xd3] sm:$0xff]
        %v5393 = vld [vmem:[%s4771 + $0xeb] sm:$0xff]
        %v5394 = vld [vmem:[%s4771 + $0xf3] sm:$0xff]
        %v5395 = vld [vmem:[%s4771 + $0x10b] sm:$0xff]
        %v5396 = vld [vmem:[%s4771 + $0x113] sm:$0xff]
        %v5397 = vld [vmem:[%s4771 + $0x12b] sm:$0xff]
        %v5398 = vld [vmem:[%s4771 + $0x133] sm:$0xff]
        %v5399 = vld [vmem:[%s4771 + $0x14b] sm:$0xff]
        %v5400 = vld [vmem:[%s4771 + $0x153] sm:$0xff]
        %v5401 = vld [vmem:[%s4771 + $0x16b] sm:$0xff]
        %v5402 = vld [vmem:[%s4771 + $0x173] sm:$0xff]
        %v5403 = vld [vmem:[%s4771 + $0x18b] sm:$0xff]
        %v5404 = vld [vmem:[%s4771 + $0x193] sm:$0xff]
        %v5405 = vld [vmem:[%s4771 + $0x1ab] sm:$0xff]
        %v5406 = vld [vmem:[%s4771 + $0x1b3] sm:$0xff]
        %v5407 = vld [vmem:[%s4771 + $0x1cb] sm:$0xff]
        %v5408 = vld [vmem:[%s4771 + $0x1d3] sm:$0xff]
        %v5409 = vld [vmem:[%s4771 + $0x1eb] sm:$0xff]
        %v5410 = vld [vmem:[%s4771 + $0x1f3] sm:$0xff]
        %v5411 = vld [vmem:[%s4804 + $0x6] sm:$0x1]
        %v5412 = vlaneseq
        %v5413 = vshrl.u32 %v5412, 7
        %v5414 = vsub.s32 0, %v5413
        %v5415 = vrot.slane %v5411, %v5414
        %v5416 = vmul.f32 %v5379, %v5415
        %v5417 = vmul.f32 %v5380, %v5415
        %v5418 = vmul.f32 %v5381, %v5415
        %v5419 = vmul.f32 %v5382, %v5415
        %v5420 = vmul.f32 %v5383, %v5415
        %v5421 = vmul.f32 %v5384, %v5415
        %v5422 = vmul.f32 %v5385, %v5415
        %v5423 = vmul.f32 %v5386, %v5415
        %v5424 = vmul.f32 %v5387, %v5415
        %v5425 = vmul.f32 %v5388, %v5415
        %v5426 = vmul.f32 %v5389, %v5415
        %v5427 = vmul.f32 %v5390, %v5415
        %v5428 = vmul.f32 %v5391, %v5415
        %v5429 = vmul.f32 %v5392, %v5415
        %v5430 = vmul.f32 %v5393, %v5415
        %v5431 = vmul.f32 %v5394, %v5415
        %v5432 = vmul.f32 %v5395, %v5415
        %v5433 = vmul.f32 %v5396, %v5415
        %v5434 = vmul.f32 %v5397, %v5415
        %v5435 = vmul.f32 %v5398, %v5415
        %v5436 = vmul.f32 %v5399, %v5415
        %v5437 = vmul.f32 %v5400, %v5415
        %v5438 = vmul.f32 %v5401, %v5415
        %v5439 = vmul.f32 %v5402, %v5415
        %v5440 = vmul.f32 %v5403, %v5415
        %v5441 = vmul.f32 %v5404, %v5415
        %v5442 = vmul.f32 %v5405, %v5415
        %v5443 = vmul.f32 %v5406, %v5415
        %v5444 = vmul.f32 %v5407, %v5415
        %v5445 = vmul.f32 %v5408, %v5415
        %v5446 = vmul.f32 %v5409, %v5415
        %v5447 = vmul.f32 %v5410, %v5415
        %v5448 = vadd.f32 %v5347, %v5416
        %v5449 = vadd.f32 %v5348, %v5417
        %v5450 = vadd.f32 %v5349, %v5418
        %v5451 = vadd.f32 %v5350, %v5419
        %v5452 = vadd.f32 %v5351, %v5420
        %v5453 = vadd.f32 %v5352, %v5421
        %v5454 = vadd.f32 %v5353, %v5422
        %v5455 = vadd.f32 %v5354, %v5423
        %v5456 = vadd.f32 %v5355, %v5424
        %v5457 = vadd.f32 %v5356, %v5425
        %v5458 = vadd.f32 %v5357, %v5426
        %v5459 = vadd.f32 %v5358, %v5427
        %v5460 = vadd.f32 %v5359, %v5428
        %v5461 = vadd.f32 %v5360, %v5429
        %v5462 = vadd.f32 %v5361, %v5430
        %v5463 = vadd.f32 %v5362, %v5431
        %v5464 = vadd.f32 %v5363, %v5432
        %v5465 = vadd.f32 %v5364, %v5433
        %v5466 = vadd.f32 %v5365, %v5434
        %v5467 = vadd.f32 %v5366, %v5435
        %v5468 = vadd.f32 %v5367, %v5436
        %v5469 = vadd.f32 %v5368, %v5437
        %v5470 = vadd.f32 %v5369, %v5438
        %v5471 = vadd.f32 %v5370, %v5439
        %v5472 = vadd.f32 %v5371, %v5440
        %v5473 = vadd.f32 %v5372, %v5441
        %v5474 = vadd.f32 %v5373, %v5442
        %v5475 = vadd.f32 %v5374, %v5443
        %v5476 = vadd.f32 %v5375, %v5444
        %v5477 = vadd.f32 %v5376, %v5445
        %v5478 = vadd.f32 %v5377, %v5446
        %v5479 = vadd.f32 %v5378, %v5447
        %v5480 = vld [vmem:[%s364] sm:$0x1]
        %v5482 = vlaneseq
        %v5483 = vshrl.u32 %v5482, 7
        %v5484 = vsub.s32 0, %v5483
        %v5485 = vrot.slane %v5480, %v5484
        %v5487 = vadd.f32 %v5448, %v5485
        %v5488 = vadd.f32 %v5449, %v5485
        %v5489 = vadd.f32 %v5450, %v5485
        %v5490 = vadd.f32 %v5451, %v5485
        %v5491 = vadd.f32 %v5452, %v5485
        %v5492 = vadd.f32 %v5453, %v5485
        %v5493 = vadd.f32 %v5454, %v5485
        %v5494 = vadd.f32 %v5455, %v5485
        %v5495 = vadd.f32 %v5456, %v5485
        %v5496 = vadd.f32 %v5457, %v5485
        %v5497 = vadd.f32 %v5458, %v5485
        %v5498 = vadd.f32 %v5459, %v5485
        %v5499 = vadd.f32 %v5460, %v5485
        %v5500 = vadd.f32 %v5461, %v5485
        %v5501 = vadd.f32 %v5462, %v5485
        %v5502 = vadd.f32 %v5463, %v5485
        %v5503 = vadd.f32 %v5464, %v5485
        %v5504 = vadd.f32 %v5465, %v5485
        %v5505 = vadd.f32 %v5466, %v5485
        %v5506 = vadd.f32 %v5467, %v5485
        %v5507 = vadd.f32 %v5468, %v5485
        %v5508 = vadd.f32 %v5469, %v5485
        %v5509 = vadd.f32 %v5470, %v5485
        %v5510 = vadd.f32 %v5471, %v5485
        %v5511 = vadd.f32 %v5472, %v5485
        %v5512 = vadd.f32 %v5473, %v5485
        %v5513 = vadd.f32 %v5474, %v5485
        %v5514 = vadd.f32 %v5475, %v5485
        %v5515 = vadd.f32 %v5476, %v5485
        %v5516 = vadd.f32 %v5477, %v5485
        %v5517 = vadd.f32 %v5478, %v5485
        %v5518 = vadd.f32 %v5479, %v5485
        %v5519 = vsel %vm366, %v5487, 0.0
        %v5520 = vsel %vm366, %v5488, 0.0
        %v5521 = vadd.f32 %v5519, %v5520
        %v5522 = vsel %vm366, %v5489, 0.0
        %v5523 = vadd.f32 %v5521, %v5522
        %v5524 = vsel %vm366, %v5490, 0.0
        %v5525 = vadd.f32 %v5523, %v5524
        %v5526 = vsel %vm366, %v5491, 0.0
        %v5527 = vadd.f32 %v5525, %v5526
        %v5528 = vsel %vm366, %v5492, 0.0
        %v5529 = vadd.f32 %v5527, %v5528
        %v5530 = vsel %vm366, %v5493, 0.0
        %v5531 = vadd.f32 %v5529, %v5530
        %v5532 = vsel %vm366, %v5494, 0.0
        %v5533 = vadd.f32 %v5531, %v5532
        %v5534 = vsel %vm366, %v5495, 0.0
        %v5535 = vadd.f32 %v5533, %v5534
        %v5536 = vsel %vm366, %v5496, 0.0
        %v5537 = vadd.f32 %v5535, %v5536
        %v5538 = vsel %vm366, %v5497, 0.0
        %v5539 = vadd.f32 %v5537, %v5538
        %v5540 = vsel %vm366, %v5498, 0.0
        %v5541 = vadd.f32 %v5539, %v5540
        %v5542 = vsel %vm366, %v5499, 0.0
        %v5543 = vadd.f32 %v5541, %v5542
        %v5544 = vsel %vm366, %v5500, 0.0
        %v5545 = vadd.f32 %v5543, %v5544
        %v5546 = vsel %vm366, %v5501, 0.0
        %v5547 = vadd.f32 %v5545, %v5546
        %v5548 = vsel %vm366, %v5502, 0.0
        %v5549 = vadd.f32 %v5547, %v5548
        %v5550 = vsel %vm366, %v5503, 0.0
        %v5551 = vadd.f32 %v5549, %v5550
        %v5552 = vsel %vm366, %v5504, 0.0
        %v5553 = vadd.f32 %v5551, %v5552
        %v5554 = vsel %vm366, %v5505, 0.0
        %v5555 = vadd.f32 %v5553, %v5554
        %v5556 = vsel %vm366, %v5506, 0.0
        %v5557 = vadd.f32 %v5555, %v5556
        %v5558 = vsel %vm366, %v5507, 0.0
        %v5559 = vadd.f32 %v5557, %v5558
        %v5560 = vsel %vm366, %v5508, 0.0
        %v5561 = vadd.f32 %v5559, %v5560
        %v5562 = vsel %vm366, %v5509, 0.0
        %v5563 = vadd.f32 %v5561, %v5562
        %v5564 = vsel %vm366, %v5510, 0.0
        %v5565 = vadd.f32 %v5563, %v5564
        %v5566 = vsel %vm366, %v5511, 0.0
        %v5567 = vadd.f32 %v5565, %v5566
        %v5568 = vsel %vm366, %v5512, 0.0
        %v5569 = vadd.f32 %v5567, %v5568
        %v5570 = vsel %vm366, %v5513, 0.0
        %v5571 = vadd.f32 %v5569, %v5570
        %v5572 = vsel %vm366, %v5514, 0.0
        %v5573 = vadd.f32 %v5571, %v5572
        %v5574 = vsel %vm366, %v5515, 0.0
        %v5575 = vadd.f32 %v5573, %v5574
        %v5576 = vsel %vm366, %v5516, 0.0
        %v5577 = vadd.f32 %v5575, %v5576
        %v5578 = vsel %vm366, %v5517, 0.0
        %v5579 = vadd.f32 %v5577, %v5578
        %v5580 = vsel %vm366, %v5518, 0.0
        %v5581 = vadd.f32 %v5579, %v5580
        %v5582 = vrot.slane %v5581, 4
        %v5583 = vadd.f32 %v5581, %v5582
        %v5584 = vrot.slane %v5583, 2
        %v5585 = vadd.f32 %v5583, %v5584
        %v5586 = vrot.slane %v5585, 1
        %v5587 = vadd.f32 %v5585, %v5586
        %v5588 = vmul.f32 %v5487, %v5487
        %v5589 = vmul.f32 %v5488, %v5488
        %v5590 = vmul.f32 %v5489, %v5489
        %v5591 = vmul.f32 %v5490, %v5490
        %v5592 = vmul.f32 %v5491, %v5491
        %v5593 = vmul.f32 %v5492, %v5492
        %v5594 = vmul.f32 %v5493, %v5493
        %v5595 = vmul.f32 %v5494, %v5494
        %v5596 = vmul.f32 %v5495, %v5495
        %v5597 = vmul.f32 %v5496, %v5496
        %v5598 = vmul.f32 %v5497, %v5497
        %v5599 = vmul.f32 %v5498, %v5498
        %v5600 = vmul.f32 %v5499, %v5499
        %v5601 = vmul.f32 %v5500, %v5500
        %v5602 = vmul.f32 %v5501, %v5501
        %v5603 = vmul.f32 %v5502, %v5502
        %v5604 = vmul.f32 %v5503, %v5503
        %v5605 = vmul.f32 %v5504, %v5504
        %v5606 = vmul.f32 %v5505, %v5505
        %v5607 = vmul.f32 %v5506, %v5506
        %v5608 = vmul.f32 %v5507, %v5507
        %v5609 = vmul.f32 %v5508, %v5508
        %v5610 = vmul.f32 %v5509, %v5509
        %v5611 = vmul.f32 %v5510, %v5510
        %v5612 = vmul.f32 %v5511, %v5511
        %v5613 = vmul.f32 %v5512, %v5512
        %v5614 = vmul.f32 %v5513, %v5513
        %v5615 = vmul.f32 %v5514, %v5514
        %v5616 = vmul.f32 %v5515, %v5515
        %v5617 = vmul.f32 %v5516, %v5516
        %v5618 = vmul.f32 %v5517, %v5517
        %v5619 = vmul.f32 %v5518, %v5518
        %v5620 = vsel %vm366, %v5588, 0.0
        %v5621 = vsel %vm366, %v5589, 0.0
        %v5622 = vadd.f32 %v5620, %v5621
        %v5623 = vsel %vm366, %v5590, 0.0
        %v5624 = vadd.f32 %v5622, %v5623
        %v5625 = vsel %vm366, %v5591, 0.0
        %v5626 = vadd.f32 %v5624, %v5625
        %v5627 = vsel %vm366, %v5592, 0.0
        %v5628 = vadd.f32 %v5626, %v5627
        %v5629 = vsel %vm366, %v5593, 0.0
        %v5630 = vadd.f32 %v5628, %v5629
        %v5631 = vsel %vm366, %v5594, 0.0
        %v5632 = vadd.f32 %v5630, %v5631
        %v5633 = vsel %vm366, %v5595, 0.0
        %v5634 = vadd.f32 %v5632, %v5633
        %v5635 = vsel %vm366, %v5596, 0.0
        %v5636 = vadd.f32 %v5634, %v5635
        %v5637 = vsel %vm366, %v5597, 0.0
        %v5638 = vadd.f32 %v5636, %v5637
        %v5639 = vsel %vm366, %v5598, 0.0
        %v5640 = vadd.f32 %v5638, %v5639
        %v5641 = vsel %vm366, %v5599, 0.0
        %v5642 = vadd.f32 %v5640, %v5641
        %v5643 = vsel %vm366, %v5600, 0.0
        %v5644 = vadd.f32 %v5642, %v5643
        %v5645 = vsel %vm366, %v5601, 0.0
        %v5646 = vadd.f32 %v5644, %v5645
        %v5647 = vsel %vm366, %v5602, 0.0
        %v5648 = vadd.f32 %v5646, %v5647
        %v5649 = vsel %vm366, %v5603, 0.0
        %v5650 = vadd.f32 %v5648, %v5649
        %v5651 = vsel %vm366, %v5604, 0.0
        %v5652 = vadd.f32 %v5650, %v5651
        %v5653 = vsel %vm366, %v5605, 0.0
        %v5654 = vadd.f32 %v5652, %v5653
        %v5655 = vsel %vm366, %v5606, 0.0
        %v5656 = vadd.f32 %v5654, %v5655
        %v5657 = vsel %vm366, %v5607, 0.0
        %v5658 = vadd.f32 %v5656, %v5657
        %v5659 = vsel %vm366, %v5608, 0.0
        %v5660 = vadd.f32 %v5658, %v5659
        %v5661 = vsel %vm366, %v5609, 0.0
        %v5662 = vadd.f32 %v5660, %v5661
        %v5663 = vsel %vm366, %v5610, 0.0
        %v5664 = vadd.f32 %v5662, %v5663
        %v5665 = vsel %vm366, %v5611, 0.0
        %v5666 = vadd.f32 %v5664, %v5665
        %v5667 = vsel %vm366, %v5612, 0.0
        %v5668 = vadd.f32 %v5666, %v5667
        %v5669 = vsel %vm366, %v5613, 0.0
        %v5670 = vadd.f32 %v5668, %v5669
        %v5671 = vsel %vm366, %v5614, 0.0
        %v5672 = vadd.f32 %v5670, %v5671
        %v5673 = vsel %vm366, %v5615, 0.0
        %v5674 = vadd.f32 %v5672, %v5673
        %v5675 = vsel %vm366, %v5616, 0.0
        %v5676 = vadd.f32 %v5674, %v5675
        %v5677 = vsel %vm366, %v5617, 0.0
        %v5678 = vadd.f32 %v5676, %v5677
        %v5679 = vsel %vm366, %v5618, 0.0
        %v5680 = vadd.f32 %v5678, %v5679
        %v5681 = vsel %vm366, %v5619, 0.0
        %v5682 = vadd.f32 %v5680, %v5681
        %v5683 = vrot.slane %v5682, 4
        %v5684 = vadd.f32 %v5682, %v5683
        %v5685 = vrot.slane %v5684, 2
        %v5686 = vadd.f32 %v5684, %v5685
        %v5687 = vrot.slane %v5686, 1
        %v5688 = vadd.f32 %v5686, %v5687
        %v5689 = vsel %vm366, %v5587, 0.0
        %5690 = vadd.xlane.f32.xlu0 %v5689
        %v5691 = vpop.xlane.xlu0 %5690
        %v5692 = vrcp.pop 1024.0
        %v5693 = vmul.f32 %v5691, %v5692
        %v5694 = vsel %vm366, %v5688, 0.0
        %5695 = vadd.xlane.f32.xlu0 %v5694
        %v5696 = vpop.xlane.xlu0 %5695
        %v5697 = vmul.f32 %v5696, %v5692
        %v5698 = vmul.f32 %v5693, %v5693
        %v5699 = vsub.f32 %v5697, %v5698
        %v5700 = vadd.f32 %v5699, 1e-05
        %v5701 = vrsqrt.pop %v5700
        %v5702 = vld [vmem:[%s3] sm:$0x1]
        %v5703 = vmul.f32 %v5701, %v5702
        %v5704 = vld [vmem:[%s4] sm:$0x1]
        %v5705 = vmul.f32 %v5693, %v5703
        %v5706 = vsub.f32 %v5704, %v5705
        %v5707 = vld [vmem:[%s5] sm:$0x3]
        %v5708 = vld [vmem:[%s7] sm:$0xf]
        %v5709 = vld [vmem:[%s7 + $0x4] sm:$0xf]
        %v5710 = vld [vmem:[%s6] sm:$0x1]
        %v5711 = vld [vmem:[%s8] sm:$0x1]
        %v5713 = vlaneseq
        %v5714 = vshrl.u32 %v5713, 7
        %v5715 = vsub.s32 0, %v5714
        %v5716 = vrot.slane %v5703, %v5715
        %v5718 = vmul.f32 %v5487, %v5716
        %v5719 = vmul.f32 %v5488, %v5716
        %v5720 = vmul.f32 %v5489, %v5716
        %v5721 = vmul.f32 %v5490, %v5716
        %v5722 = vmul.f32 %v5491, %v5716
        %v5723 = vmul.f32 %v5492, %v5716
        %v5724 = vmul.f32 %v5493, %v5716
        %v5725 = vmul.f32 %v5494, %v5716
        %v5726 = vmul.f32 %v5495, %v5716
        %v5727 = vmul.f32 %v5496, %v5716
        %v5728 = vmul.f32 %v5497, %v5716
        %v5729 = vmul.f32 %v5498, %v5716
        %v5730 = vmul.f32 %v5499, %v5716
        %v5731 = vmul.f32 %v5500, %v5716
        %v5732 = vmul.f32 %v5501, %v5716
        %v5733 = vmul.f32 %v5502, %v5716
        %v5734 = vmul.f32 %v5503, %v5716
        %v5735 = vmul.f32 %v5504, %v5716
        %v5736 = vmul.f32 %v5505, %v5716
        %v5737 = vmul.f32 %v5506, %v5716
        %v5738 = vmul.f32 %v5507, %v5716
        %v5739 = vmul.f32 %v5508, %v5716
        %v5740 = vmul.f32 %v5509, %v5716
        %v5741 = vmul.f32 %v5510, %v5716
        %v5742 = vmul.f32 %v5511, %v5716
        %v5743 = vmul.f32 %v5512, %v5716
        %v5744 = vmul.f32 %v5513, %v5716
        %v5745 = vmul.f32 %v5514, %v5716
        %v5746 = vmul.f32 %v5515, %v5716
        %v5747 = vmul.f32 %v5516, %v5716
        %v5748 = vmul.f32 %v5517, %v5716
        %v5749 = vmul.f32 %v5518, %v5716
        %v5751 = vlaneseq
        %v5752 = vshrl.u32 %v5751, 7
        %v5753 = vsub.s32 0, %v5752
        %v5754 = vrot.slane %v5706, %v5753
        %v5756 = vadd.f32 %v5718, %v5754
        %v5757 = vadd.f32 %v5719, %v5754
        %v5758 = vadd.f32 %v5720, %v5754
        %v5759 = vadd.f32 %v5721, %v5754
        %v5760 = vadd.f32 %v5722, %v5754
        %v5761 = vadd.f32 %v5723, %v5754
        %v5762 = vadd.f32 %v5724, %v5754
        %v5763 = vadd.f32 %v5725, %v5754
        %v5764 = vadd.f32 %v5726, %v5754
        %v5765 = vadd.f32 %v5727, %v5754
        %v5766 = vadd.f32 %v5728, %v5754
        %v5767 = vadd.f32 %v5729, %v5754
        %v5768 = vadd.f32 %v5730, %v5754
        %v5769 = vadd.f32 %v5731, %v5754
        %v5770 = vadd.f32 %v5732, %v5754
        %v5771 = vadd.f32 %v5733, %v5754
        %v5772 = vadd.f32 %v5734, %v5754
        %v5773 = vadd.f32 %v5735, %v5754
        %v5774 = vadd.f32 %v5736, %v5754
        %v5775 = vadd.f32 %v5737, %v5754
        %v5776 = vadd.f32 %v5738, %v5754
        %v5777 = vadd.f32 %v5739, %v5754
        %v5778 = vadd.f32 %v5740, %v5754
        %v5779 = vadd.f32 %v5741, %v5754
        %v5780 = vadd.f32 %v5742, %v5754
        %v5781 = vadd.f32 %v5743, %v5754
        %v5782 = vadd.f32 %v5744, %v5754
        %v5783 = vadd.f32 %v5745, %v5754
        %v5784 = vadd.f32 %v5746, %v5754
        %v5785 = vadd.f32 %v5747, %v5754
        %v5786 = vadd.f32 %v5748, %v5754
        %v5787 = vadd.f32 %v5749, %v5754
        %v5788 = vpack.c.bf16 %v5757, %v5756
        %v5789 = vpack.c.bf16 %v5759, %v5758
        %v5790 = vpack.c.bf16 %v5761, %v5760
        %v5791 = vpack.c.bf16 %v5763, %v5762
        %v5792 = vpack.c.bf16 %v5765, %v5764
        %v5793 = vpack.c.bf16 %v5767, %v5766
        %v5794 = vpack.c.bf16 %v5769, %v5768
        %v5795 = vpack.c.bf16 %v5771, %v5770
        %v5796 = vpack.c.bf16 %v5773, %v5772
        %v5797 = vpack.c.bf16 %v5775, %v5774
        %v5798 = vpack.c.bf16 %v5777, %v5776
        %v5799 = vpack.c.bf16 %v5779, %v5778
        %v5800 = vpack.c.bf16 %v5781, %v5780
        %v5801 = vpack.c.bf16 %v5783, %v5782
        %v5802 = vpack.c.bf16 %v5785, %v5784
        %v5803 = vpack.c.bf16 %v5787, %v5786
        %v5805 = vlaneseq
        %v5806 = vshrl.u32 %v5805, 7
        %v5807 = vsub.s32 0, %v5806
        %v5808 = vrot.slane %v5710, %v5807
        %v5811 = vsel %vm366, %v5788, 0
        %v5814 = vsel %vm366, %v5789, 0
        %v5817 = vsel %vm366, %v5790, 0
        %v5820 = vsel %vm366, %v5791, 0
        %v5823 = vsel %vm366, %v5792, 0
        %v5826 = vsel %vm366, %v5793, 0
        %v5829 = vsel %vm366, %v5794, 0
        %v5832 = vsel %vm366, %v5795, 0
        %v5835 = vsel %vm366, %v5796, 0
        %v5838 = vsel %vm366, %v5797, 0
        %v5841 = vsel %vm366, %v5798, 0
        %v5844 = vsel %vm366, %v5799, 0
        %v5847 = vsel %vm366, %v5800, 0
        %v5850 = vsel %vm366, %v5801, 0
        %v5853 = vsel %vm366, %v5802, 0
        %v5856 = vsel %vm366, %v5803, 0
        %vm5858 = vcmask 1041408
        %v5860 = vsel %vm5858, %v5707, 0
        %5862 = vmatprep.subr.bf16.mxu0 0
        %5863 = vmatpush1.bf16.msra.mxu0 %v5860
        %5864 = vmatprep.subr.bf16.mxu0 0
        %5865 = vmatpush1.bf16.msra.mxu0 0
        %5866 = vmatprep.subr.bf16.mxu0 0
        %5867 = vmatpush1.bf16.msra.mxu0 0
        %5868 = vmatprep.subr.bf16.mxu0 0
        %5869 = vmatpush1.bf16.msra.mxu0 0
        %5870 = vmatprep.subr.bf16.mxu0 0
        %5871 = vmatpush1.bf16.msra.mxu0 0
        %5872 = vmatprep.subr.bf16.mxu0 0
        %5873 = vmatpush1.bf16.msra.mxu0 0
        %5874 = vmatprep.subr.bf16.mxu0 0
        %5875 = vmatpush1.bf16.msra.mxu0 0
        %5876 = vmatprep.subr.bf16.mxu0 0
        %5877 = vmatpush1.bf16.msra.mxu0 0
        %5878 = vmatprep.subr.bf16.mxu0 0
        %5879 = vmatpush1.bf16.msra.mxu0 0
        %5880 = vmatprep.subr.bf16.mxu0 0
        %5881 = vmatpush1.bf16.msra.mxu0 0
        %5882 = vmatprep.subr.bf16.mxu0 0
        %5883 = vmatpush1.bf16.msra.mxu0 0
        %5884 = vmatprep.subr.bf16.mxu0 0
        %5885 = vmatpush1.bf16.msra.mxu0 0
        %5886 = vmatprep.subr.bf16.mxu0 0
        %5887 = vmatpush1.bf16.msra.mxu0 0
        %5888 = vmatprep.subr.bf16.mxu0 0
        %5889 = vmatpush1.bf16.msra.mxu0 0
        %5890 = vmatprep.subr.bf16.mxu0 0
        %5891 = vmatpush1.bf16.msra.mxu0 0
        %5892 = vmatprep.subr.bf16.mxu0 0
        %5893 = vmatpush1.bf16.msra.mxu0 0
        %5894 = vmatprep.mubr.bf16.mxu0 0
        %5895 = vmatmul.mubr.bf16.gmra.mrb[0].mxu0 %v5811
        %v5896 = vpop.f32.mrb[0].mxu0
        %v5897 = vadd.f32 %v5808, %v5896
        %v5898 = vpop.f32.mrb[0].mxu0
        %v5899 = vpop.f32.mrb[0].mxu0
        %v5900 = vadd.f32 %v5808, %v5899
        %v5901 = vpop.f32.mrb[0].mxu0
        %5902 = vmatprep.mubr.bf16.mxu0 0
        %5903 = vmatmul.mubr.bf16.gmra.mrb[0].mxu0 %v5814
        %v5904 = vpop.f32.mrb[0].mxu0
        %v5905 = vadd.f32 %v5808, %v5904
        %v5906 = vpop.f32.mrb[0].mxu0
        %v5907 = vpop.f32.mrb[0].mxu0
        %v5908 = vadd.f32 %v5808, %v5907
        %v5909 = vpop.f32.mrb[0].mxu0
        %5910 = vmatprep.mubr.bf16.mxu0 0
        %5911 = vmatmul.mubr.bf16.gmra.mrb[0].mxu0 %v5817
        %v5912 = vpop.f32.mrb[0].mxu0
        %v5913 = vadd.f32 %v5808, %v5912
        %v5914 = vpop.f32.mrb[0].mxu0
        %v5915 = vpop.f32.mrb[0].mxu0
        %v5916 = vadd.f32 %v5808, %v5915
        %v5917 = vpop.f32.mrb[0].mxu0
        %5918 = vmatprep.mubr.bf16.mxu0 0
        %5919 = vmatmul.mubr.bf16.gmra.mrb[0].mxu0 %v5820
        %v5920 = vpop.f32.mrb[0].mxu0
        %v5921 = vadd.f32 %v5808, %v5920
        %v5922 = vpop.f32.mrb[0].mxu0
        %v5923 = vpop.f32.mrb[0].mxu0
        %v5924 = vadd.f32 %v5808, %v5923
        %v5925 = vpop.f32.mrb[0].mxu0
        %5926 = vmatprep.mubr.bf16.mxu0 0
        %5927 = vmatmul.mubr.bf16.gmra.mrb[0].mxu0 %v5823
        %v5928 = vpop.f32.mrb[0].mxu0
        %v5929 = vadd.f32 %v5808, %v5928
        %v5930 = vpop.f32.mrb[0].mxu0
        %v5931 = vpop.f32.mrb[0].mxu0
        %v5932 = vadd.f32 %v5808, %v5931
        %v5933 = vpop.f32.mrb[0].mxu0
        %5934 = vmatprep.mubr.bf16.mxu0 0
        %5935 = vmatmul.mubr.bf16.gmra.mrb[0].mxu0 %v5826
        %v5936 = vpop.f32.mrb[0].mxu0
        %v5937 = vadd.f32 %v5808, %v5936
        %v5938 = vpop.f32.mrb[0].mxu0
        %v5939 = vpop.f32.mrb[0].mxu0
        %v5940 = vadd.f32 %v5808, %v5939
        %v5941 = vpop.f32.mrb[0].mxu0
        %5942 = vmatprep.mubr.bf16.mxu0 0
        %5943 = vmatmul.mubr.bf16.gmra.mrb[0].mxu0 %v5829
        %v5944 = vpop.f32.mrb[0].mxu0
        %v5945 = vadd.f32 %v5808, %v5944
        %v5946 = vpop.f32.mrb[0].mxu0
        %v5947 = vpop.f32.mrb[0].mxu0
        %v5948 = vadd.f32 %v5808, %v5947
        %v5949 = vpop.f32.mrb[0].mxu0
        %5950 = vmatprep.mubr.bf16.mxu0 0
        %5951 = vmatmul.mubr.bf16.gmra.mrb[0].mxu0 %v5832
        %v5952 = vpop.f32.mrb[0].mxu0
        %v5953 = vadd.f32 %v5808, %v5952
        %v5954 = vpop.f32.mrb[0].mxu0
        %v5955 = vpop.f32.mrb[0].mxu0
        %v5956 = vadd.f32 %v5808, %v5955
        %v5957 = vpop.f32.mrb[0].mxu0
        %5958 = vmatprep.mubr.bf16.mxu0 0
        %5959 = vmatmul.mubr.bf16.gmra.mrb[0].mxu0 %v5835
        %v5960 = vpop.f32.mrb[0].mxu0
        %v5961 = vadd.f32 %v5808, %v5960
        %v5962 = vpop.f32.mrb[0].mxu0
        %v5963 = vpop.f32.mrb[0].mxu0
        %v5964 = vadd.f32 %v5808, %v5963
        %v5965 = vpop.f32.mrb[0].mxu0
        %5966 = vmatprep.mubr.bf16.mxu0 0
        %5967 = vmatmul.mubr.bf16.gmra.mrb[0].mxu0 %v5838
        %v5968 = vpop.f32.mrb[0].mxu0
        %v5969 = vadd.f32 %v5808, %v5968
        %v5970 = vpop.f32.mrb[0].mxu0
        %v5971 = vpop.f32.mrb[0].mxu0
        %v5972 = vadd.f32 %v5808, %v5971
        %v5973 = vpop.f32.mrb[0].mxu0
        %5974 = vmatprep.mubr.bf16.mxu0 0
        %5975 = vmatmul.mubr.bf16.gmra.mrb[0].mxu0 %v5841
        %v5976 = vpop.f32.mrb[0].mxu0
        %v5977 = vadd.f32 %v5808, %v5976
        %v5978 = vpop.f32.mrb[0].mxu0
        %v5979 = vpop.f32.mrb[0].mxu0
        %v5980 = vadd.f32 %v5808, %v5979
        %v5981 = vpop.f32.mrb[0].mxu0
        %5982 = vmatprep.mubr.bf16.mxu0 0
        %5983 = vmatmul.mubr.bf16.gmra.mrb[0].mxu0 %v5844
        %v5984 = vpop.f32.mrb[0].mxu0
        %v5985 = vadd.f32 %v5808, %v5984
        %v5986 = vpop.f32.mrb[0].mxu0
        %v5987 = vpop.f32.mrb[0].mxu0
        %v5988 = vadd.f32 %v5808, %v5987
        %v5989 = vpop.f32.mrb[0].mxu0
        %5990 = vmatprep.mubr.bf16.mxu0 0
        %5991 = vmatmul.mubr.bf16.gmra.mrb[0].mxu0 %v5847
        %v5992 = vpop.f32.mrb[0].mxu0
        %v5993 = vadd.f32 %v5808, %v5992
        %v5994 = vpop.f32.mrb[0].mxu0
        %v5995 = vpop.f32.mrb[0].mxu0
        %v5996 = vadd.f32 %v5808, %v5995
        %v5997 = vpop.f32.mrb[0].mxu0
        %5998 = vmatprep.mubr.bf16.mxu0 0
        %5999 = vmatmul.mubr.bf16.gmra.mrb[0].mxu0 %v5850
        %v6000 = vpop.f32.mrb[0].mxu0
        %v6001 = vadd.f32 %v5808, %v6000
        %v6002 = vpop.f32.mrb[0].mxu0
        %v6003 = vpop.f32.mrb[0].mxu0
        %v6004 = vadd.f32 %v5808, %v6003
        %v6005 = vpop.f32.mrb[0].mxu0
        %6006 = vmatprep.mubr.bf16.mxu0 0
        %6007 = vmatmul.mubr.bf16.gmra.mrb[0].mxu0 %v5853
        %v6008 = vpop.f32.mrb[0].mxu0
        %v6009 = vadd.f32 %v5808, %v6008
        %v6010 = vpop.f32.mrb[0].mxu0
        %v6011 = vpop.f32.mrb[0].mxu0
        %v6012 = vadd.f32 %v5808, %v6011
        %v6013 = vpop.f32.mrb[0].mxu0
        %6014 = vmatprep.mubr.bf16.mxu0 0
        %6015 = vmatmul.mubr.bf16.gmra.mrb[0].mxu0 %v5856
        %v6016 = vpop.f32.mrb[0].mxu0
        %v6017 = vadd.f32 %v5808, %v6016
        %v6018 = vpop.f32.mrb[0].mxu0
        %v6019 = vpop.f32.mrb[0].mxu0
        %v6020 = vadd.f32 %v5808, %v6019
        %v6021 = vpop.f32.mrb[0].mxu0
        %6022 = vdwg.mxu0
        %v6023 = vxor.u32 %v5897, 2147483648
        %v6024 = vxor.u32 %v5900, 2147483648
        %v6025 = vxor.u32 %v5905, 2147483648
        %v6026 = vxor.u32 %v5908, 2147483648
        %v6027 = vxor.u32 %v5913, 2147483648
        %v6028 = vxor.u32 %v5916, 2147483648
        %v6029 = vxor.u32 %v5921, 2147483648
        %v6030 = vxor.u32 %v5924, 2147483648
        %v6031 = vxor.u32 %v5929, 2147483648
        %v6032 = vxor.u32 %v5932, 2147483648
        %v6033 = vxor.u32 %v5937, 2147483648
        %v6034 = vxor.u32 %v5940, 2147483648
        %v6035 = vxor.u32 %v5945, 2147483648
        %v6036 = vxor.u32 %v5948, 2147483648
        %v6037 = vxor.u32 %v5953, 2147483648
        %v6038 = vxor.u32 %v5956, 2147483648
        %v6039 = vxor.u32 %v5961, 2147483648
        %v6040 = vxor.u32 %v5964, 2147483648
        %v6041 = vxor.u32 %v5969, 2147483648
        %v6042 = vxor.u32 %v5972, 2147483648
        %v6043 = vxor.u32 %v5977, 2147483648
        %v6044 = vxor.u32 %v5980, 2147483648
        %v6045 = vxor.u32 %v5985, 2147483648
        %v6046 = vxor.u32 %v5988, 2147483648
        %v6047 = vxor.u32 %v5993, 2147483648
        %v6048 = vxor.u32 %v5996, 2147483648
        %v6049 = vxor.u32 %v6001, 2147483648
        %v6050 = vxor.u32 %v6004, 2147483648
        %v6051 = vxor.u32 %v6009, 2147483648
        %v6052 = vxor.u32 %v6012, 2147483648
        %v6053 = vxor.u32 %v6017, 2147483648
        %v6054 = vxor.u32 %v6020, 2147483648
        %v6055 = vmul.f32 %v6023, 1.442695
        %v6056 = vpow.pop %v6055
        %v6057 = vmul.f32 %v6024, 1.442695
        %v6058 = vpow.pop %v6057
        %v6059 = vmul.f32 %v6025, 1.442695
        %v6060 = vpow.pop %v6059
        %v6061 = vmul.f32 %v6026, 1.442695
        %v6062 = vpow.pop %v6061
        %v6063 = vmul.f32 %v6027, 1.442695
        %v6064 = vpow.pop %v6063
        %v6065 = vmul.f32 %v6028, 1.442695
        %v6066 = vpow.pop %v6065
        %v6067 = vmul.f32 %v6029, 1.442695
        %v6068 = vpow.pop %v6067
        %v6069 = vmul.f32 %v6030, 1.442695
        %v6070 = vpow.pop %v6069
        %v6071 = vmul.f32 %v6031, 1.442695
        %v6072 = vpow.pop %v6071
        %v6073 = vmul.f32 %v6032, 1.442695
        %v6074 = vpow.pop %v6073
        %v6075 = vmul.f32 %v6033, 1.442695
        %v6076 = vpow.pop %v6075
        %v6077 = vmul.f32 %v6034, 1.442695
        %v6078 = vpow.pop %v6077
        %v6079 = vmul.f32 %v6035, 1.442695
        %v6080 = vpow.pop %v6079
        %v6081 = vmul.f32 %v6036, 1.442695
        %v6082 = vpow.pop %v6081
        %v6083 = vmul.f32 %v6037, 1.442695
        %v6084 = vpow.pop %v6083
        %v6085 = vmul.f32 %v6038, 1.442695
        %v6086 = vpow.pop %v6085
        %v6087 = vmul.f32 %v6039, 1.442695
        %v6088 = vpow.pop %v6087
        %v6089 = vmul.f32 %v6040, 1.442695
        %v6090 = vpow.pop %v6089
        %v6091 = vmul.f32 %v6041, 1.442695
        %v6092 = vpow.pop %v6091
        %v6093 = vmul.f32 %v6042, 1.442695
        %v6094 = vpow.pop %v6093
        %v6095 = vmul.f32 %v6043, 1.442695
        %v6096 = vpow.pop %v6095
        %v6097 = vmul.f32 %v6044, 1.442695
        %v6098 = vpow.pop %v6097
        %v6099 = vmul.f32 %v6045, 1.442695
        %v6100 = vpow.pop %v6099
        %v6101 = vmul.f32 %v6046, 1.442695
        %v6102 = vpow.pop %v6101
        %v6103 = vmul.f32 %v6047, 1.442695
        %v6104 = vpow.pop %v6103
        %v6105 = vmul.f32 %v6048, 1.442695
        %v6106 = vpow.pop %v6105
        %v6107 = vmul.f32 %v6049, 1.442695
        %v6108 = vpow.pop %v6107
        %v6109 = vmul.f32 %v6050, 1.442695
        %v6110 = vpow.pop %v6109
        %v6111 = vmul.f32 %v6051, 1.442695
        %v6112 = vpow.pop %v6111
        %v6113 = vmul.f32 %v6052, 1.442695
        %v6114 = vpow.pop %v6113
        %v6115 = vmul.f32 %v6053, 1.442695
        %v6116 = vpow.pop %v6115
        %v6117 = vmul.f32 %v6054, 1.442695
        %v6118 = vpow.pop %v6117
        %v6119 = vadd.f32 %v6056, 1.0
        %v6120 = vadd.f32 %v6058, 1.0
        %v6121 = vadd.f32 %v6060, 1.0
        %v6122 = vadd.f32 %v6062, 1.0
        %v6123 = vadd.f32 %v6064, 1.0
        %v6124 = vadd.f32 %v6066, 1.0
        %v6125 = vadd.f32 %v6068, 1.0
        %v6126 = vadd.f32 %v6070, 1.0
        %v6127 = vadd.f32 %v6072, 1.0
        %v6128 = vadd.f32 %v6074, 1.0
        %v6129 = vadd.f32 %v6076, 1.0
        %v6130 = vadd.f32 %v6078, 1.0
        %v6131 = vadd.f32 %v6080, 1.0
        %v6132 = vadd.f32 %v6082, 1.0
        %v6133 = vadd.f32 %v6084, 1.0
        %v6134 = vadd.f32 %v6086, 1.0
        %v6135 = vadd.f32 %v6088, 1.0
        %v6136 = vadd.f32 %v6090, 1.0
        %v6137 = vadd.f32 %v6092, 1.0
        %v6138 = vadd.f32 %v6094, 1.0
        %v6139 = vadd.f32 %v6096, 1.0
        %v6140 = vadd.f32 %v6098, 1.0
        %v6141 = vadd.f32 %v6100, 1.0
        %v6142 = vadd.f32 %v6102, 1.0
        %v6143 = vadd.f32 %v6104, 1.0
        %v6144 = vadd.f32 %v6106, 1.0
        %v6145 = vadd.f32 %v6108, 1.0
        %v6146 = vadd.f32 %v6110, 1.0
        %v6147 = vadd.f32 %v6112, 1.0
        %v6148 = vadd.f32 %v6114, 1.0
        %v6149 = vadd.f32 %v6116, 1.0
        %v6150 = vadd.f32 %v6118, 1.0
        %v6151 = vrcp.pop %v6119
        %v6152 = vmul.f32 1.0, %v6151
        %v6153 = vrcp.pop %v6120
        %v6154 = vmul.f32 1.0, %v6153
        %v6155 = vrcp.pop %v6121
        %v6156 = vmul.f32 1.0, %v6155
        %v6157 = vrcp.pop %v6122
        %v6158 = vmul.f32 1.0, %v6157
        %v6159 = vrcp.pop %v6123
        %v6160 = vmul.f32 1.0, %v6159
        %v6161 = vrcp.pop %v6124
        %v6162 = vmul.f32 1.0, %v6161
        %v6163 = vrcp.pop %v6125
        %v6164 = vmul.f32 1.0, %v6163
        %v6165 = vrcp.pop %v6126
        %v6166 = vmul.f32 1.0, %v6165
        %v6167 = vrcp.pop %v6127
        %v6168 = vmul.f32 1.0, %v6167
        %v6169 = vrcp.pop %v6128
        %v6170 = vmul.f32 1.0, %v6169
        %v6171 = vrcp.pop %v6129
        %v6172 = vmul.f32 1.0, %v6171
        %v6173 = vrcp.pop %v6130
        %v6174 = vmul.f32 1.0, %v6173
        %v6175 = vrcp.pop %v6131
        %v6176 = vmul.f32 1.0, %v6175
        %v6177 = vrcp.pop %v6132
        %v6178 = vmul.f32 1.0, %v6177
        %v6179 = vrcp.pop %v6133
        %v6180 = vmul.f32 1.0, %v6179
        %v6181 = vrcp.pop %v6134
        %v6182 = vmul.f32 1.0, %v6181
        %v6183 = vrcp.pop %v6135
        %v6184 = vmul.f32 1.0, %v6183
        %v6185 = vrcp.pop %v6136
        %v6186 = vmul.f32 1.0, %v6185
        %v6187 = vrcp.pop %v6137
        %v6188 = vmul.f32 1.0, %v6187
        %v6189 = vrcp.pop %v6138
        %v6190 = vmul.f32 1.0, %v6189
        %v6191 = vrcp.pop %v6139
        %v6192 = vmul.f32 1.0, %v6191
        %v6193 = vrcp.pop %v6140
        %v6194 = vmul.f32 1.0, %v6193
        %v6195 = vrcp.pop %v6141
        %v6196 = vmul.f32 1.0, %v6195
        %v6197 = vrcp.pop %v6142
        %v6198 = vmul.f32 1.0, %v6197
        %v6199 = vrcp.pop %v6143
        %v6200 = vmul.f32 1.0, %v6199
        %v6201 = vrcp.pop %v6144
        %v6202 = vmul.f32 1.0, %v6201
        %v6203 = vrcp.pop %v6145
        %v6204 = vmul.f32 1.0, %v6203
        %v6205 = vrcp.pop %v6146
        %v6206 = vmul.f32 1.0, %v6205
        %v6207 = vrcp.pop %v6147
        %v6208 = vmul.f32 1.0, %v6207
        %v6209 = vrcp.pop %v6148
        %v6210 = vmul.f32 1.0, %v6209
        %v6211 = vrcp.pop %v6149
        %v6212 = vmul.f32 1.0, %v6211
        %v6213 = vrcp.pop %v6150
        %v6214 = vmul.f32 1.0, %v6213
        %v6215 = vmul.f32 %v5897, %v6152
        %v6216 = vmul.f32 %v5900, %v6154
        %v6217 = vmul.f32 %v5905, %v6156
        %v6218 = vmul.f32 %v5908, %v6158
        %v6219 = vmul.f32 %v5913, %v6160
        %v6220 = vmul.f32 %v5916, %v6162
        %v6221 = vmul.f32 %v5921, %v6164
        %v6222 = vmul.f32 %v5924, %v6166
        %v6223 = vmul.f32 %v5929, %v6168
        %v6224 = vmul.f32 %v5932, %v6170
        %v6225 = vmul.f32 %v5937, %v6172
        %v6226 = vmul.f32 %v5940, %v6174
        %v6227 = vmul.f32 %v5945, %v6176
        %v6228 = vmul.f32 %v5948, %v6178
        %v6229 = vmul.f32 %v5953, %v6180
        %v6230 = vmul.f32 %v5956, %v6182
        %v6231 = vmul.f32 %v5961, %v6184
        %v6232 = vmul.f32 %v5964, %v6186
        %v6233 = vmul.f32 %v5969, %v6188
        %v6234 = vmul.f32 %v5972, %v6190
        %v6235 = vmul.f32 %v5977, %v6192
        %v6236 = vmul.f32 %v5980, %v6194
        %v6237 = vmul.f32 %v5985, %v6196
        %v6238 = vmul.f32 %v5988, %v6198
        %v6239 = vmul.f32 %v5993, %v6200
        %v6240 = vmul.f32 %v5996, %v6202
        %v6241 = vmul.f32 %v6001, %v6204
        %v6242 = vmul.f32 %v6004, %v6206
        %v6243 = vmul.f32 %v6009, %v6208
        %v6244 = vmul.f32 %v6012, %v6210
        %v6245 = vmul.f32 %v6017, %v6212
        %v6246 = vmul.f32 %v6020, %v6214
        %v6247 = vpack.c.bf16 %v6216, %v6215
        %v6248 = vpack.c.bf16 %v6218, %v6217
        %v6249 = vpack.c.bf16 %v6220, %v6219
        %v6250 = vpack.c.bf16 %v6222, %v6221
        %v6251 = vpack.c.bf16 %v6224, %v6223
        %v6252 = vpack.c.bf16 %v6226, %v6225
        %v6253 = vpack.c.bf16 %v6228, %v6227
        %v6254 = vpack.c.bf16 %v6230, %v6229
        %v6255 = vpack.c.bf16 %v6232, %v6231
        %v6256 = vpack.c.bf16 %v6234, %v6233
        %v6257 = vpack.c.bf16 %v6236, %v6235
        %v6258 = vpack.c.bf16 %v6238, %v6237
        %v6259 = vpack.c.bf16 %v6240, %v6239
        %v6260 = vpack.c.bf16 %v6242, %v6241
        %v6261 = vpack.c.bf16 %v6244, %v6243
        %v6262 = vpack.c.bf16 %v6246, %v6245
        %v6264 = vlaneseq
        %v6265 = vshrl.u32 %v6264, 7
        %v6266 = vsub.s32 0, %v6265
        %v6267 = vrot.slane %v5711, %v6266
        %v6271 = vunpack.c.l.b16 %v5708
        %v6272 = vunpack.c.l.b16 %v5709
        %v6273 = vpack.c.b16 %v6272, %v6271
        %vm6275 = vcmask 130048
        %v6277 = vsel %vm6275, %v6247, 0
        %v6280 = vsel %vm6275, %v6248, 0
        %v6283 = vsel %vm6275, %v6249, 0
        %v6286 = vsel %vm6275, %v6250, 0
        %v6289 = vsel %vm6275, %v6251, 0
        %v6292 = vsel %vm6275, %v6252, 0
        %v6295 = vsel %vm6275, %v6253, 0
        %v6298 = vsel %vm6275, %v6254, 0
        %v6301 = vsel %vm6275, %v6255, 0
        %v6304 = vsel %vm6275, %v6256, 0
        %v6307 = vsel %vm6275, %v6257, 0
        %v6310 = vsel %vm6275, %v6258, 0
        %v6313 = vsel %vm6275, %v6259, 0
        %v6316 = vsel %vm6275, %v6260, 0
        %v6319 = vsel %vm6275, %v6261, 0
        %v6322 = vsel %vm6275, %v6262, 0
        %6324 = vmatprep.subr.bf16.mxu0 0
        %6325 = vmatpush1.bf16.msra.mxu0 %v6273
        %6326 = vmatprep.subr.bf16.mxu0 0
        %6327 = vmatpush1.bf16.msra.mxu0 0
        %6328 = vmatprep.subr.bf16.mxu0 0
        %6329 = vmatpush1.bf16.msra.mxu0 0
        %6330 = vmatprep.subr.bf16.mxu0 0
        %6331 = vmatpush1.bf16.msra.mxu0 0
        %6332 = vmatprep.subr.bf16.mxu0 0
        %6333 = vmatpush1.bf16.msra.mxu0 0
        %6334 = vmatprep.subr.bf16.mxu0 0
        %6335 = vmatpush1.bf16.msra.mxu0 0
        %6336 = vmatprep.subr.bf16.mxu0 0
        %6337 = vmatpush1.bf16.msra.mxu0 0
        %6338 = vmatprep.subr.bf16.mxu0 0
        %6339 = vmatpush1.bf16.msra.mxu0 0
        %6340 = vmatprep.subr.bf16.mxu0 0
        %6341 = vmatpush1.bf16.msra.mxu0 0
        %6342 = vmatprep.subr.bf16.mxu0 0
        %6343 = vmatpush1.bf16.msra.mxu0 0
        %6344 = vmatprep.subr.bf16.mxu0 0
        %6345 = vmatpush1.bf16.msra.mxu0 0
        %6346 = vmatprep.subr.bf16.mxu0 0
        %6347 = vmatpush1.bf16.msra.mxu0 0
        %6348 = vmatprep.subr.bf16.mxu0 0
        %6349 = vmatpush1.bf16.msra.mxu0 0
        %6350 = vmatprep.subr.bf16.mxu0 0
        %6351 = vmatpush1.bf16.msra.mxu0 0
        %6352 = vmatprep.subr.bf16.mxu0 0
        %6353 = vmatpush1.bf16.msra.mxu0 0
        %6354 = vmatprep.subr.bf16.mxu0 0
        %6355 = vmatpush1.bf16.msra.mxu0 0
        %6356 = vmatprep.mubr.bf16.mxu0 0
        %6357 = vmatmul.mubr.bf16.gmra.mrb[0].mxu0 %v6277
        %v6358 = vpop.f32.mrb[0].mxu0
        %v6359 = vadd.f32 %v6267, %v6358
        %v6360 = vpop.f32.mrb[0].mxu0
        %v6361 = vpop.f32.mrb[0].mxu0
        %v6362 = vadd.f32 %v6267, %v6361
        %v6363 = vpop.f32.mrb[0].mxu0
        %6364 = vmatprep.mubr.bf16.mxu0 0
        %6365 = vmatmul.mubr.bf16.gmra.mrb[0].mxu0 %v6280
        %v6366 = vpop.f32.mrb[0].mxu0
        %v6367 = vadd.f32 %v6267, %v6366
        %v6368 = vpop.f32.mrb[0].mxu0
        %v6369 = vpop.f32.mrb[0].mxu0
        %v6370 = vadd.f32 %v6267, %v6369
        %v6371 = vpop.f32.mrb[0].mxu0
        %6372 = vmatprep.mubr.bf16.mxu0 0
        %6373 = vmatmul.mubr.bf16.gmra.mrb[0].mxu0 %v6283
        %v6374 = vpop.f32.mrb[0].mxu0
        %v6375 = vadd.f32 %v6267, %v6374
        %v6376 = vpop.f32.mrb[0].mxu0
        %v6377 = vpop.f32.mrb[0].mxu0
        %v6378 = vadd.f32 %v6267, %v6377
        %v6379 = vpop.f32.mrb[0].mxu0
        %6380 = vmatprep.mubr.bf16.mxu0 0
        %6381 = vmatmul.mubr.bf16.gmra.mrb[0].mxu0 %v6286
        %v6382 = vpop.f32.mrb[0].mxu0
        %v6383 = vadd.f32 %v6267, %v6382
        %v6384 = vpop.f32.mrb[0].mxu0
        %v6385 = vpop.f32.mrb[0].mxu0
        %v6386 = vadd.f32 %v6267, %v6385
        %v6387 = vpop.f32.mrb[0].mxu0
        %6388 = vmatprep.mubr.bf16.mxu0 0
        %6389 = vmatmul.mubr.bf16.gmra.mrb[0].mxu0 %v6289
        %v6390 = vpop.f32.mrb[0].mxu0
        %v6391 = vadd.f32 %v6267, %v6390
        %v6392 = vpop.f32.mrb[0].mxu0
        %v6393 = vpop.f32.mrb[0].mxu0
        %v6394 = vadd.f32 %v6267, %v6393
        %v6395 = vpop.f32.mrb[0].mxu0
        %6396 = vmatprep.mubr.bf16.mxu0 0
        %6397 = vmatmul.mubr.bf16.gmra.mrb[0].mxu0 %v6292
        %v6398 = vpop.f32.mrb[0].mxu0
        %v6399 = vadd.f32 %v6267, %v6398
        %v6400 = vpop.f32.mrb[0].mxu0
        %v6401 = vpop.f32.mrb[0].mxu0
        %v6402 = vadd.f32 %v6267, %v6401
        %v6403 = vpop.f32.mrb[0].mxu0
        %6404 = vmatprep.mubr.bf16.mxu0 0
        %6405 = vmatmul.mubr.bf16.gmra.mrb[0].mxu0 %v6295
        %v6406 = vpop.f32.mrb[0].mxu0
        %v6407 = vadd.f32 %v6267, %v6406
        %v6408 = vpop.f32.mrb[0].mxu0
        %v6409 = vpop.f32.mrb[0].mxu0
        %v6410 = vadd.f32 %v6267, %v6409
        %v6411 = vpop.f32.mrb[0].mxu0
        %6412 = vmatprep.mubr.bf16.mxu0 0
        %6413 = vmatmul.mubr.bf16.gmra.mrb[0].mxu0 %v6298
        %v6414 = vpop.f32.mrb[0].mxu0
        %v6415 = vadd.f32 %v6267, %v6414
        %v6416 = vpop.f32.mrb[0].mxu0
        %v6417 = vpop.f32.mrb[0].mxu0
        %v6418 = vadd.f32 %v6267, %v6417
        %v6419 = vpop.f32.mrb[0].mxu0
        %6420 = vmatprep.mubr.bf16.mxu0 0
        %6421 = vmatmul.mubr.bf16.gmra.mrb[0].mxu0 %v6301
        %v6422 = vpop.f32.mrb[0].mxu0
        %v6423 = vadd.f32 %v6267, %v6422
        %v6424 = vpop.f32.mrb[0].mxu0
        %v6425 = vpop.f32.mrb[0].mxu0
        %v6426 = vadd.f32 %v6267, %v6425
        %v6427 = vpop.f32.mrb[0].mxu0
        %6428 = vmatprep.mubr.bf16.mxu0 0
        %6429 = vmatmul.mubr.bf16.gmra.mrb[0].mxu0 %v6304
        %v6430 = vpop.f32.mrb[0].mxu0
        %v6431 = vadd.f32 %v6267, %v6430
        %v6432 = vpop.f32.mrb[0].mxu0
        %v6433 = vpop.f32.mrb[0].mxu0
        %v6434 = vadd.f32 %v6267, %v6433
        %v6435 = vpop.f32.mrb[0].mxu0
        %6436 = vmatprep.mubr.bf16.mxu0 0
        %6437 = vmatmul.mubr.bf16.gmra.mrb[0].mxu0 %v6307
        %v6438 = vpop.f32.mrb[0].mxu0
        %v6439 = vadd.f32 %v6267, %v6438
        %v6440 = vpop.f32.mrb[0].mxu0
        %v6441 = vpop.f32.mrb[0].mxu0
        %v6442 = vadd.f32 %v6267, %v6441
        %v6443 = vpop.f32.mrb[0].mxu0
        %6444 = vmatprep.mubr.bf16.mxu0 0
        %6445 = vmatmul.mubr.bf16.gmra.mrb[0].mxu0 %v6310
        %v6446 = vpop.f32.mrb[0].mxu0
        %v6447 = vadd.f32 %v6267, %v6446
        %v6448 = vpop.f32.mrb[0].mxu0
        %v6449 = vpop.f32.mrb[0].mxu0
        %v6450 = vadd.f32 %v6267, %v6449
        %v6451 = vpop.f32.mrb[0].mxu0
        %6452 = vmatprep.mubr.bf16.mxu0 0
        %6453 = vmatmul.mubr.bf16.gmra.mrb[0].mxu0 %v6313
        %v6454 = vpop.f32.mrb[0].mxu0
        %v6455 = vadd.f32 %v6267, %v6454
        %v6456 = vpop.f32.mrb[0].mxu0
        %v6457 = vpop.f32.mrb[0].mxu0
        %v6458 = vadd.f32 %v6267, %v6457
        %v6459 = vpop.f32.mrb[0].mxu0
        %6460 = vmatprep.mubr.bf16.mxu0 0
        %6461 = vmatmul.mubr.bf16.gmra.mrb[0].mxu0 %v6316
        %v6462 = vpop.f32.mrb[0].mxu0
        %v6463 = vadd.f32 %v6267, %v6462
        %v6464 = vpop.f32.mrb[0].mxu0
        %v6465 = vpop.f32.mrb[0].mxu0
        %v6466 = vadd.f32 %v6267, %v6465
        %v6467 = vpop.f32.mrb[0].mxu0
        %6468 = vmatprep.mubr.bf16.mxu0 0
        %6469 = vmatmul.mubr.bf16.gmra.mrb[0].mxu0 %v6319
        %v6470 = vpop.f32.mrb[0].mxu0
        %v6471 = vadd.f32 %v6267, %v6470
        %v6472 = vpop.f32.mrb[0].mxu0
        %v6473 = vpop.f32.mrb[0].mxu0
        %v6474 = vadd.f32 %v6267, %v6473
        %v6475 = vpop.f32.mrb[0].mxu0
        %6476 = vmatprep.mubr.bf16.mxu0 0
        %6477 = vmatmul.mubr.bf16.gmra.mrb[0].mxu0 %v6322
        %v6478 = vpop.f32.mrb[0].mxu0
        %v6479 = vadd.f32 %v6267, %v6478
        %v6480 = vpop.f32.mrb[0].mxu0
        %v6481 = vpop.f32.mrb[0].mxu0
        %v6482 = vadd.f32 %v6267, %v6481
        %v6483 = vpop.f32.mrb[0].mxu0
        %6484 = vdwg.mxu0
        %v6485 = vld [vmem:[%s356] sm:$0xff]
        %v6486 = vld [vmem:[%s356 + $0x8] sm:$0xff]
        %v6487 = vld [vmem:[%s356 + $0x10] sm:$0xff]
        %v6488 = vld [vmem:[%s356 + $0x18] sm:$0xff]
        %v6489 = vld [vmem:[%s356 + $0x20] sm:$0xff]
        %v6490 = vld [vmem:[%s356 + $0x28] sm:$0xff]
        %v6491 = vld [vmem:[%s356 + $0x30] sm:$0xff]
        %v6492 = vld [vmem:[%s356 + $0x38] sm:$0xff]
        %v6493 = vld [vmem:[%s356 + $0x40] sm:$0xff]
        %v6494 = vld [vmem:[%s356 + $0x48] sm:$0xff]
        %v6495 = vld [vmem:[%s356 + $0x50] sm:$0xff]
        %v6496 = vld [vmem:[%s356 + $0x58] sm:$0xff]
        %v6497 = vld [vmem:[%s356 + $0x60] sm:$0xff]
        %v6498 = vld [vmem:[%s356 + $0x68] sm:$0xff]
        %v6499 = vld [vmem:[%s356 + $0x70] sm:$0xff]
        %v6500 = vld [vmem:[%s356 + $0x78] sm:$0xff]
        %v6501 = vld [vmem:[%s356 + $0x80] sm:$0xff]
        %v6502 = vld [vmem:[%s356 + $0x88] sm:$0xff]
        %v6503 = vld [vmem:[%s356 + $0x90] sm:$0xff]
        %v6504 = vld [vmem:[%s356 + $0x98] sm:$0xff]
        %v6505 = vld [vmem:[%s356 + $0xa0] sm:$0xff]
        %v6506 = vld [vmem:[%s356 + $0xa8] sm:$0xff]
        %v6507 = vld [vmem:[%s356 + $0xb0] sm:$0xff]
        %v6508 = vld [vmem:[%s356 + $0xb8] sm:$0xff]
        %v6509 = vld [vmem:[%s356 + $0xc0] sm:$0xff]
        %v6510 = vld [vmem:[%s356 + $0xc8] sm:$0xff]
        %v6511 = vld [vmem:[%s356 + $0xd0] sm:$0xff]
        %v6512 = vld [vmem:[%s356 + $0xd8] sm:$0xff]
        %v6513 = vld [vmem:[%s356 + $0xe0] sm:$0xff]
        %v6514 = vld [vmem:[%s356 + $0xe8] sm:$0xff]
        %v6515 = vld [vmem:[%s356 + $0xf0] sm:$0xff]
        %v6516 = vld [vmem:[%s356 + $0xf8] sm:$0xff]
        %v6517 = vadd.f32 %v6485, %v6359
        %v6518 = vadd.f32 %v6486, %v6362
        %v6519 = vadd.f32 %v6487, %v6367
        %v6520 = vadd.f32 %v6488, %v6370
        %v6521 = vadd.f32 %v6489, %v6375
        %v6522 = vadd.f32 %v6490, %v6378
        %v6523 = vadd.f32 %v6491, %v6383
        %v6524 = vadd.f32 %v6492, %v6386
        %v6525 = vadd.f32 %v6493, %v6391
        %v6526 = vadd.f32 %v6494, %v6394
        %v6527 = vadd.f32 %v6495, %v6399
        %v6528 = vadd.f32 %v6496, %v6402
        %v6529 = vadd.f32 %v6497, %v6407
        %v6530 = vadd.f32 %v6498, %v6410
        %v6531 = vadd.f32 %v6499, %v6415
        %v6532 = vadd.f32 %v6500, %v6418
        %v6533 = vadd.f32 %v6501, %v6423
        %v6534 = vadd.f32 %v6502, %v6426
        %v6535 = vadd.f32 %v6503, %v6431
        %v6536 = vadd.f32 %v6504, %v6434
        %v6537 = vadd.f32 %v6505, %v6439
        %v6538 = vadd.f32 %v6506, %v6442
        %v6539 = vadd.f32 %v6507, %v6447
        %v6540 = vadd.f32 %v6508, %v6450
        %v6541 = vadd.f32 %v6509, %v6455
        %v6542 = vadd.f32 %v6510, %v6458
        %v6543 = vadd.f32 %v6511, %v6463
        %v6544 = vadd.f32 %v6512, %v6466
        %v6545 = vadd.f32 %v6513, %v6471
        %v6546 = vadd.f32 %v6514, %v6474
        %v6547 = vadd.f32 %v6515, %v6479
        %v6548 = vadd.f32 %v6516, %v6482
        %6549 = vxpose.xlu0.b32.start [1/16] %v6517, 128
        %6550 = vxpose.xlu0.b32.cont [2/16] %v6518, 128
        %6551 = vxpose.xlu0.b32.cont [3/16] %v6519, 128
        %6552 = vxpose.xlu0.b32.cont [4/16] %v6520, 128
        %6553 = vxpose.xlu0.b32.cont [5/16] %v6521, 128
        %6554 = vxpose.xlu0.b32.cont [6/16] %v6522, 128
        %6555 = vxpose.xlu0.b32.cont [7/16] %v6523, 128
        %6556 = vxpose.xlu0.b32.cont [8/16] %v6524, 128
        %6557 = vxpose.xlu0.b32.cont [9/16] %v6525, 128
        %6558 = vxpose.xlu0.b32.cont [10/16] %v6526, 128
        %6559 = vxpose.xlu0.b32.cont [11/16] %v6527, 128
        %6560 = vxpose.xlu0.b32.cont [12/16] %v6528, 128
        %6561 = vxpose.xlu0.b32.cont [13/16] %v6529, 128
        %6562 = vxpose.xlu0.b32.cont [14/16] %v6530, 128
        %6563 = vxpose.xlu0.b32.cont [15/16] %v6531, 128
        %6564 = vxpose.xlu0.b32.end [16/16] %v6532, 128
        %v6565 = vpop.trf.xlu0
        %v6566 = vpop.trf.xlu0
        %v6567 = vpop.trf.xlu0
        %v6568 = vpop.trf.xlu0
        %v6569 = vpop.trf.xlu0
        %v6570 = vpop.trf.xlu0
        %v6571 = vpop.trf.xlu0
        %v6572 = vpop.trf.xlu0
        %v6573 = vpop.trf.xlu0
        %v6574 = vpop.trf.xlu0
        %v6575 = vpop.trf.xlu0
        %v6576 = vpop.trf.xlu0
        %v6577 = vpop.trf.xlu0
        %v6578 = vpop.trf.xlu0
        %v6579 = vpop.trf.xlu0
        %v6580 = vpop.trf.xlu0
        %6581 = vxpose.xlu0.b32.start [1/16] %v6533, 128
        %6582 = vxpose.xlu0.b32.cont [2/16] %v6534, 128
        %6583 = vxpose.xlu0.b32.cont [3/16] %v6535, 128
        %6584 = vxpose.xlu0.b32.cont [4/16] %v6536, 128
        %6585 = vxpose.xlu0.b32.cont [5/16] %v6537, 128
        %6586 = vxpose.xlu0.b32.cont [6/16] %v6538, 128
        %6587 = vxpose.xlu0.b32.cont [7/16] %v6539, 128
        %6588 = vxpose.xlu0.b32.cont [8/16] %v6540, 128
        %6589 = vxpose.xlu0.b32.cont [9/16] %v6541, 128
        %6590 = vxpose.xlu0.b32.cont [10/16] %v6542, 128
        %6591 = vxpose.xlu0.b32.cont [11/16] %v6543, 128
        %6592 = vxpose.xlu0.b32.cont [12/16] %v6544, 128
        %6593 = vxpose.xlu0.b32.cont [13/16] %v6545, 128
        %6594 = vxpose.xlu0.b32.cont [14/16] %v6546, 128
        %6595 = vxpose.xlu0.b32.cont [15/16] %v6547, 128
        %6596 = vxpose.xlu0.b32.end [16/16] %v6548, 128
        %v6597 = vpop.trf.xlu0
        %v6598 = vpop.trf.xlu0
        %v6599 = vpop.trf.xlu0
        %v6600 = vpop.trf.xlu0
        %v6601 = vpop.trf.xlu0
        %v6602 = vpop.trf.xlu0
        %v6603 = vpop.trf.xlu0
        %v6604 = vpop.trf.xlu0
        %v6605 = vpop.trf.xlu0
        %v6606 = vpop.trf.xlu0
        %v6607 = vpop.trf.xlu0
        %v6608 = vpop.trf.xlu0
        %v6609 = vpop.trf.xlu0
        %v6610 = vpop.trf.xlu0
        %v6611 = vpop.trf.xlu0
        %v6612 = vpop.trf.xlu0
        %v6615 = vcombine.low %v6565, %v6597
        %6617 = vst [vmem:[%s351] sm:$0xff] %v6615
        %s6618 = sand.u32 %s235, 1
        %s6619 = scalar_lea.sflag [#allocation4], %s6618
        %s6620 = sand.u32 %s235, 1
        %s6621 = smul.addr %s6620, 8
        %s6622 = scalar_lea.vmem [#allocation3], %s6621
        // Predicated region
        $region57: #{tpu_custom_call.1} parent=55 // pred_check
          %p6623 = pneg %p245
        $region58: #{tpu_custom_call.1} parent=55 // pred_check_branch
          %6625 = sbr.rel (%p6623) target = $region60
        $region59: #{tpu_custom_call.1} parent=55 // pred_region
          %s6627 = ssub.s32 128, 128
          %6628 = vsyncadd %s6619, %s6627
          %s6629 = smul.addr %s23, 2
          %s6630 = smul.addr %s6629, 64
          %s6631 = scalar_lea.hbm %s9, %s6630
          %s6633 = sshll.u32 %s6622, 4
          %s6634 = int_to_ptr.vmem [resolvable:$true] %s6633
          %6636 = dma.vmem_to_hbm [thread:$0]  %s6634, 128, %s6631, %s6619
        $region60: #{tpu_custom_call.1} parent=55 // pred_fallthru
          _
      $region56: #{tpu_custom_call.1} parent=5 // pred_fallthru
        _
      %p6637 = scmp.le.s32.totalorder 2, %s18
      // Predicated region
      $region61: #{tpu_custom_call.1} parent=5 // pred_check
        %p6638 = pneg %p6637
      $region62: #{tpu_custom_call.1} parent=5 // pred_check_branch
        %6640 = sbr.rel (%p6638) target = $region64
      $region63: #{tpu_custom_call.1} parent=5 // pred_region
        %s6641 = ssub.s32 %s18, 2
        // Predicated region
        $region65: #{tpu_custom_call.1} parent=63 // pred_check
          %p6642 = pneg %p251
        $region66: #{tpu_custom_call.1} parent=63 // pred_check_branch
          %6644 = sbr.rel (%p6642) target = $region68
        $region67: #{tpu_custom_call.1} parent=63 // pred_region
          %s6645 = sand.u32 %s236, 1
          %s6646 = scalar_lea.sflag [#allocation4], %s6645
          %s6647 = sand.u32 %s236, 1
          %s6648 = smul.addr %s6647, 8
          %s6649 = scalar_lea.vmem [#allocation3], %s6648
          %6650 = dma.done %s6646, 128
        $region68: #{tpu_custom_call.1} parent=63 // pred_fallthru
          _
      $region64: #{tpu_custom_call.1} parent=5 // pred_fallthru
        _
    $region6: #{tpu_custom_call.1} parent=1 // loop_footer
      %s22 = sadd.s32 1, %s18
    $region7: #{tpu_custom_call.1} parent=1 // loop_footer_branch
      %17 = sbr.rel target = $region3
    $region8: #{tpu_custom_call.1} parent=1 // loop_exit
      _
    %6651 = vsyncpa [#allocation4], 1
    %s6652 = scalar_lea.sflag [#allocation4], 1
    %6653 = vsyncpa %s6652, 1

</llo_original>
